<compile_context>
chip_gen: v7x
topology: tpu7x:2x2x1
jax: 0.10.0
libtpu: 0.0.40
codegen_flags: <defaults>
</compile_context>

<pallas_src>
import functools

import numpy as np
import jax
import jax.numpy as jnp
from jax.experimental import pallas as pl
from jax.experimental.pallas import tpu as pltpu

CP = 128                        # padded channel width == TPU lane count
VMEM_LIMIT = 32 * 1024 * 1024   # explicit scoped-VMEM limit (fits v5e/v6e/v7x)


# ---------------------------------------------------------------------------
# Small static-shift helpers (used inside the kernel; shifts are compile-time)
# ---------------------------------------------------------------------------
def _shift2d(m, ry, rx):
    """result[y, x, :] = m[y+ry, x+rx, :], zero-filled outside.  ry/rx static ints."""
    H, W, C = m.shape
    if ry:
        z = jnp.zeros((abs(ry), W, C), m.dtype)
        m = (jnp.concatenate([z, m[:ry]], axis=0) if ry < 0
             else jnp.concatenate([m[ry:], z], axis=0))
    if rx:
        z = jnp.zeros((H, abs(rx), C), m.dtype)
        m = (jnp.concatenate([z, m[:, :rx]], axis=1) if rx < 0
             else jnp.concatenate([m[:, rx:], z], axis=1))
    return m


def _rshift(m, s):
    """Rows of a 2-D map: result[y, :] = m[y+s, :], zero-filled.  s static int."""
    if s == 0:
        return m
    H, W = m.shape
    z = jnp.zeros((abs(s), W), m.dtype)
    return (jnp.concatenate([z, m[:s]], axis=0) if s < 0
            else jnp.concatenate([m[s:], z], axis=0))


# ---------------------------------------------------------------------------
# Fused bottleneck kernel: conv1 -> conv2(3x3) -> conv3 -> (downsample) -> CBAM
#                          -> residual -> ReLU, one grid step per batch element
# ---------------------------------------------------------------------------
def _bottleneck_kernel(*refs, stride, has_down, c_real, Ho, Wo, k_sa):
    if has_down:
        (x_ref, w1r, s1r, b1r, w2r, s2r, b2r, w3r, s3r, b3r,
         wdr, sdr, bdr, cw1r, cw2r, satr, o_ref) = refs
    else:
        (x_ref, w1r, s1r, b1r, w2r, s2r, b2r, w3r, s3r, b3r,
         cw1r, cw2r, satr, o_ref) = refs

    f32, bf16 = jnp.float32, jnp.bfloat16
    HW = Ho * Wo
    x = x_ref[0]                                             # (rows_in, CP) bf16

    # ---- conv1 (1x1) + bn1 + relu ---------------------------------------------------
    o1 = jnp.dot(x, w1r[...], preferred_element_type=f32)
    o1 = jnp.maximum(o1 * s1r[...] + b1r[...], 0.0)          # (rows_in, CP) f32

    # ---- conv2 (3x3, stride) + bn2 + relu: one K=9*CP MXU dot on an assembled patch --
    taps = []
    if stride == 2:
        # o1 is in plane-major order; plane q = qy*2+qx holds o1_spatial[qy::2, qx::2].
        planes = o1.reshape(4, Ho, Wo, CP)
        for dy in range(3):
            for dx in range(3):
                q = ((dy + 1) % 2) * 2 + ((dx + 1) % 2)
                ry = -1 if dy == 0 else 0
                rx = -1 if dx == 0 else 0
                taps.append(_shift2d(planes[q], ry, rx).reshape(HW, CP).astype(bf16))
    else:
        m3 = o1.reshape(Ho, Wo, CP)
        for dy in range(3):
            for dx in range(3):
                taps.append(_shift2d(m3, dy - 1, dx - 1).reshape(HW, CP).astype(bf16))
    patch = jnp.concatenate(taps, axis=1)                    # (HW, 9*CP) bf16
    o2 = jnp.dot(patch, w2r[...], preferred_element_type=f32)
    o2 = jnp.maximum(o2 * s2r[...] + b2r[...], 0.0).astype(bf16)   # (HW, CP)

    # ---- conv3 (1x1) + bn3 (no relu before attention) --------------------------------
    o3 = jnp.dot(o2, w3r[...], preferred_element_type=f32)
    o3 = o3 * s3r[...] + b3r[...]                            # (HW, CP) f32

    # ---- identity / downsample path ---------------------------------------------------
    if has_down:
        p0 = x.reshape(4, Ho, Wo, CP)[0].reshape(HW, CP)     # plane 0 == x[::2, ::2]
        idn = jnp.dot(p0, wdr[...], preferred_element_type=f32)
        idn = idn * sdr[...] + bdr[...]
    else:
        idn = x.astype(f32)                                  # (HW, CP)

    # ---- channel attention: MLP on [avg; max] pooled rows (two small MXU dots) --------
    avg = jnp.mean(o3, axis=0, keepdims=True)                # (1, CP)
    mxv = jnp.max(o3, axis=0, keepdims=True)                 # (1, CP)
    pooled = jnp.concatenate([avg, mxv], axis=0).astype(bf16)        # (2, CP)
    hid = jnp.maximum(jnp.dot(pooled, cw1r[...], preferred_element_type=f32), 0.0)
    logits = jnp.dot(hid.astype(bf16), cw2r[...], preferred_element_type=f32)   # (2, CP)
    ca = jax.nn.sigmoid(logits[0:1, :] + logits[1:2, :])             # (1, CP)
    xca = o3 * ca                                                    # (HW, CP) f32

    # ---- spatial attention: 7x7 conv over [mean_C, max_C] as ONE (Ho,14Wo)@(14Wo,Wo) dot
    xca3 = xca.reshape(Ho, Wo, CP)
    mean_c = jnp.sum(xca3, axis=-1) * (1.0 / c_real)                 # (Ho, Wo)
    lane = jax.lax.broadcasted_iota(jnp.int32, (1, 1, CP), 2)        # real-channel mask
    max_c = jnp.max(jnp.where(lane < c_real, xca3, jnp.finfo(f32).min), axis=-1)
    gcols = []
    for cmap in (mean_c, max_c):                                     # channel order [mean, max]
        for dy in range(7):
            gcols.append(_rshift(cmap, dy - 3))                      # G[y, k*Wo+x'] = m[y+dy-3, x']
    if k_sa > 14 * Wo:
        gcols.append(jnp.zeros((Ho, k_sa - 14 * Wo), f32))           # pad K to 128
    G = jnp.concatenate(gcols, axis=1).astype(bf16)                  # (Ho, k_sa)
    sa = jax.nn.sigmoid(jnp.dot(G, satr[...], preferred_element_type=f32))  # (Ho, Wo)

    # ---- scale, residual add, final relu ----------------------------------------------
    out = jnp.maximum(xca3 * sa[:, :, None] + idn.reshape(Ho, Wo, CP), 0.0)
    o_ref[...] = out.reshape(1, HW, CP).astype(o_ref.dtype)


def _full_spec(a):
    nd = a.ndim
    return pl.BlockSpec(a.shape, lambda n: (0,) * nd)


def bottleneck(x_flat, p, *, stride, has_down, c_real, Ho, Wo):
    """x_flat: (N, rows_in, CP) bf16 (plane-major for stride-2, row-major otherwise)."""
    N, rows_in, _ = x_flat.shape
    HW = Ho * Wo
    args = [x_flat, p["w1"], p["s1"], p["b1"], p["w2"], p["s2"], p["b2"],
            p["w3"], p["s3"], p["b3"]]
    if has_down:
        args += [p["wd"], p["sd"], p["bd"]]
    args += [p["ca_w1"], p["ca_w2"], p["sa_t"]]

    in_specs = [pl.BlockSpec((1, rows_in, CP), lambda n: (n, 0, 0))]
    in_specs += [_full_spec(a) for a in args[1:]]

    kernel = functools.partial(_bottleneck_kernel, stride=stride, has_down=has_down,
                               c_real=c_real, Ho=Ho, Wo=Wo, k_sa=p["sa_t"].shape[0])
    return pl.pallas_call(
        kernel,
        out_shape=jax.ShapeDtypeStruct((N, HW, CP), jnp.bfloat16),
        grid=(N,),
        in_specs=in_specs,
        out_specs=pl.BlockSpec((1, HW, CP), lambda n: (n, 0, 0)),
        compiler_params=pltpu.CompilerParams(
            dimension_semantics=("parallel",), vmem_limit_bytes=VMEM_LIMIT),
    )(*args)


def layer3_forward(x_nchw, params, c_out_real):
    x = jnp.transpose(x_nchw, (0, 2, 3, 1)).astype(jnp.float32)      # NHWC
    N, H, W, cin = x.shape
    x = jnp.pad(x, ((0, 0), (0, 0), (0, 0), (0, CP - cin)))          # lane-dense channels
    Ho, Wo = H // 2, W // 2
    # Parity-plane reorder of the block-0 INPUT only (single cheap XLA pass):
    # plane q = qy*2+qx holds x[:, qy::2, qx::2, :].
    planes = jnp.stack([x[:, qy::2, qx::2, :] for qy in (0, 1) for qx in (0, 1)], axis=1)
    y = planes.reshape(N, 4 * Ho * Wo, CP).astype(jnp.bfloat16)
    y = bottleneck(y, params[0], stride=2, has_down=True, c_real=c_out_real, Ho=Ho, Wo=Wo)
    for i in (1, 2, 3):
        y = bottleneck(y, params[i], stride=1, has_down=False, c_real=c_out_real, Ho=Ho, Wo=Wo)
    y = y.reshape(N, Ho, Wo, CP)[..., :c_out_real].astype(jnp.float32)
    return jnp.transpose(y, (0, 3, 1, 2))


# ---------------------------------------------------------------------------
# Deterministic parameter construction (synthetic, channel-padded to CP)
# ---------------------------------------------------------------------------
def _embed(w, shape):
    return jnp.zeros(shape, jnp.float32).at[tuple(slice(0, s) for s in w.shape)].set(w)


def _bn_fold(key, c_real, eps=1e-5):
    k1, k2, k3, k4 = jax.random.split(key, 4)
    gamma = 1.0 + 0.1 * jax.random.normal(k1, (c_real,), jnp.float32)
    beta = 0.1 * jax.random.normal(k2, (c_real,), jnp.float32)
    mean = 0.1 * jax.random.normal(k3, (c_real,), jnp.float32)
    var = 1.0 + 0.1 * jnp.abs(jax.random.normal(k4, (c_real,), jnp.float32))
    scale = gamma * jax.lax.rsqrt(var + eps)
    bias = beta - mean * scale
    # padded channels: scale=1, bias=0 so they stay exactly zero through the network
    s = jnp.ones((CP,), jnp.float32).at[:c_real].set(scale)
    b = jnp.zeros((CP,), jnp.float32).at[:c_real].set(bias)
    return s.reshape(1, CP), b.reshape(1, CP)


def _build_sa_toeplitz(w7, Wo, k_pad):
    """T[(c*7+dy)*Wo + x', x] = w7[dy, x'-x+3, c]  (7x7 conv over W as one matmul)."""
    w7 = np.asarray(w7, np.float32)
    T = np.zeros((k_pad, Wo), np.float32)
    for c in range(2):
        for dy in range(7):
            k = c * 7 + dy
            for xp in range(Wo):
                for xx in range(Wo):
                    dx = xp - xx + 3
                    if 0 <= dx < 7:
                        T[k * Wo + xp, xx] = w7[dy, dx, c]
    return jnp.asarray(T)


def make_bottleneck_params(key, cin, cout, has_down, ratio=8, Wo=8):
    width = cout                       # base_width=64, groups=1 -> width == planes
    hidden = max(cout // ratio, 1)
    ks = jax.random.split(key, 12)
    conv = lambda k, shape: 0.1 * jax.random.normal(k, shape, jnp.float32)

    p = {}
    p["w1"] = _embed(conv(ks[0], (cin, width)), (CP, CP)).astype(jnp.bfloat16)
    p["s1"], p["b1"] = _bn_fold(ks[1], width)
    p["w2"] = _embed(conv(ks[2], (3, 3, width, width)),
                     (3, 3, CP, CP)).reshape(9 * CP, CP).astype(jnp.bfloat16)  # tap-major rows
    p["s2"], p["b2"] = _bn_fold(ks[3], width)
    p["w3"] = _embed(conv(ks[4], (width, cout)), (CP, CP)).astype(jnp.bfloat16)
    p["s3"], p["b3"] = _bn_fold(ks[5], cout)
    # channel-attention MLP:  pooled(2,CP) @ ca_w1 -> relu -> @ ca_w2   (zero-padded to CPxCP)
    p["ca_w1"] = _embed(conv(ks[6], (cout, hidden)), (CP, CP)).astype(jnp.bfloat16)
    p["ca_w2"] = _embed(conv(ks[7], (hidden, cout)), (CP, CP)).astype(jnp.bfloat16)
    # spatial-attention 7x7 conv weights (dy, dx, [mean, max]) folded into a Toeplitz matrix
    k_pad = ((14 * Wo + 127) // 128) * 128
    p["sa_t"] = _build_sa_toeplitz(conv(ks[8], (7, 7, 2)), Wo, k_pad).astype(jnp.bfloat16)
    if has_down:
        p["wd"] = _embed(conv(ks[9], (cin, cout)), (CP, CP)).astype(jnp.bfloat16)
        p["sd"], p["bd"] = _bn_fold(ks[10], cout)
    return p


# ---------------------------------------------------------------------------
if __name__ == "__main__":
    key = jax.random.PRNGKey(0)
    kx, kp = jax.random.split(key)

    inplanes, outplanes = 16, 16       # outplanes divisible by CBAM ratio=8
    batch, spatial = 2, 16

    x = jax.random.normal(kx, (batch, inplanes, spatial, spatial), jnp.float32)

    pkeys = jax.random.split(kp, 4)
    params = [make_bottleneck_params(pkeys[0], inplanes, outplanes, has_down=True,
                                     Wo=spatial // 2)]
    for i in range(1, 4):
        params.append(make_bottleneck_params(pkeys[i], outplanes, outplanes,
                                             has_down=False, Wo=spatial // 2))

    fwd = jax.jit(lambda a: layer3_forward(a, params, outplanes))
    out = jax.block_until_ready(fwd(x))

    assert out.shape == (batch, outplanes, spatial // 2, spatial // 2), out.shape
    assert bool(jnp.all(jnp.isfinite(out)))
    print("KERNEL_OK")
</pallas_src>

<mosaic_0001>
module attributes {stable_mosaic.version = 11 : i64} {
  func.func @_bottleneck_kernel(%arg0: i32, %arg1: memref<1x64x128xbf16, #tpu.memory_space<vmem>>, %arg2: memref<128x128xbf16, #tpu.memory_space<vmem>>, %arg3: memref<1x128xf32, #tpu.memory_space<vmem>>, %arg4: memref<1x128xf32, #tpu.memory_space<vmem>>, %arg5: memref<1152x128xbf16, #tpu.memory_space<vmem>>, %arg6: memref<1x128xf32, #tpu.memory_space<vmem>>, %arg7: memref<1x128xf32, #tpu.memory_space<vmem>>, %arg8: memref<128x128xbf16, #tpu.memory_space<vmem>>, %arg9: memref<1x128xf32, #tpu.memory_space<vmem>>, %arg10: memref<1x128xf32, #tpu.memory_space<vmem>>, %arg11: memref<128x128xbf16, #tpu.memory_space<vmem>>, %arg12: memref<128x128xbf16, #tpu.memory_space<vmem>>, %arg13: memref<128x8xbf16, #tpu.memory_space<vmem>>, %arg14: memref<1x64x128xbf16, #tpu.memory_space<vmem>>) attributes {dimension_semantics = [#tpu.dimension_semantics<parallel>], iteration_bounds = array<i64: 2>, scalar_prefetch = 0 : i64, scratch_operands = 0 : i64, tpu.core_type = #tpu.core_type<tc>, window_params = [{transform_indices = @transform_0, window_bounds = array<i64: 1, 64, 128>}, {pipeline_mode = #tpu.pipeline_mode<synchronous>, transform_indices = @transform_1, window_bounds = array<i64: 128, 128>}, {pipeline_mode = #tpu.pipeline_mode<synchronous>, transform_indices = @transform_2, window_bounds = array<i64: 1, 128>}, {pipeline_mode = #tpu.pipeline_mode<synchronous>, transform_indices = @transform_3, window_bounds = array<i64: 1, 128>}, {pipeline_mode = #tpu.pipeline_mode<synchronous>, transform_indices = @transform_4, window_bounds = array<i64: 1152, 128>}, {pipeline_mode = #tpu.pipeline_mode<synchronous>, transform_indices = @transform_5, window_bounds = array<i64: 1, 128>}, {pipeline_mode = #tpu.pipeline_mode<synchronous>, transform_indices = @transform_6, window_bounds = array<i64: 1, 128>}, {pipeline_mode = #tpu.pipeline_mode<synchronous>, transform_indices = @transform_7, window_bounds = array<i64: 128, 128>}, {pipeline_mode = #tpu.pipeline_mode<synchronous>, transform_indices = @transform_8, window_bounds = array<i64: 1, 128>}, {pipeline_mode = #tpu.pipeline_mode<synchronous>, transform_indices = @transform_9, window_bounds = array<i64: 1, 128>}, {pipeline_mode = #tpu.pipeline_mode<synchronous>, transform_indices = @transform_10, window_bounds = array<i64: 128, 128>}, {pipeline_mode = #tpu.pipeline_mode<synchronous>, transform_indices = @transform_11, window_bounds = array<i64: 128, 128>}, {pipeline_mode = #tpu.pipeline_mode<synchronous>, transform_indices = @transform_12, window_bounds = array<i64: 128, 8>}, {transform_indices = @transform_13, window_bounds = array<i64: 1, 64, 128>}]} {
    %c0 = arith.constant 0 : index
    %c0_0 = arith.constant 0 : index
    %c0_1 = arith.constant 0 : index
    %0 = vector.load %arg1[%c0, %c0_0, %c0_1] : memref<1x64x128xbf16, #tpu.memory_space<vmem>>, vector<1x64x128xbf16>
    %1 = vector.shape_cast %0 : vector<1x64x128xbf16> to vector<64x128xbf16>
    %c0_2 = arith.constant 0 : index
    %c0_3 = arith.constant 0 : index
    %2 = vector.load %arg2[%c0_2, %c0_3] : memref<128x128xbf16, #tpu.memory_space<vmem>>, vector<128x128xbf16>
    %cst = arith.constant dense<0.000000e+00> : vector<64x128xf32>
    %3 = tpu.matmul %1, %2, %cst {dimension_numbers = #tpu.dot_dimension_numbers<[1], [0], [0], [1], [0, 0, 1, 1], [], []>} : vector<64x128xbf16>, vector<128x128xbf16>, vector<64x128xf32> -> vector<64x128xf32>
    %c0_4 = arith.constant 0 : index
    %c0_5 = arith.constant 0 : index
    %4 = vector.load %arg3[%c0_4, %c0_5] : memref<1x128xf32, #tpu.memory_space<vmem>>, vector<1x128xf32>
    %5 = vector.broadcast %4 : vector<1x128xf32> to vector<64x128xf32>
    %6 = arith.mulf %3, %5 : vector<64x128xf32>
    %c0_6 = arith.constant 0 : index
    %c0_7 = arith.constant 0 : index
    %7 = vector.load %arg4[%c0_6, %c0_7] : memref<1x128xf32, #tpu.memory_space<vmem>>, vector<1x128xf32>
    %8 = vector.broadcast %7 : vector<1x128xf32> to vector<64x128xf32>
    %9 = arith.addf %6, %8 : vector<64x128xf32>
    %cst_8 = arith.constant 0.000000e+00 : f32
    %10 = vector.broadcast %cst_8 : f32 to vector<64x128xf32>
    %11 = arith.maximumf %9, %10 : vector<64x128xf32>
    %12 = vector.shape_cast %11 : vector<64x128xf32> to vector<8x8x128xf32>
    %cst_9 = arith.constant 0.000000e+00 : f32
    %13 = vector.broadcast %cst_9 : f32 to vector<1x8x128xf32>
    %14 = vector.extract_strided_slice %12 {offsets = [0, 0, 0], sizes = [7, 8, 128], strides = [1, 1, 1]} : vector<8x8x128xf32> to vector<7x8x128xf32>
    %15 = tpu.concatenate %13, %14 in 0 : vector<1x8x128xf32>, vector<7x8x128xf32> -> vector<8x8x128xf32>
    %cst_10 = arith.constant 0.000000e+00 : f32
    %16 = vector.broadcast %cst_10 : f32 to vector<8x1x128xf32>
    %17 = vector.extract_strided_slice %15 {offsets = [0, 0, 0], sizes = [8, 7, 128], strides = [1, 1, 1]} : vector<8x8x128xf32> to vector<8x7x128xf32>
    %18 = tpu.concatenate %16, %17 in 1 : vector<8x1x128xf32>, vector<8x7x128xf32> -> vector<8x8x128xf32>
    %19 = vector.shape_cast %18 : vector<8x8x128xf32> to vector<64x128xf32>
    %20 = arith.truncf %19 : vector<64x128xf32> to vector<64x128xbf16>
    %cst_11 = arith.constant 0.000000e+00 : f32
    %21 = vector.broadcast %cst_11 : f32 to vector<1x8x128xf32>
    %22 = vector.extract_strided_slice %12 {offsets = [0, 0, 0], sizes = [7, 8, 128], strides = [1, 1, 1]} : vector<8x8x128xf32> to vector<7x8x128xf32>
    %23 = tpu.concatenate %21, %22 in 0 : vector<1x8x128xf32>, vector<7x8x128xf32> -> vector<8x8x128xf32>
    %24 = vector.shape_cast %23 : vector<8x8x128xf32> to vector<64x128xf32>
    %25 = arith.truncf %24 : vector<64x128xf32> to vector<64x128xbf16>
    %cst_12 = arith.constant 0.000000e+00 : f32
    %26 = vector.broadcast %cst_12 : f32 to vector<1x8x128xf32>
    %27 = vector.extract_strided_slice %12 {offsets = [0, 0, 0], sizes = [7, 8, 128], strides = [1, 1, 1]} : vector<8x8x128xf32> to vector<7x8x128xf32>
    %28 = tpu.concatenate %26, %27 in 0 : vector<1x8x128xf32>, vector<7x8x128xf32> -> vector<8x8x128xf32>
    %cst_13 = arith.constant 0.000000e+00 : f32
    %29 = vector.broadcast %cst_13 : f32 to vector<8x1x128xf32>
    %30 = vector.extract_strided_slice %28 {offsets = [0, 1, 0], sizes = [8, 7, 128], strides = [1, 1, 1]} : vector<8x8x128xf32> to vector<8x7x128xf32>
    %31 = tpu.concatenate %30, %29 in 1 : vector<8x7x128xf32>, vector<8x1x128xf32> -> vector<8x8x128xf32>
    %32 = vector.shape_cast %31 : vector<8x8x128xf32> to vector<64x128xf32>
    %33 = arith.truncf %32 : vector<64x128xf32> to vector<64x128xbf16>
    %cst_14 = arith.constant 0.000000e+00 : f32
    %34 = vector.broadcast %cst_14 : f32 to vector<8x1x128xf32>
    %35 = vector.extract_strided_slice %12 {offsets = [0, 0, 0], sizes = [8, 7, 128], strides = [1, 1, 1]} : vector<8x8x128xf32> to vector<8x7x128xf32>
    %36 = tpu.concatenate %34, %35 in 1 : vector<8x1x128xf32>, vector<8x7x128xf32> -> vector<8x8x128xf32>
    %37 = vector.shape_cast %36 : vector<8x8x128xf32> to vector<64x128xf32>
    %38 = arith.truncf %37 : vector<64x128xf32> to vector<64x128xbf16>
    %39 = vector.shape_cast %12 : vector<8x8x128xf32> to vector<64x128xf32>
    %40 = arith.truncf %39 : vector<64x128xf32> to vector<64x128xbf16>
    %cst_15 = arith.constant 0.000000e+00 : f32
    %41 = vector.broadcast %cst_15 : f32 to vector<8x1x128xf32>
    %42 = vector.extract_strided_slice %12 {offsets = [0, 1, 0], sizes = [8, 7, 128], strides = [1, 1, 1]} : vector<8x8x128xf32> to vector<8x7x128xf32>
    %43 = tpu.concatenate %42, %41 in 1 : vector<8x7x128xf32>, vector<8x1x128xf32> -> vector<8x8x128xf32>
    %44 = vector.shape_cast %43 : vector<8x8x128xf32> to vector<64x128xf32>
    %45 = arith.truncf %44 : vector<64x128xf32> to vector<64x128xbf16>
    %cst_16 = arith.constant 0.000000e+00 : f32
    %46 = vector.broadcast %cst_16 : f32 to vector<1x8x128xf32>
    %47 = vector.extract_strided_slice %12 {offsets = [1, 0, 0], sizes = [7, 8, 128], strides = [1, 1, 1]} : vector<8x8x128xf32> to vector<7x8x128xf32>
    %48 = tpu.concatenate %47, %46 in 0 : vector<7x8x128xf32>, vector<1x8x128xf32> -> vector<8x8x128xf32>
    %cst_17 = arith.constant 0.000000e+00 : f32
    %49 = vector.broadcast %cst_17 : f32 to vector<8x1x128xf32>
    %50 = vector.extract_strided_slice %48 {offsets = [0, 0, 0], sizes = [8, 7, 128], strides = [1, 1, 1]} : vector<8x8x128xf32> to vector<8x7x128xf32>
    %51 = tpu.concatenate %49, %50 in 1 : vector<8x1x128xf32>, vector<8x7x128xf32> -> vector<8x8x128xf32>
    %52 = vector.shape_cast %51 : vector<8x8x128xf32> to vector<64x128xf32>
    %53 = arith.truncf %52 : vector<64x128xf32> to vector<64x128xbf16>
    %cst_18 = arith.constant 0.000000e+00 : f32
    %54 = vector.broadcast %cst_18 : f32 to vector<1x8x128xf32>
    %55 = vector.extract_strided_slice %12 {offsets = [1, 0, 0], sizes = [7, 8, 128], strides = [1, 1, 1]} : vector<8x8x128xf32> to vector<7x8x128xf32>
    %56 = tpu.concatenate %55, %54 in 0 : vector<7x8x128xf32>, vector<1x8x128xf32> -> vector<8x8x128xf32>
    %57 = vector.shape_cast %56 : vector<8x8x128xf32> to vector<64x128xf32>
    %58 = arith.truncf %57 : vector<64x128xf32> to vector<64x128xbf16>
    %cst_19 = arith.constant 0.000000e+00 : f32
    %59 = vector.broadcast %cst_19 : f32 to vector<1x8x128xf32>
    %60 = vector.extract_strided_slice %12 {offsets = [1, 0, 0], sizes = [7, 8, 128], strides = [1, 1, 1]} : vector<8x8x128xf32> to vector<7x8x128xf32>
    %61 = tpu.concatenate %60, %59 in 0 : vector<7x8x128xf32>, vector<1x8x128xf32> -> vector<8x8x128xf32>
    %cst_20 = arith.constant 0.000000e+00 : f32
    %62 = vector.broadcast %cst_20 : f32 to vector<8x1x128xf32>
    %63 = vector.extract_strided_slice %61 {offsets = [0, 1, 0], sizes = [8, 7, 128], strides = [1, 1, 1]} : vector<8x8x128xf32> to vector<8x7x128xf32>
    %64 = tpu.concatenate %63, %62 in 1 : vector<8x7x128xf32>, vector<8x1x128xf32> -> vector<8x8x128xf32>
    %65 = vector.shape_cast %64 : vector<8x8x128xf32> to vector<64x128xf32>
    %66 = arith.truncf %65 : vector<64x128xf32> to vector<64x128xbf16>
    %67 = tpu.concatenate %20, %25, %33, %38, %40, %45, %53, %58, %66 in 1 : vector<64x128xbf16>, vector<64x128xbf16>, vector<64x128xbf16>, vector<64x128xbf16>, vector<64x128xbf16>, vector<64x128xbf16>, vector<64x128xbf16>, vector<64x128xbf16>, vector<64x128xbf16> -> vector<64x1152xbf16>
    %c0_21 = arith.constant 0 : index
    %c0_22 = arith.constant 0 : index
    %68 = vector.load %arg5[%c0_21, %c0_22] : memref<1152x128xbf16, #tpu.memory_space<vmem>>, vector<1152x128xbf16>
    %cst_23 = arith.constant dense<0.000000e+00> : vector<64x128xf32>
    %69 = tpu.matmul %67, %68, %cst_23 {dimension_numbers = #tpu.dot_dimension_numbers<[1], [0], [0], [1], [0, 0, 1, 1], [], []>} : vector<64x1152xbf16>, vector<1152x128xbf16>, vector<64x128xf32> -> vector<64x128xf32>
    %c0_24 = arith.constant 0 : index
    %c0_25 = arith.constant 0 : index
    %70 = vector.load %arg6[%c0_24, %c0_25] : memref<1x128xf32, #tpu.memory_space<vmem>>, vector<1x128xf32>
    %71 = vector.broadcast %70 : vector<1x128xf32> to vector<64x128xf32>
    %72 = arith.mulf %69, %71 : vector<64x128xf32>
    %c0_26 = arith.constant 0 : index
    %c0_27 = arith.constant 0 : index
    %73 = vector.load %arg7[%c0_26, %c0_27] : memref<1x128xf32, #tpu.memory_space<vmem>>, vector<1x128xf32>
    %74 = vector.broadcast %73 : vector<1x128xf32> to vector<64x128xf32>
    %75 = arith.addf %72, %74 : vector<64x128xf32>
    %cst_28 = arith.constant 0.000000e+00 : f32
    %76 = vector.broadcast %cst_28 : f32 to vector<64x128xf32>
    %77 = arith.maximumf %75, %76 : vector<64x128xf32>
    %78 = arith.truncf %77 : vector<64x128xf32> to vector<64x128xbf16>
    %c0_29 = arith.constant 0 : index
    %c0_30 = arith.constant 0 : index
    %79 = vector.load %arg8[%c0_29, %c0_30] : memref<128x128xbf16, #tpu.memory_space<vmem>>, vector<128x128xbf16>
    %cst_31 = arith.constant dense<0.000000e+00> : vector<64x128xf32>
    %80 = tpu.matmul %78, %79, %cst_31 {dimension_numbers = #tpu.dot_dimension_numbers<[1], [0], [0], [1], [0, 0, 1, 1], [], []>} : vector<64x128xbf16>, vector<128x128xbf16>, vector<64x128xf32> -> vector<64x128xf32>
    %c0_32 = arith.constant 0 : index
    %c0_33 = arith.constant 0 : index
    %81 = vector.load %arg9[%c0_32, %c0_33] : memref<1x128xf32, #tpu.memory_space<vmem>>, vector<1x128xf32>
    %82 = vector.broadcast %81 : vector<1x128xf32> to vector<64x128xf32>
    %83 = arith.mulf %80, %82 : vector<64x128xf32>
    %c0_34 = arith.constant 0 : index
    %c0_35 = arith.constant 0 : index
    %84 = vector.load %arg10[%c0_34, %c0_35] : memref<1x128xf32, #tpu.memory_space<vmem>>, vector<1x128xf32>
    %85 = vector.broadcast %84 : vector<1x128xf32> to vector<64x128xf32>
    %86 = arith.addf %83, %85 : vector<64x128xf32>
    %87 = arith.extf %1 : vector<64x128xbf16> to vector<64x128xf32>
    %cst_36 = arith.constant dense<0.000000e+00> : vector<128xf32>
    %88 = vector.multi_reduction <add>, %86, %cst_36 [0] : vector<64x128xf32> to vector<128xf32>
    %89 = vector.shape_cast %88 : vector<128xf32> to vector<1x128xf32>
    %cst_37 = arith.constant 6.400000e+01 : f32
    %90 = vector.broadcast %cst_37 : f32 to vector<1x128xf32>
    %91 = arith.divf %89, %90 : vector<1x128xf32>
    %cst_38 = arith.constant dense<0xFF800000> : vector<128xf32>
    %92 = vector.multi_reduction <maximumf>, %86, %cst_38 [0] : vector<64x128xf32> to vector<128xf32>
    %93 = vector.shape_cast %92 : vector<128xf32> to vector<1x128xf32>
    %94 = tpu.concatenate %91, %93 in 0 : vector<1x128xf32>, vector<1x128xf32> -> vector<2x128xf32>
    %95 = arith.truncf %94 : vector<2x128xf32> to vector<2x128xbf16>
    %c0_39 = arith.constant 0 : index
    %c0_40 = arith.constant 0 : index
    %96 = vector.load %arg11[%c0_39, %c0_40] : memref<128x128xbf16, #tpu.memory_space<vmem>>, vector<128x128xbf16>
    %cst_41 = arith.constant dense<0.000000e+00> : vector<2x128xf32>
    %97 = tpu.matmul %95, %96, %cst_41 {dimension_numbers = #tpu.dot_dimension_numbers<[1], [0], [0], [1], [0, 0, 1, 1], [], []>} : vector<2x128xbf16>, vector<128x128xbf16>, vector<2x128xf32> -> vector<2x128xf32>
    %cst_42 = arith.constant 0.000000e+00 : f32
    %98 = vector.broadcast %cst_42 : f32 to vector<2x128xf32>
    %99 = arith.maximumf %97, %98 : vector<2x128xf32>
    %100 = arith.truncf %99 : vector<2x128xf32> to vector<2x128xbf16>
    %c0_43 = arith.constant 0 : index
    %c0_44 = arith.constant 0 : index
    %101 = vector.load %arg12[%c0_43, %c0_44] : memref<128x128xbf16, #tpu.memory_space<vmem>>, vector<128x128xbf16>
    %cst_45 = arith.constant dense<0.000000e+00> : vector<2x128xf32>
    %102 = tpu.matmul %100, %101, %cst_45 {dimension_numbers = #tpu.dot_dimension_numbers<[1], [0], [0], [1], [0, 0, 1, 1], [], []>} : vector<2x128xbf16>, vector<128x128xbf16>, vector<2x128xf32> -> vector<2x128xf32>
    %103 = vector.extract_strided_slice %102 {offsets = [0, 0], sizes = [1, 128], strides = [1, 1]} : vector<2x128xf32> to vector<1x128xf32>
    %104 = vector.extract_strided_slice %102 {offsets = [1, 0], sizes = [1, 128], strides = [1, 1]} : vector<2x128xf32> to vector<1x128xf32>
    %105 = arith.addf %103, %104 : vector<1x128xf32>
    %106 = arith.negf %105 : vector<1x128xf32>
    %107 = math.exp %106 : vector<1x128xf32>
    %cst_46 = arith.constant 1.000000e+00 : f32
    %108 = vector.broadcast %cst_46 : f32 to vector<1x128xf32>
    %109 = arith.addf %108, %107 : vector<1x128xf32>
    %110 = arith.divf %108, %109 : vector<1x128xf32>
    %111 = vector.broadcast %110 : vector<1x128xf32> to vector<64x128xf32>
    %112 = arith.mulf %86, %111 : vector<64x128xf32>
    %113 = vector.shape_cast %112 : vector<64x128xf32> to vector<8x8x128xf32>
    %cst_47 = arith.constant dense<0.000000e+00> : vector<8x8xf32>
    %114 = vector.multi_reduction <add>, %113, %cst_47 [2] : vector<8x8x128xf32> to vector<8x8xf32>
    %cst_48 = arith.constant 6.250000e-02 : f32
    %115 = vector.broadcast %cst_48 : f32 to vector<8x8xf32>
    %116 = arith.mulf %114, %115 : vector<8x8xf32>
    %117 = tpu.iota {dimensions = array<i32: 2>} : vector<1x1x128xi32>
    %c16_i32 = arith.constant 16 : i32
    %118 = vector.broadcast %c16_i32 : i32 to vector<1x1x128xi32>
    %119 = arith.cmpi slt, %117, %118 : vector<1x1x128xi32>
    %cst_49 = arith.constant -3.40282347E+38 : f32
    %120 = vector.shape_cast %119 : vector<1x1x128xi1> to vector<1x1x128xi1>
    %121 = vector.broadcast %120 : vector<1x1x128xi1> to vector<8x8x128xi1>
    %122 = vector.broadcast %cst_49 : f32 to vector<8x8x128xf32>
    %123 = arith.select %121, %113, %122 : vector<8x8x128xi1>, vector<8x8x128xf32>
    %cst_50 = arith.constant dense<0xFF800000> : vector<8x8xf32>
    %124 = vector.multi_reduction <maximumf>, %123, %cst_50 [2] : vector<8x8x128xf32> to vector<8x8xf32>
    %cst_51 = arith.constant 0.000000e+00 : f32
    %125 = vector.broadcast %cst_51 : f32 to vector<3x8xf32>
    %126 = vector.extract_strided_slice %116 {offsets = [0, 0], sizes = [5, 8], strides = [1, 1]} : vector<8x8xf32> to vector<5x8xf32>
    %127 = tpu.concatenate %125, %126 in 0 : vector<3x8xf32>, vector<5x8xf32> -> vector<8x8xf32>
    %cst_52 = arith.constant 0.000000e+00 : f32
    %128 = vector.broadcast %cst_52 : f32 to vector<2x8xf32>
    %129 = vector.extract_strided_slice %116 {offsets = [0, 0], sizes = [6, 8], strides = [1, 1]} : vector<8x8xf32> to vector<6x8xf32>
    %130 = tpu.concatenate %128, %129 in 0 : vector<2x8xf32>, vector<6x8xf32> -> vector<8x8xf32>
    %cst_53 = arith.constant 0.000000e+00 : f32
    %131 = vector.broadcast %cst_53 : f32 to vector<1x8xf32>
    %132 = vector.extract_strided_slice %116 {offsets = [0, 0], sizes = [7, 8], strides = [1, 1]} : vector<8x8xf32> to vector<7x8xf32>
    %133 = tpu.concatenate %131, %132 in 0 : vector<1x8xf32>, vector<7x8xf32> -> vector<8x8xf32>
    %cst_54 = arith.constant 0.000000e+00 : f32
    %134 = vector.broadcast %cst_54 : f32 to vector<1x8xf32>
    %135 = vector.extract_strided_slice %116 {offsets = [1, 0], sizes = [7, 8], strides = [1, 1]} : vector<8x8xf32> to vector<7x8xf32>
    %136 = tpu.concatenate %135, %134 in 0 : vector<7x8xf32>, vector<1x8xf32> -> vector<8x8xf32>
    %cst_55 = arith.constant 0.000000e+00 : f32
    %137 = vector.broadcast %cst_55 : f32 to vector<2x8xf32>
    %138 = vector.extract_strided_slice %116 {offsets = [2, 0], sizes = [6, 8], strides = [1, 1]} : vector<8x8xf32> to vector<6x8xf32>
    %139 = tpu.concatenate %138, %137 in 0 : vector<6x8xf32>, vector<2x8xf32> -> vector<8x8xf32>
    %cst_56 = arith.constant 0.000000e+00 : f32
    %140 = vector.broadcast %cst_56 : f32 to vector<3x8xf32>
    %141 = vector.extract_strided_slice %116 {offsets = [3, 0], sizes = [5, 8], strides = [1, 1]} : vector<8x8xf32> to vector<5x8xf32>
    %142 = tpu.concatenate %141, %140 in 0 : vector<5x8xf32>, vector<3x8xf32> -> vector<8x8xf32>
    %cst_57 = arith.constant 0.000000e+00 : f32
    %143 = vector.broadcast %cst_57 : f32 to vector<3x8xf32>
    %144 = vector.extract_strided_slice %124 {offsets = [0, 0], sizes = [5, 8], strides = [1, 1]} : vector<8x8xf32> to vector<5x8xf32>
    %145 = tpu.concatenate %143, %144 in 0 : vector<3x8xf32>, vector<5x8xf32> -> vector<8x8xf32>
    %cst_58 = arith.constant 0.000000e+00 : f32
    %146 = vector.broadcast %cst_58 : f32 to vector<2x8xf32>
    %147 = vector.extract_strided_slice %124 {offsets = [0, 0], sizes = [6, 8], strides = [1, 1]} : vector<8x8xf32> to vector<6x8xf32>
    %148 = tpu.concatenate %146, %147 in 0 : vector<2x8xf32>, vector<6x8xf32> -> vector<8x8xf32>
    %cst_59 = arith.constant 0.000000e+00 : f32
    %149 = vector.broadcast %cst_59 : f32 to vector<1x8xf32>
    %150 = vector.extract_strided_slice %124 {offsets = [0, 0], sizes = [7, 8], strides = [1, 1]} : vector<8x8xf32> to vector<7x8xf32>
    %151 = tpu.concatenate %149, %150 in 0 : vector<1x8xf32>, vector<7x8xf32> -> vector<8x8xf32>
    %cst_60 = arith.constant 0.000000e+00 : f32
    %152 = vector.broadcast %cst_60 : f32 to vector<1x8xf32>
    %153 = vector.extract_strided_slice %124 {offsets = [1, 0], sizes = [7, 8], strides = [1, 1]} : vector<8x8xf32> to vector<7x8xf32>
    %154 = tpu.concatenate %153, %152 in 0 : vector<7x8xf32>, vector<1x8xf32> -> vector<8x8xf32>
    %cst_61 = arith.constant 0.000000e+00 : f32
    %155 = vector.broadcast %cst_61 : f32 to vector<2x8xf32>
    %156 = vector.extract_strided_slice %124 {offsets = [2, 0], sizes = [6, 8], strides = [1, 1]} : vector<8x8xf32> to vector<6x8xf32>
    %157 = tpu.concatenate %156, %155 in 0 : vector<6x8xf32>, vector<2x8xf32> -> vector<8x8xf32>
    %cst_62 = arith.constant 0.000000e+00 : f32
    %158 = vector.broadcast %cst_62 : f32 to vector<3x8xf32>
    %159 = vector.extract_strided_slice %124 {offsets = [3, 0], sizes = [5, 8], strides = [1, 1]} : vector<8x8xf32> to vector<5x8xf32>
    %160 = tpu.concatenate %159, %158 in 0 : vector<5x8xf32>, vector<3x8xf32> -> vector<8x8xf32>
    %cst_63 = arith.constant 0.000000e+00 : f32
    %161 = vector.broadcast %cst_63 : f32 to vector<8x16xf32>
    %162 = tpu.concatenate %127, %130, %133, %116, %136, %139, %142, %145, %148, %151, %124, %154, %157, %160, %161 in 1 : vector<8x8xf32>, vector<8x8xf32>, vector<8x8xf32>, vector<8x8xf32>, vector<8x8xf32>, vector<8x8xf32>, vector<8x8xf32>, vector<8x8xf32>, vector<8x8xf32>, vector<8x8xf32>, vector<8x8xf32>, vector<8x8xf32>, vector<8x8xf32>, vector<8x8xf32>, vector<8x16xf32> -> vector<8x128xf32>
    %163 = arith.truncf %162 : vector<8x128xf32> to vector<8x128xbf16>
    %c0_64 = arith.constant 0 : index
    %c0_65 = arith.constant 0 : index
    %164 = vector.load %arg13[%c0_64, %c0_65] : memref<128x8xbf16, #tpu.memory_space<vmem>>, vector<128x8xbf16>
    %cst_66 = arith.constant dense<0.000000e+00> : vector<8x8xf32>
    %165 = tpu.matmul %163, %164, %cst_66 {dimension_numbers = #tpu.dot_dimension_numbers<[1], [0], [0], [1], [0, 0, 1, 1], [], []>} : vector<8x128xbf16>, vector<128x8xbf16>, vector<8x8xf32> -> vector<8x8xf32>
    %166 = arith.negf %165 : vector<8x8xf32>
    %167 = math.exp %166 : vector<8x8xf32>
    %cst_67 = arith.constant 1.000000e+00 : f32
    %168 = vector.broadcast %cst_67 : f32 to vector<8x8xf32>
    %169 = arith.addf %168, %167 : vector<8x8xf32>
    %170 = arith.divf %168, %169 : vector<8x8xf32>
    %171 = vector.shape_cast %170 : vector<8x8xf32> to vector<8x8x1xf32>
    %172 = vector.broadcast %171 : vector<8x8x1xf32> to vector<8x8x128xf32>
    %173 = arith.mulf %113, %172 : vector<8x8x128xf32>
    %174 = vector.shape_cast %87 : vector<64x128xf32> to vector<8x8x128xf32>
    %175 = arith.addf %173, %174 : vector<8x8x128xf32>
    %cst_68 = arith.constant 0.000000e+00 : f32
    %176 = vector.broadcast %cst_68 : f32 to vector<8x8x128xf32>
    %177 = arith.maximumf %175, %176 : vector<8x8x128xf32>
    %178 = vector.shape_cast %177 : vector<8x8x128xf32> to vector<1x64x128xf32>
    %179 = arith.truncf %178 : vector<1x64x128xf32> to vector<1x64x128xbf16>
    %c0_69 = arith.constant 0 : index
    %c0_70 = arith.constant 0 : index
    %c0_71 = arith.constant 0 : index
    %180 = vector.load %arg14[%c0_69, %c0_70, %c0_71] : memref<1x64x128xbf16, #tpu.memory_space<vmem>>, vector<1x64x128xbf16>
    tpu.vector_store %arg14[%c0_69, %c0_70, %c0_71], %179 {strides = array<i32>} : memref<1x64x128xbf16, #tpu.memory_space<vmem>>, vector<1x64x128xbf16>,
    return
  }
  func.func @transform_0(%arg0: i32) -> (i32, i32, i32) {
    %c0_i32 = arith.constant 0 : i32
    %c0_i32_0 = arith.constant 0 : i32
    %c0_i32_1 = arith.constant 0 : i32
    return %arg0, %c0_i32, %c0_i32_0 : i32, i32, i32
  }
  func.func @transform_1(%arg0: i32) -> (i32, i32) {
    %c0_i32 = arith.constant 0 : i32
    %c0_i32_0 = arith.constant 0 : i32
    %c0_i32_1 = arith.constant 0 : i32
    return %c0_i32, %c0_i32_0 : i32, i32
  }
  func.func @transform_2(%arg0: i32) -> (i32, i32) {
    %c0_i32 = arith.constant 0 : i32
    %c0_i32_0 = arith.constant 0 : i32
    %c0_i32_1 = arith.constant 0 : i32
    return %c0_i32, %c0_i32_0 : i32, i32
  }
  func.func @transform_3(%arg0: i32) -> (i32, i32) {
    %c0_i32 = arith.constant 0 : i32
    %c0_i32_0 = arith.constant 0 : i32
    %c0_i32_1 = arith.constant 0 : i32
    return %c0_i32, %c0_i32_0 : i32, i32
  }
  func.func @transform_4(%arg0: i32) -> (i32, i32) {
    %c0_i32 = arith.constant 0 : i32
    %c0_i32_0 = arith.constant 0 : i32
    %c0_i32_1 = arith.constant 0 : i32
    return %c0_i32, %c0_i32_0 : i32, i32
  }
  func.func @transform_5(%arg0: i32) -> (i32, i32) {
    %c0_i32 = arith.constant 0 : i32
    %c0_i32_0 = arith.constant 0 : i32
    %c0_i32_1 = arith.constant 0 : i32
    return %c0_i32, %c0_i32_0 : i32, i32
  }
  func.func @transform_6(%arg0: i32) -> (i32, i32) {
    %c0_i32 = arith.constant 0 : i32
    %c0_i32_0 = arith.constant 0 : i32
    %c0_i32_1 = arith.constant 0 : i32
    return %c0_i32, %c0_i32_0 : i32, i32
  }
  func.func @transform_7(%arg0: i32) -> (i32, i32) {
    %c0_i32 = arith.constant 0 : i32
    %c0_i32_0 = arith.constant 0 : i32
    %c0_i32_1 = arith.constant 0 : i32
    return %c0_i32, %c0_i32_0 : i32, i32
  }
  func.func @transform_8(%arg0: i32) -> (i32, i32) {
    %c0_i32 = arith.constant 0 : i32
    %c0_i32_0 = arith.constant 0 : i32
    %c0_i32_1 = arith.constant 0 : i32
    return %c0_i32, %c0_i32_0 : i32, i32
  }
  func.func @transform_9(%arg0: i32) -> (i32, i32) {
    %c0_i32 = arith.constant 0 : i32
    %c0_i32_0 = arith.constant 0 : i32
    %c0_i32_1 = arith.constant 0 : i32
    return %c0_i32, %c0_i32_0 : i32, i32
  }
  func.func @transform_10(%arg0: i32) -> (i32, i32) {
    %c0_i32 = arith.constant 0 : i32
    %c0_i32_0 = arith.constant 0 : i32
    %c0_i32_1 = arith.constant 0 : i32
    return %c0_i32, %c0_i32_0 : i32, i32
  }
  func.func @transform_11(%arg0: i32) -> (i32, i32) {
    %c0_i32 = arith.constant 0 : i32
    %c0_i32_0 = arith.constant 0 : i32
    %c0_i32_1 = arith.constant 0 : i32
    return %c0_i32, %c0_i32_0 : i32, i32
  }
  func.func @transform_12(%arg0: i32) -> (i32, i32) {
    %c0_i32 = arith.constant 0 : i32
    %c0_i32_0 = arith.constant 0 : i32
    %c0_i32_1 = arith.constant 0 : i32
    return %c0_i32, %c0_i32_0 : i32, i32
  }
  func.func @transform_13(%arg0: i32) -> (i32, i32, i32) {
    %c0_i32 = arith.constant 0 : i32
    %c0_i32_0 = arith.constant 0 : i32
    %c0_i32_1 = arith.constant 0 : i32
    return %arg0, %c0_i32, %c0_i32_0 : i32, i32, i32
  }
}

module attributes {stable_mosaic.version = 11 : i64} {
  func.func @_bottleneck_kernel(%arg0: i32, %arg1: memref<1x256x128xbf16, #tpu.memory_space<vmem>>, %arg2: memref<128x128xbf16, #tpu.memory_space<vmem>>, %arg3: memref<1x128xf32, #tpu.memory_space<vmem>>, %arg4: memref<1x128xf32, #tpu.memory_space<vmem>>, %arg5: memref<1152x128xbf16, #tpu.memory_space<vmem>>, %arg6: memref<1x128xf32, #tpu.memory_space<vmem>>, %arg7: memref<1x128xf32, #tpu.memory_space<vmem>>, %arg8: memref<128x128xbf16, #tpu.memory_space<vmem>>, %arg9: memref<1x128xf32, #tpu.memory_space<vmem>>, %arg10: memref<1x128xf32, #tpu.memory_space<vmem>>, %arg11: memref<128x128xbf16, #tpu.memory_space<vmem>>, %arg12: memref<1x128xf32, #tpu.memory_space<vmem>>, %arg13: memref<1x128xf32, #tpu.memory_space<vmem>>, %arg14: memref<128x128xbf16, #tpu.memory_space<vmem>>, %arg15: memref<128x128xbf16, #tpu.memory_space<vmem>>, %arg16: memref<128x8xbf16, #tpu.memory_space<vmem>>, %arg17: memref<1x64x128xbf16, #tpu.memory_space<vmem>>) attributes {dimension_semantics = [#tpu.dimension_semantics<parallel>], iteration_bounds = array<i64: 2>, scalar_prefetch = 0 : i64, scratch_operands = 0 : i64, tpu.core_type = #tpu.core_type<tc>, window_params = [{transform_indices = @transform_0, window_bounds = array<i64: 1, 256, 128>}, {pipeline_mode = #tpu.pipeline_mode<synchronous>, transform_indices = @transform_1, window_bounds = array<i64: 128, 128>}, {pipeline_mode = #tpu.pipeline_mode<synchronous>, transform_indices = @transform_2, window_bounds = array<i64: 1, 128>}, {pipeline_mode = #tpu.pipeline_mode<synchronous>, transform_indices = @transform_3, window_bounds = array<i64: 1, 128>}, {pipeline_mode = #tpu.pipeline_mode<synchronous>, transform_indices = @transform_4, window_bounds = array<i64: 1152, 128>}, {pipeline_mode = #tpu.pipeline_mode<synchronous>, transform_indices = @transform_5, window_bounds = array<i64: 1, 128>}, {pipeline_mode = #tpu.pipeline_mode<synchronous>, transform_indices = @transform_6, window_bounds = array<i64: 1, 128>}, {pipeline_mode = #tpu.pipeline_mode<synchronous>, transform_indices = @transform_7, window_bounds = array<i64: 128, 128>}, {pipeline_mode = #tpu.pipeline_mode<synchronous>, transform_indices = @transform_8, window_bounds = array<i64: 1, 128>}, {pipeline_mode = #tpu.pipeline_mode<synchronous>, transform_indices = @transform_9, window_bounds = array<i64: 1, 128>}, {pipeline_mode = #tpu.pipeline_mode<synchronous>, transform_indices = @transform_10, window_bounds = array<i64: 128, 128>}, {pipeline_mode = #tpu.pipeline_mode<synchronous>, transform_indices = @transform_11, window_bounds = array<i64: 1, 128>}, {pipeline_mode = #tpu.pipeline_mode<synchronous>, transform_indices = @transform_12, window_bounds = array<i64: 1, 128>}, {pipeline_mode = #tpu.pipeline_mode<synchronous>, transform_indices = @transform_13, window_bounds = array<i64: 128, 128>}, {pipeline_mode = #tpu.pipeline_mode<synchronous>, transform_indices = @transform_14, window_bounds = array<i64: 128, 128>}, {pipeline_mode = #tpu.pipeline_mode<synchronous>, transform_indices = @transform_15, window_bounds = array<i64: 128, 8>}, {transform_indices = @transform_16, window_bounds = array<i64: 1, 64, 128>}]} {
    %c0 = arith.constant 0 : index
    %c0_0 = arith.constant 0 : index
    %c0_1 = arith.constant 0 : index
    %0 = vector.load %arg1[%c0, %c0_0, %c0_1] : memref<1x256x128xbf16, #tpu.memory_space<vmem>>, vector<1x256x128xbf16>
    %1 = vector.shape_cast %0 : vector<1x256x128xbf16> to vector<256x128xbf16>
    %c0_2 = arith.constant 0 : index
    %c0_3 = arith.constant 0 : index
    %2 = vector.load %arg2[%c0_2, %c0_3] : memref<128x128xbf16, #tpu.memory_space<vmem>>, vector<128x128xbf16>
    %cst = arith.constant dense<0.000000e+00> : vector<256x128xf32>
    %3 = tpu.matmul %1, %2, %cst {dimension_numbers = #tpu.dot_dimension_numbers<[1], [0], [0], [1], [0, 0, 1, 1], [], []>} : vector<256x128xbf16>, vector<128x128xbf16>, vector<256x128xf32> -> vector<256x128xf32>
    %c0_4 = arith.constant 0 : index
    %c0_5 = arith.constant 0 : index
    %4 = vector.load %arg3[%c0_4, %c0_5] : memref<1x128xf32, #tpu.memory_space<vmem>>, vector<1x128xf32>
    %5 = vector.broadcast %4 : vector<1x128xf32> to vector<256x128xf32>
    %6 = arith.mulf %3, %5 : vector<256x128xf32>
    %c0_6 = arith.constant 0 : index
    %c0_7 = arith.constant 0 : index
    %7 = vector.load %arg4[%c0_6, %c0_7] : memref<1x128xf32, #tpu.memory_space<vmem>>, vector<1x128xf32>
    %8 = vector.broadcast %7 : vector<1x128xf32> to vector<256x128xf32>
    %9 = arith.addf %6, %8 : vector<256x128xf32>
    %cst_8 = arith.constant 0.000000e+00 : f32
    %10 = vector.broadcast %cst_8 : f32 to vector<256x128xf32>
    %11 = arith.maximumf %9, %10 : vector<256x128xf32>
    %12 = vector.shape_cast %11 : vector<256x128xf32> to vector<4x8x8x128xf32>
    %13 = vector.extract_strided_slice %12 {offsets = [3, 0, 0, 0], sizes = [1, 8, 8, 128], strides = [1, 1, 1, 1]} : vector<4x8x8x128xf32> to vector<1x8x8x128xf32>
    %14 = vector.shape_cast %13 : vector<1x8x8x128xf32> to vector<8x8x128xf32>
    %cst_9 = arith.constant 0.000000e+00 : f32
    %15 = vector.broadcast %cst_9 : f32 to vector<1x8x128xf32>
    %16 = vector.extract_strided_slice %14 {offsets = [0, 0, 0], sizes = [7, 8, 128], strides = [1, 1, 1]} : vector<8x8x128xf32> to vector<7x8x128xf32>
    %17 = tpu.concatenate %15, %16 in 0 : vector<1x8x128xf32>, vector<7x8x128xf32> -> vector<8x8x128xf32>
    %cst_10 = arith.constant 0.000000e+00 : f32
    %18 = vector.broadcast %cst_10 : f32 to vector<8x1x128xf32>
    %19 = vector.extract_strided_slice %17 {offsets = [0, 0, 0], sizes = [8, 7, 128], strides = [1, 1, 1]} : vector<8x8x128xf32> to vector<8x7x128xf32>
    %20 = tpu.concatenate %18, %19 in 1 : vector<8x1x128xf32>, vector<8x7x128xf32> -> vector<8x8x128xf32>
    %21 = vector.shape_cast %20 : vector<8x8x128xf32> to vector<64x128xf32>
    %22 = arith.truncf %21 : vector<64x128xf32> to vector<64x128xbf16>
    %23 = vector.extract_strided_slice %12 {offsets = [2, 0, 0, 0], sizes = [1, 8, 8, 128], strides = [1, 1, 1, 1]} : vector<4x8x8x128xf32> to vector<1x8x8x128xf32>
    %24 = vector.shape_cast %23 : vector<1x8x8x128xf32> to vector<8x8x128xf32>
    %cst_11 = arith.constant 0.000000e+00 : f32
    %25 = vector.broadcast %cst_11 : f32 to vector<1x8x128xf32>
    %26 = vector.extract_strided_slice %24 {offsets = [0, 0, 0], sizes = [7, 8, 128], strides = [1, 1, 1]} : vector<8x8x128xf32> to vector<7x8x128xf32>
    %27 = tpu.concatenate %25, %26 in 0 : vector<1x8x128xf32>, vector<7x8x128xf32> -> vector<8x8x128xf32>
    %28 = vector.shape_cast %27 : vector<8x8x128xf32> to vector<64x128xf32>
    %29 = arith.truncf %28 : vector<64x128xf32> to vector<64x128xbf16>
    %30 = vector.extract_strided_slice %12 {offsets = [3, 0, 0, 0], sizes = [1, 8, 8, 128], strides = [1, 1, 1, 1]} : vector<4x8x8x128xf32> to vector<1x8x8x128xf32>
    %31 = vector.shape_cast %30 : vector<1x8x8x128xf32> to vector<8x8x128xf32>
    %cst_12 = arith.constant 0.000000e+00 : f32
    %32 = vector.broadcast %cst_12 : f32 to vector<1x8x128xf32>
    %33 = vector.extract_strided_slice %31 {offsets = [0, 0, 0], sizes = [7, 8, 128], strides = [1, 1, 1]} : vector<8x8x128xf32> to vector<7x8x128xf32>
    %34 = tpu.concatenate %32, %33 in 0 : vector<1x8x128xf32>, vector<7x8x128xf32> -> vector<8x8x128xf32>
    %35 = vector.shape_cast %34 : vector<8x8x128xf32> to vector<64x128xf32>
    %36 = arith.truncf %35 : vector<64x128xf32> to vector<64x128xbf16>
    %37 = vector.extract_strided_slice %12 {offsets = [1, 0, 0, 0], sizes = [1, 8, 8, 128], strides = [1, 1, 1, 1]} : vector<4x8x8x128xf32> to vector<1x8x8x128xf32>
    %38 = vector.shape_cast %37 : vector<1x8x8x128xf32> to vector<8x8x128xf32>
    %cst_13 = arith.constant 0.000000e+00 : f32
    %39 = vector.broadcast %cst_13 : f32 to vector<8x1x128xf32>
    %40 = vector.extract_strided_slice %38 {offsets = [0, 0, 0], sizes = [8, 7, 128], strides = [1, 1, 1]} : vector<8x8x128xf32> to vector<8x7x128xf32>
    %41 = tpu.concatenate %39, %40 in 1 : vector<8x1x128xf32>, vector<8x7x128xf32> -> vector<8x8x128xf32>
    %42 = vector.shape_cast %41 : vector<8x8x128xf32> to vector<64x128xf32>
    %43 = arith.truncf %42 : vector<64x128xf32> to vector<64x128xbf16>
    %44 = vector.extract_strided_slice %12 {offsets = [0, 0, 0, 0], sizes = [1, 8, 8, 128], strides = [1, 1, 1, 1]} : vector<4x8x8x128xf32> to vector<1x8x8x128xf32>
    %45 = vector.shape_cast %44 : vector<1x8x8x128xf32> to vector<8x8x128xf32>
    %46 = vector.shape_cast %45 : vector<8x8x128xf32> to vector<64x128xf32>
    %47 = arith.truncf %46 : vector<64x128xf32> to vector<64x128xbf16>
    %48 = vector.extract_strided_slice %12 {offsets = [1, 0, 0, 0], sizes = [1, 8, 8, 128], strides = [1, 1, 1, 1]} : vector<4x8x8x128xf32> to vector<1x8x8x128xf32>
    %49 = vector.shape_cast %48 : vector<1x8x8x128xf32> to vector<8x8x128xf32>
    %50 = vector.shape_cast %49 : vector<8x8x128xf32> to vector<64x128xf32>
    %51 = arith.truncf %50 : vector<64x128xf32> to vector<64x128xbf16>
    %52 = vector.extract_strided_slice %12 {offsets = [3, 0, 0, 0], sizes = [1, 8, 8, 128], strides = [1, 1, 1, 1]} : vector<4x8x8x128xf32> to vector<1x8x8x128xf32>
    %53 = vector.shape_cast %52 : vector<1x8x8x128xf32> to vector<8x8x128xf32>
    %cst_14 = arith.constant 0.000000e+00 : f32
    %54 = vector.broadcast %cst_14 : f32 to vector<8x1x128xf32>
    %55 = vector.extract_strided_slice %53 {offsets = [0, 0, 0], sizes = [8, 7, 128], strides = [1, 1, 1]} : vector<8x8x128xf32> to vector<8x7x128xf32>
    %56 = tpu.concatenate %54, %55 in 1 : vector<8x1x128xf32>, vector<8x7x128xf32> -> vector<8x8x128xf32>
    %57 = vector.shape_cast %56 : vector<8x8x128xf32> to vector<64x128xf32>
    %58 = arith.truncf %57 : vector<64x128xf32> to vector<64x128xbf16>
    %59 = vector.extract_strided_slice %12 {offsets = [2, 0, 0, 0], sizes = [1, 8, 8, 128], strides = [1, 1, 1, 1]} : vector<4x8x8x128xf32> to vector<1x8x8x128xf32>
    %60 = vector.shape_cast %59 : vector<1x8x8x128xf32> to vector<8x8x128xf32>
    %61 = vector.shape_cast %60 : vector<8x8x128xf32> to vector<64x128xf32>
    %62 = arith.truncf %61 : vector<64x128xf32> to vector<64x128xbf16>
    %63 = vector.extract_strided_slice %12 {offsets = [3, 0, 0, 0], sizes = [1, 8, 8, 128], strides = [1, 1, 1, 1]} : vector<4x8x8x128xf32> to vector<1x8x8x128xf32>
    %64 = vector.shape_cast %63 : vector<1x8x8x128xf32> to vector<8x8x128xf32>
    %65 = vector.shape_cast %64 : vector<8x8x128xf32> to vector<64x128xf32>
    %66 = arith.truncf %65 : vector<64x128xf32> to vector<64x128xbf16>
    %67 = tpu.concatenate %22, %29, %36, %43, %47, %51, %58, %62, %66 in 1 : vector<64x128xbf16>, vector<64x128xbf16>, vector<64x128xbf16>, vector<64x128xbf16>, vector<64x128xbf16>, vector<64x128xbf16>, vector<64x128xbf16>, vector<64x128xbf16>, vector<64x128xbf16> -> vector<64x1152xbf16>
    %c0_15 = arith.constant 0 : index
    %c0_16 = arith.constant 0 : index
    %68 = vector.load %arg5[%c0_15, %c0_16] : memref<1152x128xbf16, #tpu.memory_space<vmem>>, vector<1152x128xbf16>
    %cst_17 = arith.constant dense<0.000000e+00> : vector<64x128xf32>
    %69 = tpu.matmul %67, %68, %cst_17 {dimension_numbers = #tpu.dot_dimension_numbers<[1], [0], [0], [1], [0, 0, 1, 1], [], []>} : vector<64x1152xbf16>, vector<1152x128xbf16>, vector<64x128xf32> -> vector<64x128xf32>
    %c0_18 = arith.constant 0 : index
    %c0_19 = arith.constant 0 : index
    %70 = vector.load %arg6[%c0_18, %c0_19] : memref<1x128xf32, #tpu.memory_space<vmem>>, vector<1x128xf32>
    %71 = vector.broadcast %70 : vector<1x128xf32> to vector<64x128xf32>
    %72 = arith.mulf %69, %71 : vector<64x128xf32>
    %c0_20 = arith.constant 0 : index
    %c0_21 = arith.constant 0 : index
    %73 = vector.load %arg7[%c0_20, %c0_21] : memref<1x128xf32, #tpu.memory_space<vmem>>, vector<1x128xf32>
    %74 = vector.broadcast %73 : vector<1x128xf32> to vector<64x128xf32>
    %75 = arith.addf %72, %74 : vector<64x128xf32>
    %cst_22 = arith.constant 0.000000e+00 : f32
    %76 = vector.broadcast %cst_22 : f32 to vector<64x128xf32>
    %77 = arith.maximumf %75, %76 : vector<64x128xf32>
    %78 = arith.truncf %77 : vector<64x128xf32> to vector<64x128xbf16>
    %c0_23 = arith.constant 0 : index
    %c0_24 = arith.constant 0 : index
    %79 = vector.load %arg8[%c0_23, %c0_24] : memref<128x128xbf16, #tpu.memory_space<vmem>>, vector<128x128xbf16>
    %cst_25 = arith.constant dense<0.000000e+00> : vector<64x128xf32>
    %80 = tpu.matmul %78, %79, %cst_25 {dimension_numbers = #tpu.dot_dimension_numbers<[1], [0], [0], [1], [0, 0, 1, 1], [], []>} : vector<64x128xbf16>, vector<128x128xbf16>, vector<64x128xf32> -> vector<64x128xf32>
    %c0_26 = arith.constant 0 : index
    %c0_27 = arith.constant 0 : index
    %81 = vector.load %arg9[%c0_26, %c0_27] : memref<1x128xf32, #tpu.memory_space<vmem>>, vector<1x128xf32>
    %82 = vector.broadcast %81 : vector<1x128xf32> to vector<64x128xf32>
    %83 = arith.mulf %80, %82 : vector<64x128xf32>
    %c0_28 = arith.constant 0 : index
    %c0_29 = arith.constant 0 : index
    %84 = vector.load %arg10[%c0_28, %c0_29] : memref<1x128xf32, #tpu.memory_space<vmem>>, vector<1x128xf32>
    %85 = vector.broadcast %84 : vector<1x128xf32> to vector<64x128xf32>
    %86 = arith.addf %83, %85 : vector<64x128xf32>
    %87 = vector.shape_cast %1 : vector<256x128xbf16> to vector<4x8x8x128xbf16>
    %88 = vector.extract_strided_slice %87 {offsets = [0, 0, 0, 0], sizes = [1, 8, 8, 128], strides = [1, 1, 1, 1]} : vector<4x8x8x128xbf16> to vector<1x8x8x128xbf16>
    %89 = vector.shape_cast %88 : vector<1x8x8x128xbf16> to vector<8x8x128xbf16>
    %90 = vector.shape_cast %89 : vector<8x8x128xbf16> to vector<64x128xbf16>
    %c0_30 = arith.constant 0 : index
    %c0_31 = arith.constant 0 : index
    %91 = vector.load %arg11[%c0_30, %c0_31] : memref<128x128xbf16, #tpu.memory_space<vmem>>, vector<128x128xbf16>
    %cst_32 = arith.constant dense<0.000000e+00> : vector<64x128xf32>
    %92 = tpu.matmul %90, %91, %cst_32 {dimension_numbers = #tpu.dot_dimension_numbers<[1], [0], [0], [1], [0, 0, 1, 1], [], []>} : vector<64x128xbf16>, vector<128x128xbf16>, vector<64x128xf32> -> vector<64x128xf32>
    %c0_33 = arith.constant 0 : index
    %c0_34 = arith.constant 0 : index
    %93 = vector.load %arg12[%c0_33, %c0_34] : memref<1x128xf32, #tpu.memory_space<vmem>>, vector<1x128xf32>
    %94 = vector.broadcast %93 : vector<1x128xf32> to vector<64x128xf32>
    %95 = arith.mulf %92, %94 : vector<64x128xf32>
    %c0_35 = arith.constant 0 : index
    %c0_36 = arith.constant 0 : index
    %96 = vector.load %arg13[%c0_35, %c0_36] : memref<1x128xf32, #tpu.memory_space<vmem>>, vector<1x128xf32>
    %97 = vector.broadcast %96 : vector<1x128xf32> to vector<64x128xf32>
    %98 = arith.addf %95, %97 : vector<64x128xf32>
    %cst_37 = arith.constant dense<0.000000e+00> : vector<128xf32>
    %99 = vector.multi_reduction <add>, %86, %cst_37 [0] : vector<64x128xf32> to vector<128xf32>
    %100 = vector.shape_cast %99 : vector<128xf32> to vector<1x128xf32>
    %cst_38 = arith.constant 6.400000e+01 : f32
    %101 = vector.broadcast %cst_38 : f32 to vector<1x128xf32>
    %102 = arith.divf %100, %101 : vector<1x128xf32>
    %cst_39 = arith.constant dense<0xFF800000> : vector<128xf32>
    %103 = vector.multi_reduction <maximumf>, %86, %cst_39 [0] : vector<64x128xf32> to vector<128xf32>
    %104 = vector.shape_cast %103 : vector<128xf32> to vector<1x128xf32>
    %105 = tpu.concatenate %102, %104 in 0 : vector<1x128xf32>, vector<1x128xf32> -> vector<2x128xf32>
    %106 = arith.truncf %105 : vector<2x128xf32> to vector<2x128xbf16>
    %c0_40 = arith.constant 0 : index
    %c0_41 = arith.constant 0 : index
    %107 = vector.load %arg14[%c0_40, %c0_41] : memref<128x128xbf16, #tpu.memory_space<vmem>>, vector<128x128xbf16>
    %cst_42 = arith.constant dense<0.000000e+00> : vector<2x128xf32>
    %108 = tpu.matmul %106, %107, %cst_42 {dimension_numbers = #tpu.dot_dimension_numbers<[1], [0], [0], [1], [0, 0, 1, 1], [], []>} : vector<2x128xbf16>, vector<128x128xbf16>, vector<2x128xf32> -> vector<2x128xf32>
    %cst_43 = arith.constant 0.000000e+00 : f32
    %109 = vector.broadcast %cst_43 : f32 to vector<2x128xf32>
    %110 = arith.maximumf %108, %109 : vector<2x128xf32>
    %111 = arith.truncf %110 : vector<2x128xf32> to vector<2x128xbf16>
    %c0_44 = arith.constant 0 : index
    %c0_45 = arith.constant 0 : index
    %112 = vector.load %arg15[%c0_44, %c0_45] : memref<128x128xbf16, #tpu.memory_space<vmem>>, vector<128x128xbf16>
    %cst_46 = arith.constant dense<0.000000e+00> : vector<2x128xf32>
    %113 = tpu.matmul %111, %112, %cst_46 {dimension_numbers = #tpu.dot_dimension_numbers<[1], [0], [0], [1], [0, 0, 1, 1], [], []>} : vector<2x128xbf16>, vector<128x128xbf16>, vector<2x128xf32> -> vector<2x128xf32>
    %114 = vector.extract_strided_slice %113 {offsets = [0, 0], sizes = [1, 128], strides = [1, 1]} : vector<2x128xf32> to vector<1x128xf32>
    %115 = vector.extract_strided_slice %113 {offsets = [1, 0], sizes = [1, 128], strides = [1, 1]} : vector<2x128xf32> to vector<1x128xf32>
    %116 = arith.addf %114, %115 : vector<1x128xf32>
    %117 = arith.negf %116 : vector<1x128xf32>
    %118 = math.exp %117 : vector<1x128xf32>
    %cst_47 = arith.constant 1.000000e+00 : f32
    %119 = vector.broadcast %cst_47 : f32 to vector<1x128xf32>
    %120 = arith.addf %119, %118 : vector<1x128xf32>
    %121 = arith.divf %119, %120 : vector<1x128xf32>
    %122 = vector.broadcast %121 : vector<1x128xf32> to vector<64x128xf32>
    %123 = arith.mulf %86, %122 : vector<64x128xf32>
    %124 = vector.shape_cast %123 : vector<64x128xf32> to vector<8x8x128xf32>
    %cst_48 = arith.constant dense<0.000000e+00> : vector<8x8xf32>
    %125 = vector.multi_reduction <add>, %124, %cst_48 [2] : vector<8x8x128xf32> to vector<8x8xf32>
    %cst_49 = arith.constant 6.250000e-02 : f32
    %126 = vector.broadcast %cst_49 : f32 to vector<8x8xf32>
    %127 = arith.mulf %125, %126 : vector<8x8xf32>
    %128 = tpu.iota {dimensions = array<i32: 2>} : vector<1x1x128xi32>
    %c16_i32 = arith.constant 16 : i32
    %129 = vector.broadcast %c16_i32 : i32 to vector<1x1x128xi32>
    %130 = arith.cmpi slt, %128, %129 : vector<1x1x128xi32>
    %cst_50 = arith.constant -3.40282347E+38 : f32
    %131 = vector.shape_cast %130 : vector<1x1x128xi1> to vector<1x1x128xi1>
    %132 = vector.broadcast %131 : vector<1x1x128xi1> to vector<8x8x128xi1>
    %133 = vector.broadcast %cst_50 : f32 to vector<8x8x128xf32>
    %134 = arith.select %132, %124, %133 : vector<8x8x128xi1>, vector<8x8x128xf32>
    %cst_51 = arith.constant dense<0xFF800000> : vector<8x8xf32>
    %135 = vector.multi_reduction <maximumf>, %134, %cst_51 [2] : vector<8x8x128xf32> to vector<8x8xf32>
    %cst_52 = arith.constant 0.000000e+00 : f32
    %136 = vector.broadcast %cst_52 : f32 to vector<3x8xf32>
    %137 = vector.extract_strided_slice %127 {offsets = [0, 0], sizes = [5, 8], strides = [1, 1]} : vector<8x8xf32> to vector<5x8xf32>
    %138 = tpu.concatenate %136, %137 in 0 : vector<3x8xf32>, vector<5x8xf32> -> vector<8x8xf32>
    %cst_53 = arith.constant 0.000000e+00 : f32
    %139 = vector.broadcast %cst_53 : f32 to vector<2x8xf32>
    %140 = vector.extract_strided_slice %127 {offsets = [0, 0], sizes = [6, 8], strides = [1, 1]} : vector<8x8xf32> to vector<6x8xf32>
    %141 = tpu.concatenate %139, %140 in 0 : vector<2x8xf32>, vector<6x8xf32> -> vector<8x8xf32>
    %cst_54 = arith.constant 0.000000e+00 : f32
    %142 = vector.broadcast %cst_54 : f32 to vector<1x8xf32>
    %143 = vector.extract_strided_slice %127 {offsets = [0, 0], sizes = [7, 8], strides = [1, 1]} : vector<8x8xf32> to vector<7x8xf32>
    %144 = tpu.concatenate %142, %143 in 0 : vector<1x8xf32>, vector<7x8xf32> -> vector<8x8xf32>
    %cst_55 = arith.constant 0.000000e+00 : f32
    %145 = vector.broadcast %cst_55 : f32 to vector<1x8xf32>
    %146 = vector.extract_strided_slice %127 {offsets = [1, 0], sizes = [7, 8], strides = [1, 1]} : vector<8x8xf32> to vector<7x8xf32>
    %147 = tpu.concatenate %146, %145 in 0 : vector<7x8xf32>, vector<1x8xf32> -> vector<8x8xf32>
    %cst_56 = arith.constant 0.000000e+00 : f32
    %148 = vector.broadcast %cst_56 : f32 to vector<2x8xf32>
    %149 = vector.extract_strided_slice %127 {offsets = [2, 0], sizes = [6, 8], strides = [1, 1]} : vector<8x8xf32> to vector<6x8xf32>
    %150 = tpu.concatenate %149, %148 in 0 : vector<6x8xf32>, vector<2x8xf32> -> vector<8x8xf32>
    %cst_57 = arith.constant 0.000000e+00 : f32
    %151 = vector.broadcast %cst_57 : f32 to vector<3x8xf32>
    %152 = vector.extract_strided_slice %127 {offsets = [3, 0], sizes = [5, 8], strides = [1, 1]} : vector<8x8xf32> to vector<5x8xf32>
    %153 = tpu.concatenate %152, %151 in 0 : vector<5x8xf32>, vector<3x8xf32> -> vector<8x8xf32>
    %cst_58 = arith.constant 0.000000e+00 : f32
    %154 = vector.broadcast %cst_58 : f32 to vector<3x8xf32>
    %155 = vector.extract_strided_slice %135 {offsets = [0, 0], sizes = [5, 8], strides = [1, 1]} : vector<8x8xf32> to vector<5x8xf32>
    %156 = tpu.concatenate %154, %155 in 0 : vector<3x8xf32>, vector<5x8xf32> -> vector<8x8xf32>
    %cst_59 = arith.constant 0.000000e+00 : f32
    %157 = vector.broadcast %cst_59 : f32 to vector<2x8xf32>
    %158 = vector.extract_strided_slice %135 {offsets = [0, 0], sizes = [6, 8], strides = [1, 1]} : vector<8x8xf32> to vector<6x8xf32>
    %159 = tpu.concatenate %157, %158 in 0 : vector<2x8xf32>, vector<6x8xf32> -> vector<8x8xf32>
    %cst_60 = arith.constant 0.000000e+00 : f32
    %160 = vector.broadcast %cst_60 : f32 to vector<1x8xf32>
    %161 = vector.extract_strided_slice %135 {offsets = [0, 0], sizes = [7, 8], strides = [1, 1]} : vector<8x8xf32> to vector<7x8xf32>
    %162 = tpu.concatenate %160, %161 in 0 : vector<1x8xf32>, vector<7x8xf32> -> vector<8x8xf32>
    %cst_61 = arith.constant 0.000000e+00 : f32
    %163 = vector.broadcast %cst_61 : f32 to vector<1x8xf32>
    %164 = vector.extract_strided_slice %135 {offsets = [1, 0], sizes = [7, 8], strides = [1, 1]} : vector<8x8xf32> to vector<7x8xf32>
    %165 = tpu.concatenate %164, %163 in 0 : vector<7x8xf32>, vector<1x8xf32> -> vector<8x8xf32>
    %cst_62 = arith.constant 0.000000e+00 : f32
    %166 = vector.broadcast %cst_62 : f32 to vector<2x8xf32>
    %167 = vector.extract_strided_slice %135 {offsets = [2, 0], sizes = [6, 8], strides = [1, 1]} : vector<8x8xf32> to vector<6x8xf32>
    %168 = tpu.concatenate %167, %166 in 0 : vector<6x8xf32>, vector<2x8xf32> -> vector<8x8xf32>
    %cst_63 = arith.constant 0.000000e+00 : f32
    %169 = vector.broadcast %cst_63 : f32 to vector<3x8xf32>
    %170 = vector.extract_strided_slice %135 {offsets = [3, 0], sizes = [5, 8], strides = [1, 1]} : vector<8x8xf32> to vector<5x8xf32>
    %171 = tpu.concatenate %170, %169 in 0 : vector<5x8xf32>, vector<3x8xf32> -> vector<8x8xf32>
    %cst_64 = arith.constant 0.000000e+00 : f32
    %172 = vector.broadcast %cst_64 : f32 to vector<8x16xf32>
    %173 = tpu.concatenate %138, %141, %144, %127, %147, %150, %153, %156, %159, %162, %135, %165, %168, %171, %172 in 1 : vector<8x8xf32>, vector<8x8xf32>, vector<8x8xf32>, vector<8x8xf32>, vector<8x8xf32>, vector<8x8xf32>, vector<8x8xf32>, vector<8x8xf32>, vector<8x8xf32>, vector<8x8xf32>, vector<8x8xf32>, vector<8x8xf32>, vector<8x8xf32>, vector<8x8xf32>, vector<8x16xf32> -> vector<8x128xf32>
    %174 = arith.truncf %173 : vector<8x128xf32> to vector<8x128xbf16>
    %c0_65 = arith.constant 0 : index
    %c0_66 = arith.constant 0 : index
    %175 = vector.load %arg16[%c0_65, %c0_66] : memref<128x8xbf16, #tpu.memory_space<vmem>>, vector<128x8xbf16>
    %cst_67 = arith.constant dense<0.000000e+00> : vector<8x8xf32>
    %176 = tpu.matmul %174, %175, %cst_67 {dimension_numbers = #tpu.dot_dimension_numbers<[1], [0], [0], [1], [0, 0, 1, 1], [], []>} : vector<8x128xbf16>, vector<128x8xbf16>, vector<8x8xf32> -> vector<8x8xf32>
    %177 = arith.negf %176 : vector<8x8xf32>
    %178 = math.exp %177 : vector<8x8xf32>
    %cst_68 = arith.constant 1.000000e+00 : f32
    %179 = vector.broadcast %cst_68 : f32 to vector<8x8xf32>
    %180 = arith.addf %179, %178 : vector<8x8xf32>
    %181 = arith.divf %179, %180 : vector<8x8xf32>
    %182 = vector.shape_cast %181 : vector<8x8xf32> to vector<8x8x1xf32>
    %183 = vector.broadcast %182 : vector<8x8x1xf32> to vector<8x8x128xf32>
    %184 = arith.mulf %124, %183 : vector<8x8x128xf32>
    %185 = vector.shape_cast %98 : vector<64x128xf32> to vector<8x8x128xf32>
    %186 = arith.addf %184, %185 : vector<8x8x128xf32>
    %cst_69 = arith.constant 0.000000e+00 : f32
    %187 = vector.broadcast %cst_69 : f32 to vector<8x8x128xf32>
    %188 = arith.maximumf %186, %187 : vector<8x8x128xf32>
    %189 = vector.shape_cast %188 : vector<8x8x128xf32> to vector<1x64x128xf32>
    %190 = arith.truncf %189 : vector<1x64x128xf32> to vector<1x64x128xbf16>
    %c0_70 = arith.constant 0 : index
    %c0_71 = arith.constant 0 : index
    %c0_72 = arith.constant 0 : index
    %191 = vector.load %arg17[%c0_70, %c0_71, %c0_72] : memref<1x64x128xbf16, #tpu.memory_space<vmem>>, vector<1x64x128xbf16>
    tpu.vector_store %arg17[%c0_70, %c0_71, %c0_72], %190 {strides = array<i32>} : memref<1x64x128xbf16, #tpu.memory_space<vmem>>, vector<1x64x128xbf16>,
    return
  }
  func.func @transform_0(%arg0: i32) -> (i32, i32, i32) {
    %c0_i32 = arith.constant 0 : i32
    %c0_i32_0 = arith.constant 0 : i32
    %c0_i32_1 = arith.constant 0 : i32
    return %arg0, %c0_i32, %c0_i32_0 : i32, i32, i32
  }
  func.func @transform_1(%arg0: i32) -> (i32, i32) {
    %c0_i32 = arith.constant 0 : i32
    %c0_i32_0 = arith.constant 0 : i32
    %c0_i32_1 = arith.constant 0 : i32
    return %c0_i32, %c0_i32_0 : i32, i32
  }
  func.func @transform_2(%arg0: i32) -> (i32, i32) {
    %c0_i32 = arith.constant 0 : i32
    %c0_i32_0 = arith.constant 0 : i32
    %c0_i32_1 = arith.constant 0 : i32
    return %c0_i32, %c0_i32_0 : i32, i32
  }
  func.func @transform_3(%arg0: i32) -> (i32, i32) {
    %c0_i32 = arith.constant 0 : i32
    %c0_i32_0 = arith.constant 0 : i32
    %c0_i32_1 = arith.constant 0 : i32
    return %c0_i32, %c0_i32_0 : i32, i32
  }
  func.func @transform_4(%arg0: i32) -> (i32, i32) {
    %c0_i32 = arith.constant 0 : i32
    %c0_i32_0 = arith.constant 0 : i32
    %c0_i32_1 = arith.constant 0 : i32
    return %c0_i32, %c0_i32_0 : i32, i32
  }
  func.func @transform_5(%arg0: i32) -> (i32, i32) {
    %c0_i32 = arith.constant 0 : i32
    %c0_i32_0 = arith.constant 0 : i32
    %c0_i32_1 = arith.constant 0 : i32
    return %c0_i32, %c0_i32_0 : i32, i32
  }
  func.func @transform_6(%arg0: i32) -> (i32, i32) {
    %c0_i32 = arith.constant 0 : i32
    %c0_i32_0 = arith.constant 0 : i32
    %c0_i32_1 = arith.constant 0 : i32
    return %c0_i32, %c0_i32_0 : i32, i32
  }
  func.func @transform_7(%arg0: i32) -> (i32, i32) {
    %c0_i32 = arith.constant 0 : i32
    %c0_i32_0 = arith.constant 0 : i32
    %c0_i32_1 = arith.constant 0 : i32
    return %c0_i32, %c0_i32_0 : i32, i32
  }
  func.func @transform_8(%arg0: i32) -> (i32, i32) {
    %c0_i32 = arith.constant 0 : i32
    %c0_i32_0 = arith.constant 0 : i32
    %c0_i32_1 = arith.constant 0 : i32
    return %c0_i32, %c0_i32_0 : i32, i32
  }
  func.func @transform_9(%arg0: i32) -> (i32, i32) {
    %c0_i32 = arith.constant 0 : i32
    %c0_i32_0 = arith.constant 0 : i32
    %c0_i32_1 = arith.constant 0 : i32
    return %c0_i32, %c0_i32_0 : i32, i32
  }
  func.func @transform_10(%arg0: i32) -> (i32, i32) {
    %c0_i32 = arith.constant 0 : i32
    %c0_i32_0 = arith.constant 0 : i32
    %c0_i32_1 = arith.constant 0 : i32
    return %c0_i32, %c0_i32_0 : i32, i32
  }
  func.func @transform_11(%arg0: i32) -> (i32, i32) {
    %c0_i32 = arith.constant 0 : i32
    %c0_i32_0 = arith.constant 0 : i32
    %c0_i32_1 = arith.constant 0 : i32
    return %c0_i32, %c0_i32_0 : i32, i32
  }
  func.func @transform_12(%arg0: i32) -> (i32, i32) {
    %c0_i32 = arith.constant 0 : i32
    %c0_i32_0 = arith.constant 0 : i32
    %c0_i32_1 = arith.constant 0 : i32
    return %c0_i32, %c0_i32_0 : i32, i32
  }
  func.func @transform_13(%arg0: i32) -> (i32, i32) {
    %c0_i32 = arith.constant 0 : i32
    %c0_i32_0 = arith.constant 0 : i32
    %c0_i32_1 = arith.constant 0 : i32
    return %c0_i32, %c0_i32_0 : i32, i32
  }
  func.func @transform_14(%arg0: i32) -> (i32, i32) {
    %c0_i32 = arith.constant 0 : i32
    %c0_i32_0 = arith.constant 0 : i32
    %c0_i32_1 = arith.constant 0 : i32
    return %c0_i32, %c0_i32_0 : i32, i32
  }
  func.func @transform_15(%arg0: i32) -> (i32, i32) {
    %c0_i32 = arith.constant 0 : i32
    %c0_i32_0 = arith.constant 0 : i32
    %c0_i32_1 = arith.constant 0 : i32
    return %c0_i32, %c0_i32_0 : i32, i32
  }
  func.func @transform_16(%arg0: i32) -> (i32, i32, i32) {
    %c0_i32 = arith.constant 0 : i32
    %c0_i32_0 = arith.constant 0 : i32
    %c0_i32_1 = arith.constant 0 : i32
    return %arg0, %c0_i32, %c0_i32_0 : i32, i32, i32
  }
}

module attributes {stable_mosaic.version = 11 : i64} {
  func.func @_bottleneck_kernel(%arg0: i32, %arg1: memref<1x64x128xbf16, #tpu.memory_space<vmem>>, %arg2: memref<128x128xbf16, #tpu.memory_space<vmem>>, %arg3: memref<1x128xf32, #tpu.memory_space<vmem>>, %arg4: memref<1x128xf32, #tpu.memory_space<vmem>>, %arg5: memref<1152x128xbf16, #tpu.memory_space<vmem>>, %arg6: memref<1x128xf32, #tpu.memory_space<vmem>>, %arg7: memref<1x128xf32, #tpu.memory_space<vmem>>, %arg8: memref<128x128xbf16, #tpu.memory_space<vmem>>, %arg9: memref<1x128xf32, #tpu.memory_space<vmem>>, %arg10: memref<1x128xf32, #tpu.memory_space<vmem>>, %arg11: memref<128x128xbf16, #tpu.memory_space<vmem>>, %arg12: memref<128x128xbf16, #tpu.memory_space<vmem>>, %arg13: memref<128x8xbf16, #tpu.memory_space<vmem>>, %arg14: memref<1x64x128xbf16, #tpu.memory_space<vmem>>) attributes {dimension_semantics = [#tpu.dimension_semantics<parallel>], iteration_bounds = array<i64: 2>, scalar_prefetch = 0 : i64, scratch_operands = 0 : i64, tpu.core_type = #tpu.core_type<tc>, window_params = [{transform_indices = @transform_0, window_bounds = array<i64: 1, 64, 128>}, {pipeline_mode = #tpu.pipeline_mode<synchronous>, transform_indices = @transform_1, window_bounds = array<i64: 128, 128>}, {pipeline_mode = #tpu.pipeline_mode<synchronous>, transform_indices = @transform_2, window_bounds = array<i64: 1, 128>}, {pipeline_mode = #tpu.pipeline_mode<synchronous>, transform_indices = @transform_3, window_bounds = array<i64: 1, 128>}, {pipeline_mode = #tpu.pipeline_mode<synchronous>, transform_indices = @transform_4, window_bounds = array<i64: 1152, 128>}, {pipeline_mode = #tpu.pipeline_mode<synchronous>, transform_indices = @transform_5, window_bounds = array<i64: 1, 128>}, {pipeline_mode = #tpu.pipeline_mode<synchronous>, transform_indices = @transform_6, window_bounds = array<i64: 1, 128>}, {pipeline_mode = #tpu.pipeline_mode<synchronous>, transform_indices = @transform_7, window_bounds = array<i64: 128, 128>}, {pipeline_mode = #tpu.pipeline_mode<synchronous>, transform_indices = @transform_8, window_bounds = array<i64: 1, 128>}, {pipeline_mode = #tpu.pipeline_mode<synchronous>, transform_indices = @transform_9, window_bounds = array<i64: 1, 128>}, {pipeline_mode = #tpu.pipeline_mode<synchronous>, transform_indices = @transform_10, window_bounds = array<i64: 128, 128>}, {pipeline_mode = #tpu.pipeline_mode<synchronous>, transform_indices = @transform_11, window_bounds = array<i64: 128, 128>}, {pipeline_mode = #tpu.pipeline_mode<synchronous>, transform_indices = @transform_12, window_bounds = array<i64: 128, 8>}, {transform_indices = @transform_13, window_bounds = array<i64: 1, 64, 128>}]} {
    %c0 = arith.constant 0 : index
    %c0_0 = arith.constant 0 : index
    %c0_1 = arith.constant 0 : index
    %0 = vector.load %arg1[%c0, %c0_0, %c0_1] : memref<1x64x128xbf16, #tpu.memory_space<vmem>>, vector<1x64x128xbf16>
    %1 = vector.shape_cast %0 : vector<1x64x128xbf16> to vector<64x128xbf16>
    %c0_2 = arith.constant 0 : index
    %c0_3 = arith.constant 0 : index
    %2 = vector.load %arg2[%c0_2, %c0_3] : memref<128x128xbf16, #tpu.memory_space<vmem>>, vector<128x128xbf16>
    %cst = arith.constant dense<0.000000e+00> : vector<64x128xf32>
    %3 = tpu.matmul %1, %2, %cst {dimension_numbers = #tpu.dot_dimension_numbers<[1], [0], [0], [1], [0, 0, 1, 1], [], []>} : vector<64x128xbf16>, vector<128x128xbf16>, vector<64x128xf32> -> vector<64x128xf32>
    %c0_4 = arith.constant 0 : index
    %c0_5 = arith.constant 0 : index
    %4 = vector.load %arg3[%c0_4, %c0_5] : memref<1x128xf32, #tpu.memory_space<vmem>>, vector<1x128xf32>
    %5 = vector.broadcast %4 : vector<1x128xf32> to vector<64x128xf32>
    %6 = arith.mulf %3, %5 : vector<64x128xf32>
    %c0_6 = arith.constant 0 : index
    %c0_7 = arith.constant 0 : index
    %7 = vector.load %arg4[%c0_6, %c0_7] : memref<1x128xf32, #tpu.memory_space<vmem>>, vector<1x128xf32>
    %8 = vector.broadcast %7 : vector<1x128xf32> to vector<64x128xf32>
    %9 = arith.addf %6, %8 : vector<64x128xf32>
    %cst_8 = arith.constant 0.000000e+00 : f32
    %10 = vector.broadcast %cst_8 : f32 to vector<64x128xf32>
    %11 = arith.maximumf %9, %10 : vector<64x128xf32>
    %12 = vector.shape_cast %11 : vector<64x128xf32> to vector<8x8x128xf32>
    %cst_9 = arith.constant 0.000000e+00 : f32
    %13 = vector.broadcast %cst_9 : f32 to vector<1x8x128xf32>
    %14 = vector.extract_strided_slice %12 {offsets = [0, 0, 0], sizes = [7, 8, 128], strides = [1, 1, 1]} : vector<8x8x128xf32> to vector<7x8x128xf32>
    %15 = tpu.concatenate %13, %14 in 0 : vector<1x8x128xf32>, vector<7x8x128xf32> -> vector<8x8x128xf32>
    %cst_10 = arith.constant 0.000000e+00 : f32
    %16 = vector.broadcast %cst_10 : f32 to vector<8x1x128xf32>
    %17 = vector.extract_strided_slice %15 {offsets = [0, 0, 0], sizes = [8, 7, 128], strides = [1, 1, 1]} : vector<8x8x128xf32> to vector<8x7x128xf32>
    %18 = tpu.concatenate %16, %17 in 1 : vector<8x1x128xf32>, vector<8x7x128xf32> -> vector<8x8x128xf32>
    %19 = vector.shape_cast %18 : vector<8x8x128xf32> to vector<64x128xf32>
    %20 = arith.truncf %19 : vector<64x128xf32> to vector<64x128xbf16>
    %cst_11 = arith.constant 0.000000e+00 : f32
    %21 = vector.broadcast %cst_11 : f32 to vector<1x8x128xf32>
    %22 = vector.extract_strided_slice %12 {offsets = [0, 0, 0], sizes = [7, 8, 128], strides = [1, 1, 1]} : vector<8x8x128xf32> to vector<7x8x128xf32>
    %23 = tpu.concatenate %21, %22 in 0 : vector<1x8x128xf32>, vector<7x8x128xf32> -> vector<8x8x128xf32>
    %24 = vector.shape_cast %23 : vector<8x8x128xf32> to vector<64x128xf32>
    %25 = arith.truncf %24 : vector<64x128xf32> to vector<64x128xbf16>
    %cst_12 = arith.constant 0.000000e+00 : f32
    %26 = vector.broadcast %cst_12 : f32 to vector<1x8x128xf32>
    %27 = vector.extract_strided_slice %12 {offsets = [0, 0, 0], sizes = [7, 8, 128], strides = [1, 1, 1]} : vector<8x8x128xf32> to vector<7x8x128xf32>
    %28 = tpu.concatenate %26, %27 in 0 : vector<1x8x128xf32>, vector<7x8x128xf32> -> vector<8x8x128xf32>
    %cst_13 = arith.constant 0.000000e+00 : f32
    %29 = vector.broadcast %cst_13 : f32 to vector<8x1x128xf32>
    %30 = vector.extract_strided_slice %28 {offsets = [0, 1, 0], sizes = [8, 7, 128], strides = [1, 1, 1]} : vector<8x8x128xf32> to vector<8x7x128xf32>
    %31 = tpu.concatenate %30, %29 in 1 : vector<8x7x128xf32>, vector<8x1x128xf32> -> vector<8x8x128xf32>
    %32 = vector.shape_cast %31 : vector<8x8x128xf32> to vector<64x128xf32>
    %33 = arith.truncf %32 : vector<64x128xf32> to vector<64x128xbf16>
    %cst_14 = arith.constant 0.000000e+00 : f32
    %34 = vector.broadcast %cst_14 : f32 to vector<8x1x128xf32>
    %35 = vector.extract_strided_slice %12 {offsets = [0, 0, 0], sizes = [8, 7, 128], strides = [1, 1, 1]} : vector<8x8x128xf32> to vector<8x7x128xf32>
    %36 = tpu.concatenate %34, %35 in 1 : vector<8x1x128xf32>, vector<8x7x128xf32> -> vector<8x8x128xf32>
    %37 = vector.shape_cast %36 : vector<8x8x128xf32> to vector<64x128xf32>
    %38 = arith.truncf %37 : vector<64x128xf32> to vector<64x128xbf16>
    %39 = vector.shape_cast %12 : vector<8x8x128xf32> to vector<64x128xf32>
    %40 = arith.truncf %39 : vector<64x128xf32> to vector<64x128xbf16>
    %cst_15 = arith.constant 0.000000e+00 : f32
    %41 = vector.broadcast %cst_15 : f32 to vector<8x1x128xf32>
    %42 = vector.extract_strided_slice %12 {offsets = [0, 1, 0], sizes = [8, 7, 128], strides = [1, 1, 1]} : vector<8x8x128xf32> to vector<8x7x128xf32>
    %43 = tpu.concatenate %42, %41 in 1 : vector<8x7x128xf32>, vector<8x1x128xf32> -> vector<8x8x128xf32>
    %44 = vector.shape_cast %43 : vector<8x8x128xf32> to vector<64x128xf32>
    %45 = arith.truncf %44 : vector<64x128xf32> to vector<64x128xbf16>
    %cst_16 = arith.constant 0.000000e+00 : f32
    %46 = vector.broadcast %cst_16 : f32 to vector<1x8x128xf32>
    %47 = vector.extract_strided_slice %12 {offsets = [1, 0, 0], sizes = [7, 8, 128], strides = [1, 1, 1]} : vector<8x8x128xf32> to vector<7x8x128xf32>
    %48 = tpu.concatenate %47, %46 in 0 : vector<7x8x128xf32>, vector<1x8x128xf32> -> vector<8x8x128xf32>
    %cst_17 = arith.constant 0.000000e+00 : f32
    %49 = vector.broadcast %cst_17 : f32 to vector<8x1x128xf32>
    %50 = vector.extract_strided_slice %48 {offsets = [0, 0, 0], sizes = [8, 7, 128], strides = [1, 1, 1]} : vector<8x8x128xf32> to vector<8x7x128xf32>
    %51 = tpu.concatenate %49, %50 in 1 : vector<8x1x128xf32>, vector<8x7x128xf32> -> vector<8x8x128xf32>
    %52 = vector.shape_cast %51 : vector<8x8x128xf32> to vector<64x128xf32>
    %53 = arith.truncf %52 : vector<64x128xf32> to vector<64x128xbf16>
    %cst_18 = arith.constant 0.000000e+00 : f32
    %54 = vector.broadcast %cst_18 : f32 to vector<1x8x128xf32>
    %55 = vector.extract_strided_slice %12 {offsets = [1, 0, 0], sizes = [7, 8, 128], strides = [1, 1, 1]} : vector<8x8x128xf32> to vector<7x8x128xf32>
    %56 = tpu.concatenate %55, %54 in 0 : vector<7x8x128xf32>, vector<1x8x128xf32> -> vector<8x8x128xf32>
    %57 = vector.shape_cast %56 : vector<8x8x128xf32> to vector<64x128xf32>
    %58 = arith.truncf %57 : vector<64x128xf32> to vector<64x128xbf16>
    %cst_19 = arith.constant 0.000000e+00 : f32
    %59 = vector.broadcast %cst_19 : f32 to vector<1x8x128xf32>
    %60 = vector.extract_strided_slice %12 {offsets = [1, 0, 0], sizes = [7, 8, 128], strides = [1, 1, 1]} : vector<8x8x128xf32> to vector<7x8x128xf32>
    %61 = tpu.concatenate %60, %59 in 0 : vector<7x8x128xf32>, vector<1x8x128xf32> -> vector<8x8x128xf32>
    %cst_20 = arith.constant 0.000000e+00 : f32
    %62 = vector.broadcast %cst_20 : f32 to vector<8x1x128xf32>
    %63 = vector.extract_strided_slice %61 {offsets = [0, 1, 0], sizes = [8, 7, 128], strides = [1, 1, 1]} : vector<8x8x128xf32> to vector<8x7x128xf32>
    %64 = tpu.concatenate %63, %62 in 1 : vector<8x7x128xf32>, vector<8x1x128xf32> -> vector<8x8x128xf32>
    %65 = vector.shape_cast %64 : vector<8x8x128xf32> to vector<64x128xf32>
    %66 = arith.truncf %65 : vector<64x128xf32> to vector<64x128xbf16>
    %67 = tpu.concatenate %20, %25, %33, %38, %40, %45, %53, %58, %66 in 1 : vector<64x128xbf16>, vector<64x128xbf16>, vector<64x128xbf16>, vector<64x128xbf16>, vector<64x128xbf16>, vector<64x128xbf16>, vector<64x128xbf16>, vector<64x128xbf16>, vector<64x128xbf16> -> vector<64x1152xbf16>
    %c0_21 = arith.constant 0 : index
    %c0_22 = arith.constant 0 : index
    %68 = vector.load %arg5[%c0_21, %c0_22] : memref<1152x128xbf16, #tpu.memory_space<vmem>>, vector<1152x128xbf16>
    %cst_23 = arith.constant dense<0.000000e+00> : vector<64x128xf32>
    %69 = tpu.matmul %67, %68, %cst_23 {dimension_numbers = #tpu.dot_dimension_numbers<[1], [0], [0], [1], [0, 0, 1, 1], [], []>} : vector<64x1152xbf16>, vector<1152x128xbf16>, vector<64x128xf32> -> vector<64x128xf32>
    %c0_24 = arith.constant 0 : index
    %c0_25 = arith.constant 0 : index
    %70 = vector.load %arg6[%c0_24, %c0_25] : memref<1x128xf32, #tpu.memory_space<vmem>>, vector<1x128xf32>
    %71 = vector.broadcast %70 : vector<1x128xf32> to vector<64x128xf32>
    %72 = arith.mulf %69, %71 : vector<64x128xf32>
    %c0_26 = arith.constant 0 : index
    %c0_27 = arith.constant 0 : index
    %73 = vector.load %arg7[%c0_26, %c0_27] : memref<1x128xf32, #tpu.memory_space<vmem>>, vector<1x128xf32>
    %74 = vector.broadcast %73 : vector<1x128xf32> to vector<64x128xf32>
    %75 = arith.addf %72, %74 : vector<64x128xf32>
    %cst_28 = arith.constant 0.000000e+00 : f32
    %76 = vector.broadcast %cst_28 : f32 to vector<64x128xf32>
    %77 = arith.maximumf %75, %76 : vector<64x128xf32>
    %78 = arith.truncf %77 : vector<64x128xf32> to vector<64x128xbf16>
    %c0_29 = arith.constant 0 : index
    %c0_30 = arith.constant 0 : index
    %79 = vector.load %arg8[%c0_29, %c0_30] : memref<128x128xbf16, #tpu.memory_space<vmem>>, vector<128x128xbf16>
    %cst_31 = arith.constant dense<0.000000e+00> : vector<64x128xf32>
    %80 = tpu.matmul %78, %79, %cst_31 {dimension_numbers = #tpu.dot_dimension_numbers<[1], [0], [0], [1], [0, 0, 1, 1], [], []>} : vector<64x128xbf16>, vector<128x128xbf16>, vector<64x128xf32> -> vector<64x128xf32>
    %c0_32 = arith.constant 0 : index
    %c0_33 = arith.constant 0 : index
    %81 = vector.load %arg9[%c0_32, %c0_33] : memref<1x128xf32, #tpu.memory_space<vmem>>, vector<1x128xf32>
    %82 = vector.broadcast %81 : vector<1x128xf32> to vector<64x128xf32>
    %83 = arith.mulf %80, %82 : vector<64x128xf32>
    %c0_34 = arith.constant 0 : index
    %c0_35 = arith.constant 0 : index
    %84 = vector.load %arg10[%c0_34, %c0_35] : memref<1x128xf32, #tpu.memory_space<vmem>>, vector<1x128xf32>
    %85 = vector.broadcast %84 : vector<1x128xf32> to vector<64x128xf32>
    %86 = arith.addf %83, %85 : vector<64x128xf32>
    %87 = arith.extf %1 : vector<64x128xbf16> to vector<64x128xf32>
    %cst_36 = arith.constant dense<0.000000e+00> : vector<128xf32>
    %88 = vector.multi_reduction <add>, %86, %cst_36 [0] : vector<64x128xf32> to vector<128xf32>
    %89 = vector.shape_cast %88 : vector<128xf32> to vector<1x128xf32>
    %cst_37 = arith.constant 6.400000e+01 : f32
    %90 = vector.broadcast %cst_37 : f32 to vector<1x128xf32>
    %91 = arith.divf %89, %90 : vector<1x128xf32>
    %cst_38 = arith.constant dense<0xFF800000> : vector<128xf32>
    %92 = vector.multi_reduction <maximumf>, %86, %cst_38 [0] : vector<64x128xf32> to vector<128xf32>
    %93 = vector.shape_cast %92 : vector<128xf32> to vector<1x128xf32>
    %94 = tpu.concatenate %91, %93 in 0 : vector<1x128xf32>, vector<1x128xf32> -> vector<2x128xf32>
    %95 = arith.truncf %94 : vector<2x128xf32> to vector<2x128xbf16>
    %c0_39 = arith.constant 0 : index
    %c0_40 = arith.constant 0 : index
    %96 = vector.load %arg11[%c0_39, %c0_40] : memref<128x128xbf16, #tpu.memory_space<vmem>>, vector<128x128xbf16>
    %cst_41 = arith.constant dense<0.000000e+00> : vector<2x128xf32>
    %97 = tpu.matmul %95, %96, %cst_41 {dimension_numbers = #tpu.dot_dimension_numbers<[1], [0], [0], [1], [0, 0, 1, 1], [], []>} : vector<2x128xbf16>, vector<128x128xbf16>, vector<2x128xf32> -> vector<2x128xf32>
    %cst_42 = arith.constant 0.000000e+00 : f32
    %98 = vector.broadcast %cst_42 : f32 to vector<2x128xf32>
    %99 = arith.maximumf %97, %98 : vector<2x128xf32>
    %100 = arith.truncf %99 : vector<2x128xf32> to vector<2x128xbf16>
    %c0_43 = arith.constant 0 : index
    %c0_44 = arith.constant 0 : index
    %101 = vector.load %arg12[%c0_43, %c0_44] : memref<128x128xbf16, #tpu.memory_space<vmem>>, vector<128x128xbf16>
    %cst_45 = arith.constant dense<0.000000e+00> : vector<2x128xf32>
    %102 = tpu.matmul %100, %101, %cst_45 {dimension_numbers = #tpu.dot_dimension_numbers<[1], [0], [0], [1], [0, 0, 1, 1], [], []>} : vector<2x128xbf16>, vector<128x128xbf16>, vector<2x128xf32> -> vector<2x128xf32>
    %103 = vector.extract_strided_slice %102 {offsets = [0, 0], sizes = [1, 128], strides = [1, 1]} : vector<2x128xf32> to vector<1x128xf32>
    %104 = vector.extract_strided_slice %102 {offsets = [1, 0], sizes = [1, 128], strides = [1, 1]} : vector<2x128xf32> to vector<1x128xf32>
    %105 = arith.addf %103, %104 : vector<1x128xf32>
    %106 = arith.negf %105 : vector<1x128xf32>
    %107 = math.exp %106 : vector<1x128xf32>
    %cst_46 = arith.constant 1.000000e+00 : f32
    %108 = vector.broadcast %cst_46 : f32 to vector<1x128xf32>
    %109 = arith.addf %108, %107 : vector<1x128xf32>
    %110 = arith.divf %108, %109 : vector<1x128xf32>
    %111 = vector.broadcast %110 : vector<1x128xf32> to vector<64x128xf32>
    %112 = arith.mulf %86, %111 : vector<64x128xf32>
    %113 = vector.shape_cast %112 : vector<64x128xf32> to vector<8x8x128xf32>
    %cst_47 = arith.constant dense<0.000000e+00> : vector<8x8xf32>
    %114 = vector.multi_reduction <add>, %113, %cst_47 [2] : vector<8x8x128xf32> to vector<8x8xf32>
    %cst_48 = arith.constant 6.250000e-02 : f32
    %115 = vector.broadcast %cst_48 : f32 to vector<8x8xf32>
    %116 = arith.mulf %114, %115 : vector<8x8xf32>
    %117 = tpu.iota {dimensions = array<i32: 2>} : vector<1x1x128xi32>
    %c16_i32 = arith.constant 16 : i32
    %118 = vector.broadcast %c16_i32 : i32 to vector<1x1x128xi32>
    %119 = arith.cmpi slt, %117, %118 : vector<1x1x128xi32>
    %cst_49 = arith.constant -3.40282347E+38 : f32
    %120 = vector.shape_cast %119 : vector<1x1x128xi1> to vector<1x1x128xi1>
    %121 = vector.broadcast %120 : vector<1x1x128xi1> to vector<8x8x128xi1>
    %122 = vector.broadcast %cst_49 : f32 to vector<8x8x128xf32>
    %123 = arith.select %121, %113, %122 : vector<8x8x128xi1>, vector<8x8x128xf32>
    %cst_50 = arith.constant dense<0xFF800000> : vector<8x8xf32>
    %124 = vector.multi_reduction <maximumf>, %123, %cst_50 [2] : vector<8x8x128xf32> to vector<8x8xf32>
    %cst_51 = arith.constant 0.000000e+00 : f32
    %125 = vector.broadcast %cst_51 : f32 to vector<3x8xf32>
    %126 = vector.extract_strided_slice %116 {offsets = [0, 0], sizes = [5, 8], strides = [1, 1]} : vector<8x8xf32> to vector<5x8xf32>
    %127 = tpu.concatenate %125, %126 in 0 : vector<3x8xf32>, vector<5x8xf32> -> vector<8x8xf32>
    %cst_52 = arith.constant 0.000000e+00 : f32
    %128 = vector.broadcast %cst_52 : f32 to vector<2x8xf32>
    %129 = vector.extract_strided_slice %116 {offsets = [0, 0], sizes = [6, 8], strides = [1, 1]} : vector<8x8xf32> to vector<6x8xf32>
    %130 = tpu.concatenate %128, %129 in 0 : vector<2x8xf32>, vector<6x8xf32> -> vector<8x8xf32>
    %cst_53 = arith.constant 0.000000e+00 : f32
    %131 = vector.broadcast %cst_53 : f32 to vector<1x8xf32>
    %132 = vector.extract_strided_slice %116 {offsets = [0, 0], sizes = [7, 8], strides = [1, 1]} : vector<8x8xf32> to vector<7x8xf32>
    %133 = tpu.concatenate %131, %132 in 0 : vector<1x8xf32>, vector<7x8xf32> -> vector<8x8xf32>
    %cst_54 = arith.constant 0.000000e+00 : f32
    %134 = vector.broadcast %cst_54 : f32 to vector<1x8xf32>
    %135 = vector.extract_strided_slice %116 {offsets = [1, 0], sizes = [7, 8], strides = [1, 1]} : vector<8x8xf32> to vector<7x8xf32>
    %136 = tpu.concatenate %135, %134 in 0 : vector<7x8xf32>, vector<1x8xf32> -> vector<8x8xf32>
    %cst_55 = arith.constant 0.000000e+00 : f32
    %137 = vector.broadcast %cst_55 : f32 to vector<2x8xf32>
    %138 = vector.extract_strided_slice %116 {offsets = [2, 0], sizes = [6, 8], strides = [1, 1]} : vector<8x8xf32> to vector<6x8xf32>
    %139 = tpu.concatenate %138, %137 in 0 : vector<6x8xf32>, vector<2x8xf32> -> vector<8x8xf32>
    %cst_56 = arith.constant 0.000000e+00 : f32
    %140 = vector.broadcast %cst_56 : f32 to vector<3x8xf32>
    %141 = vector.extract_strided_slice %116 {offsets = [3, 0], sizes = [5, 8], strides = [1, 1]} : vector<8x8xf32> to vector<5x8xf32>
    %142 = tpu.concatenate %141, %140 in 0 : vector<5x8xf32>, vector<3x8xf32> -> vector<8x8xf32>
    %cst_57 = arith.constant 0.000000e+00 : f32
    %143 = vector.broadcast %cst_57 : f32 to vector<3x8xf32>
    %144 = vector.extract_strided_slice %124 {offsets = [0, 0], sizes = [5, 8], strides = [1, 1]} : vector<8x8xf32> to vector<5x8xf32>
    %145 = tpu.concatenate %143, %144 in 0 : vector<3x8xf32>, vector<5x8xf32> -> vector<8x8xf32>
    %cst_58 = arith.constant 0.000000e+00 : f32
    %146 = vector.broadcast %cst_58 : f32 to vector<2x8xf32>
    %147 = vector.extract_strided_slice %124 {offsets = [0, 0], sizes = [6, 8], strides = [1, 1]} : vector<8x8xf32> to vector<6x8xf32>
    %148 = tpu.concatenate %146, %147 in 0 : vector<2x8xf32>, vector<6x8xf32> -> vector<8x8xf32>
    %cst_59 = arith.constant 0.000000e+00 : f32
    %149 = vector.broadcast %cst_59 : f32 to vector<1x8xf32>
    %150 = vector.extract_strided_slice %124 {offsets = [0, 0], sizes = [7, 8], strides = [1, 1]} : vector<8x8xf32> to vector<7x8xf32>
    %151 = tpu.concatenate %149, %150 in 0 : vector<1x8xf32>, vector<7x8xf32> -> vector<8x8xf32>
    %cst_60 = arith.constant 0.000000e+00 : f32
    %152 = vector.broadcast %cst_60 : f32 to vector<1x8xf32>
    %153 = vector.extract_strided_slice %124 {offsets = [1, 0], sizes = [7, 8], strides = [1, 1]} : vector<8x8xf32> to vector<7x8xf32>
    %154 = tpu.concatenate %153, %152 in 0 : vector<7x8xf32>, vector<1x8xf32> -> vector<8x8xf32>
    %cst_61 = arith.constant 0.000000e+00 : f32
    %155 = vector.broadcast %cst_61 : f32 to vector<2x8xf32>
    %156 = vector.extract_strided_slice %124 {offsets = [2, 0], sizes = [6, 8], strides = [1, 1]} : vector<8x8xf32> to vector<6x8xf32>
    %157 = tpu.concatenate %156, %155 in 0 : vector<6x8xf32>, vector<2x8xf32> -> vector<8x8xf32>
    %cst_62 = arith.constant 0.000000e+00 : f32
    %158 = vector.broadcast %cst_62 : f32 to vector<3x8xf32>
    %159 = vector.extract_strided_slice %124 {offsets = [3, 0], sizes = [5, 8], strides = [1, 1]} : vector<8x8xf32> to vector<5x8xf32>
    %160 = tpu.concatenate %159, %158 in 0 : vector<5x8xf32>, vector<3x8xf32> -> vector<8x8xf32>
    %cst_63 = arith.constant 0.000000e+00 : f32
    %161 = vector.broadcast %cst_63 : f32 to vector<8x16xf32>
    %162 = tpu.concatenate %127, %130, %133, %116, %136, %139, %142, %145, %148, %151, %124, %154, %157, %160, %161 in 1 : vector<8x8xf32>, vector<8x8xf32>, vector<8x8xf32>, vector<8x8xf32>, vector<8x8xf32>, vector<8x8xf32>, vector<8x8xf32>, vector<8x8xf32>, vector<8x8xf32>, vector<8x8xf32>, vector<8x8xf32>, vector<8x8xf32>, vector<8x8xf32>, vector<8x8xf32>, vector<8x16xf32> -> vector<8x128xf32>
    %163 = arith.truncf %162 : vector<8x128xf32> to vector<8x128xbf16>
    %c0_64 = arith.constant 0 : index
    %c0_65 = arith.constant 0 : index
    %164 = vector.load %arg13[%c0_64, %c0_65] : memref<128x8xbf16, #tpu.memory_space<vmem>>, vector<128x8xbf16>
    %cst_66 = arith.constant dense<0.000000e+00> : vector<8x8xf32>
    %165 = tpu.matmul %163, %164, %cst_66 {dimension_numbers = #tpu.dot_dimension_numbers<[1], [0], [0], [1], [0, 0, 1, 1], [], []>} : vector<8x128xbf16>, vector<128x8xbf16>, vector<8x8xf32> -> vector<8x8xf32>
    %166 = arith.negf %165 : vector<8x8xf32>
    %167 = math.exp %166 : vector<8x8xf32>
    %cst_67 = arith.constant 1.000000e+00 : f32
    %168 = vector.broadcast %cst_67 : f32 to vector<8x8xf32>
    %169 = arith.addf %168, %167 : vector<8x8xf32>
    %170 = arith.divf %168, %169 : vector<8x8xf32>
    %171 = vector.shape_cast %170 : vector<8x8xf32> to vector<8x8x1xf32>
    %172 = vector.broadcast %171 : vector<8x8x1xf32> to vector<8x8x128xf32>
    %173 = arith.mulf %113, %172 : vector<8x8x128xf32>
    %174 = vector.shape_cast %87 : vector<64x128xf32> to vector<8x8x128xf32>
    %175 = arith.addf %173, %174 : vector<8x8x128xf32>
    %cst_68 = arith.constant 0.000000e+00 : f32
    %176 = vector.broadcast %cst_68 : f32 to vector<8x8x128xf32>
    %177 = arith.maximumf %175, %176 : vector<8x8x128xf32>
    %178 = vector.shape_cast %177 : vector<8x8x128xf32> to vector<1x64x128xf32>
    %179 = arith.truncf %178 : vector<1x64x128xf32> to vector<1x64x128xbf16>
    %c0_69 = arith.constant 0 : index
    %c0_70 = arith.constant 0 : index
    %c0_71 = arith.constant 0 : index
    %180 = vector.load %arg14[%c0_69, %c0_70, %c0_71] : memref<1x64x128xbf16, #tpu.memory_space<vmem>>, vector<1x64x128xbf16>
    tpu.vector_store %arg14[%c0_69, %c0_70, %c0_71], %179 {strides = array<i32>} : memref<1x64x128xbf16, #tpu.memory_space<vmem>>, vector<1x64x128xbf16>,
    return
  }
  func.func @transform_0(%arg0: i32) -> (i32, i32, i32) {
    %c0_i32 = arith.constant 0 : i32
    %c0_i32_0 = arith.constant 0 : i32
    %c0_i32_1 = arith.constant 0 : i32
    return %arg0, %c0_i32, %c0_i32_0 : i32, i32, i32
  }
  func.func @transform_1(%arg0: i32) -> (i32, i32) {
    %c0_i32 = arith.constant 0 : i32
    %c0_i32_0 = arith.constant 0 : i32
    %c0_i32_1 = arith.constant 0 : i32
    return %c0_i32, %c0_i32_0 : i32, i32
  }
  func.func @transform_2(%arg0: i32) -> (i32, i32) {
    %c0_i32 = arith.constant 0 : i32
    %c0_i32_0 = arith.constant 0 : i32
    %c0_i32_1 = arith.constant 0 : i32
    return %c0_i32, %c0_i32_0 : i32, i32
  }
  func.func @transform_3(%arg0: i32) -> (i32, i32) {
    %c0_i32 = arith.constant 0 : i32
    %c0_i32_0 = arith.constant 0 : i32
    %c0_i32_1 = arith.constant 0 : i32
    return %c0_i32, %c0_i32_0 : i32, i32
  }
  func.func @transform_4(%arg0: i32) -> (i32, i32) {
    %c0_i32 = arith.constant 0 : i32
    %c0_i32_0 = arith.constant 0 : i32
    %c0_i32_1 = arith.constant 0 : i32
    return %c0_i32, %c0_i32_0 : i32, i32
  }
  func.func @transform_5(%arg0: i32) -> (i32, i32) {
    %c0_i32 = arith.constant 0 : i32
    %c0_i32_0 = arith.constant 0 : i32
    %c0_i32_1 = arith.constant 0 : i32
    return %c0_i32, %c0_i32_0 : i32, i32
  }
  func.func @transform_6(%arg0: i32) -> (i32, i32) {
    %c0_i32 = arith.constant 0 : i32
    %c0_i32_0 = arith.constant 0 : i32
    %c0_i32_1 = arith.constant 0 : i32
    return %c0_i32, %c0_i32_0 : i32, i32
  }
  func.func @transform_7(%arg0: i32) -> (i32, i32) {
    %c0_i32 = arith.constant 0 : i32
    %c0_i32_0 = arith.constant 0 : i32
    %c0_i32_1 = arith.constant 0 : i32
    return %c0_i32, %c0_i32_0 : i32, i32
  }
  func.func @transform_8(%arg0: i32) -> (i32, i32) {
    %c0_i32 = arith.constant 0 : i32
    %c0_i32_0 = arith.constant 0 : i32
    %c0_i32_1 = arith.constant 0 : i32
    return %c0_i32, %c0_i32_0 : i32, i32
  }
  func.func @transform_9(%arg0: i32) -> (i32, i32) {
    %c0_i32 = arith.constant 0 : i32
    %c0_i32_0 = arith.constant 0 : i32
    %c0_i32_1 = arith.constant 0 : i32
    return %c0_i32, %c0_i32_0 : i32, i32
  }
  func.func @transform_10(%arg0: i32) -> (i32, i32) {
    %c0_i32 = arith.constant 0 : i32
    %c0_i32_0 = arith.constant 0 : i32
    %c0_i32_1 = arith.constant 0 : i32
    return %c0_i32, %c0_i32_0 : i32, i32
  }
  func.func @transform_11(%arg0: i32) -> (i32, i32) {
    %c0_i32 = arith.constant 0 : i32
    %c0_i32_0 = arith.constant 0 : i32
    %c0_i32_1 = arith.constant 0 : i32
    return %c0_i32, %c0_i32_0 : i32, i32
  }
  func.func @transform_12(%arg0: i32) -> (i32, i32) {
    %c0_i32 = arith.constant 0 : i32
    %c0_i32_0 = arith.constant 0 : i32
    %c0_i32_1 = arith.constant 0 : i32
    return %c0_i32, %c0_i32_0 : i32, i32
  }
  func.func @transform_13(%arg0: i32) -> (i32, i32, i32) {
    %c0_i32 = arith.constant 0 : i32
    %c0_i32_0 = arith.constant 0 : i32
    %c0_i32_1 = arith.constant 0 : i32
    return %arg0, %c0_i32, %c0_i32_0 : i32, i32, i32
  }
}

</mosaic_0001>

<llo_original>
// kernel: _lambda_.5
$region0: #{_lambda_.5}
  #allocation0 [shape = 'u32[]', space=smem, size = 0x4, offset = 0x4, fixed_abs, tag = 'smem constant byte address 0x4 - core index']
  #allocation1 [shape = 'u32[144,128]{1,0:T(1,128)}', space=vmem, size = 0x12000, scoped, tag = 'internal scratch']
  %s0 = inlined_call_operand.vmem [shape: bf16[2,64,128], index: 0, kind: input, shape index: {}]
  %s1 = inlined_call_operand.vmem [shape: bf16[128,128], index: 1, kind: input, shape index: {}]
  %s2 = inlined_call_operand.vmem [shape: f32[1,128], index: 2, kind: input, shape index: {}]
  %s3 = inlined_call_operand.vmem [shape: f32[1,128], index: 3, kind: input, shape index: {}]
  %s4 = inlined_call_operand.vmem [shape: bf16[1152,128], index: 4, kind: input, shape index: {}]
  %s5 = inlined_call_operand.vmem [shape: f32[1,128], index: 5, kind: input, shape index: {}]
  %s6 = inlined_call_operand.vmem [shape: f32[1,128], index: 6, kind: input, shape index: {}]
  %s7 = inlined_call_operand.vmem [shape: bf16[128,128], index: 7, kind: input, shape index: {}]
  %s8 = inlined_call_operand.vmem [shape: f32[1,128], index: 8, kind: input, shape index: {}]
  %s9 = inlined_call_operand.vmem [shape: f32[1,128], index: 9, kind: input, shape index: {}]
  %s10 = inlined_call_operand.vmem [shape: bf16[128,128], index: 10, kind: input, shape index: {}]
  %s11 = inlined_call_operand.vmem [shape: bf16[128,128], index: 11, kind: input, shape index: {}]
  %s12 = inlined_call_operand.vmem [shape: bf16[128,8], index: 12, kind: input, shape index: {}]
  %s13 = inlined_call_operand.vmem [shape: bf16[2,64,128], index: 13, kind: output, shape index: {}]
  %s14 = sld [smem:[#allocation0]]
  $region85: #{_lambda_.5} parent=0
    _
  %s16 = ssub.s32 1, %s14
  %s17 = scalar_select 0, %s16, %s14
  loop: start=0, step=1, limit=4
  $region2: #{_lambda_.5} parent=0 // loop_pre_header
    _
  $region3: #{_lambda_.5} parent=0 // loop_header
    %s19 = sphi 0, %s23
    %p20 = scmp.ge.s32.totalorder %s19, 4
    %s29 = sphi 0, %s31
    %s32 = sphi 0, %s29
    %s33 = sphi 0, %s32
    %s49 = sphi 0, %s33
    %s53 = sphi 0, %s53
    %s55 = sphi 0, %s53
    %s56 = sphi 0, %s55
    %s70 = sphi 0, %s56
    %s74 = sphi 0, %s74
    %s76 = sphi 0, %s74
    %s77 = sphi 0, %s76
    %s91 = sphi 0, %s77
    %s95 = sphi 0, %s95
    %s97 = sphi 0, %s95
    %s98 = sphi 0, %s97
    %s112 = sphi 0, %s98
    %s116 = sphi 0, %s116
    %s118 = sphi 0, %s116
    %s119 = sphi 0, %s118
    %s133 = sphi 0, %s119
    %s137 = sphi 0, %s137
    %s139 = sphi 0, %s137
    %s140 = sphi 0, %s139
    %s154 = sphi 0, %s140
    %s158 = sphi 0, %s158
    %s160 = sphi 0, %s158
    %s161 = sphi 0, %s160
    %s175 = sphi 0, %s161
    %s179 = sphi 0, %s179
    %s181 = sphi 0, %s179
    %s182 = sphi 0, %s181
    %s196 = sphi 0, %s182
    %s200 = sphi 0, %s200
    %s202 = sphi 0, %s200
    %s203 = sphi 0, %s202
    %s217 = sphi 0, %s203
    %s221 = sphi 0, %s221
    %s223 = sphi 0, %s221
    %s224 = sphi 0, %s223
    %s238 = sphi 0, %s224
    %s242 = sphi 0, %s242
    %s244 = sphi 0, %s242
    %s245 = sphi 0, %s244
    %s259 = sphi 0, %s245
    %s263 = sphi 0, %s263
    %s265 = sphi 0, %s263
    %s266 = sphi 0, %s265
    %s280 = sphi 0, %s266
    %s284 = sphi 0, %s284
    %s286 = sphi 0, %s284
    %s287 = sphi 0, %s286
    %s301 = sphi 0, %s287
    %s307 = sphi 0, %s309
    %s310 = sphi 0, %s307
    %s311 = sphi 0, %s310
    %s327 = sphi 0, %s311
  $region4: #{_lambda_.5} parent=0 // loop_header_branch
    %22 = sbr.rel (%p20) target = $region8
  $region5: #{_lambda_.5} parent=0 // loop_body
    %s24 = ssub.s32 %s19, 1
    %s25 = ssub.s32 %s19, 2
    %s26 = sadd.s32 %s19, 1
    %s27 = ssub.s32 %s19, %s26
    %p28 = scmp.eq.s32.totalorder %s27, 0
    %s30 = sadd.s32 %s29, 1
    %s31 = scalar_select %p28, %s29, %s30
    %p34 = pneg %p28
    %p35 = scmp.eq.s32.totalorder %s19, 1
    %p36 = por %p34, %p35
    %p37 = scmp.ne.s32.totalorder %s29, %s32
    %p38 = scmp.eq.s32.totalorder %s19, 0
    %p39 = por %p37, %p38
    %p40 = scmp.ne.s32.totalorder %s29, %s32
    %p41 = scmp.eq.s32.totalorder %s24, 1
    %p42 = por %p40, %p41
    %p43 = scmp.ne.s32.totalorder %s32, %s33
    %p44 = scmp.eq.s32.totalorder %s24, 0
    %p45 = por %p43, %p44
    %p46 = scmp.ne.s32.totalorder %s32, %s33
    %p47 = scmp.eq.s32.totalorder %s25, 1
    %p48 = por %p46, %p47
    %p50 = scmp.ne.s32.totalorder %s33, %s49
    %p51 = scmp.eq.s32.totalorder %s25, 0
    %p52 = por %p50, %p51
    %s54 = sadd.s32 %s53, 1
    %p57 = scmp.eq.s32.totalorder %s19, 1
    %p58 = scmp.ne.s32.totalorder %s53, %s55
    %p59 = scmp.eq.s32.totalorder %s19, 0
    %p60 = por %p58, %p59
    %p61 = scmp.ne.s32.totalorder %s53, %s55
    %p62 = scmp.eq.s32.totalorder %s24, 1
    %p63 = por %p61, %p62
    %p64 = scmp.ne.s32.totalorder %s55, %s56
    %p65 = scmp.eq.s32.totalorder %s24, 0
    %p66 = por %p64, %p65
    %p67 = scmp.ne.s32.totalorder %s55, %s56
    %p68 = scmp.eq.s32.totalorder %s25, 1
    %p69 = por %p67, %p68
    %p71 = scmp.ne.s32.totalorder %s56, %s70
    %p72 = scmp.eq.s32.totalorder %s25, 0
    %p73 = por %p71, %p72
    %s75 = sadd.s32 %s74, 1
    %p78 = scmp.eq.s32.totalorder %s19, 1
    %p79 = scmp.ne.s32.totalorder %s74, %s76
    %p80 = scmp.eq.s32.totalorder %s19, 0
    %p81 = por %p79, %p80
    %p82 = scmp.ne.s32.totalorder %s74, %s76
    %p83 = scmp.eq.s32.totalorder %s24, 1
    %p84 = por %p82, %p83
    %p85 = scmp.ne.s32.totalorder %s76, %s77
    %p86 = scmp.eq.s32.totalorder %s24, 0
    %p87 = por %p85, %p86
    %p88 = scmp.ne.s32.totalorder %s76, %s77
    %p89 = scmp.eq.s32.totalorder %s25, 1
    %p90 = por %p88, %p89
    %p92 = scmp.ne.s32.totalorder %s77, %s91
    %p93 = scmp.eq.s32.totalorder %s25, 0
    %p94 = por %p92, %p93
    %s96 = sadd.s32 %s95, 1
    %p99 = scmp.eq.s32.totalorder %s19, 1
    %p100 = scmp.ne.s32.totalorder %s95, %s97
    %p101 = scmp.eq.s32.totalorder %s19, 0
    %p102 = por %p100, %p101
    %p103 = scmp.ne.s32.totalorder %s95, %s97
    %p104 = scmp.eq.s32.totalorder %s24, 1
    %p105 = por %p103, %p104
    %p106 = scmp.ne.s32.totalorder %s97, %s98
    %p107 = scmp.eq.s32.totalorder %s24, 0
    %p108 = por %p106, %p107
    %p109 = scmp.ne.s32.totalorder %s97, %s98
    %p110 = scmp.eq.s32.totalorder %s25, 1
    %p111 = por %p109, %p110
    %p113 = scmp.ne.s32.totalorder %s98, %s112
    %p114 = scmp.eq.s32.totalorder %s25, 0
    %p115 = por %p113, %p114
    %s117 = sadd.s32 %s116, 1
    %p120 = scmp.eq.s32.totalorder %s19, 1
    %p121 = scmp.ne.s32.totalorder %s116, %s118
    %p122 = scmp.eq.s32.totalorder %s19, 0
    %p123 = por %p121, %p122
    %p124 = scmp.ne.s32.totalorder %s116, %s118
    %p125 = scmp.eq.s32.totalorder %s24, 1
    %p126 = por %p124, %p125
    %p127 = scmp.ne.s32.totalorder %s118, %s119
    %p128 = scmp.eq.s32.totalorder %s24, 0
    %p129 = por %p127, %p128
    %p130 = scmp.ne.s32.totalorder %s118, %s119
    %p131 = scmp.eq.s32.totalorder %s25, 1
    %p132 = por %p130, %p131
    %p134 = scmp.ne.s32.totalorder %s119, %s133
    %p135 = scmp.eq.s32.totalorder %s25, 0
    %p136 = por %p134, %p135
    %s138 = sadd.s32 %s137, 1
    %p141 = scmp.eq.s32.totalorder %s19, 1
    %p142 = scmp.ne.s32.totalorder %s137, %s139
    %p143 = scmp.eq.s32.totalorder %s19, 0
    %p144 = por %p142, %p143
    %p145 = scmp.ne.s32.totalorder %s137, %s139
    %p146 = scmp.eq.s32.totalorder %s24, 1
    %p147 = por %p145, %p146
    %p148 = scmp.ne.s32.totalorder %s139, %s140
    %p149 = scmp.eq.s32.totalorder %s24, 0
    %p150 = por %p148, %p149
    %p151 = scmp.ne.s32.totalorder %s139, %s140
    %p152 = scmp.eq.s32.totalorder %s25, 1
    %p153 = por %p151, %p152
    %p155 = scmp.ne.s32.totalorder %s140, %s154
    %p156 = scmp.eq.s32.totalorder %s25, 0
    %p157 = por %p155, %p156
    %s159 = sadd.s32 %s158, 1
    %p162 = scmp.eq.s32.totalorder %s19, 1
    %p163 = scmp.ne.s32.totalorder %s158, %s160
    %p164 = scmp.eq.s32.totalorder %s19, 0
    %p165 = por %p163, %p164
    %p166 = scmp.ne.s32.totalorder %s158, %s160
    %p167 = scmp.eq.s32.totalorder %s24, 1
    %p168 = por %p166, %p167
    %p169 = scmp.ne.s32.totalorder %s160, %s161
    %p170 = scmp.eq.s32.totalorder %s24, 0
    %p171 = por %p169, %p170
    %p172 = scmp.ne.s32.totalorder %s160, %s161
    %p173 = scmp.eq.s32.totalorder %s25, 1
    %p174 = por %p172, %p173
    %p176 = scmp.ne.s32.totalorder %s161, %s175
    %p177 = scmp.eq.s32.totalorder %s25, 0
    %p178 = por %p176, %p177
    %s180 = sadd.s32 %s179, 1
    %p183 = scmp.eq.s32.totalorder %s19, 1
    %p184 = scmp.ne.s32.totalorder %s179, %s181
    %p185 = scmp.eq.s32.totalorder %s19, 0
    %p186 = por %p184, %p185
    %p187 = scmp.ne.s32.totalorder %s179, %s181
    %p188 = scmp.eq.s32.totalorder %s24, 1
    %p189 = por %p187, %p188
    %p190 = scmp.ne.s32.totalorder %s181, %s182
    %p191 = scmp.eq.s32.totalorder %s24, 0
    %p192 = por %p190, %p191
    %p193 = scmp.ne.s32.totalorder %s181, %s182
    %p194 = scmp.eq.s32.totalorder %s25, 1
    %p195 = por %p193, %p194
    %p197 = scmp.ne.s32.totalorder %s182, %s196
    %p198 = scmp.eq.s32.totalorder %s25, 0
    %p199 = por %p197, %p198
    %s201 = sadd.s32 %s200, 1
    %p204 = scmp.eq.s32.totalorder %s19, 1
    %p205 = scmp.ne.s32.totalorder %s200, %s202
    %p206 = scmp.eq.s32.totalorder %s19, 0
    %p207 = por %p205, %p206
    %p208 = scmp.ne.s32.totalorder %s200, %s202
    %p209 = scmp.eq.s32.totalorder %s24, 1
    %p210 = por %p208, %p209
    %p211 = scmp.ne.s32.totalorder %s202, %s203
    %p212 = scmp.eq.s32.totalorder %s24, 0
    %p213 = por %p211, %p212
    %p214 = scmp.ne.s32.totalorder %s202, %s203
    %p215 = scmp.eq.s32.totalorder %s25, 1
    %p216 = por %p214, %p215
    %p218 = scmp.ne.s32.totalorder %s203, %s217
    %p219 = scmp.eq.s32.totalorder %s25, 0
    %p220 = por %p218, %p219
    %s222 = sadd.s32 %s221, 1
    %p225 = scmp.eq.s32.totalorder %s19, 1
    %p226 = scmp.ne.s32.totalorder %s221, %s223
    %p227 = scmp.eq.s32.totalorder %s19, 0
    %p228 = por %p226, %p227
    %p229 = scmp.ne.s32.totalorder %s221, %s223
    %p230 = scmp.eq.s32.totalorder %s24, 1
    %p231 = por %p229, %p230
    %p232 = scmp.ne.s32.totalorder %s223, %s224
    %p233 = scmp.eq.s32.totalorder %s24, 0
    %p234 = por %p232, %p233
    %p235 = scmp.ne.s32.totalorder %s223, %s224
    %p236 = scmp.eq.s32.totalorder %s25, 1
    %p237 = por %p235, %p236
    %p239 = scmp.ne.s32.totalorder %s224, %s238
    %p240 = scmp.eq.s32.totalorder %s25, 0
    %p241 = por %p239, %p240
    %s243 = sadd.s32 %s242, 1
    %p246 = scmp.eq.s32.totalorder %s19, 1
    %p247 = scmp.ne.s32.totalorder %s242, %s244
    %p248 = scmp.eq.s32.totalorder %s19, 0
    %p249 = por %p247, %p248
    %p250 = scmp.ne.s32.totalorder %s242, %s244
    %p251 = scmp.eq.s32.totalorder %s24, 1
    %p252 = por %p250, %p251
    %p253 = scmp.ne.s32.totalorder %s244, %s245
    %p254 = scmp.eq.s32.totalorder %s24, 0
    %p255 = por %p253, %p254
    %p256 = scmp.ne.s32.totalorder %s244, %s245
    %p257 = scmp.eq.s32.totalorder %s25, 1
    %p258 = por %p256, %p257
    %p260 = scmp.ne.s32.totalorder %s245, %s259
    %p261 = scmp.eq.s32.totalorder %s25, 0
    %p262 = por %p260, %p261
    %s264 = sadd.s32 %s263, 1
    %p267 = scmp.eq.s32.totalorder %s19, 1
    %p268 = scmp.ne.s32.totalorder %s263, %s265
    %p269 = scmp.eq.s32.totalorder %s19, 0
    %p270 = por %p268, %p269
    %p271 = scmp.ne.s32.totalorder %s263, %s265
    %p272 = scmp.eq.s32.totalorder %s24, 1
    %p273 = por %p271, %p272
    %p274 = scmp.ne.s32.totalorder %s265, %s266
    %p275 = scmp.eq.s32.totalorder %s24, 0
    %p276 = por %p274, %p275
    %p277 = scmp.ne.s32.totalorder %s265, %s266
    %p278 = scmp.eq.s32.totalorder %s25, 1
    %p279 = por %p277, %p278
    %p281 = scmp.ne.s32.totalorder %s266, %s280
    %p282 = scmp.eq.s32.totalorder %s25, 0
    %p283 = por %p281, %p282
    %s285 = sadd.s32 %s284, 1
    %p288 = scmp.eq.s32.totalorder %s19, 1
    %p289 = scmp.ne.s32.totalorder %s284, %s286
    %p290 = scmp.eq.s32.totalorder %s19, 0
    %p291 = por %p289, %p290
    %p292 = scmp.ne.s32.totalorder %s284, %s286
    %p293 = scmp.eq.s32.totalorder %s24, 1
    %p294 = por %p292, %p293
    %p295 = scmp.ne.s32.totalorder %s286, %s287
    %p296 = scmp.eq.s32.totalorder %s24, 0
    %p297 = por %p295, %p296
    %p298 = scmp.ne.s32.totalorder %s286, %s287
    %p299 = scmp.eq.s32.totalorder %s25, 1
    %p300 = por %p298, %p299
    %p302 = scmp.ne.s32.totalorder %s287, %s301
    %p303 = scmp.eq.s32.totalorder %s25, 0
    %p304 = por %p302, %p303
    %s305 = ssub.s32 %s19, %s26
    %p306 = scmp.eq.s32.totalorder %s305, 0
    %s308 = sadd.s32 %s307, 1
    %s309 = scalar_select %p306, %s307, %s308
    %p312 = pneg %p306
    %p313 = scmp.eq.s32.totalorder %s19, 1
    %p314 = por %p312, %p313
    %p315 = scmp.ne.s32.totalorder %s307, %s310
    %p316 = scmp.eq.s32.totalorder %s19, 0
    %p317 = por %p315, %p316
    %p318 = scmp.ne.s32.totalorder %s307, %s310
    %p319 = scmp.eq.s32.totalorder %s24, 1
    %p320 = por %p318, %p319
    %p321 = scmp.ne.s32.totalorder %s310, %s311
    %p322 = scmp.eq.s32.totalorder %s24, 0
    %p323 = por %p321, %p322
    %p324 = scmp.ne.s32.totalorder %s310, %s311
    %p325 = scmp.eq.s32.totalorder %s25, 1
    %p326 = por %p324, %p325
    %p328 = scmp.ne.s32.totalorder %s311, %s327
    %p329 = scmp.eq.s32.totalorder %s25, 0
    %p330 = por %p328, %p329
    %p331 = scmp.le.s32.totalorder 1, %s19
    %p332 = scmp.lt.s32.totalorder %s19, 3
    %p333 = pnand %p331, %p332
    %p334 = pneg %p333
    // Predicated region
    $region9: #{_lambda_.5} parent=5 // pred_check
      _
    $region10: #{_lambda_.5} parent=5 // pred_check_branch
      %336 = sbr.rel (%p333) target = $region12
    $region11: #{_lambda_.5} parent=5 // pred_region
      %s337 = ssub.s32 %s19, 1
      // Predicated region
      $region13: #{_lambda_.5} parent=11 // pred_check
        %p338 = pneg %p66
      $region14: #{_lambda_.5} parent=11 // pred_check_branch
        %340 = sbr.rel (%p338) target = $region16
      $region15: #{_lambda_.5} parent=11 // pred_region
        _
      $region16: #{_lambda_.5} parent=11 // pred_fallthru
        _
      // Predicated region
      $region17: #{_lambda_.5} parent=11 // pred_check
        %p341 = pneg %p87
      $region18: #{_lambda_.5} parent=11 // pred_check_branch
        %343 = sbr.rel (%p341) target = $region20
      $region19: #{_lambda_.5} parent=11 // pred_region
        _
      $region20: #{_lambda_.5} parent=11 // pred_fallthru
        _
      // Predicated region
      $region21: #{_lambda_.5} parent=11 // pred_check
        %p344 = pneg %p108
      $region22: #{_lambda_.5} parent=11 // pred_check_branch
        %346 = sbr.rel (%p344) target = $region24
      $region23: #{_lambda_.5} parent=11 // pred_region
        _
      $region24: #{_lambda_.5} parent=11 // pred_fallthru
        _
      // Predicated region
      $region25: #{_lambda_.5} parent=11 // pred_check
        %p347 = pneg %p129
      $region26: #{_lambda_.5} parent=11 // pred_check_branch
        %349 = sbr.rel (%p347) target = $region28
      $region27: #{_lambda_.5} parent=11 // pred_region
        _
      $region28: #{_lambda_.5} parent=11 // pred_fallthru
        _
      // Predicated region
      $region29: #{_lambda_.5} parent=11 // pred_check
        %p350 = pneg %p150
      $region30: #{_lambda_.5} parent=11 // pred_check_branch
        %352 = sbr.rel (%p350) target = $region32
      $region31: #{_lambda_.5} parent=11 // pred_region
        _
      $region32: #{_lambda_.5} parent=11 // pred_fallthru
        _
      // Predicated region
      $region33: #{_lambda_.5} parent=11 // pred_check
        %p353 = pneg %p171
      $region34: #{_lambda_.5} parent=11 // pred_check_branch
        %355 = sbr.rel (%p353) target = $region36
      $region35: #{_lambda_.5} parent=11 // pred_region
        _
      $region36: #{_lambda_.5} parent=11 // pred_fallthru
        _
      // Predicated region
      $region37: #{_lambda_.5} parent=11 // pred_check
        %p356 = pneg %p192
      $region38: #{_lambda_.5} parent=11 // pred_check_branch
        %358 = sbr.rel (%p356) target = $region40
      $region39: #{_lambda_.5} parent=11 // pred_region
        _
      $region40: #{_lambda_.5} parent=11 // pred_fallthru
        _
      // Predicated region
      $region41: #{_lambda_.5} parent=11 // pred_check
        %p359 = pneg %p213
      $region42: #{_lambda_.5} parent=11 // pred_check_branch
        %361 = sbr.rel (%p359) target = $region44
      $region43: #{_lambda_.5} parent=11 // pred_region
        _
      $region44: #{_lambda_.5} parent=11 // pred_fallthru
        _
      // Predicated region
      $region45: #{_lambda_.5} parent=11 // pred_check
        %p362 = pneg %p234
      $region46: #{_lambda_.5} parent=11 // pred_check_branch
        %364 = sbr.rel (%p362) target = $region48
      $region47: #{_lambda_.5} parent=11 // pred_region
        _
      $region48: #{_lambda_.5} parent=11 // pred_fallthru
        _
      // Predicated region
      $region49: #{_lambda_.5} parent=11 // pred_check
        %p365 = pneg %p255
      $region50: #{_lambda_.5} parent=11 // pred_check_branch
        %367 = sbr.rel (%p365) target = $region52
      $region51: #{_lambda_.5} parent=11 // pred_region
        _
      $region52: #{_lambda_.5} parent=11 // pred_fallthru
        _
      // Predicated region
      $region53: #{_lambda_.5} parent=11 // pred_check
        %p368 = pneg %p276
      $region54: #{_lambda_.5} parent=11 // pred_check_branch
        %370 = sbr.rel (%p368) target = $region56
      $region55: #{_lambda_.5} parent=11 // pred_region
        _
      $region56: #{_lambda_.5} parent=11 // pred_fallthru
        _
      // Predicated region
      $region57: #{_lambda_.5} parent=11 // pred_check
        %p371 = pneg %p297
      $region58: #{_lambda_.5} parent=11 // pred_check_branch
        %373 = sbr.rel (%p371) target = $region60
      $region59: #{_lambda_.5} parent=11 // pred_region
        _
      $region60: #{_lambda_.5} parent=11 // pred_fallthru
        _
    $region12: #{_lambda_.5} parent=5 // pred_fallthru
      _
    %p374 = scmp.lt.s32.totalorder %s19, 2
    // Predicated region
    $region61: #{_lambda_.5} parent=5 // pred_check
      %p375 = pneg %p374
    $region62: #{_lambda_.5} parent=5 // pred_check_branch
      %377 = sbr.rel (%p375) target = $region64
    $region63: #{_lambda_.5} parent=5 // pred_region
      // Predicated region
      $region65: #{_lambda_.5} parent=63 // pred_check
        %p378 = pneg %p39
      $region66: #{_lambda_.5} parent=63 // pred_check_branch
        %380 = sbr.rel (%p378) target = $region68
      $region67: #{_lambda_.5} parent=63 // pred_region
        %p381 = scmp.lt.s32.totalorder %s19, 1
        %s382 = scalar_select %p381, %s19, 1
        %s383 = smul.addr %s382, 8
        %s384 = smul.addr %s383, 4
        %s385 = scalar_lea.vmem %s0, %s384
      $region68: #{_lambda_.5} parent=63 // pred_fallthru
        _
    $region64: #{_lambda_.5} parent=5 // pred_fallthru
      _
    %p386 = scmp.le.s32.totalorder 1, %s19
    %p387 = scmp.lt.s32.totalorder %s19, 3
    %p388 = pnand %p386, %p387
    %p389 = pneg %p388
    // Predicated region
    $region69: #{_lambda_.5} parent=5 // pred_check
      _
    $region70: #{_lambda_.5} parent=5 // pred_check_branch
      %391 = sbr.rel (%p388) target = $region72
    $region71: #{_lambda_.5} parent=5 // pred_region
      %s392 = ssub.s32 %s19, 1
      %p393 = scmp.lt.s32.totalorder %s24, 1
      %s394 = scalar_select %p393, %s24, 1
      %s395 = smul.addr %s394, 8
      %s396 = smul.addr %s395, 4
      %s397 = scalar_lea.vmem %s0, %s396
      %p398 = pneg %p45
      %p399 = pneg %p42
      %p400 = pneg %p66
      %p401 = pneg %p63
      %p402 = pneg %p87
      %p403 = pneg %p84
      %p404 = pneg %p108
      %p405 = pneg %p105
      %p406 = pneg %p129
      %p407 = pneg %p126
      %p408 = pneg %p150
      %p409 = pneg %p147
      %p410 = pneg %p171
      %p411 = pneg %p168
      %p412 = pneg %p192
      %p413 = pneg %p189
      %p414 = pneg %p213
      %p415 = pneg %p210
      %p416 = pneg %p234
      %p417 = pneg %p231
      %p418 = pneg %p255
      %p419 = pneg %p252
      %p420 = pneg %p276
      %p421 = pneg %p273
      %p422 = pneg %p297
      %p423 = pneg %p294
      %p424 = pneg %p323
      %p425 = pneg %p320
      %p426 = scmp.lt.s32.totalorder %s24, 1
      %s427 = scalar_select %p426, %s24, 1
      %s428 = smul.addr %s427, 8
      %s429 = smul.addr %s428, 4
      %s430 = scalar_lea.vmem %s13, %s429
      %p431 = scmp.lt.s32.totalorder %s24, 1
      %s432 = scalar_select %p431, %s24, 1
      %s433 = smul.addr %s432, 8
      %s434 = smul.addr %s433, 4
      %s435 = scalar_lea.vmem %s0, %s434
      %p436 = scmp.lt.s32.totalorder %s24, 1
      %s437 = scalar_select %p436, %s24, 1
      %s438 = smul.addr %s437, 8
      %s439 = smul.addr %s438, 4
      %s440 = scalar_lea.vmem %s13, %s439
      %v442 = vld [vmem:[%s435] sm:$0xf]
      %v443 = vld [vmem:[%s435 + $0x4] sm:$0xf]
      %v444 = vld [vmem:[%s435 + $0x8] sm:$0xf]
      %v445 = vld [vmem:[%s435 + $0xc] sm:$0xf]
      %v446 = vld [vmem:[%s435 + $0x10] sm:$0xf]
      %v447 = vld [vmem:[%s435 + $0x14] sm:$0xf]
      %v448 = vld [vmem:[%s435 + $0x18] sm:$0xf]
      %v449 = vld [vmem:[%s435 + $0x1c] sm:$0xf]
      %v450 = vld [vmem:[%s1] sm:$0xf]
      %v451 = vld [vmem:[%s1 + $0x4] sm:$0xf]
      %v452 = vld [vmem:[%s1 + $0x8] sm:$0xf]
      %v453 = vld [vmem:[%s1 + $0xc] sm:$0xf]
      %v454 = vld [vmem:[%s1 + $0x10] sm:$0xf]
      %v455 = vld [vmem:[%s1 + $0x14] sm:$0xf]
      %v456 = vld [vmem:[%s1 + $0x18] sm:$0xf]
      %v457 = vld [vmem:[%s1 + $0x1c] sm:$0xf]
      %v458 = vld [vmem:[%s1 + $0x20] sm:$0xf]
      %v459 = vld [vmem:[%s1 + $0x24] sm:$0xf]
      %v460 = vld [vmem:[%s1 + $0x28] sm:$0xf]
      %v461 = vld [vmem:[%s1 + $0x2c] sm:$0xf]
      %v462 = vld [vmem:[%s1 + $0x30] sm:$0xf]
      %v463 = vld [vmem:[%s1 + $0x34] sm:$0xf]
      %v464 = vld [vmem:[%s1 + $0x38] sm:$0xf]
      %v465 = vld [vmem:[%s1 + $0x3c] sm:$0xf]
      %v474 = vunpack.c.l.b16 %v442
      %v475 = vunpack.c.l.b16 %v443
      %v476 = vunpack.c.l.b16 %v444
      %v477 = vunpack.c.l.b16 %v445
      %v478 = vunpack.c.l.b16 %v446
      %v479 = vunpack.c.l.b16 %v447
      %v480 = vunpack.c.l.b16 %v448
      %v481 = vunpack.c.l.b16 %v449
      %v482 = vpack.c.b16 %v475, %v474
      %v483 = vpack.c.b16 %v477, %v476
      %v484 = vpack.c.b16 %v479, %v478
      %v485 = vpack.c.b16 %v481, %v480
      %v506 = vunpack.c.l.b16 %v450
      %v507 = vunpack.c.l.b16 %v451
      %v508 = vunpack.c.l.b16 %v452
      %v509 = vunpack.c.l.b16 %v453
      %v510 = vunpack.c.l.b16 %v454
      %v511 = vunpack.c.l.b16 %v455
      %v512 = vunpack.c.l.b16 %v456
      %v513 = vunpack.c.l.b16 %v457
      %v514 = vunpack.c.l.b16 %v458
      %v515 = vunpack.c.l.b16 %v459
      %v516 = vunpack.c.l.b16 %v460
      %v517 = vunpack.c.l.b16 %v461
      %v518 = vunpack.c.l.b16 %v462
      %v519 = vunpack.c.l.b16 %v463
      %v520 = vunpack.c.l.b16 %v464
      %v521 = vunpack.c.l.b16 %v465
      %v522 = vpack.c.b16 %v507, %v506
      %v523 = vpack.c.b16 %v509, %v508
      %v524 = vpack.c.b16 %v511, %v510
      %v525 = vpack.c.b16 %v513, %v512
      %v526 = vpack.c.b16 %v515, %v514
      %v527 = vpack.c.b16 %v517, %v516
      %v528 = vpack.c.b16 %v519, %v518
      %v529 = vpack.c.b16 %v521, %v520
      %538 = vmatprep.subr.bf16.mxu0 0
      %539 = vmatpush1.bf16.msra.mxu0 %v522
      %540 = vmatprep.subr.bf16.mxu0 0
      %541 = vmatpush1.bf16.msra.mxu0 %v523
      %542 = vmatprep.subr.bf16.mxu0 0
      %543 = vmatpush1.bf16.msra.mxu0 %v524
      %544 = vmatprep.subr.bf16.mxu0 0
      %545 = vmatpush1.bf16.msra.mxu0 %v525
      %546 = vmatprep.subr.bf16.mxu0 0
      %547 = vmatpush1.bf16.msra.mxu0 %v526
      %548 = vmatprep.subr.bf16.mxu0 0
      %549 = vmatpush1.bf16.msra.mxu0 %v527
      %550 = vmatprep.subr.bf16.mxu0 0
      %551 = vmatpush1.bf16.msra.mxu0 %v528
      %552 = vmatprep.subr.bf16.mxu0 0
      %553 = vmatpush1.bf16.msra.mxu0 %v529
      %554 = vmatprep.subr.bf16.mxu0 0
      %555 = vmatpush1.bf16.msra.mxu0 0
      %556 = vmatprep.subr.bf16.mxu0 0
      %557 = vmatpush1.bf16.msra.mxu0 0
      %558 = vmatprep.subr.bf16.mxu0 0
      %559 = vmatpush1.bf16.msra.mxu0 0
      %560 = vmatprep.subr.bf16.mxu0 0
      %561 = vmatpush1.bf16.msra.mxu0 0
      %562 = vmatprep.subr.bf16.mxu0 0
      %563 = vmatpush1.bf16.msra.mxu0 0
      %564 = vmatprep.subr.bf16.mxu0 0
      %565 = vmatpush1.bf16.msra.mxu0 0
      %566 = vmatprep.subr.bf16.mxu0 0
      %567 = vmatpush1.bf16.msra.mxu0 0
      %568 = vmatprep.subr.bf16.mxu0 0
      %569 = vmatpush1.bf16.msra.mxu0 0
      %570 = vmatprep.mubr.bf16.mxu0 0
      %571 = vmatmul.mubr.bf16.gmra.mrb[0].mxu0 %v482
      %v572 = vpop.f32.mrb[0].mxu0
      %v573 = vadd.f32 0.0, %v572
      %v574 = vpop.f32.mrb[0].mxu0
      %v575 = vpop.f32.mrb[0].mxu0
      %v576 = vadd.f32 0.0, %v575
      %v577 = vpop.f32.mrb[0].mxu0
      %578 = vmatprep.mubr.bf16.mxu0 0
      %579 = vmatmul.mubr.bf16.gmra.mrb[0].mxu0 %v483
      %v580 = vpop.f32.mrb[0].mxu0
      %v581 = vadd.f32 0.0, %v580
      %v582 = vpop.f32.mrb[0].mxu0
      %v583 = vpop.f32.mrb[0].mxu0
      %v584 = vadd.f32 0.0, %v583
      %v585 = vpop.f32.mrb[0].mxu0
      %586 = vmatprep.mubr.bf16.mxu0 0
      %587 = vmatmul.mubr.bf16.gmra.mrb[0].mxu0 %v484
      %v588 = vpop.f32.mrb[0].mxu0
      %v589 = vadd.f32 0.0, %v588
      %v590 = vpop.f32.mrb[0].mxu0
      %v591 = vpop.f32.mrb[0].mxu0
      %v592 = vadd.f32 0.0, %v591
      %v593 = vpop.f32.mrb[0].mxu0
      %594 = vmatprep.mubr.bf16.mxu0 0
      %595 = vmatmul.mubr.bf16.gmra.mrb[0].mxu0 %v485
      %v596 = vpop.f32.mrb[0].mxu0
      %v597 = vadd.f32 0.0, %v596
      %v598 = vpop.f32.mrb[0].mxu0
      %v599 = vpop.f32.mrb[0].mxu0
      %v600 = vadd.f32 0.0, %v599
      %v601 = vpop.f32.mrb[0].mxu0
      %602 = vdwg.mxu0
      %v603 = vld [vmem:[%s2] sm:$0x1]
      %v605 = vlaneseq
      %v606 = vshrl.u32 %v605, 7
      %v607 = vsub.s32 0, %v606
      %v608 = vrot.slane %v603, %v607
      %v610 = vmul.f32 %v573, %v608
      %v611 = vmul.f32 %v576, %v608
      %v612 = vmul.f32 %v581, %v608
      %v613 = vmul.f32 %v584, %v608
      %v614 = vmul.f32 %v589, %v608
      %v615 = vmul.f32 %v592, %v608
      %v616 = vmul.f32 %v597, %v608
      %v617 = vmul.f32 %v600, %v608
      %v618 = vld [vmem:[%s3] sm:$0x1]
      %v620 = vlaneseq
      %v621 = vshrl.u32 %v620, 7
      %v622 = vsub.s32 0, %v621
      %v623 = vrot.slane %v618, %v622
      %v625 = vadd.f32 %v610, %v623
      %v626 = vadd.f32 %v611, %v623
      %v627 = vadd.f32 %v612, %v623
      %v628 = vadd.f32 %v613, %v623
      %v629 = vadd.f32 %v614, %v623
      %v630 = vadd.f32 %v615, %v623
      %v631 = vadd.f32 %v616, %v623
      %v632 = vadd.f32 %v617, %v623
      %v633 = vmax.f32 %v625, 0.0
      %v634 = vmax.f32 %v626, 0.0
      %v635 = vmax.f32 %v627, 0.0
      %v636 = vmax.f32 %v628, 0.0
      %v637 = vmax.f32 %v629, 0.0
      %v638 = vmax.f32 %v630, 0.0
      %v639 = vmax.f32 %v631, 0.0
      %v640 = vmax.f32 %v632, 0.0
      %v649 = vrot.slane 0.0, 7
      %v650 = vrot.slane %v633, 7
      %v651 = vrot.slane %v634, 7
      %v652 = vrot.slane %v635, 7
      %v653 = vrot.slane %v636, 7
      %v654 = vrot.slane %v637, 7
      %v655 = vrot.slane %v638, 7
      %v656 = vrot.slane %v639, 7
      %vm665 = vcmask 1040384
      %v666 = vsel %vm665, 0.0, %v649
      %v667 = vsel %vm665, 0.0, %v650
      %v668 = vsel %vm665, 0.0, %v651
      %v669 = vsel %vm665, 0.0, %v652
      %v670 = vsel %vm665, 0.0, %v653
      %v671 = vsel %vm665, 0.0, %v654
      %v672 = vsel %vm665, 0.0, %v655
      %v673 = vsel %vm665, 0.0, %v656
      %v674 = vpack.c.bf16 %v667, %v666
      %v675 = vpack.c.bf16 %v669, %v668
      %v676 = vpack.c.bf16 %v671, %v670
      %v677 = vpack.c.bf16 %v673, %v672
      %v678 = vpack.c.bf16 %v633, 0.0
      %v679 = vpack.c.bf16 %v635, %v634
      %v680 = vpack.c.bf16 %v637, %v636
      %v681 = vpack.c.bf16 %v639, %v638
      %v682 = vrot.slane 0.0, 1
      %v683 = vrot.slane %v633, 1
      %v684 = vrot.slane %v634, 1
      %v685 = vrot.slane %v635, 1
      %v686 = vrot.slane %v636, 1
      %v687 = vrot.slane %v637, 1
      %v688 = vrot.slane %v638, 1
      %v689 = vrot.slane %v639, 1
      %vm698 = vcmask 1046528
      %v699 = vsel %vm698, %v682, 0.0
      %v700 = vsel %vm698, %v683, 0.0
      %v701 = vsel %vm698, %v684, 0.0
      %v702 = vsel %vm698, %v685, 0.0
      %v703 = vsel %vm698, %v686, 0.0
      %v704 = vsel %vm698, %v687, 0.0
      %v705 = vsel %vm698, %v688, 0.0
      %v706 = vsel %vm698, %v689, 0.0
      %v707 = vpack.c.bf16 %v700, %v699
      %v708 = vpack.c.bf16 %v702, %v701
      %v709 = vpack.c.bf16 %v704, %v703
      %v710 = vpack.c.bf16 %v706, %v705
      %v712 = vrot.slane %v640, 7
      %v714 = vsel %vm665, 0.0, %v712
      %v715 = vpack.c.bf16 %v668, %v667
      %v716 = vpack.c.bf16 %v670, %v669
      %v717 = vpack.c.bf16 %v672, %v671
      %v718 = vpack.c.bf16 %v714, %v673
      %v719 = vpack.c.bf16 %v634, %v633
      %v720 = vpack.c.bf16 %v636, %v635
      %v721 = vpack.c.bf16 %v638, %v637
      %v722 = vpack.c.bf16 %v640, %v639
      %v723 = vrot.slane %v640, 1
      %v725 = vsel %vm698, %v723, 0.0
      %v726 = vpack.c.bf16 %v701, %v700
      %v727 = vpack.c.bf16 %v703, %v702
      %v728 = vpack.c.bf16 %v705, %v704
      %v729 = vpack.c.bf16 %v725, %v706
      %v730 = vpack.c.bf16 %v666, %v714
      %v731 = vpack.c.bf16 0.0, %v640
      %v732 = vpack.c.bf16 %v699, %v725
      %v733 = vld [vmem:[%s4] sm:$0xf]
      %v734 = vld [vmem:[%s4 + $0x4] sm:$0xf]
      %v735 = vld [vmem:[%s4 + $0x8] sm:$0xf]
      %v736 = vld [vmem:[%s4 + $0xc] sm:$0xf]
      %v737 = vld [vmem:[%s4 + $0x10] sm:$0xf]
      %v738 = vld [vmem:[%s4 + $0x14] sm:$0xf]
      %v739 = vld [vmem:[%s4 + $0x18] sm:$0xf]
      %v740 = vld [vmem:[%s4 + $0x1c] sm:$0xf]
      %v741 = vld [vmem:[%s4 + $0x20] sm:$0xf]
      %v742 = vld [vmem:[%s4 + $0x24] sm:$0xf]
      %v743 = vld [vmem:[%s4 + $0x28] sm:$0xf]
      %v744 = vld [vmem:[%s4 + $0x2c] sm:$0xf]
      %v745 = vld [vmem:[%s4 + $0x30] sm:$0xf]
      %v746 = vld [vmem:[%s4 + $0x34] sm:$0xf]
      %v747 = vld [vmem:[%s4 + $0x38] sm:$0xf]
      %v748 = vld [vmem:[%s4 + $0x3c] sm:$0xf]
      %v749 = vld [vmem:[%s4 + $0x40] sm:$0xf]
      %v750 = vld [vmem:[%s4 + $0x44] sm:$0xf]
      %v751 = vld [vmem:[%s4 + $0x48] sm:$0xf]
      %v752 = vld [vmem:[%s4 + $0x4c] sm:$0xf]
      %v753 = vld [vmem:[%s4 + $0x50] sm:$0xf]
      %v754 = vld [vmem:[%s4 + $0x54] sm:$0xf]
      %v755 = vld [vmem:[%s4 + $0x58] sm:$0xf]
      %v756 = vld [vmem:[%s4 + $0x5c] sm:$0xf]
      %v757 = vld [vmem:[%s4 + $0x60] sm:$0xf]
      %v758 = vld [vmem:[%s4 + $0x64] sm:$0xf]
      %v759 = vld [vmem:[%s4 + $0x68] sm:$0xf]
      %v760 = vld [vmem:[%s4 + $0x6c] sm:$0xf]
      %v761 = vld [vmem:[%s4 + $0x70] sm:$0xf]
      %v762 = vld [vmem:[%s4 + $0x74] sm:$0xf]
      %v763 = vld [vmem:[%s4 + $0x78] sm:$0xf]
      %v764 = vld [vmem:[%s4 + $0x7c] sm:$0xf]
      %v765 = vld [vmem:[%s4 + $0x80] sm:$0xf]
      %v766 = vld [vmem:[%s4 + $0x84] sm:$0xf]
      %v767 = vld [vmem:[%s4 + $0x88] sm:$0xf]
      %v768 = vld [vmem:[%s4 + $0x8c] sm:$0xf]
      %v769 = vld [vmem:[%s4 + $0x90] sm:$0xf]
      %v770 = vld [vmem:[%s4 + $0x94] sm:$0xf]
      %v771 = vld [vmem:[%s4 + $0x98] sm:$0xf]
      %v772 = vld [vmem:[%s4 + $0x9c] sm:$0xf]
      %v773 = vld [vmem:[%s4 + $0xa0] sm:$0xf]
      %v774 = vld [vmem:[%s4 + $0xa4] sm:$0xf]
      %v775 = vld [vmem:[%s4 + $0xa8] sm:$0xf]
      %v776 = vld [vmem:[%s4 + $0xac] sm:$0xf]
      %v777 = vld [vmem:[%s4 + $0xb0] sm:$0xf]
      %v778 = vld [vmem:[%s4 + $0xb4] sm:$0xf]
      %v779 = vld [vmem:[%s4 + $0xb8] sm:$0xf]
      %v780 = vld [vmem:[%s4 + $0xbc] sm:$0xf]
      %v781 = vld [vmem:[%s4 + $0xc0] sm:$0xf]
      %v782 = vld [vmem:[%s4 + $0xc4] sm:$0xf]
      %v783 = vld [vmem:[%s4 + $0xc8] sm:$0xf]
      %v784 = vld [vmem:[%s4 + $0xcc] sm:$0xf]
      %v785 = vld [vmem:[%s4 + $0xd0] sm:$0xf]
      %v786 = vld [vmem:[%s4 + $0xd4] sm:$0xf]
      %v787 = vld [vmem:[%s4 + $0xd8] sm:$0xf]
      %v788 = vld [vmem:[%s4 + $0xdc] sm:$0xf]
      %v789 = vld [vmem:[%s4 + $0xe0] sm:$0xf]
      %v790 = vld [vmem:[%s4 + $0xe4] sm:$0xf]
      %v791 = vld [vmem:[%s4 + $0xe8] sm:$0xf]
      %v792 = vld [vmem:[%s4 + $0xec] sm:$0xf]
      %v793 = vld [vmem:[%s4 + $0xf0] sm:$0xf]
      %v794 = vld [vmem:[%s4 + $0xf4] sm:$0xf]
      %v795 = vld [vmem:[%s4 + $0xf8] sm:$0xf]
      %v796 = vld [vmem:[%s4 + $0xfc] sm:$0xf]
      %v797 = vld [vmem:[%s4 + $0x100] sm:$0xf]
      %v798 = vld [vmem:[%s4 + $0x104] sm:$0xf]
      %v799 = vld [vmem:[%s4 + $0x108] sm:$0xf]
      %v800 = vld [vmem:[%s4 + $0x10c] sm:$0xf]
      %v801 = vld [vmem:[%s4 + $0x110] sm:$0xf]
      %v802 = vld [vmem:[%s4 + $0x114] sm:$0xf]
      %v803 = vld [vmem:[%s4 + $0x118] sm:$0xf]
      %v804 = vld [vmem:[%s4 + $0x11c] sm:$0xf]
      %v805 = vld [vmem:[%s4 + $0x120] sm:$0xf]
      %v806 = vld [vmem:[%s4 + $0x124] sm:$0xf]
      %v807 = vld [vmem:[%s4 + $0x128] sm:$0xf]
      %v808 = vld [vmem:[%s4 + $0x12c] sm:$0xf]
      %v809 = vld [vmem:[%s4 + $0x130] sm:$0xf]
      %v810 = vld [vmem:[%s4 + $0x134] sm:$0xf]
      %v811 = vld [vmem:[%s4 + $0x138] sm:$0xf]
      %v812 = vld [vmem:[%s4 + $0x13c] sm:$0xf]
      %v813 = vld [vmem:[%s4 + $0x140] sm:$0xf]
      %v814 = vld [vmem:[%s4 + $0x144] sm:$0xf]
      %v815 = vld [vmem:[%s4 + $0x148] sm:$0xf]
      %v816 = vld [vmem:[%s4 + $0x14c] sm:$0xf]
      %v817 = vld [vmem:[%s4 + $0x150] sm:$0xf]
      %v818 = vld [vmem:[%s4 + $0x154] sm:$0xf]
      %v819 = vld [vmem:[%s4 + $0x158] sm:$0xf]
      %v820 = vld [vmem:[%s4 + $0x15c] sm:$0xf]
      %v821 = vld [vmem:[%s4 + $0x160] sm:$0xf]
      %v822 = vld [vmem:[%s4 + $0x164] sm:$0xf]
      %v823 = vld [vmem:[%s4 + $0x168] sm:$0xf]
      %v824 = vld [vmem:[%s4 + $0x16c] sm:$0xf]
      %v825 = vld [vmem:[%s4 + $0x170] sm:$0xf]
      %v826 = vld [vmem:[%s4 + $0x174] sm:$0xf]
      %v827 = vld [vmem:[%s4 + $0x178] sm:$0xf]
      %v828 = vld [vmem:[%s4 + $0x17c] sm:$0xf]
      %v829 = vld [vmem:[%s4 + $0x180] sm:$0xf]
      %v830 = vld [vmem:[%s4 + $0x184] sm:$0xf]
      %v831 = vld [vmem:[%s4 + $0x188] sm:$0xf]
      %v832 = vld [vmem:[%s4 + $0x18c] sm:$0xf]
      %v833 = vld [vmem:[%s4 + $0x190] sm:$0xf]
      %v834 = vld [vmem:[%s4 + $0x194] sm:$0xf]
      %v835 = vld [vmem:[%s4 + $0x198] sm:$0xf]
      %v836 = vld [vmem:[%s4 + $0x19c] sm:$0xf]
      %v837 = vld [vmem:[%s4 + $0x1a0] sm:$0xf]
      %v838 = vld [vmem:[%s4 + $0x1a4] sm:$0xf]
      %v839 = vld [vmem:[%s4 + $0x1a8] sm:$0xf]
      %v840 = vld [vmem:[%s4 + $0x1ac] sm:$0xf]
      %v841 = vld [vmem:[%s4 + $0x1b0] sm:$0xf]
      %v842 = vld [vmem:[%s4 + $0x1b4] sm:$0xf]
      %v843 = vld [vmem:[%s4 + $0x1b8] sm:$0xf]
      %v844 = vld [vmem:[%s4 + $0x1bc] sm:$0xf]
      %v845 = vld [vmem:[%s4 + $0x1c0] sm:$0xf]
      %v846 = vld [vmem:[%s4 + $0x1c4] sm:$0xf]
      %v847 = vld [vmem:[%s4 + $0x1c8] sm:$0xf]
      %v848 = vld [vmem:[%s4 + $0x1cc] sm:$0xf]
      %v849 = vld [vmem:[%s4 + $0x1d0] sm:$0xf]
      %v850 = vld [vmem:[%s4 + $0x1d4] sm:$0xf]
      %v851 = vld [vmem:[%s4 + $0x1d8] sm:$0xf]
      %v852 = vld [vmem:[%s4 + $0x1dc] sm:$0xf]
      %v853 = vld [vmem:[%s4 + $0x1e0] sm:$0xf]
      %v854 = vld [vmem:[%s4 + $0x1e4] sm:$0xf]
      %v855 = vld [vmem:[%s4 + $0x1e8] sm:$0xf]
      %v856 = vld [vmem:[%s4 + $0x1ec] sm:$0xf]
      %v857 = vld [vmem:[%s4 + $0x1f0] sm:$0xf]
      %v858 = vld [vmem:[%s4 + $0x1f4] sm:$0xf]
      %v859 = vld [vmem:[%s4 + $0x1f8] sm:$0xf]
      %v860 = vld [vmem:[%s4 + $0x1fc] sm:$0xf]
      %v861 = vld [vmem:[%s4 + $0x200] sm:$0xf]
      %v862 = vld [vmem:[%s4 + $0x204] sm:$0xf]
      %v863 = vld [vmem:[%s4 + $0x208] sm:$0xf]
      %v864 = vld [vmem:[%s4 + $0x20c] sm:$0xf]
      %v865 = vld [vmem:[%s4 + $0x210] sm:$0xf]
      %v866 = vld [vmem:[%s4 + $0x214] sm:$0xf]
      %v867 = vld [vmem:[%s4 + $0x218] sm:$0xf]
      %v868 = vld [vmem:[%s4 + $0x21c] sm:$0xf]
      %v869 = vld [vmem:[%s4 + $0x220] sm:$0xf]
      %v870 = vld [vmem:[%s4 + $0x224] sm:$0xf]
      %v871 = vld [vmem:[%s4 + $0x228] sm:$0xf]
      %v872 = vld [vmem:[%s4 + $0x22c] sm:$0xf]
      %v873 = vld [vmem:[%s4 + $0x230] sm:$0xf]
      %v874 = vld [vmem:[%s4 + $0x234] sm:$0xf]
      %v875 = vld [vmem:[%s4 + $0x238] sm:$0xf]
      %v876 = vld [vmem:[%s4 + $0x23c] sm:$0xf]
      %v1021 = vunpack.c.l.b16 %v733
      %v1022 = vunpack.c.l.b16 %v734
      %v1023 = vunpack.c.l.b16 %v735
      %v1024 = vunpack.c.l.b16 %v736
      %v1025 = vunpack.c.l.b16 %v737
      %v1026 = vunpack.c.l.b16 %v738
      %v1027 = vunpack.c.l.b16 %v739
      %v1028 = vunpack.c.l.b16 %v740
      %v1029 = vunpack.c.l.b16 %v741
      %v1030 = vunpack.c.l.b16 %v742
      %v1031 = vunpack.c.l.b16 %v743
      %v1032 = vunpack.c.l.b16 %v744
      %v1033 = vunpack.c.l.b16 %v745
      %v1034 = vunpack.c.l.b16 %v746
      %v1035 = vunpack.c.l.b16 %v747
      %v1036 = vunpack.c.l.b16 %v748
      %v1037 = vunpack.c.l.b16 %v749
      %v1038 = vunpack.c.l.b16 %v750
      %v1039 = vunpack.c.l.b16 %v751
      %v1040 = vunpack.c.l.b16 %v752
      %v1041 = vunpack.c.l.b16 %v753
      %v1042 = vunpack.c.l.b16 %v754
      %v1043 = vunpack.c.l.b16 %v755
      %v1044 = vunpack.c.l.b16 %v756
      %v1045 = vunpack.c.l.b16 %v757
      %v1046 = vunpack.c.l.b16 %v758
      %v1047 = vunpack.c.l.b16 %v759
      %v1048 = vunpack.c.l.b16 %v760
      %v1049 = vunpack.c.l.b16 %v761
      %v1050 = vunpack.c.l.b16 %v762
      %v1051 = vunpack.c.l.b16 %v763
      %v1052 = vunpack.c.l.b16 %v764
      %v1053 = vunpack.c.l.b16 %v765
      %v1054 = vunpack.c.l.b16 %v766
      %v1055 = vunpack.c.l.b16 %v767
      %v1056 = vunpack.c.l.b16 %v768
      %v1057 = vunpack.c.l.b16 %v769
      %v1058 = vunpack.c.l.b16 %v770
      %v1059 = vunpack.c.l.b16 %v771
      %v1060 = vunpack.c.l.b16 %v772
      %v1061 = vunpack.c.l.b16 %v773
      %v1062 = vunpack.c.l.b16 %v774
      %v1063 = vunpack.c.l.b16 %v775
      %v1064 = vunpack.c.l.b16 %v776
      %v1065 = vunpack.c.l.b16 %v777
      %v1066 = vunpack.c.l.b16 %v778
      %v1067 = vunpack.c.l.b16 %v779
      %v1068 = vunpack.c.l.b16 %v780
      %v1069 = vunpack.c.l.b16 %v781
      %v1070 = vunpack.c.l.b16 %v782
      %v1071 = vunpack.c.l.b16 %v783
      %v1072 = vunpack.c.l.b16 %v784
      %v1073 = vunpack.c.l.b16 %v785
      %v1074 = vunpack.c.l.b16 %v786
      %v1075 = vunpack.c.l.b16 %v787
      %v1076 = vunpack.c.l.b16 %v788
      %v1077 = vunpack.c.l.b16 %v789
      %v1078 = vunpack.c.l.b16 %v790
      %v1079 = vunpack.c.l.b16 %v791
      %v1080 = vunpack.c.l.b16 %v792
      %v1081 = vunpack.c.l.b16 %v793
      %v1082 = vunpack.c.l.b16 %v794
      %v1083 = vunpack.c.l.b16 %v795
      %v1084 = vunpack.c.l.b16 %v796
      %v1085 = vunpack.c.l.b16 %v797
      %v1086 = vunpack.c.l.b16 %v798
      %v1087 = vunpack.c.l.b16 %v799
      %v1088 = vunpack.c.l.b16 %v800
      %v1089 = vunpack.c.l.b16 %v801
      %v1090 = vunpack.c.l.b16 %v802
      %v1091 = vunpack.c.l.b16 %v803
      %v1092 = vunpack.c.l.b16 %v804
      %v1093 = vunpack.c.l.b16 %v805
      %v1094 = vunpack.c.l.b16 %v806
      %v1095 = vunpack.c.l.b16 %v807
      %v1096 = vunpack.c.l.b16 %v808
      %v1097 = vunpack.c.l.b16 %v809
      %v1098 = vunpack.c.l.b16 %v810
      %v1099 = vunpack.c.l.b16 %v811
      %v1100 = vunpack.c.l.b16 %v812
      %v1101 = vunpack.c.l.b16 %v813
      %v1102 = vunpack.c.l.b16 %v814
      %v1103 = vunpack.c.l.b16 %v815
      %v1104 = vunpack.c.l.b16 %v816
      %v1105 = vunpack.c.l.b16 %v817
      %v1106 = vunpack.c.l.b16 %v818
      %v1107 = vunpack.c.l.b16 %v819
      %v1108 = vunpack.c.l.b16 %v820
      %v1109 = vunpack.c.l.b16 %v821
      %v1110 = vunpack.c.l.b16 %v822
      %v1111 = vunpack.c.l.b16 %v823
      %v1112 = vunpack.c.l.b16 %v824
      %v1113 = vunpack.c.l.b16 %v825
      %v1114 = vunpack.c.l.b16 %v826
      %v1115 = vunpack.c.l.b16 %v827
      %v1116 = vunpack.c.l.b16 %v828
      %v1117 = vunpack.c.l.b16 %v829
      %v1118 = vunpack.c.l.b16 %v830
      %v1119 = vunpack.c.l.b16 %v831
      %v1120 = vunpack.c.l.b16 %v832
      %v1121 = vunpack.c.l.b16 %v833
      %v1122 = vunpack.c.l.b16 %v834
      %v1123 = vunpack.c.l.b16 %v835
      %v1124 = vunpack.c.l.b16 %v836
      %v1125 = vunpack.c.l.b16 %v837
      %v1126 = vunpack.c.l.b16 %v838
      %v1127 = vunpack.c.l.b16 %v839
      %v1128 = vunpack.c.l.b16 %v840
      %v1129 = vunpack.c.l.b16 %v841
      %v1130 = vunpack.c.l.b16 %v842
      %v1131 = vunpack.c.l.b16 %v843
      %v1132 = vunpack.c.l.b16 %v844
      %v1133 = vunpack.c.l.b16 %v845
      %v1134 = vunpack.c.l.b16 %v846
      %v1135 = vunpack.c.l.b16 %v847
      %v1136 = vunpack.c.l.b16 %v848
      %v1137 = vunpack.c.l.b16 %v849
      %v1138 = vunpack.c.l.b16 %v850
      %v1139 = vunpack.c.l.b16 %v851
      %v1140 = vunpack.c.l.b16 %v852
      %v1141 = vunpack.c.l.b16 %v853
      %v1142 = vunpack.c.l.b16 %v854
      %v1143 = vunpack.c.l.b16 %v855
      %v1144 = vunpack.c.l.b16 %v856
      %v1145 = vunpack.c.l.b16 %v857
      %v1146 = vunpack.c.l.b16 %v858
      %v1147 = vunpack.c.l.b16 %v859
      %v1148 = vunpack.c.l.b16 %v860
      %v1149 = vunpack.c.l.b16 %v861
      %v1150 = vunpack.c.l.b16 %v862
      %v1151 = vunpack.c.l.b16 %v863
      %v1152 = vunpack.c.l.b16 %v864
      %v1153 = vunpack.c.l.b16 %v865
      %v1154 = vunpack.c.l.b16 %v866
      %v1155 = vunpack.c.l.b16 %v867
      %v1156 = vunpack.c.l.b16 %v868
      %v1157 = vunpack.c.l.b16 %v869
      %v1158 = vunpack.c.l.b16 %v870
      %v1159 = vunpack.c.l.b16 %v871
      %v1160 = vunpack.c.l.b16 %v872
      %v1161 = vunpack.c.l.b16 %v873
      %v1162 = vunpack.c.l.b16 %v874
      %v1163 = vunpack.c.l.b16 %v875
      %v1164 = vunpack.c.l.b16 %v876
      %v1165 = vpack.c.b16 %v1022, %v1021
      %v1166 = vpack.c.b16 %v1024, %v1023
      %v1167 = vpack.c.b16 %v1026, %v1025
      %v1168 = vpack.c.b16 %v1028, %v1027
      %v1169 = vpack.c.b16 %v1030, %v1029
      %v1170 = vpack.c.b16 %v1032, %v1031
      %v1171 = vpack.c.b16 %v1034, %v1033
      %v1172 = vpack.c.b16 %v1036, %v1035
      %v1173 = vpack.c.b16 %v1038, %v1037
      %v1174 = vpack.c.b16 %v1040, %v1039
      %v1175 = vpack.c.b16 %v1042, %v1041
      %v1176 = vpack.c.b16 %v1044, %v1043
      %v1177 = vpack.c.b16 %v1046, %v1045
      %v1178 = vpack.c.b16 %v1048, %v1047
      %v1179 = vpack.c.b16 %v1050, %v1049
      %v1180 = vpack.c.b16 %v1052, %v1051
      %v1181 = vpack.c.b16 %v1054, %v1053
      %v1182 = vpack.c.b16 %v1056, %v1055
      %v1183 = vpack.c.b16 %v1058, %v1057
      %v1184 = vpack.c.b16 %v1060, %v1059
      %v1185 = vpack.c.b16 %v1062, %v1061
      %v1186 = vpack.c.b16 %v1064, %v1063
      %v1187 = vpack.c.b16 %v1066, %v1065
      %v1188 = vpack.c.b16 %v1068, %v1067
      %v1189 = vpack.c.b16 %v1070, %v1069
      %v1190 = vpack.c.b16 %v1072, %v1071
      %v1191 = vpack.c.b16 %v1074, %v1073
      %v1192 = vpack.c.b16 %v1076, %v1075
      %v1193 = vpack.c.b16 %v1078, %v1077
      %v1194 = vpack.c.b16 %v1080, %v1079
      %v1195 = vpack.c.b16 %v1082, %v1081
      %v1196 = vpack.c.b16 %v1084, %v1083
      %v1197 = vpack.c.b16 %v1086, %v1085
      %v1198 = vpack.c.b16 %v1088, %v1087
      %v1199 = vpack.c.b16 %v1090, %v1089
      %v1200 = vpack.c.b16 %v1092, %v1091
      %v1201 = vpack.c.b16 %v1094, %v1093
      %v1202 = vpack.c.b16 %v1096, %v1095
      %v1203 = vpack.c.b16 %v1098, %v1097
      %v1204 = vpack.c.b16 %v1100, %v1099
      %v1205 = vpack.c.b16 %v1102, %v1101
      %v1206 = vpack.c.b16 %v1104, %v1103
      %v1207 = vpack.c.b16 %v1106, %v1105
      %v1208 = vpack.c.b16 %v1108, %v1107
      %v1209 = vpack.c.b16 %v1110, %v1109
      %v1210 = vpack.c.b16 %v1112, %v1111
      %v1211 = vpack.c.b16 %v1114, %v1113
      %v1212 = vpack.c.b16 %v1116, %v1115
      %v1213 = vpack.c.b16 %v1118, %v1117
      %v1214 = vpack.c.b16 %v1120, %v1119
      %v1215 = vpack.c.b16 %v1122, %v1121
      %v1216 = vpack.c.b16 %v1124, %v1123
      %v1217 = vpack.c.b16 %v1126, %v1125
      %v1218 = vpack.c.b16 %v1128, %v1127
      %v1219 = vpack.c.b16 %v1130, %v1129
      %v1220 = vpack.c.b16 %v1132, %v1131
      %v1221 = vpack.c.b16 %v1134, %v1133
      %v1222 = vpack.c.b16 %v1136, %v1135
      %v1223 = vpack.c.b16 %v1138, %v1137
      %v1224 = vpack.c.b16 %v1140, %v1139
      %v1225 = vpack.c.b16 %v1142, %v1141
      %v1226 = vpack.c.b16 %v1144, %v1143
      %v1227 = vpack.c.b16 %v1146, %v1145
      %v1228 = vpack.c.b16 %v1148, %v1147
      %v1229 = vpack.c.b16 %v1150, %v1149
      %v1230 = vpack.c.b16 %v1152, %v1151
      %v1231 = vpack.c.b16 %v1154, %v1153
      %v1232 = vpack.c.b16 %v1156, %v1155
      %v1233 = vpack.c.b16 %v1158, %v1157
      %v1234 = vpack.c.b16 %v1160, %v1159
      %v1235 = vpack.c.b16 %v1162, %v1161
      %v1236 = vpack.c.b16 %v1164, %v1163
      %1309 = vmatprep.subr.bf16.mxu0 0
      %1310 = vmatpush1.bf16.msra.mxu0 %v1165
      %1311 = vmatprep.subr.bf16.mxu0 0
      %1312 = vmatpush1.bf16.msra.mxu0 %v1166
      %1313 = vmatprep.subr.bf16.mxu0 0
      %1314 = vmatpush1.bf16.msra.mxu0 %v1167
      %1315 = vmatprep.subr.bf16.mxu0 0
      %1316 = vmatpush1.bf16.msra.mxu0 %v1168
      %1317 = vmatprep.subr.bf16.mxu0 0
      %1318 = vmatpush1.bf16.msra.mxu0 %v1169
      %1319 = vmatprep.subr.bf16.mxu0 0
      %1320 = vmatpush1.bf16.msra.mxu0 %v1170
      %1321 = vmatprep.subr.bf16.mxu0 0
      %1322 = vmatpush1.bf16.msra.mxu0 %v1171
      %1323 = vmatprep.subr.bf16.mxu0 0
      %1324 = vmatpush1.bf16.msra.mxu0 %v1172
      %1325 = vmatprep.subr.bf16.mxu0 0
      %1326 = vmatpush1.bf16.msra.mxu0 %v1173
      %1327 = vmatprep.subr.bf16.mxu0 0
      %1328 = vmatpush1.bf16.msra.mxu0 %v1174
      %1329 = vmatprep.subr.bf16.mxu0 0
      %1330 = vmatpush1.bf16.msra.mxu0 %v1175
      %1331 = vmatprep.subr.bf16.mxu0 0
      %1332 = vmatpush1.bf16.msra.mxu0 %v1176
      %1333 = vmatprep.subr.bf16.mxu0 0
      %1334 = vmatpush1.bf16.msra.mxu0 %v1177
      %1335 = vmatprep.subr.bf16.mxu0 0
      %1336 = vmatpush1.bf16.msra.mxu0 %v1178
      %1337 = vmatprep.subr.bf16.mxu0 0
      %1338 = vmatpush1.bf16.msra.mxu0 %v1179
      %1339 = vmatprep.subr.bf16.mxu0 0
      %1340 = vmatpush1.bf16.msra.mxu0 %v1180
      %1341 = vmatprep.mubr.bf16.mxu0 %v678
      %1342 = vmatmul.mubr.bf16.gmra.mrb[0].mxu0 %v674
      %v1343 = vpop.f32.mrb[0].mxu0
      %v1344 = vadd.f32 0.0, %v1343
      %v1345 = vpop.f32.mrb[0].mxu0
      %v1346 = vpop.f32.mrb[0].mxu0
      %v1347 = vadd.f32 0.0, %v1346
      %v1348 = vpop.f32.mrb[0].mxu0
      %1349 = vmatprep.mubr.bf16.mxu0 %v679
      %1350 = vmatmul.mubr.bf16.gmra.mrb[0].mxu0 %v675
      %v1351 = vpop.f32.mrb[0].mxu0
      %v1352 = vadd.f32 0.0, %v1351
      %v1353 = vpop.f32.mrb[0].mxu0
      %v1354 = vpop.f32.mrb[0].mxu0
      %v1355 = vadd.f32 0.0, %v1354
      %v1356 = vpop.f32.mrb[0].mxu0
      %1357 = vmatprep.mubr.bf16.mxu0 %v680
      %1358 = vmatmul.mubr.bf16.gmra.mrb[0].mxu0 %v676
      %v1359 = vpop.f32.mrb[0].mxu0
      %v1360 = vadd.f32 0.0, %v1359
      %v1361 = vpop.f32.mrb[0].mxu0
      %v1362 = vpop.f32.mrb[0].mxu0
      %v1363 = vadd.f32 0.0, %v1362
      %v1364 = vpop.f32.mrb[0].mxu0
      %1365 = vmatprep.mubr.bf16.mxu0 %v681
      %1366 = vmatmul.mubr.bf16.gmra.mrb[0].mxu0 %v677
      %v1367 = vpop.f32.mrb[0].mxu0
      %v1368 = vadd.f32 0.0, %v1367
      %v1369 = vpop.f32.mrb[0].mxu0
      %v1370 = vpop.f32.mrb[0].mxu0
      %v1371 = vadd.f32 0.0, %v1370
      %v1372 = vpop.f32.mrb[0].mxu0
      %1373 = vdwg.mxu0
      %1374 = vmatprep.subr.bf16.mxu0 0
      %1375 = vmatpush1.bf16.msra.mxu0 %v1181
      %1376 = vmatprep.subr.bf16.mxu0 0
      %1377 = vmatpush1.bf16.msra.mxu0 %v1182
      %1378 = vmatprep.subr.bf16.mxu0 0
      %1379 = vmatpush1.bf16.msra.mxu0 %v1183
      %1380 = vmatprep.subr.bf16.mxu0 0
      %1381 = vmatpush1.bf16.msra.mxu0 %v1184
      %1382 = vmatprep.subr.bf16.mxu0 0
      %1383 = vmatpush1.bf16.msra.mxu0 %v1185
      %1384 = vmatprep.subr.bf16.mxu0 0
      %1385 = vmatpush1.bf16.msra.mxu0 %v1186
      %1386 = vmatprep.subr.bf16.mxu0 0
      %1387 = vmatpush1.bf16.msra.mxu0 %v1187
      %1388 = vmatprep.subr.bf16.mxu0 0
      %1389 = vmatpush1.bf16.msra.mxu0 %v1188
      %1390 = vmatprep.subr.bf16.mxu0 0
      %1391 = vmatpush1.bf16.msra.mxu0 %v1189
      %1392 = vmatprep.subr.bf16.mxu0 0
      %1393 = vmatpush1.bf16.msra.mxu0 %v1190
      %1394 = vmatprep.subr.bf16.mxu0 0
      %1395 = vmatpush1.bf16.msra.mxu0 %v1191
      %1396 = vmatprep.subr.bf16.mxu0 0
      %1397 = vmatpush1.bf16.msra.mxu0 %v1192
      %1398 = vmatprep.subr.bf16.mxu0 0
      %1399 = vmatpush1.bf16.msra.mxu0 %v1193
      %1400 = vmatprep.subr.bf16.mxu0 0
      %1401 = vmatpush1.bf16.msra.mxu0 %v1194
      %1402 = vmatprep.subr.bf16.mxu0 0
      %1403 = vmatpush1.bf16.msra.mxu0 %v1195
      %1404 = vmatprep.subr.bf16.mxu0 0
      %1405 = vmatpush1.bf16.msra.mxu0 %v1196
      %1406 = vmatprep.mubr.bf16.mxu0 %v715
      %1407 = vmatmul.mubr.bf16.gmra.mrb[0].mxu0 %v707
      %v1408 = vpop.f32.mrb[0].mxu0
      %v1409 = vadd.f32 %v1344, %v1408
      %v1410 = vpop.f32.mrb[0].mxu0
      %v1411 = vpop.f32.mrb[0].mxu0
      %v1412 = vadd.f32 %v1347, %v1411
      %v1413 = vpop.f32.mrb[0].mxu0
      %1414 = vmatprep.mubr.bf16.mxu0 %v716
      %1415 = vmatmul.mubr.bf16.gmra.mrb[0].mxu0 %v708
      %v1416 = vpop.f32.mrb[0].mxu0
      %v1417 = vadd.f32 %v1352, %v1416
      %v1418 = vpop.f32.mrb[0].mxu0
      %v1419 = vpop.f32.mrb[0].mxu0
      %v1420 = vadd.f32 %v1355, %v1419
      %v1421 = vpop.f32.mrb[0].mxu0
      %1422 = vmatprep.mubr.bf16.mxu0 %v717
      %1423 = vmatmul.mubr.bf16.gmra.mrb[0].mxu0 %v709
      %v1424 = vpop.f32.mrb[0].mxu0
      %v1425 = vadd.f32 %v1360, %v1424
      %v1426 = vpop.f32.mrb[0].mxu0
      %v1427 = vpop.f32.mrb[0].mxu0
      %v1428 = vadd.f32 %v1363, %v1427
      %v1429 = vpop.f32.mrb[0].mxu0
      %1430 = vmatprep.mubr.bf16.mxu0 %v718
      %1431 = vmatmul.mubr.bf16.gmra.mrb[0].mxu0 %v710
      %v1432 = vpop.f32.mrb[0].mxu0
      %v1433 = vadd.f32 %v1368, %v1432
      %v1434 = vpop.f32.mrb[0].mxu0
      %v1435 = vpop.f32.mrb[0].mxu0
      %v1436 = vadd.f32 %v1371, %v1435
      %v1437 = vpop.f32.mrb[0].mxu0
      %1438 = vdwg.mxu0
      %1439 = vmatprep.subr.bf16.mxu0 0
      %1440 = vmatpush1.bf16.msra.mxu0 %v1197
      %1441 = vmatprep.subr.bf16.mxu0 0
      %1442 = vmatpush1.bf16.msra.mxu0 %v1198
      %1443 = vmatprep.subr.bf16.mxu0 0
      %1444 = vmatpush1.bf16.msra.mxu0 %v1199
      %1445 = vmatprep.subr.bf16.mxu0 0
      %1446 = vmatpush1.bf16.msra.mxu0 %v1200
      %1447 = vmatprep.subr.bf16.mxu0 0
      %1448 = vmatpush1.bf16.msra.mxu0 %v1201
      %1449 = vmatprep.subr.bf16.mxu0 0
      %1450 = vmatpush1.bf16.msra.mxu0 %v1202
      %1451 = vmatprep.subr.bf16.mxu0 0
      %1452 = vmatpush1.bf16.msra.mxu0 %v1203
      %1453 = vmatprep.subr.bf16.mxu0 0
      %1454 = vmatpush1.bf16.msra.mxu0 %v1204
      %1455 = vmatprep.subr.bf16.mxu0 0
      %1456 = vmatpush1.bf16.msra.mxu0 %v1205
      %1457 = vmatprep.subr.bf16.mxu0 0
      %1458 = vmatpush1.bf16.msra.mxu0 %v1206
      %1459 = vmatprep.subr.bf16.mxu0 0
      %1460 = vmatpush1.bf16.msra.mxu0 %v1207
      %1461 = vmatprep.subr.bf16.mxu0 0
      %1462 = vmatpush1.bf16.msra.mxu0 %v1208
      %1463 = vmatprep.subr.bf16.mxu0 0
      %1464 = vmatpush1.bf16.msra.mxu0 %v1209
      %1465 = vmatprep.subr.bf16.mxu0 0
      %1466 = vmatpush1.bf16.msra.mxu0 %v1210
      %1467 = vmatprep.subr.bf16.mxu0 0
      %1468 = vmatpush1.bf16.msra.mxu0 %v1211
      %1469 = vmatprep.subr.bf16.mxu0 0
      %1470 = vmatpush1.bf16.msra.mxu0 %v1212
      %1471 = vmatprep.mubr.bf16.mxu0 %v726
      %1472 = vmatmul.mubr.bf16.gmra.mrb[0].mxu0 %v719
      %v1473 = vpop.f32.mrb[0].mxu0
      %v1474 = vadd.f32 %v1409, %v1473
      %v1475 = vpop.f32.mrb[0].mxu0
      %v1476 = vpop.f32.mrb[0].mxu0
      %v1477 = vadd.f32 %v1412, %v1476
      %v1478 = vpop.f32.mrb[0].mxu0
      %1479 = vmatprep.mubr.bf16.mxu0 %v727
      %1480 = vmatmul.mubr.bf16.gmra.mrb[0].mxu0 %v720
      %v1481 = vpop.f32.mrb[0].mxu0
      %v1482 = vadd.f32 %v1417, %v1481
      %v1483 = vpop.f32.mrb[0].mxu0
      %v1484 = vpop.f32.mrb[0].mxu0
      %v1485 = vadd.f32 %v1420, %v1484
      %v1486 = vpop.f32.mrb[0].mxu0
      %1487 = vmatprep.mubr.bf16.mxu0 %v728
      %1488 = vmatmul.mubr.bf16.gmra.mrb[0].mxu0 %v721
      %v1489 = vpop.f32.mrb[0].mxu0
      %v1490 = vadd.f32 %v1425, %v1489
      %v1491 = vpop.f32.mrb[0].mxu0
      %v1492 = vpop.f32.mrb[0].mxu0
      %v1493 = vadd.f32 %v1428, %v1492
      %v1494 = vpop.f32.mrb[0].mxu0
      %1495 = vmatprep.mubr.bf16.mxu0 %v729
      %1496 = vmatmul.mubr.bf16.gmra.mrb[0].mxu0 %v722
      %v1497 = vpop.f32.mrb[0].mxu0
      %v1498 = vadd.f32 %v1433, %v1497
      %v1499 = vpop.f32.mrb[0].mxu0
      %v1500 = vpop.f32.mrb[0].mxu0
      %v1501 = vadd.f32 %v1436, %v1500
      %v1502 = vpop.f32.mrb[0].mxu0
      %1503 = vdwg.mxu0
      %1504 = vmatprep.subr.bf16.mxu0 0
      %1505 = vmatpush1.bf16.msra.mxu0 %v1213
      %1506 = vmatprep.subr.bf16.mxu0 0
      %1507 = vmatpush1.bf16.msra.mxu0 %v1214
      %1508 = vmatprep.subr.bf16.mxu0 0
      %1509 = vmatpush1.bf16.msra.mxu0 %v1215
      %1510 = vmatprep.subr.bf16.mxu0 0
      %1511 = vmatpush1.bf16.msra.mxu0 %v1216
      %1512 = vmatprep.subr.bf16.mxu0 0
      %1513 = vmatpush1.bf16.msra.mxu0 %v1217
      %1514 = vmatprep.subr.bf16.mxu0 0
      %1515 = vmatpush1.bf16.msra.mxu0 %v1218
      %1516 = vmatprep.subr.bf16.mxu0 0
      %1517 = vmatpush1.bf16.msra.mxu0 %v1219
      %1518 = vmatprep.subr.bf16.mxu0 0
      %1519 = vmatpush1.bf16.msra.mxu0 %v1220
      %1520 = vmatprep.subr.bf16.mxu0 0
      %1521 = vmatpush1.bf16.msra.mxu0 %v1221
      %1522 = vmatprep.subr.bf16.mxu0 0
      %1523 = vmatpush1.bf16.msra.mxu0 %v1222
      %1524 = vmatprep.subr.bf16.mxu0 0
      %1525 = vmatpush1.bf16.msra.mxu0 %v1223
      %1526 = vmatprep.subr.bf16.mxu0 0
      %1527 = vmatpush1.bf16.msra.mxu0 %v1224
      %1528 = vmatprep.subr.bf16.mxu0 0
      %1529 = vmatpush1.bf16.msra.mxu0 %v1225
      %1530 = vmatprep.subr.bf16.mxu0 0
      %1531 = vmatpush1.bf16.msra.mxu0 %v1226
      %1532 = vmatprep.subr.bf16.mxu0 0
      %1533 = vmatpush1.bf16.msra.mxu0 %v1227
      %1534 = vmatprep.subr.bf16.mxu0 0
      %1535 = vmatpush1.bf16.msra.mxu0 %v1228
      %1536 = vmatprep.mubr.bf16.mxu0 %v679
      %1537 = vmatmul.mubr.bf16.gmra.mrb[0].mxu0 %v675
      %v1538 = vpop.f32.mrb[0].mxu0
      %v1539 = vadd.f32 %v1474, %v1538
      %v1540 = vpop.f32.mrb[0].mxu0
      %v1541 = vpop.f32.mrb[0].mxu0
      %v1542 = vadd.f32 %v1477, %v1541
      %v1543 = vpop.f32.mrb[0].mxu0
      %1544 = vmatprep.mubr.bf16.mxu0 %v680
      %1545 = vmatmul.mubr.bf16.gmra.mrb[0].mxu0 %v676
      %v1546 = vpop.f32.mrb[0].mxu0
      %v1547 = vadd.f32 %v1482, %v1546
      %v1548 = vpop.f32.mrb[0].mxu0
      %v1549 = vpop.f32.mrb[0].mxu0
      %v1550 = vadd.f32 %v1485, %v1549
      %v1551 = vpop.f32.mrb[0].mxu0
      %1552 = vmatprep.mubr.bf16.mxu0 %v681
      %1553 = vmatmul.mubr.bf16.gmra.mrb[0].mxu0 %v677
      %v1554 = vpop.f32.mrb[0].mxu0
      %v1555 = vadd.f32 %v1490, %v1554
      %v1556 = vpop.f32.mrb[0].mxu0
      %v1557 = vpop.f32.mrb[0].mxu0
      %v1558 = vadd.f32 %v1493, %v1557
      %v1559 = vpop.f32.mrb[0].mxu0
      %1560 = vmatprep.mubr.bf16.mxu0 %v731
      %1561 = vmatmul.mubr.bf16.gmra.mrb[0].mxu0 %v730
      %v1562 = vpop.f32.mrb[0].mxu0
      %v1563 = vadd.f32 %v1498, %v1562
      %v1564 = vpop.f32.mrb[0].mxu0
      %v1565 = vpop.f32.mrb[0].mxu0
      %v1566 = vadd.f32 %v1501, %v1565
      %v1567 = vpop.f32.mrb[0].mxu0
      %1568 = vdwg.mxu0
      %1569 = vmatprep.subr.bf16.mxu0 0
      %1570 = vmatpush1.bf16.msra.mxu0 %v1229
      %1571 = vmatprep.subr.bf16.mxu0 0
      %1572 = vmatpush1.bf16.msra.mxu0 %v1230
      %1573 = vmatprep.subr.bf16.mxu0 0
      %1574 = vmatpush1.bf16.msra.mxu0 %v1231
      %1575 = vmatprep.subr.bf16.mxu0 0
      %1576 = vmatpush1.bf16.msra.mxu0 %v1232
      %1577 = vmatprep.subr.bf16.mxu0 0
      %1578 = vmatpush1.bf16.msra.mxu0 %v1233
      %1579 = vmatprep.subr.bf16.mxu0 0
      %1580 = vmatpush1.bf16.msra.mxu0 %v1234
      %1581 = vmatprep.subr.bf16.mxu0 0
      %1582 = vmatpush1.bf16.msra.mxu0 %v1235
      %1583 = vmatprep.subr.bf16.mxu0 0
      %1584 = vmatpush1.bf16.msra.mxu0 %v1236
      %1585 = vmatprep.subr.bf16.mxu0 0
      %1586 = vmatpush1.bf16.msra.mxu0 0
      %1587 = vmatprep.subr.bf16.mxu0 0
      %1588 = vmatpush1.bf16.msra.mxu0 0
      %1589 = vmatprep.subr.bf16.mxu0 0
      %1590 = vmatpush1.bf16.msra.mxu0 0
      %1591 = vmatprep.subr.bf16.mxu0 0
      %1592 = vmatpush1.bf16.msra.mxu0 0
      %1593 = vmatprep.subr.bf16.mxu0 0
      %1594 = vmatpush1.bf16.msra.mxu0 0
      %1595 = vmatprep.subr.bf16.mxu0 0
      %1596 = vmatpush1.bf16.msra.mxu0 0
      %1597 = vmatprep.subr.bf16.mxu0 0
      %1598 = vmatpush1.bf16.msra.mxu0 0
      %1599 = vmatprep.subr.bf16.mxu0 0
      %1600 = vmatpush1.bf16.msra.mxu0 0
      %1601 = vmatprep.mubr.bf16.mxu0 0
      %1602 = vmatmul.mubr.bf16.gmra.mrb[0].mxu0 %v708
      %v1603 = vpop.f32.mrb[0].mxu0
      %v1604 = vadd.f32 %v1539, %v1603
      %v1605 = vpop.f32.mrb[0].mxu0
      %v1606 = vpop.f32.mrb[0].mxu0
      %v1607 = vadd.f32 %v1542, %v1606
      %v1608 = vpop.f32.mrb[0].mxu0
      %1609 = vmatprep.mubr.bf16.mxu0 0
      %1610 = vmatmul.mubr.bf16.gmra.mrb[0].mxu0 %v709
      %v1611 = vpop.f32.mrb[0].mxu0
      %v1612 = vadd.f32 %v1547, %v1611
      %v1613 = vpop.f32.mrb[0].mxu0
      %v1614 = vpop.f32.mrb[0].mxu0
      %v1615 = vadd.f32 %v1550, %v1614
      %v1616 = vpop.f32.mrb[0].mxu0
      %1617 = vmatprep.mubr.bf16.mxu0 0
      %1618 = vmatmul.mubr.bf16.gmra.mrb[0].mxu0 %v710
      %v1619 = vpop.f32.mrb[0].mxu0
      %v1620 = vadd.f32 %v1555, %v1619
      %v1621 = vpop.f32.mrb[0].mxu0
      %v1622 = vpop.f32.mrb[0].mxu0
      %v1623 = vadd.f32 %v1558, %v1622
      %v1624 = vpop.f32.mrb[0].mxu0
      %1625 = vmatprep.mubr.bf16.mxu0 0
      %1626 = vmatmul.mubr.bf16.gmra.mrb[0].mxu0 %v732
      %v1627 = vpop.f32.mrb[0].mxu0
      %v1628 = vadd.f32 %v1563, %v1627
      %v1629 = vpop.f32.mrb[0].mxu0
      %v1630 = vpop.f32.mrb[0].mxu0
      %v1631 = vadd.f32 %v1566, %v1630
      %v1632 = vpop.f32.mrb[0].mxu0
      %1633 = vdwg.mxu0
      %v1634 = vld [vmem:[%s5] sm:$0x1]
      %v1636 = vlaneseq
      %v1637 = vshrl.u32 %v1636, 7
      %v1638 = vsub.s32 0, %v1637
      %v1639 = vrot.slane %v1634, %v1638
      %v1641 = vmul.f32 %v1604, %v1639
      %v1642 = vmul.f32 %v1607, %v1639
      %v1643 = vmul.f32 %v1612, %v1639
      %v1644 = vmul.f32 %v1615, %v1639
      %v1645 = vmul.f32 %v1620, %v1639
      %v1646 = vmul.f32 %v1623, %v1639
      %v1647 = vmul.f32 %v1628, %v1639
      %v1648 = vmul.f32 %v1631, %v1639
      %v1649 = vld [vmem:[%s6] sm:$0x1]
      %v1651 = vlaneseq
      %v1652 = vshrl.u32 %v1651, 7
      %v1653 = vsub.s32 0, %v1652
      %v1654 = vrot.slane %v1649, %v1653
      %v1656 = vadd.f32 %v1641, %v1654
      %v1657 = vadd.f32 %v1642, %v1654
      %v1658 = vadd.f32 %v1643, %v1654
      %v1659 = vadd.f32 %v1644, %v1654
      %v1660 = vadd.f32 %v1645, %v1654
      %v1661 = vadd.f32 %v1646, %v1654
      %v1662 = vadd.f32 %v1647, %v1654
      %v1663 = vadd.f32 %v1648, %v1654
      %v1664 = vmax.f32 %v1656, 0.0
      %v1665 = vmax.f32 %v1657, 0.0
      %v1666 = vmax.f32 %v1658, 0.0
      %v1667 = vmax.f32 %v1659, 0.0
      %v1668 = vmax.f32 %v1660, 0.0
      %v1669 = vmax.f32 %v1661, 0.0
      %v1670 = vmax.f32 %v1662, 0.0
      %v1671 = vmax.f32 %v1663, 0.0
      %v1672 = vpack.c.bf16 %v1665, %v1664
      %v1673 = vpack.c.bf16 %v1667, %v1666
      %v1674 = vpack.c.bf16 %v1669, %v1668
      %v1675 = vpack.c.bf16 %v1671, %v1670
      %v1676 = vld [vmem:[%s7] sm:$0xf]
      %v1677 = vld [vmem:[%s7 + $0x4] sm:$0xf]
      %v1678 = vld [vmem:[%s7 + $0x8] sm:$0xf]
      %v1679 = vld [vmem:[%s7 + $0xc] sm:$0xf]
      %v1680 = vld [vmem:[%s7 + $0x10] sm:$0xf]
      %v1681 = vld [vmem:[%s7 + $0x14] sm:$0xf]
      %v1682 = vld [vmem:[%s7 + $0x18] sm:$0xf]
      %v1683 = vld [vmem:[%s7 + $0x1c] sm:$0xf]
      %v1684 = vld [vmem:[%s7 + $0x20] sm:$0xf]
      %v1685 = vld [vmem:[%s7 + $0x24] sm:$0xf]
      %v1686 = vld [vmem:[%s7 + $0x28] sm:$0xf]
      %v1687 = vld [vmem:[%s7 + $0x2c] sm:$0xf]
      %v1688 = vld [vmem:[%s7 + $0x30] sm:$0xf]
      %v1689 = vld [vmem:[%s7 + $0x34] sm:$0xf]
      %v1690 = vld [vmem:[%s7 + $0x38] sm:$0xf]
      %v1691 = vld [vmem:[%s7 + $0x3c] sm:$0xf]
      %v1708 = vunpack.c.l.b16 %v1676
      %v1709 = vunpack.c.l.b16 %v1677
      %v1710 = vunpack.c.l.b16 %v1678
      %v1711 = vunpack.c.l.b16 %v1679
      %v1712 = vunpack.c.l.b16 %v1680
      %v1713 = vunpack.c.l.b16 %v1681
      %v1714 = vunpack.c.l.b16 %v1682
      %v1715 = vunpack.c.l.b16 %v1683
      %v1716 = vunpack.c.l.b16 %v1684
      %v1717 = vunpack.c.l.b16 %v1685
      %v1718 = vunpack.c.l.b16 %v1686
      %v1719 = vunpack.c.l.b16 %v1687
      %v1720 = vunpack.c.l.b16 %v1688
      %v1721 = vunpack.c.l.b16 %v1689
      %v1722 = vunpack.c.l.b16 %v1690
      %v1723 = vunpack.c.l.b16 %v1691
      %v1724 = vpack.c.b16 %v1709, %v1708
      %v1725 = vpack.c.b16 %v1711, %v1710
      %v1726 = vpack.c.b16 %v1713, %v1712
      %v1727 = vpack.c.b16 %v1715, %v1714
      %v1728 = vpack.c.b16 %v1717, %v1716
      %v1729 = vpack.c.b16 %v1719, %v1718
      %v1730 = vpack.c.b16 %v1721, %v1720
      %v1731 = vpack.c.b16 %v1723, %v1722
      %1740 = vmatprep.subr.bf16.mxu0 0
      %1741 = vmatpush1.bf16.msra.mxu0 %v1724
      %1742 = vmatprep.subr.bf16.mxu0 0
      %1743 = vmatpush1.bf16.msra.mxu0 %v1725
      %1744 = vmatprep.subr.bf16.mxu0 0
      %1745 = vmatpush1.bf16.msra.mxu0 %v1726
      %1746 = vmatprep.subr.bf16.mxu0 0
      %1747 = vmatpush1.bf16.msra.mxu0 %v1727
      %1748 = vmatprep.subr.bf16.mxu0 0
      %1749 = vmatpush1.bf16.msra.mxu0 %v1728
      %1750 = vmatprep.subr.bf16.mxu0 0
      %1751 = vmatpush1.bf16.msra.mxu0 %v1729
      %1752 = vmatprep.subr.bf16.mxu0 0
      %1753 = vmatpush1.bf16.msra.mxu0 %v1730
      %1754 = vmatprep.subr.bf16.mxu0 0
      %1755 = vmatpush1.bf16.msra.mxu0 %v1731
      %1756 = vmatprep.subr.bf16.mxu0 0
      %1757 = vmatpush1.bf16.msra.mxu0 0
      %1758 = vmatprep.subr.bf16.mxu0 0
      %1759 = vmatpush1.bf16.msra.mxu0 0
      %1760 = vmatprep.subr.bf16.mxu0 0
      %1761 = vmatpush1.bf16.msra.mxu0 0
      %1762 = vmatprep.subr.bf16.mxu0 0
      %1763 = vmatpush1.bf16.msra.mxu0 0
      %1764 = vmatprep.subr.bf16.mxu0 0
      %1765 = vmatpush1.bf16.msra.mxu0 0
      %1766 = vmatprep.subr.bf16.mxu0 0
      %1767 = vmatpush1.bf16.msra.mxu0 0
      %1768 = vmatprep.subr.bf16.mxu0 0
      %1769 = vmatpush1.bf16.msra.mxu0 0
      %1770 = vmatprep.subr.bf16.mxu0 0
      %1771 = vmatpush1.bf16.msra.mxu0 0
      %1772 = vmatprep.mubr.bf16.mxu0 0
      %1773 = vmatmul.mubr.bf16.gmra.mrb[0].mxu0 %v1672
      %v1774 = vpop.f32.mrb[0].mxu0
      %v1775 = vadd.f32 0.0, %v1774
      %v1776 = vpop.f32.mrb[0].mxu0
      %v1777 = vpop.f32.mrb[0].mxu0
      %v1778 = vadd.f32 0.0, %v1777
      %v1779 = vpop.f32.mrb[0].mxu0
      %1780 = vmatprep.mubr.bf16.mxu0 0
      %1781 = vmatmul.mubr.bf16.gmra.mrb[0].mxu0 %v1673
      %v1782 = vpop.f32.mrb[0].mxu0
      %v1783 = vadd.f32 0.0, %v1782
      %v1784 = vpop.f32.mrb[0].mxu0
      %v1785 = vpop.f32.mrb[0].mxu0
      %v1786 = vadd.f32 0.0, %v1785
      %v1787 = vpop.f32.mrb[0].mxu0
      %1788 = vmatprep.mubr.bf16.mxu0 0
      %1789 = vmatmul.mubr.bf16.gmra.mrb[0].mxu0 %v1674
      %v1790 = vpop.f32.mrb[0].mxu0
      %v1791 = vadd.f32 0.0, %v1790
      %v1792 = vpop.f32.mrb[0].mxu0
      %v1793 = vpop.f32.mrb[0].mxu0
      %v1794 = vadd.f32 0.0, %v1793
      %v1795 = vpop.f32.mrb[0].mxu0
      %1796 = vmatprep.mubr.bf16.mxu0 0
      %1797 = vmatmul.mubr.bf16.gmra.mrb[0].mxu0 %v1675
      %v1798 = vpop.f32.mrb[0].mxu0
      %v1799 = vadd.f32 0.0, %v1798
      %v1800 = vpop.f32.mrb[0].mxu0
      %v1801 = vpop.f32.mrb[0].mxu0
      %v1802 = vadd.f32 0.0, %v1801
      %v1803 = vpop.f32.mrb[0].mxu0
      %1804 = vdwg.mxu0
      %v1805 = vld [vmem:[%s8] sm:$0x1]
      %v1807 = vlaneseq
      %v1808 = vshrl.u32 %v1807, 7
      %v1809 = vsub.s32 0, %v1808
      %v1810 = vrot.slane %v1805, %v1809
      %v1812 = vmul.f32 %v1775, %v1810
      %v1813 = vmul.f32 %v1778, %v1810
      %v1814 = vmul.f32 %v1783, %v1810
      %v1815 = vmul.f32 %v1786, %v1810
      %v1816 = vmul.f32 %v1791, %v1810
      %v1817 = vmul.f32 %v1794, %v1810
      %v1818 = vmul.f32 %v1799, %v1810
      %v1819 = vmul.f32 %v1802, %v1810
      %v1820 = vld [vmem:[%s9] sm:$0x1]
      %v1822 = vlaneseq
      %v1823 = vshrl.u32 %v1822, 7
      %v1824 = vsub.s32 0, %v1823
      %v1825 = vrot.slane %v1820, %v1824
      %v1827 = vadd.f32 %v1812, %v1825
      %v1828 = vadd.f32 %v1813, %v1825
      %v1829 = vadd.f32 %v1814, %v1825
      %v1830 = vadd.f32 %v1815, %v1825
      %v1831 = vadd.f32 %v1816, %v1825
      %v1832 = vadd.f32 %v1817, %v1825
      %v1833 = vadd.f32 %v1818, %v1825
      %v1834 = vadd.f32 %v1819, %v1825
      %v1835 = vunpack.c.l.bf16 %v442
      %v1836 = vunpack.c.l.bf16 %v443
      %v1837 = vunpack.c.l.bf16 %v444
      %v1838 = vunpack.c.l.bf16 %v445
      %v1839 = vunpack.c.l.bf16 %v446
      %v1840 = vunpack.c.l.bf16 %v447
      %v1841 = vunpack.c.l.bf16 %v448
      %v1842 = vunpack.c.l.bf16 %v449
      %v1843 = vadd.f32 %v1827, %v1828
      %v1844 = vadd.f32 %v1843, %v1829
      %v1845 = vadd.f32 %v1844, %v1830
      %v1846 = vadd.f32 %v1845, %v1831
      %v1847 = vadd.f32 %v1846, %v1832
      %v1848 = vadd.f32 %v1847, %v1833
      %v1849 = vadd.f32 %v1848, %v1834
      %v1850 = vrot.slane %v1849, 4
      %v1851 = vadd.f32 %v1849, %v1850
      %v1852 = vrot.slane %v1851, 2
      %v1853 = vadd.f32 %v1851, %v1852
      %v1854 = vrot.slane %v1853, 1
      %v1855 = vadd.f32 %v1853, %v1854
      %v1856 = vrcp.pop 64.0
      %v1857 = vmul.f32 %v1855, %v1856
      %v1858 = vmax.f32 %v1827, %v1831
      %v1859 = vmax.f32 %v1828, %v1832
      %v1860 = vmax.f32 %v1829, %v1833
      %v1861 = vmax.f32 %v1830, %v1834
      %v1862 = vmax.f32 %v1858, %v1859
      %v1863 = vmax.f32 %v1860, %v1861
      %v1864 = vmax.f32 %v1862, %v1863
      %v1865 = vrot.slane %v1864, 4
      %v1866 = vmax.f32 %v1864, %v1865
      %v1867 = vrot.slane %v1866, 2
      %v1868 = vmax.f32 %v1866, %v1867
      %v1869 = vrot.slane %v1868, 1
      %v1870 = vmax.f32 %v1868, %v1869
      %v1871 = vsel %vm665, %v1857, %v1870
      %v1872 = vpack.c.bf16 %v1871, %v1871
      %v1873 = vld [vmem:[%s10] sm:$0xf]
      %v1874 = vld [vmem:[%s10 + $0x4] sm:$0xf]
      %v1875 = vld [vmem:[%s10 + $0x8] sm:$0xf]
      %v1876 = vld [vmem:[%s10 + $0xc] sm:$0xf]
      %v1877 = vld [vmem:[%s10 + $0x10] sm:$0xf]
      %v1878 = vld [vmem:[%s10 + $0x14] sm:$0xf]
      %v1879 = vld [vmem:[%s10 + $0x18] sm:$0xf]
      %v1880 = vld [vmem:[%s10 + $0x1c] sm:$0xf]
      %v1881 = vld [vmem:[%s10 + $0x20] sm:$0xf]
      %v1882 = vld [vmem:[%s10 + $0x24] sm:$0xf]
      %v1883 = vld [vmem:[%s10 + $0x28] sm:$0xf]
      %v1884 = vld [vmem:[%s10 + $0x2c] sm:$0xf]
      %v1885 = vld [vmem:[%s10 + $0x30] sm:$0xf]
      %v1886 = vld [vmem:[%s10 + $0x34] sm:$0xf]
      %v1887 = vld [vmem:[%s10 + $0x38] sm:$0xf]
      %v1888 = vld [vmem:[%s10 + $0x3c] sm:$0xf]
      %v1905 = vunpack.c.l.b16 %v1873
      %v1906 = vunpack.c.l.b16 %v1874
      %v1907 = vunpack.c.l.b16 %v1875
      %v1908 = vunpack.c.l.b16 %v1876
      %v1909 = vunpack.c.l.b16 %v1877
      %v1910 = vunpack.c.l.b16 %v1878
      %v1911 = vunpack.c.l.b16 %v1879
      %v1912 = vunpack.c.l.b16 %v1880
      %v1913 = vunpack.c.l.b16 %v1881
      %v1914 = vunpack.c.l.b16 %v1882
      %v1915 = vunpack.c.l.b16 %v1883
      %v1916 = vunpack.c.l.b16 %v1884
      %v1917 = vunpack.c.l.b16 %v1885
      %v1918 = vunpack.c.l.b16 %v1886
      %v1919 = vunpack.c.l.b16 %v1887
      %v1920 = vunpack.c.l.b16 %v1888
      %v1921 = vpack.c.b16 %v1906, %v1905
      %v1922 = vpack.c.b16 %v1908, %v1907
      %v1923 = vpack.c.b16 %v1910, %v1909
      %v1924 = vpack.c.b16 %v1912, %v1911
      %v1925 = vpack.c.b16 %v1914, %v1913
      %v1926 = vpack.c.b16 %v1916, %v1915
      %v1927 = vpack.c.b16 %v1918, %v1917
      %v1928 = vpack.c.b16 %v1920, %v1919
      %1937 = vmatprep.subr.bf16.mxu0 0
      %1938 = vmatpush1.bf16.msra.mxu0 %v1921
      %1939 = vmatprep.subr.bf16.mxu0 0
      %1940 = vmatpush1.bf16.msra.mxu0 %v1922
      %1941 = vmatprep.subr.bf16.mxu0 0
      %1942 = vmatpush1.bf16.msra.mxu0 %v1923
      %1943 = vmatprep.subr.bf16.mxu0 0
      %1944 = vmatpush1.bf16.msra.mxu0 %v1924
      %1945 = vmatprep.subr.bf16.mxu0 0
      %1946 = vmatpush1.bf16.msra.mxu0 %v1925
      %1947 = vmatprep.subr.bf16.mxu0 0
      %1948 = vmatpush1.bf16.msra.mxu0 %v1926
      %1949 = vmatprep.subr.bf16.mxu0 0
      %1950 = vmatpush1.bf16.msra.mxu0 %v1927
      %1951 = vmatprep.subr.bf16.mxu0 0
      %1952 = vmatpush1.bf16.msra.mxu0 %v1928
      %1953 = vmatprep.subr.bf16.mxu0 0
      %1954 = vmatpush1.bf16.msra.mxu0 0
      %1955 = vmatprep.subr.bf16.mxu0 0
      %1956 = vmatpush1.bf16.msra.mxu0 0
      %1957 = vmatprep.subr.bf16.mxu0 0
      %1958 = vmatpush1.bf16.msra.mxu0 0
      %1959 = vmatprep.subr.bf16.mxu0 0
      %1960 = vmatpush1.bf16.msra.mxu0 0
      %1961 = vmatprep.subr.bf16.mxu0 0
      %1962 = vmatpush1.bf16.msra.mxu0 0
      %1963 = vmatprep.subr.bf16.mxu0 0
      %1964 = vmatpush1.bf16.msra.mxu0 0
      %1965 = vmatprep.subr.bf16.mxu0 0
      %1966 = vmatpush1.bf16.msra.mxu0 0
      %1967 = vmatprep.subr.bf16.mxu0 0
      %1968 = vmatpush1.bf16.msra.mxu0 0
      %1969 = vmatprep.mubr.bf16.mxu0 0
      %1970 = vmatmul.mubr.bf16.gmra.mrb[0].mxu0 %v1872
      %v1971 = vpop.f32.mrb[0].mxu0
      %v1972 = vadd.f32 0.0, %v1971
      %v1973 = vpop.f32.mrb[0].mxu0
      %v1974 = vpop.f32.mrb[0].mxu0
      %v1975 = vpop.f32.mrb[0].mxu0
      %1976 = vdwg.mxu0
      %v1977 = vmax.f32 %v1972, 0.0
      %v1978 = vpack.c.bf16 %v1977, %v1977
      %v1979 = vld [vmem:[%s11] sm:$0xf]
      %v1980 = vld [vmem:[%s11 + $0x4] sm:$0xf]
      %v1981 = vld [vmem:[%s11 + $0x8] sm:$0xf]
      %v1982 = vld [vmem:[%s11 + $0xc] sm:$0xf]
      %v1983 = vld [vmem:[%s11 + $0x10] sm:$0xf]
      %v1984 = vld [vmem:[%s11 + $0x14] sm:$0xf]
      %v1985 = vld [vmem:[%s11 + $0x18] sm:$0xf]
      %v1986 = vld [vmem:[%s11 + $0x1c] sm:$0xf]
      %v1987 = vld [vmem:[%s11 + $0x20] sm:$0xf]
      %v1988 = vld [vmem:[%s11 + $0x24] sm:$0xf]
      %v1989 = vld [vmem:[%s11 + $0x28] sm:$0xf]
      %v1990 = vld [vmem:[%s11 + $0x2c] sm:$0xf]
      %v1991 = vld [vmem:[%s11 + $0x30] sm:$0xf]
      %v1992 = vld [vmem:[%s11 + $0x34] sm:$0xf]
      %v1993 = vld [vmem:[%s11 + $0x38] sm:$0xf]
      %v1994 = vld [vmem:[%s11 + $0x3c] sm:$0xf]
      %v2011 = vunpack.c.l.b16 %v1979
      %v2012 = vunpack.c.l.b16 %v1980
      %v2013 = vunpack.c.l.b16 %v1981
      %v2014 = vunpack.c.l.b16 %v1982
      %v2015 = vunpack.c.l.b16 %v1983
      %v2016 = vunpack.c.l.b16 %v1984
      %v2017 = vunpack.c.l.b16 %v1985
      %v2018 = vunpack.c.l.b16 %v1986
      %v2019 = vunpack.c.l.b16 %v1987
      %v2020 = vunpack.c.l.b16 %v1988
      %v2021 = vunpack.c.l.b16 %v1989
      %v2022 = vunpack.c.l.b16 %v1990
      %v2023 = vunpack.c.l.b16 %v1991
      %v2024 = vunpack.c.l.b16 %v1992
      %v2025 = vunpack.c.l.b16 %v1993
      %v2026 = vunpack.c.l.b16 %v1994
      %v2027 = vpack.c.b16 %v2012, %v2011
      %v2028 = vpack.c.b16 %v2014, %v2013
      %v2029 = vpack.c.b16 %v2016, %v2015
      %v2030 = vpack.c.b16 %v2018, %v2017
      %v2031 = vpack.c.b16 %v2020, %v2019
      %v2032 = vpack.c.b16 %v2022, %v2021
      %v2033 = vpack.c.b16 %v2024, %v2023
      %v2034 = vpack.c.b16 %v2026, %v2025
      %2043 = vmatprep.subr.bf16.mxu0 0
      %2044 = vmatpush1.bf16.msra.mxu0 %v2027
      %2045 = vmatprep.subr.bf16.mxu0 0
      %2046 = vmatpush1.bf16.msra.mxu0 %v2028
      %2047 = vmatprep.subr.bf16.mxu0 0
      %2048 = vmatpush1.bf16.msra.mxu0 %v2029
      %2049 = vmatprep.subr.bf16.mxu0 0
      %2050 = vmatpush1.bf16.msra.mxu0 %v2030
      %2051 = vmatprep.subr.bf16.mxu0 0
      %2052 = vmatpush1.bf16.msra.mxu0 %v2031
      %2053 = vmatprep.subr.bf16.mxu0 0
      %2054 = vmatpush1.bf16.msra.mxu0 %v2032
      %2055 = vmatprep.subr.bf16.mxu0 0
      %2056 = vmatpush1.bf16.msra.mxu0 %v2033
      %2057 = vmatprep.subr.bf16.mxu0 0
      %2058 = vmatpush1.bf16.msra.mxu0 %v2034
      %2059 = vmatprep.subr.bf16.mxu0 0
      %2060 = vmatpush1.bf16.msra.mxu0 0
      %2061 = vmatprep.subr.bf16.mxu0 0
      %2062 = vmatpush1.bf16.msra.mxu0 0
      %2063 = vmatprep.subr.bf16.mxu0 0
      %2064 = vmatpush1.bf16.msra.mxu0 0
      %2065 = vmatprep.subr.bf16.mxu0 0
      %2066 = vmatpush1.bf16.msra.mxu0 0
      %2067 = vmatprep.subr.bf16.mxu0 0
      %2068 = vmatpush1.bf16.msra.mxu0 0
      %2069 = vmatprep.subr.bf16.mxu0 0
      %2070 = vmatpush1.bf16.msra.mxu0 0
      %2071 = vmatprep.subr.bf16.mxu0 0
      %2072 = vmatpush1.bf16.msra.mxu0 0
      %2073 = vmatprep.subr.bf16.mxu0 0
      %2074 = vmatpush1.bf16.msra.mxu0 0
      %2075 = vmatprep.mubr.bf16.mxu0 0
      %2076 = vmatmul.mubr.bf16.gmra.mrb[0].mxu0 %v1978
      %v2077 = vpop.f32.mrb[0].mxu0
      %v2078 = vadd.f32 0.0, %v2077
      %v2079 = vpop.f32.mrb[0].mxu0
      %v2080 = vpop.f32.mrb[0].mxu0
      %v2081 = vpop.f32.mrb[0].mxu0
      %2082 = vdwg.mxu0
      %v2084 = vrot.slane %v2078, 1
      %v2086 = vadd.f32 %v2078, %v2084
      %v2087 = vxor.u32 %v2086, 2147483648
      %v2088 = vmul.f32 %v2087, 1.442695
      %v2089 = vpow.pop %v2088
      %v2090 = vadd.f32 %v2089, 1.0
      %v2091 = vrcp.pop %v2090
      %v2092 = vmul.f32 1.0, %v2091
      %v2093 = vlaneseq
      %v2094 = vshrl.u32 %v2093, 7
      %v2095 = vsub.s32 0, %v2094
      %v2096 = vrot.slane %v2092, %v2095
      %v2097 = vmul.f32 %v1827, %v2096
      %v2098 = vmul.f32 %v1828, %v2096
      %v2099 = vmul.f32 %v1829, %v2096
      %v2100 = vmul.f32 %v1830, %v2096
      %v2101 = vmul.f32 %v1831, %v2096
      %v2102 = vmul.f32 %v1832, %v2096
      %v2103 = vmul.f32 %v1833, %v2096
      %v2104 = vmul.f32 %v1834, %v2096
      %2105 = vadd.xlane.f32.xlu0 %v2097
      %v2106 = vpop.xlane.xlu0 %2105
      %2107 = vadd.xlane.f32.xlu0 %v2098
      %v2108 = vpop.xlane.xlu0 %2107
      %2109 = vadd.xlane.f32.xlu0 %v2099
      %v2110 = vpop.xlane.xlu0 %2109
      %2111 = vadd.xlane.f32.xlu0 %v2100
      %v2112 = vpop.xlane.xlu0 %2111
      %2113 = vadd.xlane.f32.xlu0 %v2101
      %v2114 = vpop.xlane.xlu0 %2113
      %2115 = vadd.xlane.f32.xlu0 %v2102
      %v2116 = vpop.xlane.xlu0 %2115
      %2117 = vadd.xlane.f32.xlu0 %v2103
      %v2118 = vpop.xlane.xlu0 %2117
      %2119 = vadd.xlane.f32.xlu0 %v2104
      %v2120 = vpop.xlane.xlu0 %2119
      %v2121 = vmul.f32 %v2106, 0.0625
      %v2122 = vmul.f32 %v2108, 0.0625
      %v2123 = vmul.f32 %v2110, 0.0625
      %v2124 = vmul.f32 %v2112, 0.0625
      %v2125 = vmul.f32 %v2114, 0.0625
      %v2126 = vmul.f32 %v2116, 0.0625
      %v2127 = vmul.f32 %v2118, 0.0625
      %v2128 = vmul.f32 %v2120, 0.0625
      %v2129 = vlaneseq
      %v2130 = vand.u32 %v2129, 127
      %vm2131 = vcmp.lt.s32.totalorder %v2130, 16
      %v2132 = vsel %vm2131, 1, 0
      %vm2133 = vcmp.eq.s32.totalorder %v2132, 1
      %v2134 = vsel %vm2133, %v2097, -3.4028235e+38
      %v2135 = vsel %vm2133, %v2098, -3.4028235e+38
      %v2136 = vsel %vm2133, %v2099, -3.4028235e+38
      %v2137 = vsel %vm2133, %v2100, -3.4028235e+38
      %v2138 = vsel %vm2133, %v2101, -3.4028235e+38
      %v2139 = vsel %vm2133, %v2102, -3.4028235e+38
      %v2140 = vsel %vm2133, %v2103, -3.4028235e+38
      %v2141 = vsel %vm2133, %v2104, -3.4028235e+38
      %2142 = vmax.xlane.f32.xlu0 %v2134
      %v2143 = vpop.xlane.xlu0 %2142
      %2144 = vmax.xlane.f32.xlu0 %v2135
      %v2145 = vpop.xlane.xlu0 %2144
      %2146 = vmax.xlane.f32.xlu0 %v2136
      %v2147 = vpop.xlane.xlu0 %2146
      %2148 = vmax.xlane.f32.xlu0 %v2137
      %v2149 = vpop.xlane.xlu0 %2148
      %2150 = vmax.xlane.f32.xlu0 %v2138
      %v2151 = vpop.xlane.xlu0 %2150
      %2152 = vmax.xlane.f32.xlu0 %v2139
      %v2153 = vpop.xlane.xlu0 %2152
      %2154 = vmax.xlane.f32.xlu0 %v2140
      %v2155 = vpop.xlane.xlu0 %2154
      %2156 = vmax.xlane.f32.xlu0 %v2141
      %v2157 = vpop.xlane.xlu0 %2156
      %v2163 = vlaneseq
      %v2164 = vshrl.u32 %v2163, 7
      %v2165 = vsub.s32 %v2130, %v2164
      %v2166 = vrot.slane %v2121, %v2165
      %v2167 = vlaneseq
      %v2168 = vshrl.u32 %v2167, 7
      %v2169 = vsub.s32 %v2130, %v2168
      %v2170 = vrot.slane %v2122, %v2169
      %v2171 = vlaneseq
      %v2172 = vshrl.u32 %v2171, 7
      %v2173 = vsub.s32 %v2130, %v2172
      %v2174 = vrot.slane %v2123, %v2173
      %v2175 = vlaneseq
      %v2176 = vshrl.u32 %v2175, 7
      %v2177 = vsub.s32 %v2130, %v2176
      %v2178 = vrot.slane %v2124, %v2177
      %v2179 = vlaneseq
      %v2180 = vshrl.u32 %v2179, 7
      %v2181 = vsub.s32 %v2130, %v2180
      %v2182 = vrot.slane %v2125, %v2181
      %vm2183 = vcmask 1044484
      %v2184 = vsel %vm2183, %v2170, %v2166
      %vm2185 = vcmask 1045509
      %v2186 = vsel %vm2185, %v2174, %v2184
      %vm2187 = vcmask 1046534
      %v2188 = vsel %vm2187, %v2178, %v2186
      %vm2189 = vcmask 1047559
      %v2190 = vsel %vm2189, %v2182, %v2188
      %vm2192 = vcmask 1042432
      %v2193 = vsel %vm2192, 0.0, %v2190
      %v2195 = vlaneseq
      %v2196 = vshrl.u32 %v2195, 7
      %v2197 = vsub.s32 %v2130, %v2196
      %v2198 = vrot.slane %v2126, %v2197
      %vm2199 = vcmask 1043459
      %v2200 = vsel %vm2199, %v2170, %v2166
      %v2201 = vsel %vm2183, %v2174, %v2200
      %v2202 = vsel %vm2185, %v2178, %v2201
      %v2203 = vsel %vm2187, %v2182, %v2202
      %v2204 = vsel %vm2189, %v2198, %v2203
      %vm2206 = vcmask 1041408
      %v2207 = vsel %vm2206, 0.0, %v2204
      %v2209 = vlaneseq
      %v2210 = vshrl.u32 %v2209, 7
      %v2211 = vsub.s32 %v2130, %v2210
      %v2212 = vrot.slane %v2127, %v2211
      %vm2213 = vcmask 1042434
      %v2214 = vsel %vm2213, %v2170, %v2166
      %v2215 = vsel %vm2199, %v2174, %v2214
      %v2216 = vsel %vm2183, %v2178, %v2215
      %v2217 = vsel %vm2185, %v2182, %v2216
      %v2218 = vsel %vm2187, %v2198, %v2217
      %v2219 = vsel %vm2189, %v2212, %v2218
      %v2221 = vsel %vm665, 0.0, %v2219
      %v2223 = vlaneseq
      %v2224 = vshrl.u32 %v2223, 7
      %v2225 = vsub.s32 %v2130, %v2224
      %v2226 = vrot.slane %v2128, %v2225
      %vm2227 = vcmask 1041409
      %v2228 = vsel %vm2227, %v2174, %v2170
      %v2229 = vsel %vm2213, %v2178, %v2228
      %v2230 = vsel %vm2199, %v2182, %v2229
      %v2231 = vsel %vm2183, %v2198, %v2230
      %v2232 = vsel %vm2185, %v2212, %v2231
      %v2233 = vsel %vm2187, %v2226, %v2232
      %v2235 = vsel %vm698, %v2233, 0.0
      %v2236 = vsel %vm2227, %v2178, %v2174
      %v2237 = vsel %vm2213, %v2182, %v2236
      %v2238 = vsel %vm2199, %v2198, %v2237
      %v2239 = vsel %vm2183, %v2212, %v2238
      %v2240 = vsel %vm2185, %v2226, %v2239
      %vm2242 = vcmask 1045504
      %v2243 = vsel %vm2242, %v2240, 0.0
      %v2244 = vsel %vm2227, %v2182, %v2178
      %v2245 = vsel %vm2213, %v2198, %v2244
      %v2246 = vsel %vm2199, %v2212, %v2245
      %v2247 = vsel %vm2183, %v2226, %v2246
      %vm2249 = vcmask 1044480
      %v2250 = vsel %vm2249, %v2247, 0.0
      %v2256 = vlaneseq
      %v2257 = vshrl.u32 %v2256, 7
      %v2258 = vsub.s32 %v2130, %v2257
      %v2259 = vrot.slane %v2143, %v2258
      %v2260 = vlaneseq
      %v2261 = vshrl.u32 %v2260, 7
      %v2262 = vsub.s32 %v2130, %v2261
      %v2263 = vrot.slane %v2145, %v2262
      %v2264 = vlaneseq
      %v2265 = vshrl.u32 %v2264, 7
      %v2266 = vsub.s32 %v2130, %v2265
      %v2267 = vrot.slane %v2147, %v2266
      %v2268 = vlaneseq
      %v2269 = vshrl.u32 %v2268, 7
      %v2270 = vsub.s32 %v2130, %v2269
      %v2271 = vrot.slane %v2149, %v2270
      %v2272 = vlaneseq
      %v2273 = vshrl.u32 %v2272, 7
      %v2274 = vsub.s32 %v2130, %v2273
      %v2275 = vrot.slane %v2151, %v2274
      %v2276 = vsel %vm2183, %v2263, %v2259
      %v2277 = vsel %vm2185, %v2267, %v2276
      %v2278 = vsel %vm2187, %v2271, %v2277
      %v2279 = vsel %vm2189, %v2275, %v2278
      %v2281 = vsel %vm2192, 0.0, %v2279
      %v2283 = vlaneseq
      %v2284 = vshrl.u32 %v2283, 7
      %v2285 = vsub.s32 %v2130, %v2284
      %v2286 = vrot.slane %v2153, %v2285
      %v2287 = vsel %vm2199, %v2263, %v2259
      %v2288 = vsel %vm2183, %v2267, %v2287
      %v2289 = vsel %vm2185, %v2271, %v2288
      %v2290 = vsel %vm2187, %v2275, %v2289
      %v2291 = vsel %vm2189, %v2286, %v2290
      %v2293 = vsel %vm2206, 0.0, %v2291
      %v2295 = vlaneseq
      %v2296 = vshrl.u32 %v2295, 7
      %v2297 = vsub.s32 %v2130, %v2296
      %v2298 = vrot.slane %v2155, %v2297
      %v2299 = vsel %vm2213, %v2263, %v2259
      %v2300 = vsel %vm2199, %v2267, %v2299
      %v2301 = vsel %vm2183, %v2271, %v2300
      %v2302 = vsel %vm2185, %v2275, %v2301
      %v2303 = vsel %vm2187, %v2286, %v2302
      %v2304 = vsel %vm2189, %v2298, %v2303
      %v2306 = vsel %vm665, 0.0, %v2304
      %v2308 = vlaneseq
      %v2309 = vshrl.u32 %v2308, 7
      %v2310 = vsub.s32 %v2130, %v2309
      %v2311 = vrot.slane %v2157, %v2310
      %v2312 = vsel %vm2227, %v2267, %v2263
      %v2313 = vsel %vm2213, %v2271, %v2312
      %v2314 = vsel %vm2199, %v2275, %v2313
      %v2315 = vsel %vm2183, %v2286, %v2314
      %v2316 = vsel %vm2185, %v2298, %v2315
      %v2317 = vsel %vm2187, %v2311, %v2316
      %v2319 = vsel %vm698, %v2317, 0.0
      %v2320 = vsel %vm2227, %v2271, %v2267
      %v2321 = vsel %vm2213, %v2275, %v2320
      %v2322 = vsel %vm2199, %v2286, %v2321
      %v2323 = vsel %vm2183, %v2298, %v2322
      %v2324 = vsel %vm2185, %v2311, %v2323
      %v2326 = vsel %vm2242, %v2324, 0.0
      %v2327 = vsel %vm2227, %v2275, %v2271
      %v2328 = vsel %vm2213, %v2286, %v2327
      %v2329 = vsel %vm2199, %v2298, %v2328
      %v2330 = vsel %vm2183, %v2311, %v2329
      %v2332 = vsel %vm2249, %v2330, 0.0
      %2334 = vrot.lane.b32.xlu0 %v2207, 8
      %v2335 = vpop.permute.xlu0 %2334
      %2338 = vrot.lane.b32.xlu0 %v2221, 16
      %v2339 = vpop.permute.xlu0 %2338
      %v2341 = vadd.s32 %v2130, 4294967272
      %v2342 = vlaneseq
      %v2343 = vshrl.u32 %v2342, 7
      %v2344 = vsub.s32 %v2341, %v2343
      %v2345 = vrot.slane %v2121, %v2344
      %v2346 = vlaneseq
      %v2347 = vshrl.u32 %v2346, 7
      %v2348 = vsub.s32 %v2341, %v2347
      %v2349 = vrot.slane %v2122, %v2348
      %v2350 = vlaneseq
      %v2351 = vshrl.u32 %v2350, 7
      %v2352 = vsub.s32 %v2341, %v2351
      %v2353 = vrot.slane %v2123, %v2352
      %v2354 = vlaneseq
      %v2355 = vshrl.u32 %v2354, 7
      %v2356 = vsub.s32 %v2341, %v2355
      %v2357 = vrot.slane %v2124, %v2356
      %v2358 = vlaneseq
      %v2359 = vshrl.u32 %v2358, 7
      %v2360 = vsub.s32 %v2341, %v2359
      %v2361 = vrot.slane %v2125, %v2360
      %v2362 = vlaneseq
      %v2363 = vshrl.u32 %v2362, 7
      %v2364 = vsub.s32 %v2341, %v2363
      %v2365 = vrot.slane %v2126, %v2364
      %v2366 = vlaneseq
      %v2367 = vshrl.u32 %v2366, 7
      %v2368 = vsub.s32 %v2341, %v2367
      %v2369 = vrot.slane %v2127, %v2368
      %v2370 = vlaneseq
      %v2371 = vshrl.u32 %v2370, 7
      %v2372 = vsub.s32 %v2341, %v2371
      %v2373 = vrot.slane %v2128, %v2372
      %v2374 = vsel %vm2227, %v2349, %v2345
      %v2375 = vsel %vm2213, %v2353, %v2374
      %v2376 = vsel %vm2199, %v2357, %v2375
      %v2377 = vsel %vm2183, %v2361, %v2376
      %v2378 = vsel %vm2185, %v2365, %v2377
      %v2379 = vsel %vm2187, %v2369, %v2378
      %v2380 = vsel %vm2189, %v2373, %v2379
      %2383 = vrot.lane.b32.xlu0 %v2235, 32
      %v2384 = vpop.permute.xlu0 %2383
      %2387 = vrot.lane.b32.xlu0 %v2243, 40
      %v2388 = vpop.permute.xlu0 %2387
      %2391 = vrot.lane.b32.xlu0 %v2250, 48
      %v2392 = vpop.permute.xlu0 %2391
      %2395 = vrot.lane.b32.xlu0 %v2281, 56
      %v2396 = vpop.permute.xlu0 %2395
      %2399 = vrot.lane.b32.xlu0 %v2293, 64
      %v2400 = vpop.permute.xlu0 %2399
      %2403 = vrot.lane.b32.xlu0 %v2306, 72
      %v2404 = vpop.permute.xlu0 %2403
      %v2406 = vadd.s32 %v2130, 4294967216
      %v2407 = vlaneseq
      %v2408 = vshrl.u32 %v2407, 7
      %v2409 = vsub.s32 %v2406, %v2408
      %v2410 = vrot.slane %v2143, %v2409
      %v2411 = vlaneseq
      %v2412 = vshrl.u32 %v2411, 7
      %v2413 = vsub.s32 %v2406, %v2412
      %v2414 = vrot.slane %v2145, %v2413
      %v2415 = vlaneseq
      %v2416 = vshrl.u32 %v2415, 7
      %v2417 = vsub.s32 %v2406, %v2416
      %v2418 = vrot.slane %v2147, %v2417
      %v2419 = vlaneseq
      %v2420 = vshrl.u32 %v2419, 7
      %v2421 = vsub.s32 %v2406, %v2420
      %v2422 = vrot.slane %v2149, %v2421
      %v2423 = vlaneseq
      %v2424 = vshrl.u32 %v2423, 7
      %v2425 = vsub.s32 %v2406, %v2424
      %v2426 = vrot.slane %v2151, %v2425
      %v2427 = vlaneseq
      %v2428 = vshrl.u32 %v2427, 7
      %v2429 = vsub.s32 %v2406, %v2428
      %v2430 = vrot.slane %v2153, %v2429
      %v2431 = vlaneseq
      %v2432 = vshrl.u32 %v2431, 7
      %v2433 = vsub.s32 %v2406, %v2432
      %v2434 = vrot.slane %v2155, %v2433
      %v2435 = vlaneseq
      %v2436 = vshrl.u32 %v2435, 7
      %v2437 = vsub.s32 %v2406, %v2436
      %v2438 = vrot.slane %v2157, %v2437
      %v2439 = vsel %vm2227, %v2414, %v2410
      %v2440 = vsel %vm2213, %v2418, %v2439
      %v2441 = vsel %vm2199, %v2422, %v2440
      %v2442 = vsel %vm2183, %v2426, %v2441
      %v2443 = vsel %vm2185, %v2430, %v2442
      %v2444 = vsel %vm2187, %v2434, %v2443
      %v2445 = vsel %vm2189, %v2438, %v2444
      %2448 = vrot.lane.b32.xlu0 %v2319, 88
      %v2449 = vpop.permute.xlu0 %2448
      %2452 = vrot.lane.b32.xlu0 %v2326, 96
      %v2453 = vpop.permute.xlu0 %2452
      %2456 = vrot.lane.b32.xlu0 %v2332, 104
      %v2457 = vpop.permute.xlu0 %2456
      %vm2459 = vcmask 64512
      %v2460 = vsel %vm2459, %v2193, %v2335
      %vm2461 = vcmask 130048
      %v2462 = vsel %vm2461, %v2460, %v2339
      %vm2463 = vcmask 195584
      %v2464 = vsel %vm2463, %v2462, %v2380
      %vm2465 = vcmask 261120
      %v2466 = vsel %vm2465, %v2464, %v2384
      %vm2467 = vcmask 326656
      %v2468 = vsel %vm2467, %v2466, %v2388
      %vm2469 = vcmask 392192
      %v2470 = vsel %vm2469, %v2468, %v2392
      %vm2471 = vcmask 457728
      %v2472 = vsel %vm2471, %v2470, %v2396
      %vm2473 = vcmask 523264
      %v2474 = vsel %vm2473, %v2472, %v2400
      %vm2475 = vcmask 588800
      %v2476 = vsel %vm2475, %v2474, %v2404
      %vm2477 = vcmask 654336
      %v2478 = vsel %vm2477, %v2476, %v2445
      %vm2479 = vcmask 719872
      %v2480 = vsel %vm2479, %v2478, %v2449
      %vm2481 = vcmask 785408
      %v2482 = vsel %vm2481, %v2480, %v2453
      %vm2483 = vcmask 850944
      %v2484 = vsel %vm2483, %v2482, %v2457
      %vm2485 = vcmask 916480
      %v2486 = vsel %vm2485, %v2484, 0.0
      %v2487 = vpack.c.bf16 %v2486, %v2486
      %v2488 = vld [vmem:[%s12] sm:$0xf]
      %v2489 = vld [vmem:[%s12 + $0x4] sm:$0xf]
      %v2490 = vld [vmem:[%s12 + $0x8] sm:$0xf]
      %v2491 = vld [vmem:[%s12 + $0xc] sm:$0xf]
      %v2492 = vld [vmem:[%s12 + $0x10] sm:$0xf]
      %v2493 = vld [vmem:[%s12 + $0x14] sm:$0xf]
      %v2494 = vld [vmem:[%s12 + $0x18] sm:$0xf]
      %v2495 = vld [vmem:[%s12 + $0x1c] sm:$0xf]
      %v2496 = vld [vmem:[%s12 + $0x20] sm:$0xf]
      %v2497 = vld [vmem:[%s12 + $0x24] sm:$0xf]
      %v2498 = vld [vmem:[%s12 + $0x28] sm:$0xf]
      %v2499 = vld [vmem:[%s12 + $0x2c] sm:$0xf]
      %v2500 = vld [vmem:[%s12 + $0x30] sm:$0xf]
      %v2501 = vld [vmem:[%s12 + $0x34] sm:$0xf]
      %v2502 = vld [vmem:[%s12 + $0x38] sm:$0xf]
      %v2503 = vld [vmem:[%s12 + $0x3c] sm:$0xf]
      %v2520 = vunpack.c.l.b16 %v2488
      %v2521 = vunpack.c.l.b16 %v2489
      %v2522 = vunpack.c.l.b16 %v2490
      %v2523 = vunpack.c.l.b16 %v2491
      %v2524 = vunpack.c.l.b16 %v2492
      %v2525 = vunpack.c.l.b16 %v2493
      %v2526 = vunpack.c.l.b16 %v2494
      %v2527 = vunpack.c.l.b16 %v2495
      %v2528 = vunpack.c.l.b16 %v2496
      %v2529 = vunpack.c.l.b16 %v2497
      %v2530 = vunpack.c.l.b16 %v2498
      %v2531 = vunpack.c.l.b16 %v2499
      %v2532 = vunpack.c.l.b16 %v2500
      %v2533 = vunpack.c.l.b16 %v2501
      %v2534 = vunpack.c.l.b16 %v2502
      %v2535 = vunpack.c.l.b16 %v2503
      %v2536 = vpack.c.b16 %v2521, %v2520
      %v2537 = vpack.c.b16 %v2523, %v2522
      %v2538 = vpack.c.b16 %v2525, %v2524
      %v2539 = vpack.c.b16 %v2527, %v2526
      %v2540 = vpack.c.b16 %v2529, %v2528
      %v2541 = vpack.c.b16 %v2531, %v2530
      %v2542 = vpack.c.b16 %v2533, %v2532
      %v2543 = vpack.c.b16 %v2535, %v2534
      %2552 = vmatprep.subr.bf16.mxu0 0
      %2553 = vmatpush1.bf16.msra.mxu0 %v2536
      %2554 = vmatprep.subr.bf16.mxu0 0
      %2555 = vmatpush1.bf16.msra.mxu0 %v2537
      %2556 = vmatprep.subr.bf16.mxu0 0
      %2557 = vmatpush1.bf16.msra.mxu0 %v2538
      %2558 = vmatprep.subr.bf16.mxu0 0
      %2559 = vmatpush1.bf16.msra.mxu0 %v2539
      %2560 = vmatprep.subr.bf16.mxu0 0
      %2561 = vmatpush1.bf16.msra.mxu0 %v2540
      %2562 = vmatprep.subr.bf16.mxu0 0
      %2563 = vmatpush1.bf16.msra.mxu0 %v2541
      %2564 = vmatprep.subr.bf16.mxu0 0
      %2565 = vmatpush1.bf16.msra.mxu0 %v2542
      %2566 = vmatprep.subr.bf16.mxu0 0
      %2567 = vmatpush1.bf16.msra.mxu0 %v2543
      %2568 = vmatprep.subr.bf16.mxu0 0
      %2569 = vmatpush1.bf16.msra.mxu0 0
      %2570 = vmatprep.subr.bf16.mxu0 0
      %2571 = vmatpush1.bf16.msra.mxu0 0
      %2572 = vmatprep.subr.bf16.mxu0 0
      %2573 = vmatpush1.bf16.msra.mxu0 0
      %2574 = vmatprep.subr.bf16.mxu0 0
      %2575 = vmatpush1.bf16.msra.mxu0 0
      %2576 = vmatprep.subr.bf16.mxu0 0
      %2577 = vmatpush1.bf16.msra.mxu0 0
      %2578 = vmatprep.subr.bf16.mxu0 0
      %2579 = vmatpush1.bf16.msra.mxu0 0
      %2580 = vmatprep.subr.bf16.mxu0 0
      %2581 = vmatpush1.bf16.msra.mxu0 0
      %2582 = vmatprep.subr.bf16.mxu0 0
      %2583 = vmatpush1.bf16.msra.mxu0 0
      %2584 = vmatprep.mubr.bf16.mxu0 0
      %2585 = vmatmul.mubr.bf16.gmra.mrb[0].mxu0 %v2487
      %v2586 = vpop.f32.mrb[0].mxu0
      %v2587 = vadd.f32 0.0, %v2586
      %v2588 = vpop.f32.mrb[0].mxu0
      %v2589 = vpop.f32.mrb[0].mxu0
      %v2590 = vpop.f32.mrb[0].mxu0
      %2591 = vdwg.mxu0
      %v2592 = vxor.u32 %v2587, 2147483648
      %v2593 = vmul.f32 %v2592, 1.442695
      %v2594 = vpow.pop %v2593
      %v2595 = vadd.f32 %v2594, 1.0
      %v2596 = vrcp.pop %v2595
      %v2597 = vmul.f32 1.0, %v2596
      %v2598 = vlaneseq
      %v2599 = vshrl.u32 %v2598, 7
      %v2600 = vsub.s32 0, %v2599
      %v2601 = vrot.slane %v2597, %v2600
      %2603 = vbcast.lane.b32.xlu0 %v2601, 256
      %v2604 = vpop.permute.xlu0 %2603
      %v2605 = vlaneseq
      %v2606 = vshrl.u32 %v2605, 7
      %v2607 = vsub.s32 1, %v2606
      %v2608 = vrot.slane %v2597, %v2607
      %2610 = vbcast.lane.b32.xlu0 %v2608, 256
      %v2611 = vpop.permute.xlu0 %2610
      %v2612 = vlaneseq
      %v2613 = vshrl.u32 %v2612, 7
      %v2614 = vsub.s32 2, %v2613
      %v2615 = vrot.slane %v2597, %v2614
      %2617 = vbcast.lane.b32.xlu0 %v2615, 256
      %v2618 = vpop.permute.xlu0 %2617
      %v2619 = vlaneseq
      %v2620 = vshrl.u32 %v2619, 7
      %v2621 = vsub.s32 3, %v2620
      %v2622 = vrot.slane %v2597, %v2621
      %2624 = vbcast.lane.b32.xlu0 %v2622, 256
      %v2625 = vpop.permute.xlu0 %2624
      %v2626 = vlaneseq
      %v2627 = vshrl.u32 %v2626, 7
      %v2628 = vsub.s32 4, %v2627
      %v2629 = vrot.slane %v2597, %v2628
      %2631 = vbcast.lane.b32.xlu0 %v2629, 256
      %v2632 = vpop.permute.xlu0 %2631
      %v2633 = vlaneseq
      %v2634 = vshrl.u32 %v2633, 7
      %v2635 = vsub.s32 5, %v2634
      %v2636 = vrot.slane %v2597, %v2635
      %2638 = vbcast.lane.b32.xlu0 %v2636, 256
      %v2639 = vpop.permute.xlu0 %2638
      %v2640 = vlaneseq
      %v2641 = vshrl.u32 %v2640, 7
      %v2642 = vsub.s32 6, %v2641
      %v2643 = vrot.slane %v2597, %v2642
      %2645 = vbcast.lane.b32.xlu0 %v2643, 256
      %v2646 = vpop.permute.xlu0 %2645
      %v2647 = vlaneseq
      %v2648 = vshrl.u32 %v2647, 7
      %v2649 = vsub.s32 7, %v2648
      %v2650 = vrot.slane %v2597, %v2649
      %2652 = vbcast.lane.b32.xlu0 %v2650, 256
      %v2653 = vpop.permute.xlu0 %2652
      %v2654 = vmul.f32 %v2097, %v2604
      %v2655 = vmul.f32 %v2098, %v2611
      %v2656 = vmul.f32 %v2099, %v2618
      %v2657 = vmul.f32 %v2100, %v2625
      %v2658 = vmul.f32 %v2101, %v2632
      %v2659 = vmul.f32 %v2102, %v2639
      %v2660 = vmul.f32 %v2103, %v2646
      %v2661 = vmul.f32 %v2104, %v2653
      %v2662 = vadd.f32 %v2654, %v1835
      %v2663 = vadd.f32 %v2655, %v1836
      %v2664 = vadd.f32 %v2656, %v1837
      %v2665 = vadd.f32 %v2657, %v1838
      %v2666 = vadd.f32 %v2658, %v1839
      %v2667 = vadd.f32 %v2659, %v1840
      %v2668 = vadd.f32 %v2660, %v1841
      %v2669 = vadd.f32 %v2661, %v1842
      %v2670 = vmax.f32 %v2662, 0.0
      %v2671 = vmax.f32 %v2663, 0.0
      %v2672 = vmax.f32 %v2664, 0.0
      %v2673 = vmax.f32 %v2665, 0.0
      %v2674 = vmax.f32 %v2666, 0.0
      %v2675 = vmax.f32 %v2667, 0.0
      %v2676 = vmax.f32 %v2668, 0.0
      %v2677 = vmax.f32 %v2669, 0.0
      %v2678 = vpack.c.bf16 %v2671, %v2670
      %v2679 = vpack.c.bf16 %v2673, %v2672
      %v2680 = vpack.c.bf16 %v2675, %v2674
      %v2681 = vpack.c.bf16 %v2677, %v2676
      %v2686 = vunpack.c.l.b16 %v2678
      %v2687 = vunpack.c.h.b16 %v2678
      %v2688 = vunpack.c.l.b16 %v2679
      %v2689 = vunpack.c.h.b16 %v2679
      %v2690 = vunpack.c.l.b16 %v2680
      %v2691 = vunpack.c.h.b16 %v2680
      %v2692 = vunpack.c.l.b16 %v2681
      %v2693 = vunpack.c.h.b16 %v2681
      %v2694 = vpack.c.b16 %v2686, %v2686
      %v2695 = vpack.c.b16 %v2687, %v2687
      %v2696 = vpack.c.b16 %v2688, %v2688
      %v2697 = vpack.c.b16 %v2689, %v2689
      %v2698 = vpack.c.b16 %v2690, %v2690
      %v2699 = vpack.c.b16 %v2691, %v2691
      %v2700 = vpack.c.b16 %v2692, %v2692
      %v2701 = vpack.c.b16 %v2693, %v2693
      %2710 = vst [vmem:[%s440] sm:$0xf] %v2694
      %2711 = vst [vmem:[%s440 + $0x4] sm:$0xf] %v2695
      %2712 = vst [vmem:[%s440 + $0x8] sm:$0xf] %v2696
      %2713 = vst [vmem:[%s440 + $0xc] sm:$0xf] %v2697
      %2714 = vst [vmem:[%s440 + $0x10] sm:$0xf] %v2698
      %2715 = vst [vmem:[%s440 + $0x14] sm:$0xf] %v2699
      %2716 = vst [vmem:[%s440 + $0x18] sm:$0xf] %v2700
      %2717 = vst [vmem:[%s440 + $0x1c] sm:$0xf] %v2701
      %p2718 = scmp.lt.s32.totalorder %s24, 1
      %s2719 = scalar_select %p2718, %s24, 1
      %s2720 = smul.addr %s2719, 8
      %s2721 = smul.addr %s2720, 4
      %s2722 = scalar_lea.vmem %s13, %s2721
      // Predicated region
      $region73: #{_lambda_.5} parent=71 // pred_check
        %p2723 = pneg %p320
      $region74: #{_lambda_.5} parent=71 // pred_check_branch
        %2725 = sbr.rel (%p2723) target = $region76
      $region75: #{_lambda_.5} parent=71 // pred_region
        _
      $region76: #{_lambda_.5} parent=71 // pred_fallthru
        _
    $region72: #{_lambda_.5} parent=5 // pred_fallthru
      _
    %p2726 = scmp.le.s32.totalorder 2, %s19
    // Predicated region
    $region77: #{_lambda_.5} parent=5 // pred_check
      %p2727 = pneg %p2726
    $region78: #{_lambda_.5} parent=5 // pred_check_branch
      %2729 = sbr.rel (%p2727) target = $region80
    $region79: #{_lambda_.5} parent=5 // pred_region
      %s2730 = ssub.s32 %s19, 2
      // Predicated region
      $region81: #{_lambda_.5} parent=79 // pred_check
        %p2731 = pneg %p326
      $region82: #{_lambda_.5} parent=79 // pred_check_branch
        %2733 = sbr.rel (%p2731) target = $region84
      $region83: #{_lambda_.5} parent=79 // pred_region
        %p2734 = scmp.lt.s32.totalorder %s25, 1
        %s2735 = scalar_select %p2734, %s25, 1
        %s2736 = smul.addr %s2735, 8
        %s2737 = smul.addr %s2736, 4
        %s2738 = scalar_lea.vmem %s13, %s2737
      $region84: #{_lambda_.5} parent=79 // pred_fallthru
        _
    $region80: #{_lambda_.5} parent=5 // pred_fallthru
      _
  $region6: #{_lambda_.5} parent=0 // loop_footer
    %s23 = sadd.s32 1, %s19
  $region7: #{_lambda_.5} parent=0 // loop_footer_branch
    %18 = sbr.rel target = $region3
  $region8: #{_lambda_.5} parent=0 // loop_exit
    _

// kernel: _lambda_.6
$region0: #{_lambda_.6}
  #allocation0 [shape = 'u32[]', space=smem, size = 0x4, offset = 0x4, fixed_abs, tag = 'smem constant byte address 0x4 - core index']
  #allocation1 [shape = 'u32[144,128]{1,0:T(1,128)}', space=vmem, size = 0x12000, scoped, tag = 'internal scratch']
  %s0 = inlined_call_operand.vmem [shape: bf16[2,64,128], index: 0, kind: input, shape index: {}]
  %s1 = inlined_call_operand.vmem [shape: bf16[128,128], index: 1, kind: input, shape index: {}]
  %s2 = inlined_call_operand.hbm [shape: f32[1,128], index: 2, kind: input, shape index: {}]
  %s3 = inlined_call_operand.hbm [shape: f32[1,128], index: 3, kind: input, shape index: {}]
  %s4 = inlined_call_operand.vmem [shape: bf16[1152,128], index: 4, kind: input, shape index: {}]
  %s5 = inlined_call_operand.hbm [shape: f32[1,128], index: 5, kind: input, shape index: {}]
  %s6 = inlined_call_operand.hbm [shape: f32[1,128], index: 6, kind: input, shape index: {}]
  %s7 = inlined_call_operand.vmem [shape: bf16[128,128], index: 7, kind: input, shape index: {}]
  %s8 = inlined_call_operand.hbm [shape: f32[1,128], index: 8, kind: input, shape index: {}]
  %s9 = inlined_call_operand.vmem [shape: f32[1,128], index: 9, kind: input, shape index: {}]
  %s10 = inlined_call_operand.vmem [shape: bf16[128,128], index: 10, kind: input, shape index: {}]
  %s11 = inlined_call_operand.vmem [shape: bf16[128,128], index: 11, kind: input, shape index: {}]
  %s12 = inlined_call_operand.vmem [shape: bf16[128,8], index: 12, kind: input, shape index: {}]
  %s13 = inlined_call_operand.vmem [shape: bf16[2,64,128], index: 13, kind: output, shape index: {}]
  %s14 = sld [smem:[#allocation0]]
  $region105: #{_lambda_.6} parent=0
    _
  %s16 = ssub.s32 1, %s14
  %s17 = scalar_select 0, %s16, %s14
  $region1: #{_lambda_.6} parent=0
    #allocation2 [shape = 'u8[512]{0}', space=vmem, size = 0x400, scoped, tag = 'input window, operand 2, single buffered']
    #allocation3 [shape = 's32[2]{0}', space=sflag, size = 0x8, scoped, tag = 'scoped memory for _lambda_.6']
    #allocation4 [shape = 'u8[512]{0}', space=vmem, size = 0x400, scoped, tag = 'input window, operand 3, single buffered']
    #allocation5 [shape = 's32[1]{0}', space=sflag, size = 0x4, scoped, tag = 'scoped memory for _lambda_.6']
    #allocation6 [shape = 'u8[512]{0}', space=vmem, size = 0x400, scoped, tag = 'input window, operand 5, single buffered']
    #allocation7 [shape = 'u8[512]{0}', space=vmem, size = 0x400, scoped, tag = 'input window, operand 6, single buffered']
    #allocation8 [shape = 's32[1]{0}', space=sflag, size = 0x4, scoped, tag = 'scoped memory for _lambda_.6']
    #allocation9 [shape = 'u8[512]{0}', space=vmem, size = 0x400, scoped, tag = 'input window, operand 8, single buffered']
    %18 = vsyncpa [#allocation3], 0
    %19 = vsyncpa [#allocation5], 0
    %20 = vsyncpa [#allocation8], 0
    loop: start=0, step=1, limit=4
    $region2: #{_lambda_.6} parent=1 // loop_pre_header
      _
    $region3: #{_lambda_.6} parent=1 // loop_header
      %s22 = sphi 0, %s26
      %p23 = scmp.ge.s32.totalorder %s22, 4
      %s32 = sphi 0, %s34
      %s35 = sphi 0, %s32
      %s36 = sphi 0, %s35
      %s52 = sphi 0, %s36
      %s56 = sphi 0, %s56
      %s58 = sphi 0, %s56
      %s59 = sphi 0, %s58
      %s73 = sphi 0, %s59
      %s77 = sphi 0, %s77
      %s79 = sphi 0, %s77
      %s80 = sphi 0, %s79
      %s94 = sphi 0, %s80
      %s98 = sphi 0, %s98
      %s100 = sphi 0, %s98
      %s101 = sphi 0, %s100
      %s115 = sphi 0, %s101
      %s119 = sphi 0, %s119
      %s121 = sphi 0, %s119
      %s122 = sphi 0, %s121
      %s136 = sphi 0, %s122
      %s140 = sphi 0, %s140
      %s142 = sphi 0, %s140
      %s143 = sphi 0, %s142
      %s157 = sphi 0, %s143
      %s161 = sphi 0, %s161
      %s163 = sphi 0, %s161
      %s164 = sphi 0, %s163
      %s178 = sphi 0, %s164
      %s182 = sphi 0, %s182
      %s184 = sphi 0, %s182
      %s185 = sphi 0, %s184
      %s199 = sphi 0, %s185
      %s203 = sphi 0, %s203
      %s205 = sphi 0, %s203
      %s206 = sphi 0, %s205
      %s220 = sphi 0, %s206
      %s224 = sphi 0, %s224
      %s226 = sphi 0, %s224
      %s227 = sphi 0, %s226
      %s241 = sphi 0, %s227
      %s245 = sphi 0, %s245
      %s247 = sphi 0, %s245
      %s248 = sphi 0, %s247
      %s262 = sphi 0, %s248
      %s266 = sphi 0, %s266
      %s268 = sphi 0, %s266
      %s269 = sphi 0, %s268
      %s283 = sphi 0, %s269
      %s287 = sphi 0, %s287
      %s289 = sphi 0, %s287
      %s290 = sphi 0, %s289
      %s304 = sphi 0, %s290
      %s310 = sphi 0, %s312
      %s313 = sphi 0, %s310
      %s314 = sphi 0, %s313
      %s330 = sphi 0, %s314
    $region4: #{_lambda_.6} parent=1 // loop_header_branch
      %25 = sbr.rel (%p23) target = $region8
    $region5: #{_lambda_.6} parent=1 // loop_body
      %s27 = ssub.s32 %s22, 1
      %s28 = ssub.s32 %s22, 2
      %s29 = sadd.s32 %s22, 1
      %s30 = ssub.s32 %s22, %s29
      %p31 = scmp.eq.s32.totalorder %s30, 0
      %s33 = sadd.s32 %s32, 1
      %s34 = scalar_select %p31, %s32, %s33
      %p37 = pneg %p31
      %p38 = scmp.eq.s32.totalorder %s22, 1
      %p39 = por %p37, %p38
      %p40 = scmp.ne.s32.totalorder %s32, %s35
      %p41 = scmp.eq.s32.totalorder %s22, 0
      %p42 = por %p40, %p41
      %p43 = scmp.ne.s32.totalorder %s32, %s35
      %p44 = scmp.eq.s32.totalorder %s27, 1
      %p45 = por %p43, %p44
      %p46 = scmp.ne.s32.totalorder %s35, %s36
      %p47 = scmp.eq.s32.totalorder %s27, 0
      %p48 = por %p46, %p47
      %p49 = scmp.ne.s32.totalorder %s35, %s36
      %p50 = scmp.eq.s32.totalorder %s28, 1
      %p51 = por %p49, %p50
      %p53 = scmp.ne.s32.totalorder %s36, %s52
      %p54 = scmp.eq.s32.totalorder %s28, 0
      %p55 = por %p53, %p54
      %s57 = sadd.s32 %s56, 1
      %p60 = scmp.eq.s32.totalorder %s22, 1
      %p61 = scmp.ne.s32.totalorder %s56, %s58
      %p62 = scmp.eq.s32.totalorder %s22, 0
      %p63 = por %p61, %p62
      %p64 = scmp.ne.s32.totalorder %s56, %s58
      %p65 = scmp.eq.s32.totalorder %s27, 1
      %p66 = por %p64, %p65
      %p67 = scmp.ne.s32.totalorder %s58, %s59
      %p68 = scmp.eq.s32.totalorder %s27, 0
      %p69 = por %p67, %p68
      %p70 = scmp.ne.s32.totalorder %s58, %s59
      %p71 = scmp.eq.s32.totalorder %s28, 1
      %p72 = por %p70, %p71
      %p74 = scmp.ne.s32.totalorder %s59, %s73
      %p75 = scmp.eq.s32.totalorder %s28, 0
      %p76 = por %p74, %p75
      %s78 = sadd.s32 %s77, 1
      %p81 = scmp.eq.s32.totalorder %s22, 1
      %p82 = scmp.ne.s32.totalorder %s77, %s79
      %p83 = scmp.eq.s32.totalorder %s22, 0
      %p84 = por %p82, %p83
      %p85 = scmp.ne.s32.totalorder %s77, %s79
      %p86 = scmp.eq.s32.totalorder %s27, 1
      %p87 = por %p85, %p86
      %p88 = scmp.ne.s32.totalorder %s79, %s80
      %p89 = scmp.eq.s32.totalorder %s27, 0
      %p90 = por %p88, %p89
      %p91 = scmp.ne.s32.totalorder %s79, %s80
      %p92 = scmp.eq.s32.totalorder %s28, 1
      %p93 = por %p91, %p92
      %p95 = scmp.ne.s32.totalorder %s80, %s94
      %p96 = scmp.eq.s32.totalorder %s28, 0
      %p97 = por %p95, %p96
      %s99 = sadd.s32 %s98, 1
      %p102 = scmp.eq.s32.totalorder %s22, 1
      %p103 = scmp.ne.s32.totalorder %s98, %s100
      %p104 = scmp.eq.s32.totalorder %s22, 0
      %p105 = por %p103, %p104
      %p106 = scmp.ne.s32.totalorder %s98, %s100
      %p107 = scmp.eq.s32.totalorder %s27, 1
      %p108 = por %p106, %p107
      %p109 = scmp.ne.s32.totalorder %s100, %s101
      %p110 = scmp.eq.s32.totalorder %s27, 0
      %p111 = por %p109, %p110
      %p112 = scmp.ne.s32.totalorder %s100, %s101
      %p113 = scmp.eq.s32.totalorder %s28, 1
      %p114 = por %p112, %p113
      %p116 = scmp.ne.s32.totalorder %s101, %s115
      %p117 = scmp.eq.s32.totalorder %s28, 0
      %p118 = por %p116, %p117
      %s120 = sadd.s32 %s119, 1
      %p123 = scmp.eq.s32.totalorder %s22, 1
      %p124 = scmp.ne.s32.totalorder %s119, %s121
      %p125 = scmp.eq.s32.totalorder %s22, 0
      %p126 = por %p124, %p125
      %p127 = scmp.ne.s32.totalorder %s119, %s121
      %p128 = scmp.eq.s32.totalorder %s27, 1
      %p129 = por %p127, %p128
      %p130 = scmp.ne.s32.totalorder %s121, %s122
      %p131 = scmp.eq.s32.totalorder %s27, 0
      %p132 = por %p130, %p131
      %p133 = scmp.ne.s32.totalorder %s121, %s122
      %p134 = scmp.eq.s32.totalorder %s28, 1
      %p135 = por %p133, %p134
      %p137 = scmp.ne.s32.totalorder %s122, %s136
      %p138 = scmp.eq.s32.totalorder %s28, 0
      %p139 = por %p137, %p138
      %s141 = sadd.s32 %s140, 1
      %p144 = scmp.eq.s32.totalorder %s22, 1
      %p145 = scmp.ne.s32.totalorder %s140, %s142
      %p146 = scmp.eq.s32.totalorder %s22, 0
      %p147 = por %p145, %p146
      %p148 = scmp.ne.s32.totalorder %s140, %s142
      %p149 = scmp.eq.s32.totalorder %s27, 1
      %p150 = por %p148, %p149
      %p151 = scmp.ne.s32.totalorder %s142, %s143
      %p152 = scmp.eq.s32.totalorder %s27, 0
      %p153 = por %p151, %p152
      %p154 = scmp.ne.s32.totalorder %s142, %s143
      %p155 = scmp.eq.s32.totalorder %s28, 1
      %p156 = por %p154, %p155
      %p158 = scmp.ne.s32.totalorder %s143, %s157
      %p159 = scmp.eq.s32.totalorder %s28, 0
      %p160 = por %p158, %p159
      %s162 = sadd.s32 %s161, 1
      %p165 = scmp.eq.s32.totalorder %s22, 1
      %p166 = scmp.ne.s32.totalorder %s161, %s163
      %p167 = scmp.eq.s32.totalorder %s22, 0
      %p168 = por %p166, %p167
      %p169 = scmp.ne.s32.totalorder %s161, %s163
      %p170 = scmp.eq.s32.totalorder %s27, 1
      %p171 = por %p169, %p170
      %p172 = scmp.ne.s32.totalorder %s163, %s164
      %p173 = scmp.eq.s32.totalorder %s27, 0
      %p174 = por %p172, %p173
      %p175 = scmp.ne.s32.totalorder %s163, %s164
      %p176 = scmp.eq.s32.totalorder %s28, 1
      %p177 = por %p175, %p176
      %p179 = scmp.ne.s32.totalorder %s164, %s178
      %p180 = scmp.eq.s32.totalorder %s28, 0
      %p181 = por %p179, %p180
      %s183 = sadd.s32 %s182, 1
      %p186 = scmp.eq.s32.totalorder %s22, 1
      %p187 = scmp.ne.s32.totalorder %s182, %s184
      %p188 = scmp.eq.s32.totalorder %s22, 0
      %p189 = por %p187, %p188
      %p190 = scmp.ne.s32.totalorder %s182, %s184
      %p191 = scmp.eq.s32.totalorder %s27, 1
      %p192 = por %p190, %p191
      %p193 = scmp.ne.s32.totalorder %s184, %s185
      %p194 = scmp.eq.s32.totalorder %s27, 0
      %p195 = por %p193, %p194
      %p196 = scmp.ne.s32.totalorder %s184, %s185
      %p197 = scmp.eq.s32.totalorder %s28, 1
      %p198 = por %p196, %p197
      %p200 = scmp.ne.s32.totalorder %s185, %s199
      %p201 = scmp.eq.s32.totalorder %s28, 0
      %p202 = por %p200, %p201
      %s204 = sadd.s32 %s203, 1
      %p207 = scmp.eq.s32.totalorder %s22, 1
      %p208 = scmp.ne.s32.totalorder %s203, %s205
      %p209 = scmp.eq.s32.totalorder %s22, 0
      %p210 = por %p208, %p209
      %p211 = scmp.ne.s32.totalorder %s203, %s205
      %p212 = scmp.eq.s32.totalorder %s27, 1
      %p213 = por %p211, %p212
      %p214 = scmp.ne.s32.totalorder %s205, %s206
      %p215 = scmp.eq.s32.totalorder %s27, 0
      %p216 = por %p214, %p215
      %p217 = scmp.ne.s32.totalorder %s205, %s206
      %p218 = scmp.eq.s32.totalorder %s28, 1
      %p219 = por %p217, %p218
      %p221 = scmp.ne.s32.totalorder %s206, %s220
      %p222 = scmp.eq.s32.totalorder %s28, 0
      %p223 = por %p221, %p222
      %s225 = sadd.s32 %s224, 1
      %p228 = scmp.eq.s32.totalorder %s22, 1
      %p229 = scmp.ne.s32.totalorder %s224, %s226
      %p230 = scmp.eq.s32.totalorder %s22, 0
      %p231 = por %p229, %p230
      %p232 = scmp.ne.s32.totalorder %s224, %s226
      %p233 = scmp.eq.s32.totalorder %s27, 1
      %p234 = por %p232, %p233
      %p235 = scmp.ne.s32.totalorder %s226, %s227
      %p236 = scmp.eq.s32.totalorder %s27, 0
      %p237 = por %p235, %p236
      %p238 = scmp.ne.s32.totalorder %s226, %s227
      %p239 = scmp.eq.s32.totalorder %s28, 1
      %p240 = por %p238, %p239
      %p242 = scmp.ne.s32.totalorder %s227, %s241
      %p243 = scmp.eq.s32.totalorder %s28, 0
      %p244 = por %p242, %p243
      %s246 = sadd.s32 %s245, 1
      %p249 = scmp.eq.s32.totalorder %s22, 1
      %p250 = scmp.ne.s32.totalorder %s245, %s247
      %p251 = scmp.eq.s32.totalorder %s22, 0
      %p252 = por %p250, %p251
      %p253 = scmp.ne.s32.totalorder %s245, %s247
      %p254 = scmp.eq.s32.totalorder %s27, 1
      %p255 = por %p253, %p254
      %p256 = scmp.ne.s32.totalorder %s247, %s248
      %p257 = scmp.eq.s32.totalorder %s27, 0
      %p258 = por %p256, %p257
      %p259 = scmp.ne.s32.totalorder %s247, %s248
      %p260 = scmp.eq.s32.totalorder %s28, 1
      %p261 = por %p259, %p260
      %p263 = scmp.ne.s32.totalorder %s248, %s262
      %p264 = scmp.eq.s32.totalorder %s28, 0
      %p265 = por %p263, %p264
      %s267 = sadd.s32 %s266, 1
      %p270 = scmp.eq.s32.totalorder %s22, 1
      %p271 = scmp.ne.s32.totalorder %s266, %s268
      %p272 = scmp.eq.s32.totalorder %s22, 0
      %p273 = por %p271, %p272
      %p274 = scmp.ne.s32.totalorder %s266, %s268
      %p275 = scmp.eq.s32.totalorder %s27, 1
      %p276 = por %p274, %p275
      %p277 = scmp.ne.s32.totalorder %s268, %s269
      %p278 = scmp.eq.s32.totalorder %s27, 0
      %p279 = por %p277, %p278
      %p280 = scmp.ne.s32.totalorder %s268, %s269
      %p281 = scmp.eq.s32.totalorder %s28, 1
      %p282 = por %p280, %p281
      %p284 = scmp.ne.s32.totalorder %s269, %s283
      %p285 = scmp.eq.s32.totalorder %s28, 0
      %p286 = por %p284, %p285
      %s288 = sadd.s32 %s287, 1
      %p291 = scmp.eq.s32.totalorder %s22, 1
      %p292 = scmp.ne.s32.totalorder %s287, %s289
      %p293 = scmp.eq.s32.totalorder %s22, 0
      %p294 = por %p292, %p293
      %p295 = scmp.ne.s32.totalorder %s287, %s289
      %p296 = scmp.eq.s32.totalorder %s27, 1
      %p297 = por %p295, %p296
      %p298 = scmp.ne.s32.totalorder %s289, %s290
      %p299 = scmp.eq.s32.totalorder %s27, 0
      %p300 = por %p298, %p299
      %p301 = scmp.ne.s32.totalorder %s289, %s290
      %p302 = scmp.eq.s32.totalorder %s28, 1
      %p303 = por %p301, %p302
      %p305 = scmp.ne.s32.totalorder %s290, %s304
      %p306 = scmp.eq.s32.totalorder %s28, 0
      %p307 = por %p305, %p306
      %s308 = ssub.s32 %s22, %s29
      %p309 = scmp.eq.s32.totalorder %s308, 0
      %s311 = sadd.s32 %s310, 1
      %s312 = scalar_select %p309, %s310, %s311
      %p315 = pneg %p309
      %p316 = scmp.eq.s32.totalorder %s22, 1
      %p317 = por %p315, %p316
      %p318 = scmp.ne.s32.totalorder %s310, %s313
      %p319 = scmp.eq.s32.totalorder %s22, 0
      %p320 = por %p318, %p319
      %p321 = scmp.ne.s32.totalorder %s310, %s313
      %p322 = scmp.eq.s32.totalorder %s27, 1
      %p323 = por %p321, %p322
      %p324 = scmp.ne.s32.totalorder %s313, %s314
      %p325 = scmp.eq.s32.totalorder %s27, 0
      %p326 = por %p324, %p325
      %p327 = scmp.ne.s32.totalorder %s313, %s314
      %p328 = scmp.eq.s32.totalorder %s28, 1
      %p329 = por %p327, %p328
      %p331 = scmp.ne.s32.totalorder %s314, %s330
      %p332 = scmp.eq.s32.totalorder %s28, 0
      %p333 = por %p331, %p332
      %p334 = scmp.le.s32.totalorder 1, %s22
      %p335 = scmp.lt.s32.totalorder %s22, 3
      %p336 = pnand %p334, %p335
      %p337 = pneg %p336
      // Predicated region
      $region9: #{_lambda_.6} parent=5 // pred_check
        _
      $region10: #{_lambda_.6} parent=5 // pred_check_branch
        %339 = sbr.rel (%p336) target = $region12
      $region11: #{_lambda_.6} parent=5 // pred_region
        %s340 = ssub.s32 %s22, 1
        // Predicated region
        $region13: #{_lambda_.6} parent=11 // pred_check
          %p341 = pneg %p69
        $region14: #{_lambda_.6} parent=11 // pred_check_branch
          %343 = sbr.rel (%p341) target = $region16
        $region15: #{_lambda_.6} parent=11 // pred_region
          _
        $region16: #{_lambda_.6} parent=11 // pred_fallthru
          _
        // Predicated region
        $region17: #{_lambda_.6} parent=11 // pred_check
          %p344 = pneg %p90
        $region18: #{_lambda_.6} parent=11 // pred_check_branch
          %346 = sbr.rel (%p344) target = $region20
        $region19: #{_lambda_.6} parent=11 // pred_region
          %s348 = ssub.s32 16, 16
          %349 = vsyncadd [#allocation3], %s348
          %s351 = sshll.u32 [#allocation2], 4
          %s352 = int_to_ptr.vmem [resolvable:$true] %s351
          %354 = dma.hbm_to_vmem [thread:$0]  %s2, 16, %s352, [#allocation3]
        $region20: #{_lambda_.6} parent=11 // pred_fallthru
          _
        // Predicated region
        $region21: #{_lambda_.6} parent=11 // pred_check
          %p355 = pneg %p111
        $region22: #{_lambda_.6} parent=11 // pred_check_branch
          %357 = sbr.rel (%p355) target = $region24
        $region23: #{_lambda_.6} parent=11 // pred_region
          %s359 = ssub.s32 16, 16
          %360 = vsyncadd [#allocation5], %s359
          %s362 = sshll.u32 [#allocation4], 4
          %s363 = int_to_ptr.vmem [resolvable:$true] %s362
          %365 = dma.hbm_to_vmem [thread:$0]  %s3, 16, %s363, [#allocation5]
        $region24: #{_lambda_.6} parent=11 // pred_fallthru
          _
        // Predicated region
        $region25: #{_lambda_.6} parent=11 // pred_check
          %p366 = pneg %p132
        $region26: #{_lambda_.6} parent=11 // pred_check_branch
          %368 = sbr.rel (%p366) target = $region28
        $region27: #{_lambda_.6} parent=11 // pred_region
          _
        $region28: #{_lambda_.6} parent=11 // pred_fallthru
          _
        // Predicated region
        $region29: #{_lambda_.6} parent=11 // pred_check
          %p369 = pneg %p153
        $region30: #{_lambda_.6} parent=11 // pred_check_branch
          %371 = sbr.rel (%p369) target = $region32
        $region31: #{_lambda_.6} parent=11 // pred_region
          %s373 = ssub.s32 16, 16
          %374 = vsyncadd [#allocation5], %s373
          %s376 = sshll.u32 [#allocation6], 4
          %s377 = int_to_ptr.vmem [resolvable:$true] %s376
          %379 = dma.hbm_to_vmem [thread:$0]  %s5, 16, %s377, [#allocation5]
        $region32: #{_lambda_.6} parent=11 // pred_fallthru
          _
        // Predicated region
        $region33: #{_lambda_.6} parent=11 // pred_check
          %p380 = pneg %p174
        $region34: #{_lambda_.6} parent=11 // pred_check_branch
          %382 = sbr.rel (%p380) target = $region36
        $region35: #{_lambda_.6} parent=11 // pred_region
          %s384 = ssub.s32 16, 16
          %385 = vsyncadd [#allocation8], %s384
          %s387 = sshll.u32 [#allocation7], 4
          %s388 = int_to_ptr.vmem [resolvable:$true] %s387
          %390 = dma.hbm_to_vmem [thread:$0]  %s6, 16, %s388, [#allocation8]
        $region36: #{_lambda_.6} parent=11 // pred_fallthru
          _
        // Predicated region
        $region37: #{_lambda_.6} parent=11 // pred_check
          %p391 = pneg %p195
        $region38: #{_lambda_.6} parent=11 // pred_check_branch
          %393 = sbr.rel (%p391) target = $region40
        $region39: #{_lambda_.6} parent=11 // pred_region
          _
        $region40: #{_lambda_.6} parent=11 // pred_fallthru
          _
        // Predicated region
        $region41: #{_lambda_.6} parent=11 // pred_check
          %p394 = pneg %p216
        $region42: #{_lambda_.6} parent=11 // pred_check_branch
          %396 = sbr.rel (%p394) target = $region44
        $region43: #{_lambda_.6} parent=11 // pred_region
          %s398 = ssub.s32 16, 16
          %399 = vsyncadd [#allocation8], %s398
          %s401 = sshll.u32 [#allocation9], 4
          %s402 = int_to_ptr.vmem [resolvable:$true] %s401
          %404 = dma.hbm_to_vmem [thread:$0]  %s8, 16, %s402, [#allocation8]
        $region44: #{_lambda_.6} parent=11 // pred_fallthru
          _
        // Predicated region
        $region45: #{_lambda_.6} parent=11 // pred_check
          %p405 = pneg %p237
        $region46: #{_lambda_.6} parent=11 // pred_check_branch
          %407 = sbr.rel (%p405) target = $region48
        $region47: #{_lambda_.6} parent=11 // pred_region
          _
        $region48: #{_lambda_.6} parent=11 // pred_fallthru
          _
        // Predicated region
        $region49: #{_lambda_.6} parent=11 // pred_check
          %p408 = pneg %p258
        $region50: #{_lambda_.6} parent=11 // pred_check_branch
          %410 = sbr.rel (%p408) target = $region52
        $region51: #{_lambda_.6} parent=11 // pred_region
          _
        $region52: #{_lambda_.6} parent=11 // pred_fallthru
          _
        // Predicated region
        $region53: #{_lambda_.6} parent=11 // pred_check
          %p411 = pneg %p279
        $region54: #{_lambda_.6} parent=11 // pred_check_branch
          %413 = sbr.rel (%p411) target = $region56
        $region55: #{_lambda_.6} parent=11 // pred_region
          _
        $region56: #{_lambda_.6} parent=11 // pred_fallthru
          _
        // Predicated region
        $region57: #{_lambda_.6} parent=11 // pred_check
          %p414 = pneg %p300
        $region58: #{_lambda_.6} parent=11 // pred_check_branch
          %416 = sbr.rel (%p414) target = $region60
        $region59: #{_lambda_.6} parent=11 // pred_region
          _
        $region60: #{_lambda_.6} parent=11 // pred_fallthru
          _
      $region12: #{_lambda_.6} parent=5 // pred_fallthru
        _
      %p417 = scmp.lt.s32.totalorder %s22, 2
      // Predicated region
      $region61: #{_lambda_.6} parent=5 // pred_check
        %p418 = pneg %p417
      $region62: #{_lambda_.6} parent=5 // pred_check_branch
        %420 = sbr.rel (%p418) target = $region64
      $region63: #{_lambda_.6} parent=5 // pred_region
        // Predicated region
        $region65: #{_lambda_.6} parent=63 // pred_check
          %p421 = pneg %p42
        $region66: #{_lambda_.6} parent=63 // pred_check_branch
          %423 = sbr.rel (%p421) target = $region68
        $region67: #{_lambda_.6} parent=63 // pred_region
          %p424 = scmp.lt.s32.totalorder %s22, 1
          %s425 = scalar_select %p424, %s22, 1
          %s426 = smul.addr %s425, 8
          %s427 = smul.addr %s426, 4
          %s428 = scalar_lea.vmem %s0, %s427
        $region68: #{_lambda_.6} parent=63 // pred_fallthru
          _
      $region64: #{_lambda_.6} parent=5 // pred_fallthru
        _
      %p429 = scmp.le.s32.totalorder 1, %s22
      %p430 = scmp.lt.s32.totalorder %s22, 3
      %p431 = pnand %p429, %p430
      %p432 = pneg %p431
      // Predicated region
      $region69: #{_lambda_.6} parent=5 // pred_check
        _
      $region70: #{_lambda_.6} parent=5 // pred_check_branch
        %434 = sbr.rel (%p431) target = $region72
      $region71: #{_lambda_.6} parent=5 // pred_region
        %s435 = ssub.s32 %s22, 1
        // Predicated region
        $region73: #{_lambda_.6} parent=71 // pred_check
          %p436 = pneg %p90
        $region74: #{_lambda_.6} parent=71 // pred_check_branch
          %438 = sbr.rel (%p436) target = $region76
        $region75: #{_lambda_.6} parent=71 // pred_region
          %439 = dma.done [#allocation3], 16
        $region76: #{_lambda_.6} parent=71 // pred_fallthru
          _
        // Predicated region
        $region77: #{_lambda_.6} parent=71 // pred_check
          %p440 = pneg %p111
        $region78: #{_lambda_.6} parent=71 // pred_check_branch
          %442 = sbr.rel (%p440) target = $region80
        $region79: #{_lambda_.6} parent=71 // pred_region
          %443 = dma.done [#allocation5], 16
        $region80: #{_lambda_.6} parent=71 // pred_fallthru
          _
        // Predicated region
        $region81: #{_lambda_.6} parent=71 // pred_check
          %p444 = pneg %p153
        $region82: #{_lambda_.6} parent=71 // pred_check_branch
          %446 = sbr.rel (%p444) target = $region84
        $region83: #{_lambda_.6} parent=71 // pred_region
          %447 = dma.done [#allocation5], 16
        $region84: #{_lambda_.6} parent=71 // pred_fallthru
          _
        // Predicated region
        $region85: #{_lambda_.6} parent=71 // pred_check
          %p448 = pneg %p174
        $region86: #{_lambda_.6} parent=71 // pred_check_branch
          %450 = sbr.rel (%p448) target = $region88
        $region87: #{_lambda_.6} parent=71 // pred_region
          %451 = dma.done [#allocation8], 16
        $region88: #{_lambda_.6} parent=71 // pred_fallthru
          _
        // Predicated region
        $region89: #{_lambda_.6} parent=71 // pred_check
          %p452 = pneg %p216
        $region90: #{_lambda_.6} parent=71 // pred_check_branch
          %454 = sbr.rel (%p452) target = $region92
        $region91: #{_lambda_.6} parent=71 // pred_region
          %455 = dma.done [#allocation8], 16
        $region92: #{_lambda_.6} parent=71 // pred_fallthru
          _
        %p456 = scmp.lt.s32.totalorder %s27, 1
        %s457 = scalar_select %p456, %s27, 1
        %s458 = smul.addr %s457, 8
        %s459 = smul.addr %s458, 4
        %s460 = scalar_lea.vmem %s0, %s459
        %p461 = pneg %p48
        %p462 = pneg %p45
        %p463 = pneg %p69
        %p464 = pneg %p66
        %p465 = pneg %p90
        %p466 = pneg %p87
        %p467 = pneg %p111
        %p468 = pneg %p108
        %p469 = pneg %p132
        %p470 = pneg %p129
        %p471 = pneg %p153
        %p472 = pneg %p150
        %p473 = pneg %p174
        %p474 = pneg %p171
        %p475 = pneg %p195
        %p476 = pneg %p192
        %p477 = pneg %p216
        %p478 = pneg %p213
        %p479 = pneg %p237
        %p480 = pneg %p234
        %p481 = pneg %p258
        %p482 = pneg %p255
        %p483 = pneg %p279
        %p484 = pneg %p276
        %p485 = pneg %p300
        %p486 = pneg %p297
        %p487 = pneg %p326
        %p488 = pneg %p323
        %p489 = scmp.lt.s32.totalorder %s27, 1
        %s490 = scalar_select %p489, %s27, 1
        %s491 = smul.addr %s490, 8
        %s492 = smul.addr %s491, 4
        %s493 = scalar_lea.vmem %s13, %s492
        %p494 = scmp.lt.s32.totalorder %s27, 1
        %s495 = scalar_select %p494, %s27, 1
        %s496 = smul.addr %s495, 8
        %s497 = smul.addr %s496, 4
        %s498 = scalar_lea.vmem %s0, %s497
        %p499 = scmp.lt.s32.totalorder %s27, 1
        %s500 = scalar_select %p499, %s27, 1
        %s501 = smul.addr %s500, 8
        %s502 = smul.addr %s501, 4
        %s503 = scalar_lea.vmem %s13, %s502
        %v505 = vld [vmem:[%s498] sm:$0xf]
        %v506 = vld [vmem:[%s498 + $0x4] sm:$0xf]
        %v507 = vld [vmem:[%s498 + $0x8] sm:$0xf]
        %v508 = vld [vmem:[%s498 + $0xc] sm:$0xf]
        %v509 = vld [vmem:[%s498 + $0x10] sm:$0xf]
        %v510 = vld [vmem:[%s498 + $0x14] sm:$0xf]
        %v511 = vld [vmem:[%s498 + $0x18] sm:$0xf]
        %v512 = vld [vmem:[%s498 + $0x1c] sm:$0xf]
        %v513 = vld [vmem:[%s1] sm:$0xf]
        %v514 = vld [vmem:[%s1 + $0x4] sm:$0xf]
        %v515 = vld [vmem:[%s1 + $0x8] sm:$0xf]
        %v516 = vld [vmem:[%s1 + $0xc] sm:$0xf]
        %v517 = vld [vmem:[%s1 + $0x10] sm:$0xf]
        %v518 = vld [vmem:[%s1 + $0x14] sm:$0xf]
        %v519 = vld [vmem:[%s1 + $0x18] sm:$0xf]
        %v520 = vld [vmem:[%s1 + $0x1c] sm:$0xf]
        %v521 = vld [vmem:[%s1 + $0x20] sm:$0xf]
        %v522 = vld [vmem:[%s1 + $0x24] sm:$0xf]
        %v523 = vld [vmem:[%s1 + $0x28] sm:$0xf]
        %v524 = vld [vmem:[%s1 + $0x2c] sm:$0xf]
        %v525 = vld [vmem:[%s1 + $0x30] sm:$0xf]
        %v526 = vld [vmem:[%s1 + $0x34] sm:$0xf]
        %v527 = vld [vmem:[%s1 + $0x38] sm:$0xf]
        %v528 = vld [vmem:[%s1 + $0x3c] sm:$0xf]
        %v537 = vunpack.c.l.b16 %v505
        %v538 = vunpack.c.l.b16 %v506
        %v539 = vunpack.c.l.b16 %v507
        %v540 = vunpack.c.l.b16 %v508
        %v541 = vunpack.c.l.b16 %v509
        %v542 = vunpack.c.l.b16 %v510
        %v543 = vunpack.c.l.b16 %v511
        %v544 = vunpack.c.l.b16 %v512
        %v545 = vpack.c.b16 %v538, %v537
        %v546 = vpack.c.b16 %v540, %v539
        %v547 = vpack.c.b16 %v542, %v541
        %v548 = vpack.c.b16 %v544, %v543
        %v569 = vunpack.c.l.b16 %v513
        %v570 = vunpack.c.l.b16 %v514
        %v571 = vunpack.c.l.b16 %v515
        %v572 = vunpack.c.l.b16 %v516
        %v573 = vunpack.c.l.b16 %v517
        %v574 = vunpack.c.l.b16 %v518
        %v575 = vunpack.c.l.b16 %v519
        %v576 = vunpack.c.l.b16 %v520
        %v577 = vunpack.c.l.b16 %v521
        %v578 = vunpack.c.l.b16 %v522
        %v579 = vunpack.c.l.b16 %v523
        %v580 = vunpack.c.l.b16 %v524
        %v581 = vunpack.c.l.b16 %v525
        %v582 = vunpack.c.l.b16 %v526
        %v583 = vunpack.c.l.b16 %v527
        %v584 = vunpack.c.l.b16 %v528
        %v585 = vpack.c.b16 %v570, %v569
        %v586 = vpack.c.b16 %v572, %v571
        %v587 = vpack.c.b16 %v574, %v573
        %v588 = vpack.c.b16 %v576, %v575
        %v589 = vpack.c.b16 %v578, %v577
        %v590 = vpack.c.b16 %v580, %v579
        %v591 = vpack.c.b16 %v582, %v581
        %v592 = vpack.c.b16 %v584, %v583
        %601 = vmatprep.subr.bf16.mxu0 0
        %602 = vmatpush1.bf16.msra.mxu0 %v585
        %603 = vmatprep.subr.bf16.mxu0 0
        %604 = vmatpush1.bf16.msra.mxu0 %v586
        %605 = vmatprep.subr.bf16.mxu0 0
        %606 = vmatpush1.bf16.msra.mxu0 %v587
        %607 = vmatprep.subr.bf16.mxu0 0
        %608 = vmatpush1.bf16.msra.mxu0 %v588
        %609 = vmatprep.subr.bf16.mxu0 0
        %610 = vmatpush1.bf16.msra.mxu0 %v589
        %611 = vmatprep.subr.bf16.mxu0 0
        %612 = vmatpush1.bf16.msra.mxu0 %v590
        %613 = vmatprep.subr.bf16.mxu0 0
        %614 = vmatpush1.bf16.msra.mxu0 %v591
        %615 = vmatprep.subr.bf16.mxu0 0
        %616 = vmatpush1.bf16.msra.mxu0 %v592
        %617 = vmatprep.subr.bf16.mxu0 0
        %618 = vmatpush1.bf16.msra.mxu0 0
        %619 = vmatprep.subr.bf16.mxu0 0
        %620 = vmatpush1.bf16.msra.mxu0 0
        %621 = vmatprep.subr.bf16.mxu0 0
        %622 = vmatpush1.bf16.msra.mxu0 0
        %623 = vmatprep.subr.bf16.mxu0 0
        %624 = vmatpush1.bf16.msra.mxu0 0
        %625 = vmatprep.subr.bf16.mxu0 0
        %626 = vmatpush1.bf16.msra.mxu0 0
        %627 = vmatprep.subr.bf16.mxu0 0
        %628 = vmatpush1.bf16.msra.mxu0 0
        %629 = vmatprep.subr.bf16.mxu0 0
        %630 = vmatpush1.bf16.msra.mxu0 0
        %631 = vmatprep.subr.bf16.mxu0 0
        %632 = vmatpush1.bf16.msra.mxu0 0
        %633 = vmatprep.mubr.bf16.mxu0 0
        %634 = vmatmul.mubr.bf16.gmra.mrb[0].mxu0 %v545
        %v635 = vpop.f32.mrb[0].mxu0
        %v636 = vadd.f32 0.0, %v635
        %v637 = vpop.f32.mrb[0].mxu0
        %v638 = vpop.f32.mrb[0].mxu0
        %v639 = vadd.f32 0.0, %v638
        %v640 = vpop.f32.mrb[0].mxu0
        %641 = vmatprep.mubr.bf16.mxu0 0
        %642 = vmatmul.mubr.bf16.gmra.mrb[0].mxu0 %v546
        %v643 = vpop.f32.mrb[0].mxu0
        %v644 = vadd.f32 0.0, %v643
        %v645 = vpop.f32.mrb[0].mxu0
        %v646 = vpop.f32.mrb[0].mxu0
        %v647 = vadd.f32 0.0, %v646
        %v648 = vpop.f32.mrb[0].mxu0
        %649 = vmatprep.mubr.bf16.mxu0 0
        %650 = vmatmul.mubr.bf16.gmra.mrb[0].mxu0 %v547
        %v651 = vpop.f32.mrb[0].mxu0
        %v652 = vadd.f32 0.0, %v651
        %v653 = vpop.f32.mrb[0].mxu0
        %v654 = vpop.f32.mrb[0].mxu0
        %v655 = vadd.f32 0.0, %v654
        %v656 = vpop.f32.mrb[0].mxu0
        %657 = vmatprep.mubr.bf16.mxu0 0
        %658 = vmatmul.mubr.bf16.gmra.mrb[0].mxu0 %v548
        %v659 = vpop.f32.mrb[0].mxu0
        %v660 = vadd.f32 0.0, %v659
        %v661 = vpop.f32.mrb[0].mxu0
        %v662 = vpop.f32.mrb[0].mxu0
        %v663 = vadd.f32 0.0, %v662
        %v664 = vpop.f32.mrb[0].mxu0
        %665 = vdwg.mxu0
        %v666 = vld [vmem:[#allocation2] sm:$0x1]
        %v668 = vlaneseq
        %v669 = vshrl.u32 %v668, 7
        %v670 = vsub.s32 0, %v669
        %v671 = vrot.slane %v666, %v670
        %v673 = vmul.f32 %v636, %v671
        %v674 = vmul.f32 %v639, %v671
        %v675 = vmul.f32 %v644, %v671
        %v676 = vmul.f32 %v647, %v671
        %v677 = vmul.f32 %v652, %v671
        %v678 = vmul.f32 %v655, %v671
        %v679 = vmul.f32 %v660, %v671
        %v680 = vmul.f32 %v663, %v671
        %v681 = vld [vmem:[#allocation4] sm:$0x1]
        %v683 = vlaneseq
        %v684 = vshrl.u32 %v683, 7
        %v685 = vsub.s32 0, %v684
        %v686 = vrot.slane %v681, %v685
        %v688 = vadd.f32 %v673, %v686
        %v689 = vadd.f32 %v674, %v686
        %v690 = vadd.f32 %v675, %v686
        %v691 = vadd.f32 %v676, %v686
        %v692 = vadd.f32 %v677, %v686
        %v693 = vadd.f32 %v678, %v686
        %v694 = vadd.f32 %v679, %v686
        %v695 = vadd.f32 %v680, %v686
        %v696 = vmax.f32 %v688, 0.0
        %v697 = vmax.f32 %v689, 0.0
        %v698 = vmax.f32 %v690, 0.0
        %v699 = vmax.f32 %v691, 0.0
        %v700 = vmax.f32 %v692, 0.0
        %v701 = vmax.f32 %v693, 0.0
        %v702 = vmax.f32 %v694, 0.0
        %v703 = vmax.f32 %v695, 0.0
        %v712 = vrot.slane 0.0, 7
        %v713 = vrot.slane %v696, 7
        %v714 = vrot.slane %v697, 7
        %v715 = vrot.slane %v698, 7
        %v716 = vrot.slane %v699, 7
        %v717 = vrot.slane %v700, 7
        %v718 = vrot.slane %v701, 7
        %v719 = vrot.slane %v702, 7
        %vm728 = vcmask 1040384
        %v729 = vsel %vm728, 0.0, %v712
        %v730 = vsel %vm728, 0.0, %v713
        %v731 = vsel %vm728, 0.0, %v714
        %v732 = vsel %vm728, 0.0, %v715
        %v733 = vsel %vm728, 0.0, %v716
        %v734 = vsel %vm728, 0.0, %v717
        %v735 = vsel %vm728, 0.0, %v718
        %v736 = vsel %vm728, 0.0, %v719
        %v737 = vpack.c.bf16 %v730, %v729
        %v738 = vpack.c.bf16 %v732, %v731
        %v739 = vpack.c.bf16 %v734, %v733
        %v740 = vpack.c.bf16 %v736, %v735
        %v741 = vpack.c.bf16 %v696, 0.0
        %v742 = vpack.c.bf16 %v698, %v697
        %v743 = vpack.c.bf16 %v700, %v699
        %v744 = vpack.c.bf16 %v702, %v701
        %v745 = vrot.slane 0.0, 1
        %v746 = vrot.slane %v696, 1
        %v747 = vrot.slane %v697, 1
        %v748 = vrot.slane %v698, 1
        %v749 = vrot.slane %v699, 1
        %v750 = vrot.slane %v700, 1
        %v751 = vrot.slane %v701, 1
        %v752 = vrot.slane %v702, 1
        %vm761 = vcmask 1046528
        %v762 = vsel %vm761, %v745, 0.0
        %v763 = vsel %vm761, %v746, 0.0
        %v764 = vsel %vm761, %v747, 0.0
        %v765 = vsel %vm761, %v748, 0.0
        %v766 = vsel %vm761, %v749, 0.0
        %v767 = vsel %vm761, %v750, 0.0
        %v768 = vsel %vm761, %v751, 0.0
        %v769 = vsel %vm761, %v752, 0.0
        %v770 = vpack.c.bf16 %v763, %v762
        %v771 = vpack.c.bf16 %v765, %v764
        %v772 = vpack.c.bf16 %v767, %v766
        %v773 = vpack.c.bf16 %v769, %v768
        %v775 = vrot.slane %v703, 7
        %v777 = vsel %vm728, 0.0, %v775
        %v778 = vpack.c.bf16 %v731, %v730
        %v779 = vpack.c.bf16 %v733, %v732
        %v780 = vpack.c.bf16 %v735, %v734
        %v781 = vpack.c.bf16 %v777, %v736
        %v782 = vpack.c.bf16 %v697, %v696
        %v783 = vpack.c.bf16 %v699, %v698
        %v784 = vpack.c.bf16 %v701, %v700
        %v785 = vpack.c.bf16 %v703, %v702
        %v786 = vrot.slane %v703, 1
        %v788 = vsel %vm761, %v786, 0.0
        %v789 = vpack.c.bf16 %v764, %v763
        %v790 = vpack.c.bf16 %v766, %v765
        %v791 = vpack.c.bf16 %v768, %v767
        %v792 = vpack.c.bf16 %v788, %v769
        %v793 = vpack.c.bf16 %v729, %v777
        %v794 = vpack.c.bf16 0.0, %v703
        %v795 = vpack.c.bf16 %v762, %v788
        %v796 = vld [vmem:[%s4] sm:$0xf]
        %v797 = vld [vmem:[%s4 + $0x4] sm:$0xf]
        %v798 = vld [vmem:[%s4 + $0x8] sm:$0xf]
        %v799 = vld [vmem:[%s4 + $0xc] sm:$0xf]
        %v800 = vld [vmem:[%s4 + $0x10] sm:$0xf]
        %v801 = vld [vmem:[%s4 + $0x14] sm:$0xf]
        %v802 = vld [vmem:[%s4 + $0x18] sm:$0xf]
        %v803 = vld [vmem:[%s4 + $0x1c] sm:$0xf]
        %v804 = vld [vmem:[%s4 + $0x20] sm:$0xf]
        %v805 = vld [vmem:[%s4 + $0x24] sm:$0xf]
        %v806 = vld [vmem:[%s4 + $0x28] sm:$0xf]
        %v807 = vld [vmem:[%s4 + $0x2c] sm:$0xf]
        %v808 = vld [vmem:[%s4 + $0x30] sm:$0xf]
        %v809 = vld [vmem:[%s4 + $0x34] sm:$0xf]
        %v810 = vld [vmem:[%s4 + $0x38] sm:$0xf]
        %v811 = vld [vmem:[%s4 + $0x3c] sm:$0xf]
        %v812 = vld [vmem:[%s4 + $0x40] sm:$0xf]
        %v813 = vld [vmem:[%s4 + $0x44] sm:$0xf]
        %v814 = vld [vmem:[%s4 + $0x48] sm:$0xf]
        %v815 = vld [vmem:[%s4 + $0x4c] sm:$0xf]
        %v816 = vld [vmem:[%s4 + $0x50] sm:$0xf]
        %v817 = vld [vmem:[%s4 + $0x54] sm:$0xf]
        %v818 = vld [vmem:[%s4 + $0x58] sm:$0xf]
        %v819 = vld [vmem:[%s4 + $0x5c] sm:$0xf]
        %v820 = vld [vmem:[%s4 + $0x60] sm:$0xf]
        %v821 = vld [vmem:[%s4 + $0x64] sm:$0xf]
        %v822 = vld [vmem:[%s4 + $0x68] sm:$0xf]
        %v823 = vld [vmem:[%s4 + $0x6c] sm:$0xf]
        %v824 = vld [vmem:[%s4 + $0x70] sm:$0xf]
        %v825 = vld [vmem:[%s4 + $0x74] sm:$0xf]
        %v826 = vld [vmem:[%s4 + $0x78] sm:$0xf]
        %v827 = vld [vmem:[%s4 + $0x7c] sm:$0xf]
        %v828 = vld [vmem:[%s4 + $0x80] sm:$0xf]
        %v829 = vld [vmem:[%s4 + $0x84] sm:$0xf]
        %v830 = vld [vmem:[%s4 + $0x88] sm:$0xf]
        %v831 = vld [vmem:[%s4 + $0x8c] sm:$0xf]
        %v832 = vld [vmem:[%s4 + $0x90] sm:$0xf]
        %v833 = vld [vmem:[%s4 + $0x94] sm:$0xf]
        %v834 = vld [vmem:[%s4 + $0x98] sm:$0xf]
        %v835 = vld [vmem:[%s4 + $0x9c] sm:$0xf]
        %v836 = vld [vmem:[%s4 + $0xa0] sm:$0xf]
        %v837 = vld [vmem:[%s4 + $0xa4] sm:$0xf]
        %v838 = vld [vmem:[%s4 + $0xa8] sm:$0xf]
        %v839 = vld [vmem:[%s4 + $0xac] sm:$0xf]
        %v840 = vld [vmem:[%s4 + $0xb0] sm:$0xf]
        %v841 = vld [vmem:[%s4 + $0xb4] sm:$0xf]
        %v842 = vld [vmem:[%s4 + $0xb8] sm:$0xf]
        %v843 = vld [vmem:[%s4 + $0xbc] sm:$0xf]
        %v844 = vld [vmem:[%s4 + $0xc0] sm:$0xf]
        %v845 = vld [vmem:[%s4 + $0xc4] sm:$0xf]
        %v846 = vld [vmem:[%s4 + $0xc8] sm:$0xf]
        %v847 = vld [vmem:[%s4 + $0xcc] sm:$0xf]
        %v848 = vld [vmem:[%s4 + $0xd0] sm:$0xf]
        %v849 = vld [vmem:[%s4 + $0xd4] sm:$0xf]
        %v850 = vld [vmem:[%s4 + $0xd8] sm:$0xf]
        %v851 = vld [vmem:[%s4 + $0xdc] sm:$0xf]
        %v852 = vld [vmem:[%s4 + $0xe0] sm:$0xf]
        %v853 = vld [vmem:[%s4 + $0xe4] sm:$0xf]
        %v854 = vld [vmem:[%s4 + $0xe8] sm:$0xf]
        %v855 = vld [vmem:[%s4 + $0xec] sm:$0xf]
        %v856 = vld [vmem:[%s4 + $0xf0] sm:$0xf]
        %v857 = vld [vmem:[%s4 + $0xf4] sm:$0xf]
        %v858 = vld [vmem:[%s4 + $0xf8] sm:$0xf]
        %v859 = vld [vmem:[%s4 + $0xfc] sm:$0xf]
        %v860 = vld [vmem:[%s4 + $0x100] sm:$0xf]
        %v861 = vld [vmem:[%s4 + $0x104] sm:$0xf]
        %v862 = vld [vmem:[%s4 + $0x108] sm:$0xf]
        %v863 = vld [vmem:[%s4 + $0x10c] sm:$0xf]
        %v864 = vld [vmem:[%s4 + $0x110] sm:$0xf]
        %v865 = vld [vmem:[%s4 + $0x114] sm:$0xf]
        %v866 = vld [vmem:[%s4 + $0x118] sm:$0xf]
        %v867 = vld [vmem:[%s4 + $0x11c] sm:$0xf]
        %v868 = vld [vmem:[%s4 + $0x120] sm:$0xf]
        %v869 = vld [vmem:[%s4 + $0x124] sm:$0xf]
        %v870 = vld [vmem:[%s4 + $0x128] sm:$0xf]
        %v871 = vld [vmem:[%s4 + $0x12c] sm:$0xf]
        %v872 = vld [vmem:[%s4 + $0x130] sm:$0xf]
        %v873 = vld [vmem:[%s4 + $0x134] sm:$0xf]
        %v874 = vld [vmem:[%s4 + $0x138] sm:$0xf]
        %v875 = vld [vmem:[%s4 + $0x13c] sm:$0xf]
        %v876 = vld [vmem:[%s4 + $0x140] sm:$0xf]
        %v877 = vld [vmem:[%s4 + $0x144] sm:$0xf]
        %v878 = vld [vmem:[%s4 + $0x148] sm:$0xf]
        %v879 = vld [vmem:[%s4 + $0x14c] sm:$0xf]
        %v880 = vld [vmem:[%s4 + $0x150] sm:$0xf]
        %v881 = vld [vmem:[%s4 + $0x154] sm:$0xf]
        %v882 = vld [vmem:[%s4 + $0x158] sm:$0xf]
        %v883 = vld [vmem:[%s4 + $0x15c] sm:$0xf]
        %v884 = vld [vmem:[%s4 + $0x160] sm:$0xf]
        %v885 = vld [vmem:[%s4 + $0x164] sm:$0xf]
        %v886 = vld [vmem:[%s4 + $0x168] sm:$0xf]
        %v887 = vld [vmem:[%s4 + $0x16c] sm:$0xf]
        %v888 = vld [vmem:[%s4 + $0x170] sm:$0xf]
        %v889 = vld [vmem:[%s4 + $0x174] sm:$0xf]
        %v890 = vld [vmem:[%s4 + $0x178] sm:$0xf]
        %v891 = vld [vmem:[%s4 + $0x17c] sm:$0xf]
        %v892 = vld [vmem:[%s4 + $0x180] sm:$0xf]
        %v893 = vld [vmem:[%s4 + $0x184] sm:$0xf]
        %v894 = vld [vmem:[%s4 + $0x188] sm:$0xf]
        %v895 = vld [vmem:[%s4 + $0x18c] sm:$0xf]
        %v896 = vld [vmem:[%s4 + $0x190] sm:$0xf]
        %v897 = vld [vmem:[%s4 + $0x194] sm:$0xf]
        %v898 = vld [vmem:[%s4 + $0x198] sm:$0xf]
        %v899 = vld [vmem:[%s4 + $0x19c] sm:$0xf]
        %v900 = vld [vmem:[%s4 + $0x1a0] sm:$0xf]
        %v901 = vld [vmem:[%s4 + $0x1a4] sm:$0xf]
        %v902 = vld [vmem:[%s4 + $0x1a8] sm:$0xf]
        %v903 = vld [vmem:[%s4 + $0x1ac] sm:$0xf]
        %v904 = vld [vmem:[%s4 + $0x1b0] sm:$0xf]
        %v905 = vld [vmem:[%s4 + $0x1b4] sm:$0xf]
        %v906 = vld [vmem:[%s4 + $0x1b8] sm:$0xf]
        %v907 = vld [vmem:[%s4 + $0x1bc] sm:$0xf]
        %v908 = vld [vmem:[%s4 + $0x1c0] sm:$0xf]
        %v909 = vld [vmem:[%s4 + $0x1c4] sm:$0xf]
        %v910 = vld [vmem:[%s4 + $0x1c8] sm:$0xf]
        %v911 = vld [vmem:[%s4 + $0x1cc] sm:$0xf]
        %v912 = vld [vmem:[%s4 + $0x1d0] sm:$0xf]
        %v913 = vld [vmem:[%s4 + $0x1d4] sm:$0xf]
        %v914 = vld [vmem:[%s4 + $0x1d8] sm:$0xf]
        %v915 = vld [vmem:[%s4 + $0x1dc] sm:$0xf]
        %v916 = vld [vmem:[%s4 + $0x1e0] sm:$0xf]
        %v917 = vld [vmem:[%s4 + $0x1e4] sm:$0xf]
        %v918 = vld [vmem:[%s4 + $0x1e8] sm:$0xf]
        %v919 = vld [vmem:[%s4 + $0x1ec] sm:$0xf]
        %v920 = vld [vmem:[%s4 + $0x1f0] sm:$0xf]
        %v921 = vld [vmem:[%s4 + $0x1f4] sm:$0xf]
        %v922 = vld [vmem:[%s4 + $0x1f8] sm:$0xf]
        %v923 = vld [vmem:[%s4 + $0x1fc] sm:$0xf]
        %v924 = vld [vmem:[%s4 + $0x200] sm:$0xf]
        %v925 = vld [vmem:[%s4 + $0x204] sm:$0xf]
        %v926 = vld [vmem:[%s4 + $0x208] sm:$0xf]
        %v927 = vld [vmem:[%s4 + $0x20c] sm:$0xf]
        %v928 = vld [vmem:[%s4 + $0x210] sm:$0xf]
        %v929 = vld [vmem:[%s4 + $0x214] sm:$0xf]
        %v930 = vld [vmem:[%s4 + $0x218] sm:$0xf]
        %v931 = vld [vmem:[%s4 + $0x21c] sm:$0xf]
        %v932 = vld [vmem:[%s4 + $0x220] sm:$0xf]
        %v933 = vld [vmem:[%s4 + $0x224] sm:$0xf]
        %v934 = vld [vmem:[%s4 + $0x228] sm:$0xf]
        %v935 = vld [vmem:[%s4 + $0x22c] sm:$0xf]
        %v936 = vld [vmem:[%s4 + $0x230] sm:$0xf]
        %v937 = vld [vmem:[%s4 + $0x234] sm:$0xf]
        %v938 = vld [vmem:[%s4 + $0x238] sm:$0xf]
        %v939 = vld [vmem:[%s4 + $0x23c] sm:$0xf]
        %v1084 = vunpack.c.l.b16 %v796
        %v1085 = vunpack.c.l.b16 %v797
        %v1086 = vunpack.c.l.b16 %v798
        %v1087 = vunpack.c.l.b16 %v799
        %v1088 = vunpack.c.l.b16 %v800
        %v1089 = vunpack.c.l.b16 %v801
        %v1090 = vunpack.c.l.b16 %v802
        %v1091 = vunpack.c.l.b16 %v803
        %v1092 = vunpack.c.l.b16 %v804
        %v1093 = vunpack.c.l.b16 %v805
        %v1094 = vunpack.c.l.b16 %v806
        %v1095 = vunpack.c.l.b16 %v807
        %v1096 = vunpack.c.l.b16 %v808
        %v1097 = vunpack.c.l.b16 %v809
        %v1098 = vunpack.c.l.b16 %v810
        %v1099 = vunpack.c.l.b16 %v811
        %v1100 = vunpack.c.l.b16 %v812
        %v1101 = vunpack.c.l.b16 %v813
        %v1102 = vunpack.c.l.b16 %v814
        %v1103 = vunpack.c.l.b16 %v815
        %v1104 = vunpack.c.l.b16 %v816
        %v1105 = vunpack.c.l.b16 %v817
        %v1106 = vunpack.c.l.b16 %v818
        %v1107 = vunpack.c.l.b16 %v819
        %v1108 = vunpack.c.l.b16 %v820
        %v1109 = vunpack.c.l.b16 %v821
        %v1110 = vunpack.c.l.b16 %v822
        %v1111 = vunpack.c.l.b16 %v823
        %v1112 = vunpack.c.l.b16 %v824
        %v1113 = vunpack.c.l.b16 %v825
        %v1114 = vunpack.c.l.b16 %v826
        %v1115 = vunpack.c.l.b16 %v827
        %v1116 = vunpack.c.l.b16 %v828
        %v1117 = vunpack.c.l.b16 %v829
        %v1118 = vunpack.c.l.b16 %v830
        %v1119 = vunpack.c.l.b16 %v831
        %v1120 = vunpack.c.l.b16 %v832
        %v1121 = vunpack.c.l.b16 %v833
        %v1122 = vunpack.c.l.b16 %v834
        %v1123 = vunpack.c.l.b16 %v835
        %v1124 = vunpack.c.l.b16 %v836
        %v1125 = vunpack.c.l.b16 %v837
        %v1126 = vunpack.c.l.b16 %v838
        %v1127 = vunpack.c.l.b16 %v839
        %v1128 = vunpack.c.l.b16 %v840
        %v1129 = vunpack.c.l.b16 %v841
        %v1130 = vunpack.c.l.b16 %v842
        %v1131 = vunpack.c.l.b16 %v843
        %v1132 = vunpack.c.l.b16 %v844
        %v1133 = vunpack.c.l.b16 %v845
        %v1134 = vunpack.c.l.b16 %v846
        %v1135 = vunpack.c.l.b16 %v847
        %v1136 = vunpack.c.l.b16 %v848
        %v1137 = vunpack.c.l.b16 %v849
        %v1138 = vunpack.c.l.b16 %v850
        %v1139 = vunpack.c.l.b16 %v851
        %v1140 = vunpack.c.l.b16 %v852
        %v1141 = vunpack.c.l.b16 %v853
        %v1142 = vunpack.c.l.b16 %v854
        %v1143 = vunpack.c.l.b16 %v855
        %v1144 = vunpack.c.l.b16 %v856
        %v1145 = vunpack.c.l.b16 %v857
        %v1146 = vunpack.c.l.b16 %v858
        %v1147 = vunpack.c.l.b16 %v859
        %v1148 = vunpack.c.l.b16 %v860
        %v1149 = vunpack.c.l.b16 %v861
        %v1150 = vunpack.c.l.b16 %v862
        %v1151 = vunpack.c.l.b16 %v863
        %v1152 = vunpack.c.l.b16 %v864
        %v1153 = vunpack.c.l.b16 %v865
        %v1154 = vunpack.c.l.b16 %v866
        %v1155 = vunpack.c.l.b16 %v867
        %v1156 = vunpack.c.l.b16 %v868
        %v1157 = vunpack.c.l.b16 %v869
        %v1158 = vunpack.c.l.b16 %v870
        %v1159 = vunpack.c.l.b16 %v871
        %v1160 = vunpack.c.l.b16 %v872
        %v1161 = vunpack.c.l.b16 %v873
        %v1162 = vunpack.c.l.b16 %v874
        %v1163 = vunpack.c.l.b16 %v875
        %v1164 = vunpack.c.l.b16 %v876
        %v1165 = vunpack.c.l.b16 %v877
        %v1166 = vunpack.c.l.b16 %v878
        %v1167 = vunpack.c.l.b16 %v879
        %v1168 = vunpack.c.l.b16 %v880
        %v1169 = vunpack.c.l.b16 %v881
        %v1170 = vunpack.c.l.b16 %v882
        %v1171 = vunpack.c.l.b16 %v883
        %v1172 = vunpack.c.l.b16 %v884
        %v1173 = vunpack.c.l.b16 %v885
        %v1174 = vunpack.c.l.b16 %v886
        %v1175 = vunpack.c.l.b16 %v887
        %v1176 = vunpack.c.l.b16 %v888
        %v1177 = vunpack.c.l.b16 %v889
        %v1178 = vunpack.c.l.b16 %v890
        %v1179 = vunpack.c.l.b16 %v891
        %v1180 = vunpack.c.l.b16 %v892
        %v1181 = vunpack.c.l.b16 %v893
        %v1182 = vunpack.c.l.b16 %v894
        %v1183 = vunpack.c.l.b16 %v895
        %v1184 = vunpack.c.l.b16 %v896
        %v1185 = vunpack.c.l.b16 %v897
        %v1186 = vunpack.c.l.b16 %v898
        %v1187 = vunpack.c.l.b16 %v899
        %v1188 = vunpack.c.l.b16 %v900
        %v1189 = vunpack.c.l.b16 %v901
        %v1190 = vunpack.c.l.b16 %v902
        %v1191 = vunpack.c.l.b16 %v903
        %v1192 = vunpack.c.l.b16 %v904
        %v1193 = vunpack.c.l.b16 %v905
        %v1194 = vunpack.c.l.b16 %v906
        %v1195 = vunpack.c.l.b16 %v907
        %v1196 = vunpack.c.l.b16 %v908
        %v1197 = vunpack.c.l.b16 %v909
        %v1198 = vunpack.c.l.b16 %v910
        %v1199 = vunpack.c.l.b16 %v911
        %v1200 = vunpack.c.l.b16 %v912
        %v1201 = vunpack.c.l.b16 %v913
        %v1202 = vunpack.c.l.b16 %v914
        %v1203 = vunpack.c.l.b16 %v915
        %v1204 = vunpack.c.l.b16 %v916
        %v1205 = vunpack.c.l.b16 %v917
        %v1206 = vunpack.c.l.b16 %v918
        %v1207 = vunpack.c.l.b16 %v919
        %v1208 = vunpack.c.l.b16 %v920
        %v1209 = vunpack.c.l.b16 %v921
        %v1210 = vunpack.c.l.b16 %v922
        %v1211 = vunpack.c.l.b16 %v923
        %v1212 = vunpack.c.l.b16 %v924
        %v1213 = vunpack.c.l.b16 %v925
        %v1214 = vunpack.c.l.b16 %v926
        %v1215 = vunpack.c.l.b16 %v927
        %v1216 = vunpack.c.l.b16 %v928
        %v1217 = vunpack.c.l.b16 %v929
        %v1218 = vunpack.c.l.b16 %v930
        %v1219 = vunpack.c.l.b16 %v931
        %v1220 = vunpack.c.l.b16 %v932
        %v1221 = vunpack.c.l.b16 %v933
        %v1222 = vunpack.c.l.b16 %v934
        %v1223 = vunpack.c.l.b16 %v935
        %v1224 = vunpack.c.l.b16 %v936
        %v1225 = vunpack.c.l.b16 %v937
        %v1226 = vunpack.c.l.b16 %v938
        %v1227 = vunpack.c.l.b16 %v939
        %v1228 = vpack.c.b16 %v1085, %v1084
        %v1229 = vpack.c.b16 %v1087, %v1086
        %v1230 = vpack.c.b16 %v1089, %v1088
        %v1231 = vpack.c.b16 %v1091, %v1090
        %v1232 = vpack.c.b16 %v1093, %v1092
        %v1233 = vpack.c.b16 %v1095, %v1094
        %v1234 = vpack.c.b16 %v1097, %v1096
        %v1235 = vpack.c.b16 %v1099, %v1098
        %v1236 = vpack.c.b16 %v1101, %v1100
        %v1237 = vpack.c.b16 %v1103, %v1102
        %v1238 = vpack.c.b16 %v1105, %v1104
        %v1239 = vpack.c.b16 %v1107, %v1106
        %v1240 = vpack.c.b16 %v1109, %v1108
        %v1241 = vpack.c.b16 %v1111, %v1110
        %v1242 = vpack.c.b16 %v1113, %v1112
        %v1243 = vpack.c.b16 %v1115, %v1114
        %v1244 = vpack.c.b16 %v1117, %v1116
        %v1245 = vpack.c.b16 %v1119, %v1118
        %v1246 = vpack.c.b16 %v1121, %v1120
        %v1247 = vpack.c.b16 %v1123, %v1122
        %v1248 = vpack.c.b16 %v1125, %v1124
        %v1249 = vpack.c.b16 %v1127, %v1126
        %v1250 = vpack.c.b16 %v1129, %v1128
        %v1251 = vpack.c.b16 %v1131, %v1130
        %v1252 = vpack.c.b16 %v1133, %v1132
        %v1253 = vpack.c.b16 %v1135, %v1134
        %v1254 = vpack.c.b16 %v1137, %v1136
        %v1255 = vpack.c.b16 %v1139, %v1138
        %v1256 = vpack.c.b16 %v1141, %v1140
        %v1257 = vpack.c.b16 %v1143, %v1142
        %v1258 = vpack.c.b16 %v1145, %v1144
        %v1259 = vpack.c.b16 %v1147, %v1146
        %v1260 = vpack.c.b16 %v1149, %v1148
        %v1261 = vpack.c.b16 %v1151, %v1150
        %v1262 = vpack.c.b16 %v1153, %v1152
        %v1263 = vpack.c.b16 %v1155, %v1154
        %v1264 = vpack.c.b16 %v1157, %v1156
        %v1265 = vpack.c.b16 %v1159, %v1158
        %v1266 = vpack.c.b16 %v1161, %v1160
        %v1267 = vpack.c.b16 %v1163, %v1162
        %v1268 = vpack.c.b16 %v1165, %v1164
        %v1269 = vpack.c.b16 %v1167, %v1166
        %v1270 = vpack.c.b16 %v1169, %v1168
        %v1271 = vpack.c.b16 %v1171, %v1170
        %v1272 = vpack.c.b16 %v1173, %v1172
        %v1273 = vpack.c.b16 %v1175, %v1174
        %v1274 = vpack.c.b16 %v1177, %v1176
        %v1275 = vpack.c.b16 %v1179, %v1178
        %v1276 = vpack.c.b16 %v1181, %v1180
        %v1277 = vpack.c.b16 %v1183, %v1182
        %v1278 = vpack.c.b16 %v1185, %v1184
        %v1279 = vpack.c.b16 %v1187, %v1186
        %v1280 = vpack.c.b16 %v1189, %v1188
        %v1281 = vpack.c.b16 %v1191, %v1190
        %v1282 = vpack.c.b16 %v1193, %v1192
        %v1283 = vpack.c.b16 %v1195, %v1194
        %v1284 = vpack.c.b16 %v1197, %v1196
        %v1285 = vpack.c.b16 %v1199, %v1198
        %v1286 = vpack.c.b16 %v1201, %v1200
        %v1287 = vpack.c.b16 %v1203, %v1202
        %v1288 = vpack.c.b16 %v1205, %v1204
        %v1289 = vpack.c.b16 %v1207, %v1206
        %v1290 = vpack.c.b16 %v1209, %v1208
        %v1291 = vpack.c.b16 %v1211, %v1210
        %v1292 = vpack.c.b16 %v1213, %v1212
        %v1293 = vpack.c.b16 %v1215, %v1214
        %v1294 = vpack.c.b16 %v1217, %v1216
        %v1295 = vpack.c.b16 %v1219, %v1218
        %v1296 = vpack.c.b16 %v1221, %v1220
        %v1297 = vpack.c.b16 %v1223, %v1222
        %v1298 = vpack.c.b16 %v1225, %v1224
        %v1299 = vpack.c.b16 %v1227, %v1226
        %1372 = vmatprep.subr.bf16.mxu0 0
        %1373 = vmatpush1.bf16.msra.mxu0 %v1228
        %1374 = vmatprep.subr.bf16.mxu0 0
        %1375 = vmatpush1.bf16.msra.mxu0 %v1229
        %1376 = vmatprep.subr.bf16.mxu0 0
        %1377 = vmatpush1.bf16.msra.mxu0 %v1230
        %1378 = vmatprep.subr.bf16.mxu0 0
        %1379 = vmatpush1.bf16.msra.mxu0 %v1231
        %1380 = vmatprep.subr.bf16.mxu0 0
        %1381 = vmatpush1.bf16.msra.mxu0 %v1232
        %1382 = vmatprep.subr.bf16.mxu0 0
        %1383 = vmatpush1.bf16.msra.mxu0 %v1233
        %1384 = vmatprep.subr.bf16.mxu0 0
        %1385 = vmatpush1.bf16.msra.mxu0 %v1234
        %1386 = vmatprep.subr.bf16.mxu0 0
        %1387 = vmatpush1.bf16.msra.mxu0 %v1235
        %1388 = vmatprep.subr.bf16.mxu0 0
        %1389 = vmatpush1.bf16.msra.mxu0 %v1236
        %1390 = vmatprep.subr.bf16.mxu0 0
        %1391 = vmatpush1.bf16.msra.mxu0 %v1237
        %1392 = vmatprep.subr.bf16.mxu0 0
        %1393 = vmatpush1.bf16.msra.mxu0 %v1238
        %1394 = vmatprep.subr.bf16.mxu0 0
        %1395 = vmatpush1.bf16.msra.mxu0 %v1239
        %1396 = vmatprep.subr.bf16.mxu0 0
        %1397 = vmatpush1.bf16.msra.mxu0 %v1240
        %1398 = vmatprep.subr.bf16.mxu0 0
        %1399 = vmatpush1.bf16.msra.mxu0 %v1241
        %1400 = vmatprep.subr.bf16.mxu0 0
        %1401 = vmatpush1.bf16.msra.mxu0 %v1242
        %1402 = vmatprep.subr.bf16.mxu0 0
        %1403 = vmatpush1.bf16.msra.mxu0 %v1243
        %1404 = vmatprep.mubr.bf16.mxu0 %v741
        %1405 = vmatmul.mubr.bf16.gmra.mrb[0].mxu0 %v737
        %v1406 = vpop.f32.mrb[0].mxu0
        %v1407 = vadd.f32 0.0, %v1406
        %v1408 = vpop.f32.mrb[0].mxu0
        %v1409 = vpop.f32.mrb[0].mxu0
        %v1410 = vadd.f32 0.0, %v1409
        %v1411 = vpop.f32.mrb[0].mxu0
        %1412 = vmatprep.mubr.bf16.mxu0 %v742
        %1413 = vmatmul.mubr.bf16.gmra.mrb[0].mxu0 %v738
        %v1414 = vpop.f32.mrb[0].mxu0
        %v1415 = vadd.f32 0.0, %v1414
        %v1416 = vpop.f32.mrb[0].mxu0
        %v1417 = vpop.f32.mrb[0].mxu0
        %v1418 = vadd.f32 0.0, %v1417
        %v1419 = vpop.f32.mrb[0].mxu0
        %1420 = vmatprep.mubr.bf16.mxu0 %v743
        %1421 = vmatmul.mubr.bf16.gmra.mrb[0].mxu0 %v739
        %v1422 = vpop.f32.mrb[0].mxu0
        %v1423 = vadd.f32 0.0, %v1422
        %v1424 = vpop.f32.mrb[0].mxu0
        %v1425 = vpop.f32.mrb[0].mxu0
        %v1426 = vadd.f32 0.0, %v1425
        %v1427 = vpop.f32.mrb[0].mxu0
        %1428 = vmatprep.mubr.bf16.mxu0 %v744
        %1429 = vmatmul.mubr.bf16.gmra.mrb[0].mxu0 %v740
        %v1430 = vpop.f32.mrb[0].mxu0
        %v1431 = vadd.f32 0.0, %v1430
        %v1432 = vpop.f32.mrb[0].mxu0
        %v1433 = vpop.f32.mrb[0].mxu0
        %v1434 = vadd.f32 0.0, %v1433
        %v1435 = vpop.f32.mrb[0].mxu0
        %1436 = vdwg.mxu0
        %1437 = vmatprep.subr.bf16.mxu0 0
        %1438 = vmatpush1.bf16.msra.mxu0 %v1244
        %1439 = vmatprep.subr.bf16.mxu0 0
        %1440 = vmatpush1.bf16.msra.mxu0 %v1245
        %1441 = vmatprep.subr.bf16.mxu0 0
        %1442 = vmatpush1.bf16.msra.mxu0 %v1246
        %1443 = vmatprep.subr.bf16.mxu0 0
        %1444 = vmatpush1.bf16.msra.mxu0 %v1247
        %1445 = vmatprep.subr.bf16.mxu0 0
        %1446 = vmatpush1.bf16.msra.mxu0 %v1248
        %1447 = vmatprep.subr.bf16.mxu0 0
        %1448 = vmatpush1.bf16.msra.mxu0 %v1249
        %1449 = vmatprep.subr.bf16.mxu0 0
        %1450 = vmatpush1.bf16.msra.mxu0 %v1250
        %1451 = vmatprep.subr.bf16.mxu0 0
        %1452 = vmatpush1.bf16.msra.mxu0 %v1251
        %1453 = vmatprep.subr.bf16.mxu0 0
        %1454 = vmatpush1.bf16.msra.mxu0 %v1252
        %1455 = vmatprep.subr.bf16.mxu0 0
        %1456 = vmatpush1.bf16.msra.mxu0 %v1253
        %1457 = vmatprep.subr.bf16.mxu0 0
        %1458 = vmatpush1.bf16.msra.mxu0 %v1254
        %1459 = vmatprep.subr.bf16.mxu0 0
        %1460 = vmatpush1.bf16.msra.mxu0 %v1255
        %1461 = vmatprep.subr.bf16.mxu0 0
        %1462 = vmatpush1.bf16.msra.mxu0 %v1256
        %1463 = vmatprep.subr.bf16.mxu0 0
        %1464 = vmatpush1.bf16.msra.mxu0 %v1257
        %1465 = vmatprep.subr.bf16.mxu0 0
        %1466 = vmatpush1.bf16.msra.mxu0 %v1258
        %1467 = vmatprep.subr.bf16.mxu0 0
        %1468 = vmatpush1.bf16.msra.mxu0 %v1259
        %1469 = vmatprep.mubr.bf16.mxu0 %v778
        %1470 = vmatmul.mubr.bf16.gmra.mrb[0].mxu0 %v770
        %v1471 = vpop.f32.mrb[0].mxu0
        %v1472 = vadd.f32 %v1407, %v1471
        %v1473 = vpop.f32.mrb[0].mxu0
        %v1474 = vpop.f32.mrb[0].mxu0
        %v1475 = vadd.f32 %v1410, %v1474
        %v1476 = vpop.f32.mrb[0].mxu0
        %1477 = vmatprep.mubr.bf16.mxu0 %v779
        %1478 = vmatmul.mubr.bf16.gmra.mrb[0].mxu0 %v771
        %v1479 = vpop.f32.mrb[0].mxu0
        %v1480 = vadd.f32 %v1415, %v1479
        %v1481 = vpop.f32.mrb[0].mxu0
        %v1482 = vpop.f32.mrb[0].mxu0
        %v1483 = vadd.f32 %v1418, %v1482
        %v1484 = vpop.f32.mrb[0].mxu0
        %1485 = vmatprep.mubr.bf16.mxu0 %v780
        %1486 = vmatmul.mubr.bf16.gmra.mrb[0].mxu0 %v772
        %v1487 = vpop.f32.mrb[0].mxu0
        %v1488 = vadd.f32 %v1423, %v1487
        %v1489 = vpop.f32.mrb[0].mxu0
        %v1490 = vpop.f32.mrb[0].mxu0
        %v1491 = vadd.f32 %v1426, %v1490
        %v1492 = vpop.f32.mrb[0].mxu0
        %1493 = vmatprep.mubr.bf16.mxu0 %v781
        %1494 = vmatmul.mubr.bf16.gmra.mrb[0].mxu0 %v773
        %v1495 = vpop.f32.mrb[0].mxu0
        %v1496 = vadd.f32 %v1431, %v1495
        %v1497 = vpop.f32.mrb[0].mxu0
        %v1498 = vpop.f32.mrb[0].mxu0
        %v1499 = vadd.f32 %v1434, %v1498
        %v1500 = vpop.f32.mrb[0].mxu0
        %1501 = vdwg.mxu0
        %1502 = vmatprep.subr.bf16.mxu0 0
        %1503 = vmatpush1.bf16.msra.mxu0 %v1260
        %1504 = vmatprep.subr.bf16.mxu0 0
        %1505 = vmatpush1.bf16.msra.mxu0 %v1261
        %1506 = vmatprep.subr.bf16.mxu0 0
        %1507 = vmatpush1.bf16.msra.mxu0 %v1262
        %1508 = vmatprep.subr.bf16.mxu0 0
        %1509 = vmatpush1.bf16.msra.mxu0 %v1263
        %1510 = vmatprep.subr.bf16.mxu0 0
        %1511 = vmatpush1.bf16.msra.mxu0 %v1264
        %1512 = vmatprep.subr.bf16.mxu0 0
        %1513 = vmatpush1.bf16.msra.mxu0 %v1265
        %1514 = vmatprep.subr.bf16.mxu0 0
        %1515 = vmatpush1.bf16.msra.mxu0 %v1266
        %1516 = vmatprep.subr.bf16.mxu0 0
        %1517 = vmatpush1.bf16.msra.mxu0 %v1267
        %1518 = vmatprep.subr.bf16.mxu0 0
        %1519 = vmatpush1.bf16.msra.mxu0 %v1268
        %1520 = vmatprep.subr.bf16.mxu0 0
        %1521 = vmatpush1.bf16.msra.mxu0 %v1269
        %1522 = vmatprep.subr.bf16.mxu0 0
        %1523 = vmatpush1.bf16.msra.mxu0 %v1270
        %1524 = vmatprep.subr.bf16.mxu0 0
        %1525 = vmatpush1.bf16.msra.mxu0 %v1271
        %1526 = vmatprep.subr.bf16.mxu0 0
        %1527 = vmatpush1.bf16.msra.mxu0 %v1272
        %1528 = vmatprep.subr.bf16.mxu0 0
        %1529 = vmatpush1.bf16.msra.mxu0 %v1273
        %1530 = vmatprep.subr.bf16.mxu0 0
        %1531 = vmatpush1.bf16.msra.mxu0 %v1274
        %1532 = vmatprep.subr.bf16.mxu0 0
        %1533 = vmatpush1.bf16.msra.mxu0 %v1275
        %1534 = vmatprep.mubr.bf16.mxu0 %v789
        %1535 = vmatmul.mubr.bf16.gmra.mrb[0].mxu0 %v782
        %v1536 = vpop.f32.mrb[0].mxu0
        %v1537 = vadd.f32 %v1472, %v1536
        %v1538 = vpop.f32.mrb[0].mxu0
        %v1539 = vpop.f32.mrb[0].mxu0
        %v1540 = vadd.f32 %v1475, %v1539
        %v1541 = vpop.f32.mrb[0].mxu0
        %1542 = vmatprep.mubr.bf16.mxu0 %v790
        %1543 = vmatmul.mubr.bf16.gmra.mrb[0].mxu0 %v783
        %v1544 = vpop.f32.mrb[0].mxu0
        %v1545 = vadd.f32 %v1480, %v1544
        %v1546 = vpop.f32.mrb[0].mxu0
        %v1547 = vpop.f32.mrb[0].mxu0
        %v1548 = vadd.f32 %v1483, %v1547
        %v1549 = vpop.f32.mrb[0].mxu0
        %1550 = vmatprep.mubr.bf16.mxu0 %v791
        %1551 = vmatmul.mubr.bf16.gmra.mrb[0].mxu0 %v784
        %v1552 = vpop.f32.mrb[0].mxu0
        %v1553 = vadd.f32 %v1488, %v1552
        %v1554 = vpop.f32.mrb[0].mxu0
        %v1555 = vpop.f32.mrb[0].mxu0
        %v1556 = vadd.f32 %v1491, %v1555
        %v1557 = vpop.f32.mrb[0].mxu0
        %1558 = vmatprep.mubr.bf16.mxu0 %v792
        %1559 = vmatmul.mubr.bf16.gmra.mrb[0].mxu0 %v785
        %v1560 = vpop.f32.mrb[0].mxu0
        %v1561 = vadd.f32 %v1496, %v1560
        %v1562 = vpop.f32.mrb[0].mxu0
        %v1563 = vpop.f32.mrb[0].mxu0
        %v1564 = vadd.f32 %v1499, %v1563
        %v1565 = vpop.f32.mrb[0].mxu0
        %1566 = vdwg.mxu0
        %1567 = vmatprep.subr.bf16.mxu0 0
        %1568 = vmatpush1.bf16.msra.mxu0 %v1276
        %1569 = vmatprep.subr.bf16.mxu0 0
        %1570 = vmatpush1.bf16.msra.mxu0 %v1277
        %1571 = vmatprep.subr.bf16.mxu0 0
        %1572 = vmatpush1.bf16.msra.mxu0 %v1278
        %1573 = vmatprep.subr.bf16.mxu0 0
        %1574 = vmatpush1.bf16.msra.mxu0 %v1279
        %1575 = vmatprep.subr.bf16.mxu0 0
        %1576 = vmatpush1.bf16.msra.mxu0 %v1280
        %1577 = vmatprep.subr.bf16.mxu0 0
        %1578 = vmatpush1.bf16.msra.mxu0 %v1281
        %1579 = vmatprep.subr.bf16.mxu0 0
        %1580 = vmatpush1.bf16.msra.mxu0 %v1282
        %1581 = vmatprep.subr.bf16.mxu0 0
        %1582 = vmatpush1.bf16.msra.mxu0 %v1283
        %1583 = vmatprep.subr.bf16.mxu0 0
        %1584 = vmatpush1.bf16.msra.mxu0 %v1284
        %1585 = vmatprep.subr.bf16.mxu0 0
        %1586 = vmatpush1.bf16.msra.mxu0 %v1285
        %1587 = vmatprep.subr.bf16.mxu0 0
        %1588 = vmatpush1.bf16.msra.mxu0 %v1286
        %1589 = vmatprep.subr.bf16.mxu0 0
        %1590 = vmatpush1.bf16.msra.mxu0 %v1287
        %1591 = vmatprep.subr.bf16.mxu0 0
        %1592 = vmatpush1.bf16.msra.mxu0 %v1288
        %1593 = vmatprep.subr.bf16.mxu0 0
        %1594 = vmatpush1.bf16.msra.mxu0 %v1289
        %1595 = vmatprep.subr.bf16.mxu0 0
        %1596 = vmatpush1.bf16.msra.mxu0 %v1290
        %1597 = vmatprep.subr.bf16.mxu0 0
        %1598 = vmatpush1.bf16.msra.mxu0 %v1291
        %1599 = vmatprep.mubr.bf16.mxu0 %v742
        %1600 = vmatmul.mubr.bf16.gmra.mrb[0].mxu0 %v738
        %v1601 = vpop.f32.mrb[0].mxu0
        %v1602 = vadd.f32 %v1537, %v1601
        %v1603 = vpop.f32.mrb[0].mxu0
        %v1604 = vpop.f32.mrb[0].mxu0
        %v1605 = vadd.f32 %v1540, %v1604
        %v1606 = vpop.f32.mrb[0].mxu0
        %1607 = vmatprep.mubr.bf16.mxu0 %v743
        %1608 = vmatmul.mubr.bf16.gmra.mrb[0].mxu0 %v739
        %v1609 = vpop.f32.mrb[0].mxu0
        %v1610 = vadd.f32 %v1545, %v1609
        %v1611 = vpop.f32.mrb[0].mxu0
        %v1612 = vpop.f32.mrb[0].mxu0
        %v1613 = vadd.f32 %v1548, %v1612
        %v1614 = vpop.f32.mrb[0].mxu0
        %1615 = vmatprep.mubr.bf16.mxu0 %v744
        %1616 = vmatmul.mubr.bf16.gmra.mrb[0].mxu0 %v740
        %v1617 = vpop.f32.mrb[0].mxu0
        %v1618 = vadd.f32 %v1553, %v1617
        %v1619 = vpop.f32.mrb[0].mxu0
        %v1620 = vpop.f32.mrb[0].mxu0
        %v1621 = vadd.f32 %v1556, %v1620
        %v1622 = vpop.f32.mrb[0].mxu0
        %1623 = vmatprep.mubr.bf16.mxu0 %v794
        %1624 = vmatmul.mubr.bf16.gmra.mrb[0].mxu0 %v793
        %v1625 = vpop.f32.mrb[0].mxu0
        %v1626 = vadd.f32 %v1561, %v1625
        %v1627 = vpop.f32.mrb[0].mxu0
        %v1628 = vpop.f32.mrb[0].mxu0
        %v1629 = vadd.f32 %v1564, %v1628
        %v1630 = vpop.f32.mrb[0].mxu0
        %1631 = vdwg.mxu0
        %1632 = vmatprep.subr.bf16.mxu0 0
        %1633 = vmatpush1.bf16.msra.mxu0 %v1292
        %1634 = vmatprep.subr.bf16.mxu0 0
        %1635 = vmatpush1.bf16.msra.mxu0 %v1293
        %1636 = vmatprep.subr.bf16.mxu0 0
        %1637 = vmatpush1.bf16.msra.mxu0 %v1294
        %1638 = vmatprep.subr.bf16.mxu0 0
        %1639 = vmatpush1.bf16.msra.mxu0 %v1295
        %1640 = vmatprep.subr.bf16.mxu0 0
        %1641 = vmatpush1.bf16.msra.mxu0 %v1296
        %1642 = vmatprep.subr.bf16.mxu0 0
        %1643 = vmatpush1.bf16.msra.mxu0 %v1297
        %1644 = vmatprep.subr.bf16.mxu0 0
        %1645 = vmatpush1.bf16.msra.mxu0 %v1298
        %1646 = vmatprep.subr.bf16.mxu0 0
        %1647 = vmatpush1.bf16.msra.mxu0 %v1299
        %1648 = vmatprep.subr.bf16.mxu0 0
        %1649 = vmatpush1.bf16.msra.mxu0 0
        %1650 = vmatprep.subr.bf16.mxu0 0
        %1651 = vmatpush1.bf16.msra.mxu0 0
        %1652 = vmatprep.subr.bf16.mxu0 0
        %1653 = vmatpush1.bf16.msra.mxu0 0
        %1654 = vmatprep.subr.bf16.mxu0 0
        %1655 = vmatpush1.bf16.msra.mxu0 0
        %1656 = vmatprep.subr.bf16.mxu0 0
        %1657 = vmatpush1.bf16.msra.mxu0 0
        %1658 = vmatprep.subr.bf16.mxu0 0
        %1659 = vmatpush1.bf16.msra.mxu0 0
        %1660 = vmatprep.subr.bf16.mxu0 0
        %1661 = vmatpush1.bf16.msra.mxu0 0
        %1662 = vmatprep.subr.bf16.mxu0 0
        %1663 = vmatpush1.bf16.msra.mxu0 0
        %1664 = vmatprep.mubr.bf16.mxu0 0
        %1665 = vmatmul.mubr.bf16.gmra.mrb[0].mxu0 %v771
        %v1666 = vpop.f32.mrb[0].mxu0
        %v1667 = vadd.f32 %v1602, %v1666
        %v1668 = vpop.f32.mrb[0].mxu0
        %v1669 = vpop.f32.mrb[0].mxu0
        %v1670 = vadd.f32 %v1605, %v1669
        %v1671 = vpop.f32.mrb[0].mxu0
        %1672 = vmatprep.mubr.bf16.mxu0 0
        %1673 = vmatmul.mubr.bf16.gmra.mrb[0].mxu0 %v772
        %v1674 = vpop.f32.mrb[0].mxu0
        %v1675 = vadd.f32 %v1610, %v1674
        %v1676 = vpop.f32.mrb[0].mxu0
        %v1677 = vpop.f32.mrb[0].mxu0
        %v1678 = vadd.f32 %v1613, %v1677
        %v1679 = vpop.f32.mrb[0].mxu0
        %1680 = vmatprep.mubr.bf16.mxu0 0
        %1681 = vmatmul.mubr.bf16.gmra.mrb[0].mxu0 %v773
        %v1682 = vpop.f32.mrb[0].mxu0
        %v1683 = vadd.f32 %v1618, %v1682
        %v1684 = vpop.f32.mrb[0].mxu0
        %v1685 = vpop.f32.mrb[0].mxu0
        %v1686 = vadd.f32 %v1621, %v1685
        %v1687 = vpop.f32.mrb[0].mxu0
        %1688 = vmatprep.mubr.bf16.mxu0 0
        %1689 = vmatmul.mubr.bf16.gmra.mrb[0].mxu0 %v795
        %v1690 = vpop.f32.mrb[0].mxu0
        %v1691 = vadd.f32 %v1626, %v1690
        %v1692 = vpop.f32.mrb[0].mxu0
        %v1693 = vpop.f32.mrb[0].mxu0
        %v1694 = vadd.f32 %v1629, %v1693
        %v1695 = vpop.f32.mrb[0].mxu0
        %1696 = vdwg.mxu0
        %v1697 = vld [vmem:[#allocation6] sm:$0x1]
        %v1699 = vlaneseq
        %v1700 = vshrl.u32 %v1699, 7
        %v1701 = vsub.s32 0, %v1700
        %v1702 = vrot.slane %v1697, %v1701
        %v1704 = vmul.f32 %v1667, %v1702
        %v1705 = vmul.f32 %v1670, %v1702
        %v1706 = vmul.f32 %v1675, %v1702
        %v1707 = vmul.f32 %v1678, %v1702
        %v1708 = vmul.f32 %v1683, %v1702
        %v1709 = vmul.f32 %v1686, %v1702
        %v1710 = vmul.f32 %v1691, %v1702
        %v1711 = vmul.f32 %v1694, %v1702
        %v1712 = vld [vmem:[#allocation7] sm:$0x1]
        %v1714 = vlaneseq
        %v1715 = vshrl.u32 %v1714, 7
        %v1716 = vsub.s32 0, %v1715
        %v1717 = vrot.slane %v1712, %v1716
        %v1719 = vadd.f32 %v1704, %v1717
        %v1720 = vadd.f32 %v1705, %v1717
        %v1721 = vadd.f32 %v1706, %v1717
        %v1722 = vadd.f32 %v1707, %v1717
        %v1723 = vadd.f32 %v1708, %v1717
        %v1724 = vadd.f32 %v1709, %v1717
        %v1725 = vadd.f32 %v1710, %v1717
        %v1726 = vadd.f32 %v1711, %v1717
        %v1727 = vmax.f32 %v1719, 0.0
        %v1728 = vmax.f32 %v1720, 0.0
        %v1729 = vmax.f32 %v1721, 0.0
        %v1730 = vmax.f32 %v1722, 0.0
        %v1731 = vmax.f32 %v1723, 0.0
        %v1732 = vmax.f32 %v1724, 0.0
        %v1733 = vmax.f32 %v1725, 0.0
        %v1734 = vmax.f32 %v1726, 0.0
        %v1735 = vpack.c.bf16 %v1728, %v1727
        %v1736 = vpack.c.bf16 %v1730, %v1729
        %v1737 = vpack.c.bf16 %v1732, %v1731
        %v1738 = vpack.c.bf16 %v1734, %v1733
        %v1739 = vld [vmem:[%s7] sm:$0xf]
        %v1740 = vld [vmem:[%s7 + $0x4] sm:$0xf]
        %v1741 = vld [vmem:[%s7 + $0x8] sm:$0xf]
        %v1742 = vld [vmem:[%s7 + $0xc] sm:$0xf]
        %v1743 = vld [vmem:[%s7 + $0x10] sm:$0xf]
        %v1744 = vld [vmem:[%s7 + $0x14] sm:$0xf]
        %v1745 = vld [vmem:[%s7 + $0x18] sm:$0xf]
        %v1746 = vld [vmem:[%s7 + $0x1c] sm:$0xf]
        %v1747 = vld [vmem:[%s7 + $0x20] sm:$0xf]
        %v1748 = vld [vmem:[%s7 + $0x24] sm:$0xf]
        %v1749 = vld [vmem:[%s7 + $0x28] sm:$0xf]
        %v1750 = vld [vmem:[%s7 + $0x2c] sm:$0xf]
        %v1751 = vld [vmem:[%s7 + $0x30] sm:$0xf]
        %v1752 = vld [vmem:[%s7 + $0x34] sm:$0xf]
        %v1753 = vld [vmem:[%s7 + $0x38] sm:$0xf]
        %v1754 = vld [vmem:[%s7 + $0x3c] sm:$0xf]
        %v1771 = vunpack.c.l.b16 %v1739
        %v1772 = vunpack.c.l.b16 %v1740
        %v1773 = vunpack.c.l.b16 %v1741
        %v1774 = vunpack.c.l.b16 %v1742
        %v1775 = vunpack.c.l.b16 %v1743
        %v1776 = vunpack.c.l.b16 %v1744
        %v1777 = vunpack.c.l.b16 %v1745
        %v1778 = vunpack.c.l.b16 %v1746
        %v1779 = vunpack.c.l.b16 %v1747
        %v1780 = vunpack.c.l.b16 %v1748
        %v1781 = vunpack.c.l.b16 %v1749
        %v1782 = vunpack.c.l.b16 %v1750
        %v1783 = vunpack.c.l.b16 %v1751
        %v1784 = vunpack.c.l.b16 %v1752
        %v1785 = vunpack.c.l.b16 %v1753
        %v1786 = vunpack.c.l.b16 %v1754
        %v1787 = vpack.c.b16 %v1772, %v1771
        %v1788 = vpack.c.b16 %v1774, %v1773
        %v1789 = vpack.c.b16 %v1776, %v1775
        %v1790 = vpack.c.b16 %v1778, %v1777
        %v1791 = vpack.c.b16 %v1780, %v1779
        %v1792 = vpack.c.b16 %v1782, %v1781
        %v1793 = vpack.c.b16 %v1784, %v1783
        %v1794 = vpack.c.b16 %v1786, %v1785
        %1803 = vmatprep.subr.bf16.mxu0 0
        %1804 = vmatpush1.bf16.msra.mxu0 %v1787
        %1805 = vmatprep.subr.bf16.mxu0 0
        %1806 = vmatpush1.bf16.msra.mxu0 %v1788
        %1807 = vmatprep.subr.bf16.mxu0 0
        %1808 = vmatpush1.bf16.msra.mxu0 %v1789
        %1809 = vmatprep.subr.bf16.mxu0 0
        %1810 = vmatpush1.bf16.msra.mxu0 %v1790
        %1811 = vmatprep.subr.bf16.mxu0 0
        %1812 = vmatpush1.bf16.msra.mxu0 %v1791
        %1813 = vmatprep.subr.bf16.mxu0 0
        %1814 = vmatpush1.bf16.msra.mxu0 %v1792
        %1815 = vmatprep.subr.bf16.mxu0 0
        %1816 = vmatpush1.bf16.msra.mxu0 %v1793
        %1817 = vmatprep.subr.bf16.mxu0 0
        %1818 = vmatpush1.bf16.msra.mxu0 %v1794
        %1819 = vmatprep.subr.bf16.mxu0 0
        %1820 = vmatpush1.bf16.msra.mxu0 0
        %1821 = vmatprep.subr.bf16.mxu0 0
        %1822 = vmatpush1.bf16.msra.mxu0 0
        %1823 = vmatprep.subr.bf16.mxu0 0
        %1824 = vmatpush1.bf16.msra.mxu0 0
        %1825 = vmatprep.subr.bf16.mxu0 0
        %1826 = vmatpush1.bf16.msra.mxu0 0
        %1827 = vmatprep.subr.bf16.mxu0 0
        %1828 = vmatpush1.bf16.msra.mxu0 0
        %1829 = vmatprep.subr.bf16.mxu0 0
        %1830 = vmatpush1.bf16.msra.mxu0 0
        %1831 = vmatprep.subr.bf16.mxu0 0
        %1832 = vmatpush1.bf16.msra.mxu0 0
        %1833 = vmatprep.subr.bf16.mxu0 0
        %1834 = vmatpush1.bf16.msra.mxu0 0
        %1835 = vmatprep.mubr.bf16.mxu0 0
        %1836 = vmatmul.mubr.bf16.gmra.mrb[0].mxu0 %v1735
        %v1837 = vpop.f32.mrb[0].mxu0
        %v1838 = vadd.f32 0.0, %v1837
        %v1839 = vpop.f32.mrb[0].mxu0
        %v1840 = vpop.f32.mrb[0].mxu0
        %v1841 = vadd.f32 0.0, %v1840
        %v1842 = vpop.f32.mrb[0].mxu0
        %1843 = vmatprep.mubr.bf16.mxu0 0
        %1844 = vmatmul.mubr.bf16.gmra.mrb[0].mxu0 %v1736
        %v1845 = vpop.f32.mrb[0].mxu0
        %v1846 = vadd.f32 0.0, %v1845
        %v1847 = vpop.f32.mrb[0].mxu0
        %v1848 = vpop.f32.mrb[0].mxu0
        %v1849 = vadd.f32 0.0, %v1848
        %v1850 = vpop.f32.mrb[0].mxu0
        %1851 = vmatprep.mubr.bf16.mxu0 0
        %1852 = vmatmul.mubr.bf16.gmra.mrb[0].mxu0 %v1737
        %v1853 = vpop.f32.mrb[0].mxu0
        %v1854 = vadd.f32 0.0, %v1853
        %v1855 = vpop.f32.mrb[0].mxu0
        %v1856 = vpop.f32.mrb[0].mxu0
        %v1857 = vadd.f32 0.0, %v1856
        %v1858 = vpop.f32.mrb[0].mxu0
        %1859 = vmatprep.mubr.bf16.mxu0 0
        %1860 = vmatmul.mubr.bf16.gmra.mrb[0].mxu0 %v1738
        %v1861 = vpop.f32.mrb[0].mxu0
        %v1862 = vadd.f32 0.0, %v1861
        %v1863 = vpop.f32.mrb[0].mxu0
        %v1864 = vpop.f32.mrb[0].mxu0
        %v1865 = vadd.f32 0.0, %v1864
        %v1866 = vpop.f32.mrb[0].mxu0
        %1867 = vdwg.mxu0
        %v1868 = vld [vmem:[#allocation9] sm:$0x1]
        %v1870 = vlaneseq
        %v1871 = vshrl.u32 %v1870, 7
        %v1872 = vsub.s32 0, %v1871
        %v1873 = vrot.slane %v1868, %v1872
        %v1875 = vmul.f32 %v1838, %v1873
        %v1876 = vmul.f32 %v1841, %v1873
        %v1877 = vmul.f32 %v1846, %v1873
        %v1878 = vmul.f32 %v1849, %v1873
        %v1879 = vmul.f32 %v1854, %v1873
        %v1880 = vmul.f32 %v1857, %v1873
        %v1881 = vmul.f32 %v1862, %v1873
        %v1882 = vmul.f32 %v1865, %v1873
        %v1883 = vld [vmem:[%s9] sm:$0x1]
        %v1885 = vlaneseq
        %v1886 = vshrl.u32 %v1885, 7
        %v1887 = vsub.s32 0, %v1886
        %v1888 = vrot.slane %v1883, %v1887
        %v1890 = vadd.f32 %v1875, %v1888
        %v1891 = vadd.f32 %v1876, %v1888
        %v1892 = vadd.f32 %v1877, %v1888
        %v1893 = vadd.f32 %v1878, %v1888
        %v1894 = vadd.f32 %v1879, %v1888
        %v1895 = vadd.f32 %v1880, %v1888
        %v1896 = vadd.f32 %v1881, %v1888
        %v1897 = vadd.f32 %v1882, %v1888
        %v1898 = vunpack.c.l.bf16 %v505
        %v1899 = vunpack.c.l.bf16 %v506
        %v1900 = vunpack.c.l.bf16 %v507
        %v1901 = vunpack.c.l.bf16 %v508
        %v1902 = vunpack.c.l.bf16 %v509
        %v1903 = vunpack.c.l.bf16 %v510
        %v1904 = vunpack.c.l.bf16 %v511
        %v1905 = vunpack.c.l.bf16 %v512
        %v1906 = vadd.f32 %v1890, %v1891
        %v1907 = vadd.f32 %v1906, %v1892
        %v1908 = vadd.f32 %v1907, %v1893
        %v1909 = vadd.f32 %v1908, %v1894
        %v1910 = vadd.f32 %v1909, %v1895
        %v1911 = vadd.f32 %v1910, %v1896
        %v1912 = vadd.f32 %v1911, %v1897
        %v1913 = vrot.slane %v1912, 4
        %v1914 = vadd.f32 %v1912, %v1913
        %v1915 = vrot.slane %v1914, 2
        %v1916 = vadd.f32 %v1914, %v1915
        %v1917 = vrot.slane %v1916, 1
        %v1918 = vadd.f32 %v1916, %v1917
        %v1919 = vrcp.pop 64.0
        %v1920 = vmul.f32 %v1918, %v1919
        %v1921 = vmax.f32 %v1890, %v1894
        %v1922 = vmax.f32 %v1891, %v1895
        %v1923 = vmax.f32 %v1892, %v1896
        %v1924 = vmax.f32 %v1893, %v1897
        %v1925 = vmax.f32 %v1921, %v1922
        %v1926 = vmax.f32 %v1923, %v1924
        %v1927 = vmax.f32 %v1925, %v1926
        %v1928 = vrot.slane %v1927, 4
        %v1929 = vmax.f32 %v1927, %v1928
        %v1930 = vrot.slane %v1929, 2
        %v1931 = vmax.f32 %v1929, %v1930
        %v1932 = vrot.slane %v1931, 1
        %v1933 = vmax.f32 %v1931, %v1932
        %v1934 = vsel %vm728, %v1920, %v1933
        %v1935 = vpack.c.bf16 %v1934, %v1934
        %v1936 = vld [vmem:[%s10] sm:$0xf]
        %v1937 = vld [vmem:[%s10 + $0x4] sm:$0xf]
        %v1938 = vld [vmem:[%s10 + $0x8] sm:$0xf]
        %v1939 = vld [vmem:[%s10 + $0xc] sm:$0xf]
        %v1940 = vld [vmem:[%s10 + $0x10] sm:$0xf]
        %v1941 = vld [vmem:[%s10 + $0x14] sm:$0xf]
        %v1942 = vld [vmem:[%s10 + $0x18] sm:$0xf]
        %v1943 = vld [vmem:[%s10 + $0x1c] sm:$0xf]
        %v1944 = vld [vmem:[%s10 + $0x20] sm:$0xf]
        %v1945 = vld [vmem:[%s10 + $0x24] sm:$0xf]
        %v1946 = vld [vmem:[%s10 + $0x28] sm:$0xf]
        %v1947 = vld [vmem:[%s10 + $0x2c] sm:$0xf]
        %v1948 = vld [vmem:[%s10 + $0x30] sm:$0xf]
        %v1949 = vld [vmem:[%s10 + $0x34] sm:$0xf]
        %v1950 = vld [vmem:[%s10 + $0x38] sm:$0xf]
        %v1951 = vld [vmem:[%s10 + $0x3c] sm:$0xf]
        %v1968 = vunpack.c.l.b16 %v1936
        %v1969 = vunpack.c.l.b16 %v1937
        %v1970 = vunpack.c.l.b16 %v1938
        %v1971 = vunpack.c.l.b16 %v1939
        %v1972 = vunpack.c.l.b16 %v1940
        %v1973 = vunpack.c.l.b16 %v1941
        %v1974 = vunpack.c.l.b16 %v1942
        %v1975 = vunpack.c.l.b16 %v1943
        %v1976 = vunpack.c.l.b16 %v1944
        %v1977 = vunpack.c.l.b16 %v1945
        %v1978 = vunpack.c.l.b16 %v1946
        %v1979 = vunpack.c.l.b16 %v1947
        %v1980 = vunpack.c.l.b16 %v1948
        %v1981 = vunpack.c.l.b16 %v1949
        %v1982 = vunpack.c.l.b16 %v1950
        %v1983 = vunpack.c.l.b16 %v1951
        %v1984 = vpack.c.b16 %v1969, %v1968
        %v1985 = vpack.c.b16 %v1971, %v1970
        %v1986 = vpack.c.b16 %v1973, %v1972
        %v1987 = vpack.c.b16 %v1975, %v1974
        %v1988 = vpack.c.b16 %v1977, %v1976
        %v1989 = vpack.c.b16 %v1979, %v1978
        %v1990 = vpack.c.b16 %v1981, %v1980
        %v1991 = vpack.c.b16 %v1983, %v1982
        %2000 = vmatprep.subr.bf16.mxu0 0
        %2001 = vmatpush1.bf16.msra.mxu0 %v1984
        %2002 = vmatprep.subr.bf16.mxu0 0
        %2003 = vmatpush1.bf16.msra.mxu0 %v1985
        %2004 = vmatprep.subr.bf16.mxu0 0
        %2005 = vmatpush1.bf16.msra.mxu0 %v1986
        %2006 = vmatprep.subr.bf16.mxu0 0
        %2007 = vmatpush1.bf16.msra.mxu0 %v1987
        %2008 = vmatprep.subr.bf16.mxu0 0
        %2009 = vmatpush1.bf16.msra.mxu0 %v1988
        %2010 = vmatprep.subr.bf16.mxu0 0
        %2011 = vmatpush1.bf16.msra.mxu0 %v1989
        %2012 = vmatprep.subr.bf16.mxu0 0
        %2013 = vmatpush1.bf16.msra.mxu0 %v1990
        %2014 = vmatprep.subr.bf16.mxu0 0
        %2015 = vmatpush1.bf16.msra.mxu0 %v1991
        %2016 = vmatprep.subr.bf16.mxu0 0
        %2017 = vmatpush1.bf16.msra.mxu0 0
        %2018 = vmatprep.subr.bf16.mxu0 0
        %2019 = vmatpush1.bf16.msra.mxu0 0
        %2020 = vmatprep.subr.bf16.mxu0 0
        %2021 = vmatpush1.bf16.msra.mxu0 0
        %2022 = vmatprep.subr.bf16.mxu0 0
        %2023 = vmatpush1.bf16.msra.mxu0 0
        %2024 = vmatprep.subr.bf16.mxu0 0
        %2025 = vmatpush1.bf16.msra.mxu0 0
        %2026 = vmatprep.subr.bf16.mxu0 0
        %2027 = vmatpush1.bf16.msra.mxu0 0
        %2028 = vmatprep.subr.bf16.mxu0 0
        %2029 = vmatpush1.bf16.msra.mxu0 0
        %2030 = vmatprep.subr.bf16.mxu0 0
        %2031 = vmatpush1.bf16.msra.mxu0 0
        %2032 = vmatprep.mubr.bf16.mxu0 0
        %2033 = vmatmul.mubr.bf16.gmra.mrb[0].mxu0 %v1935
        %v2034 = vpop.f32.mrb[0].mxu0
        %v2035 = vadd.f32 0.0, %v2034
        %v2036 = vpop.f32.mrb[0].mxu0
        %v2037 = vpop.f32.mrb[0].mxu0
        %v2038 = vpop.f32.mrb[0].mxu0
        %2039 = vdwg.mxu0
        %v2040 = vmax.f32 %v2035, 0.0
        %v2041 = vpack.c.bf16 %v2040, %v2040
        %v2042 = vld [vmem:[%s11] sm:$0xf]
        %v2043 = vld [vmem:[%s11 + $0x4] sm:$0xf]
        %v2044 = vld [vmem:[%s11 + $0x8] sm:$0xf]
        %v2045 = vld [vmem:[%s11 + $0xc] sm:$0xf]
        %v2046 = vld [vmem:[%s11 + $0x10] sm:$0xf]
        %v2047 = vld [vmem:[%s11 + $0x14] sm:$0xf]
        %v2048 = vld [vmem:[%s11 + $0x18] sm:$0xf]
        %v2049 = vld [vmem:[%s11 + $0x1c] sm:$0xf]
        %v2050 = vld [vmem:[%s11 + $0x20] sm:$0xf]
        %v2051 = vld [vmem:[%s11 + $0x24] sm:$0xf]
        %v2052 = vld [vmem:[%s11 + $0x28] sm:$0xf]
        %v2053 = vld [vmem:[%s11 + $0x2c] sm:$0xf]
        %v2054 = vld [vmem:[%s11 + $0x30] sm:$0xf]
        %v2055 = vld [vmem:[%s11 + $0x34] sm:$0xf]
        %v2056 = vld [vmem:[%s11 + $0x38] sm:$0xf]
        %v2057 = vld [vmem:[%s11 + $0x3c] sm:$0xf]
        %v2074 = vunpack.c.l.b16 %v2042
        %v2075 = vunpack.c.l.b16 %v2043
        %v2076 = vunpack.c.l.b16 %v2044
        %v2077 = vunpack.c.l.b16 %v2045
        %v2078 = vunpack.c.l.b16 %v2046
        %v2079 = vunpack.c.l.b16 %v2047
        %v2080 = vunpack.c.l.b16 %v2048
        %v2081 = vunpack.c.l.b16 %v2049
        %v2082 = vunpack.c.l.b16 %v2050
        %v2083 = vunpack.c.l.b16 %v2051
        %v2084 = vunpack.c.l.b16 %v2052
        %v2085 = vunpack.c.l.b16 %v2053
        %v2086 = vunpack.c.l.b16 %v2054
        %v2087 = vunpack.c.l.b16 %v2055
        %v2088 = vunpack.c.l.b16 %v2056
        %v2089 = vunpack.c.l.b16 %v2057
        %v2090 = vpack.c.b16 %v2075, %v2074
        %v2091 = vpack.c.b16 %v2077, %v2076
        %v2092 = vpack.c.b16 %v2079, %v2078
        %v2093 = vpack.c.b16 %v2081, %v2080
        %v2094 = vpack.c.b16 %v2083, %v2082
        %v2095 = vpack.c.b16 %v2085, %v2084
        %v2096 = vpack.c.b16 %v2087, %v2086
        %v2097 = vpack.c.b16 %v2089, %v2088
        %2106 = vmatprep.subr.bf16.mxu0 0
        %2107 = vmatpush1.bf16.msra.mxu0 %v2090
        %2108 = vmatprep.subr.bf16.mxu0 0
        %2109 = vmatpush1.bf16.msra.mxu0 %v2091
        %2110 = vmatprep.subr.bf16.mxu0 0
        %2111 = vmatpush1.bf16.msra.mxu0 %v2092
        %2112 = vmatprep.subr.bf16.mxu0 0
        %2113 = vmatpush1.bf16.msra.mxu0 %v2093
        %2114 = vmatprep.subr.bf16.mxu0 0
        %2115 = vmatpush1.bf16.msra.mxu0 %v2094
        %2116 = vmatprep.subr.bf16.mxu0 0
        %2117 = vmatpush1.bf16.msra.mxu0 %v2095
        %2118 = vmatprep.subr.bf16.mxu0 0
        %2119 = vmatpush1.bf16.msra.mxu0 %v2096
        %2120 = vmatprep.subr.bf16.mxu0 0
        %2121 = vmatpush1.bf16.msra.mxu0 %v2097
        %2122 = vmatprep.subr.bf16.mxu0 0
        %2123 = vmatpush1.bf16.msra.mxu0 0
        %2124 = vmatprep.subr.bf16.mxu0 0
        %2125 = vmatpush1.bf16.msra.mxu0 0
        %2126 = vmatprep.subr.bf16.mxu0 0
        %2127 = vmatpush1.bf16.msra.mxu0 0
        %2128 = vmatprep.subr.bf16.mxu0 0
        %2129 = vmatpush1.bf16.msra.mxu0 0
        %2130 = vmatprep.subr.bf16.mxu0 0
        %2131 = vmatpush1.bf16.msra.mxu0 0
        %2132 = vmatprep.subr.bf16.mxu0 0
        %2133 = vmatpush1.bf16.msra.mxu0 0
        %2134 = vmatprep.subr.bf16.mxu0 0
        %2135 = vmatpush1.bf16.msra.mxu0 0
        %2136 = vmatprep.subr.bf16.mxu0 0
        %2137 = vmatpush1.bf16.msra.mxu0 0
        %2138 = vmatprep.mubr.bf16.mxu0 0
        %2139 = vmatmul.mubr.bf16.gmra.mrb[0].mxu0 %v2041
        %v2140 = vpop.f32.mrb[0].mxu0
        %v2141 = vadd.f32 0.0, %v2140
        %v2142 = vpop.f32.mrb[0].mxu0
        %v2143 = vpop.f32.mrb[0].mxu0
        %v2144 = vpop.f32.mrb[0].mxu0
        %2145 = vdwg.mxu0
        %v2147 = vrot.slane %v2141, 1
        %v2149 = vadd.f32 %v2141, %v2147
        %v2150 = vxor.u32 %v2149, 2147483648
        %v2151 = vmul.f32 %v2150, 1.442695
        %v2152 = vpow.pop %v2151
        %v2153 = vadd.f32 %v2152, 1.0
        %v2154 = vrcp.pop %v2153
        %v2155 = vmul.f32 1.0, %v2154
        %v2156 = vlaneseq
        %v2157 = vshrl.u32 %v2156, 7
        %v2158 = vsub.s32 0, %v2157
        %v2159 = vrot.slane %v2155, %v2158
        %v2160 = vmul.f32 %v1890, %v2159
        %v2161 = vmul.f32 %v1891, %v2159
        %v2162 = vmul.f32 %v1892, %v2159
        %v2163 = vmul.f32 %v1893, %v2159
        %v2164 = vmul.f32 %v1894, %v2159
        %v2165 = vmul.f32 %v1895, %v2159
        %v2166 = vmul.f32 %v1896, %v2159
        %v2167 = vmul.f32 %v1897, %v2159
        %2168 = vadd.xlane.f32.xlu0 %v2160
        %v2169 = vpop.xlane.xlu0 %2168
        %2170 = vadd.xlane.f32.xlu0 %v2161
        %v2171 = vpop.xlane.xlu0 %2170
        %2172 = vadd.xlane.f32.xlu0 %v2162
        %v2173 = vpop.xlane.xlu0 %2172
        %2174 = vadd.xlane.f32.xlu0 %v2163
        %v2175 = vpop.xlane.xlu0 %2174
        %2176 = vadd.xlane.f32.xlu0 %v2164
        %v2177 = vpop.xlane.xlu0 %2176
        %2178 = vadd.xlane.f32.xlu0 %v2165
        %v2179 = vpop.xlane.xlu0 %2178
        %2180 = vadd.xlane.f32.xlu0 %v2166
        %v2181 = vpop.xlane.xlu0 %2180
        %2182 = vadd.xlane.f32.xlu0 %v2167
        %v2183 = vpop.xlane.xlu0 %2182
        %v2184 = vmul.f32 %v2169, 0.0625
        %v2185 = vmul.f32 %v2171, 0.0625
        %v2186 = vmul.f32 %v2173, 0.0625
        %v2187 = vmul.f32 %v2175, 0.0625
        %v2188 = vmul.f32 %v2177, 0.0625
        %v2189 = vmul.f32 %v2179, 0.0625
        %v2190 = vmul.f32 %v2181, 0.0625
        %v2191 = vmul.f32 %v2183, 0.0625
        %v2192 = vlaneseq
        %v2193 = vand.u32 %v2192, 127
        %vm2194 = vcmp.lt.s32.totalorder %v2193, 16
        %v2195 = vsel %vm2194, 1, 0
        %vm2196 = vcmp.eq.s32.totalorder %v2195, 1
        %v2197 = vsel %vm2196, %v2160, -3.4028235e+38
        %v2198 = vsel %vm2196, %v2161, -3.4028235e+38
        %v2199 = vsel %vm2196, %v2162, -3.4028235e+38
        %v2200 = vsel %vm2196, %v2163, -3.4028235e+38
        %v2201 = vsel %vm2196, %v2164, -3.4028235e+38
        %v2202 = vsel %vm2196, %v2165, -3.4028235e+38
        %v2203 = vsel %vm2196, %v2166, -3.4028235e+38
        %v2204 = vsel %vm2196, %v2167, -3.4028235e+38
        %2205 = vmax.xlane.f32.xlu0 %v2197
        %v2206 = vpop.xlane.xlu0 %2205
        %2207 = vmax.xlane.f32.xlu0 %v2198
        %v2208 = vpop.xlane.xlu0 %2207
        %2209 = vmax.xlane.f32.xlu0 %v2199
        %v2210 = vpop.xlane.xlu0 %2209
        %2211 = vmax.xlane.f32.xlu0 %v2200
        %v2212 = vpop.xlane.xlu0 %2211
        %2213 = vmax.xlane.f32.xlu0 %v2201
        %v2214 = vpop.xlane.xlu0 %2213
        %2215 = vmax.xlane.f32.xlu0 %v2202
        %v2216 = vpop.xlane.xlu0 %2215
        %2217 = vmax.xlane.f32.xlu0 %v2203
        %v2218 = vpop.xlane.xlu0 %2217
        %2219 = vmax.xlane.f32.xlu0 %v2204
        %v2220 = vpop.xlane.xlu0 %2219
        %v2226 = vlaneseq
        %v2227 = vshrl.u32 %v2226, 7
        %v2228 = vsub.s32 %v2193, %v2227
        %v2229 = vrot.slane %v2184, %v2228
        %v2230 = vlaneseq
        %v2231 = vshrl.u32 %v2230, 7
        %v2232 = vsub.s32 %v2193, %v2231
        %v2233 = vrot.slane %v2185, %v2232
        %v2234 = vlaneseq
        %v2235 = vshrl.u32 %v2234, 7
        %v2236 = vsub.s32 %v2193, %v2235
        %v2237 = vrot.slane %v2186, %v2236
        %v2238 = vlaneseq
        %v2239 = vshrl.u32 %v2238, 7
        %v2240 = vsub.s32 %v2193, %v2239
        %v2241 = vrot.slane %v2187, %v2240
        %v2242 = vlaneseq
        %v2243 = vshrl.u32 %v2242, 7
        %v2244 = vsub.s32 %v2193, %v2243
        %v2245 = vrot.slane %v2188, %v2244
        %vm2246 = vcmask 1044484
        %v2247 = vsel %vm2246, %v2233, %v2229
        %vm2248 = vcmask 1045509
        %v2249 = vsel %vm2248, %v2237, %v2247
        %vm2250 = vcmask 1046534
        %v2251 = vsel %vm2250, %v2241, %v2249
        %vm2252 = vcmask 1047559
        %v2253 = vsel %vm2252, %v2245, %v2251
        %vm2255 = vcmask 1042432
        %v2256 = vsel %vm2255, 0.0, %v2253
        %v2258 = vlaneseq
        %v2259 = vshrl.u32 %v2258, 7
        %v2260 = vsub.s32 %v2193, %v2259
        %v2261 = vrot.slane %v2189, %v2260
        %vm2262 = vcmask 1043459
        %v2263 = vsel %vm2262, %v2233, %v2229
        %v2264 = vsel %vm2246, %v2237, %v2263
        %v2265 = vsel %vm2248, %v2241, %v2264
        %v2266 = vsel %vm2250, %v2245, %v2265
        %v2267 = vsel %vm2252, %v2261, %v2266
        %vm2269 = vcmask 1041408
        %v2270 = vsel %vm2269, 0.0, %v2267
        %v2272 = vlaneseq
        %v2273 = vshrl.u32 %v2272, 7
        %v2274 = vsub.s32 %v2193, %v2273
        %v2275 = vrot.slane %v2190, %v2274
        %vm2276 = vcmask 1042434
        %v2277 = vsel %vm2276, %v2233, %v2229
        %v2278 = vsel %vm2262, %v2237, %v2277
        %v2279 = vsel %vm2246, %v2241, %v2278
        %v2280 = vsel %vm2248, %v2245, %v2279
        %v2281 = vsel %vm2250, %v2261, %v2280
        %v2282 = vsel %vm2252, %v2275, %v2281
        %v2284 = vsel %vm728, 0.0, %v2282
        %v2286 = vlaneseq
        %v2287 = vshrl.u32 %v2286, 7
        %v2288 = vsub.s32 %v2193, %v2287
        %v2289 = vrot.slane %v2191, %v2288
        %vm2290 = vcmask 1041409
        %v2291 = vsel %vm2290, %v2237, %v2233
        %v2292 = vsel %vm2276, %v2241, %v2291
        %v2293 = vsel %vm2262, %v2245, %v2292
        %v2294 = vsel %vm2246, %v2261, %v2293
        %v2295 = vsel %vm2248, %v2275, %v2294
        %v2296 = vsel %vm2250, %v2289, %v2295
        %v2298 = vsel %vm761, %v2296, 0.0
        %v2299 = vsel %vm2290, %v2241, %v2237
        %v2300 = vsel %vm2276, %v2245, %v2299
        %v2301 = vsel %vm2262, %v2261, %v2300
        %v2302 = vsel %vm2246, %v2275, %v2301
        %v2303 = vsel %vm2248, %v2289, %v2302
        %vm2305 = vcmask 1045504
        %v2306 = vsel %vm2305, %v2303, 0.0
        %v2307 = vsel %vm2290, %v2245, %v2241
        %v2308 = vsel %vm2276, %v2261, %v2307
        %v2309 = vsel %vm2262, %v2275, %v2308
        %v2310 = vsel %vm2246, %v2289, %v2309
        %vm2312 = vcmask 1044480
        %v2313 = vsel %vm2312, %v2310, 0.0
        %v2319 = vlaneseq
        %v2320 = vshrl.u32 %v2319, 7
        %v2321 = vsub.s32 %v2193, %v2320
        %v2322 = vrot.slane %v2206, %v2321
        %v2323 = vlaneseq
        %v2324 = vshrl.u32 %v2323, 7
        %v2325 = vsub.s32 %v2193, %v2324
        %v2326 = vrot.slane %v2208, %v2325
        %v2327 = vlaneseq
        %v2328 = vshrl.u32 %v2327, 7
        %v2329 = vsub.s32 %v2193, %v2328
        %v2330 = vrot.slane %v2210, %v2329
        %v2331 = vlaneseq
        %v2332 = vshrl.u32 %v2331, 7
        %v2333 = vsub.s32 %v2193, %v2332
        %v2334 = vrot.slane %v2212, %v2333
        %v2335 = vlaneseq
        %v2336 = vshrl.u32 %v2335, 7
        %v2337 = vsub.s32 %v2193, %v2336
        %v2338 = vrot.slane %v2214, %v2337
        %v2339 = vsel %vm2246, %v2326, %v2322
        %v2340 = vsel %vm2248, %v2330, %v2339
        %v2341 = vsel %vm2250, %v2334, %v2340
        %v2342 = vsel %vm2252, %v2338, %v2341
        %v2344 = vsel %vm2255, 0.0, %v2342
        %v2346 = vlaneseq
        %v2347 = vshrl.u32 %v2346, 7
        %v2348 = vsub.s32 %v2193, %v2347
        %v2349 = vrot.slane %v2216, %v2348
        %v2350 = vsel %vm2262, %v2326, %v2322
        %v2351 = vsel %vm2246, %v2330, %v2350
        %v2352 = vsel %vm2248, %v2334, %v2351
        %v2353 = vsel %vm2250, %v2338, %v2352
        %v2354 = vsel %vm2252, %v2349, %v2353
        %v2356 = vsel %vm2269, 0.0, %v2354
        %v2358 = vlaneseq
        %v2359 = vshrl.u32 %v2358, 7
        %v2360 = vsub.s32 %v2193, %v2359
        %v2361 = vrot.slane %v2218, %v2360
        %v2362 = vsel %vm2276, %v2326, %v2322
        %v2363 = vsel %vm2262, %v2330, %v2362
        %v2364 = vsel %vm2246, %v2334, %v2363
        %v2365 = vsel %vm2248, %v2338, %v2364
        %v2366 = vsel %vm2250, %v2349, %v2365
        %v2367 = vsel %vm2252, %v2361, %v2366
        %v2369 = vsel %vm728, 0.0, %v2367
        %v2371 = vlaneseq
        %v2372 = vshrl.u32 %v2371, 7
        %v2373 = vsub.s32 %v2193, %v2372
        %v2374 = vrot.slane %v2220, %v2373
        %v2375 = vsel %vm2290, %v2330, %v2326
        %v2376 = vsel %vm2276, %v2334, %v2375
        %v2377 = vsel %vm2262, %v2338, %v2376
        %v2378 = vsel %vm2246, %v2349, %v2377
        %v2379 = vsel %vm2248, %v2361, %v2378
        %v2380 = vsel %vm2250, %v2374, %v2379
        %v2382 = vsel %vm761, %v2380, 0.0
        %v2383 = vsel %vm2290, %v2334, %v2330
        %v2384 = vsel %vm2276, %v2338, %v2383
        %v2385 = vsel %vm2262, %v2349, %v2384
        %v2386 = vsel %vm2246, %v2361, %v2385
        %v2387 = vsel %vm2248, %v2374, %v2386
        %v2389 = vsel %vm2305, %v2387, 0.0
        %v2390 = vsel %vm2290, %v2338, %v2334
        %v2391 = vsel %vm2276, %v2349, %v2390
        %v2392 = vsel %vm2262, %v2361, %v2391
        %v2393 = vsel %vm2246, %v2374, %v2392
        %v2395 = vsel %vm2312, %v2393, 0.0
        %2397 = vrot.lane.b32.xlu0 %v2270, 8
        %v2398 = vpop.permute.xlu0 %2397
        %2401 = vrot.lane.b32.xlu0 %v2284, 16
        %v2402 = vpop.permute.xlu0 %2401
        %v2404 = vadd.s32 %v2193, 4294967272
        %v2405 = vlaneseq
        %v2406 = vshrl.u32 %v2405, 7
        %v2407 = vsub.s32 %v2404, %v2406
        %v2408 = vrot.slane %v2184, %v2407
        %v2409 = vlaneseq
        %v2410 = vshrl.u32 %v2409, 7
        %v2411 = vsub.s32 %v2404, %v2410
        %v2412 = vrot.slane %v2185, %v2411
        %v2413 = vlaneseq
        %v2414 = vshrl.u32 %v2413, 7
        %v2415 = vsub.s32 %v2404, %v2414
        %v2416 = vrot.slane %v2186, %v2415
        %v2417 = vlaneseq
        %v2418 = vshrl.u32 %v2417, 7
        %v2419 = vsub.s32 %v2404, %v2418
        %v2420 = vrot.slane %v2187, %v2419
        %v2421 = vlaneseq
        %v2422 = vshrl.u32 %v2421, 7
        %v2423 = vsub.s32 %v2404, %v2422
        %v2424 = vrot.slane %v2188, %v2423
        %v2425 = vlaneseq
        %v2426 = vshrl.u32 %v2425, 7
        %v2427 = vsub.s32 %v2404, %v2426
        %v2428 = vrot.slane %v2189, %v2427
        %v2429 = vlaneseq
        %v2430 = vshrl.u32 %v2429, 7
        %v2431 = vsub.s32 %v2404, %v2430
        %v2432 = vrot.slane %v2190, %v2431
        %v2433 = vlaneseq
        %v2434 = vshrl.u32 %v2433, 7
        %v2435 = vsub.s32 %v2404, %v2434
        %v2436 = vrot.slane %v2191, %v2435
        %v2437 = vsel %vm2290, %v2412, %v2408
        %v2438 = vsel %vm2276, %v2416, %v2437
        %v2439 = vsel %vm2262, %v2420, %v2438
        %v2440 = vsel %vm2246, %v2424, %v2439
        %v2441 = vsel %vm2248, %v2428, %v2440
        %v2442 = vsel %vm2250, %v2432, %v2441
        %v2443 = vsel %vm2252, %v2436, %v2442
        %2446 = vrot.lane.b32.xlu0 %v2298, 32
        %v2447 = vpop.permute.xlu0 %2446
        %2450 = vrot.lane.b32.xlu0 %v2306, 40
        %v2451 = vpop.permute.xlu0 %2450
        %2454 = vrot.lane.b32.xlu0 %v2313, 48
        %v2455 = vpop.permute.xlu0 %2454
        %2458 = vrot.lane.b32.xlu0 %v2344, 56
        %v2459 = vpop.permute.xlu0 %2458
        %2462 = vrot.lane.b32.xlu0 %v2356, 64
        %v2463 = vpop.permute.xlu0 %2462
        %2466 = vrot.lane.b32.xlu0 %v2369, 72
        %v2467 = vpop.permute.xlu0 %2466
        %v2469 = vadd.s32 %v2193, 4294967216
        %v2470 = vlaneseq
        %v2471 = vshrl.u32 %v2470, 7
        %v2472 = vsub.s32 %v2469, %v2471
        %v2473 = vrot.slane %v2206, %v2472
        %v2474 = vlaneseq
        %v2475 = vshrl.u32 %v2474, 7
        %v2476 = vsub.s32 %v2469, %v2475
        %v2477 = vrot.slane %v2208, %v2476
        %v2478 = vlaneseq
        %v2479 = vshrl.u32 %v2478, 7
        %v2480 = vsub.s32 %v2469, %v2479
        %v2481 = vrot.slane %v2210, %v2480
        %v2482 = vlaneseq
        %v2483 = vshrl.u32 %v2482, 7
        %v2484 = vsub.s32 %v2469, %v2483
        %v2485 = vrot.slane %v2212, %v2484
        %v2486 = vlaneseq
        %v2487 = vshrl.u32 %v2486, 7
        %v2488 = vsub.s32 %v2469, %v2487
        %v2489 = vrot.slane %v2214, %v2488
        %v2490 = vlaneseq
        %v2491 = vshrl.u32 %v2490, 7
        %v2492 = vsub.s32 %v2469, %v2491
        %v2493 = vrot.slane %v2216, %v2492
        %v2494 = vlaneseq
        %v2495 = vshrl.u32 %v2494, 7
        %v2496 = vsub.s32 %v2469, %v2495
        %v2497 = vrot.slane %v2218, %v2496
        %v2498 = vlaneseq
        %v2499 = vshrl.u32 %v2498, 7
        %v2500 = vsub.s32 %v2469, %v2499
        %v2501 = vrot.slane %v2220, %v2500
        %v2502 = vsel %vm2290, %v2477, %v2473
        %v2503 = vsel %vm2276, %v2481, %v2502
        %v2504 = vsel %vm2262, %v2485, %v2503
        %v2505 = vsel %vm2246, %v2489, %v2504
        %v2506 = vsel %vm2248, %v2493, %v2505
        %v2507 = vsel %vm2250, %v2497, %v2506
        %v2508 = vsel %vm2252, %v2501, %v2507
        %2511 = vrot.lane.b32.xlu0 %v2382, 88
        %v2512 = vpop.permute.xlu0 %2511
        %2515 = vrot.lane.b32.xlu0 %v2389, 96
        %v2516 = vpop.permute.xlu0 %2515
        %2519 = vrot.lane.b32.xlu0 %v2395, 104
        %v2520 = vpop.permute.xlu0 %2519
        %vm2522 = vcmask 64512
        %v2523 = vsel %vm2522, %v2256, %v2398
        %vm2524 = vcmask 130048
        %v2525 = vsel %vm2524, %v2523, %v2402
        %vm2526 = vcmask 195584
        %v2527 = vsel %vm2526, %v2525, %v2443
        %vm2528 = vcmask 261120
        %v2529 = vsel %vm2528, %v2527, %v2447
        %vm2530 = vcmask 326656
        %v2531 = vsel %vm2530, %v2529, %v2451
        %vm2532 = vcmask 392192
        %v2533 = vsel %vm2532, %v2531, %v2455
        %vm2534 = vcmask 457728
        %v2535 = vsel %vm2534, %v2533, %v2459
        %vm2536 = vcmask 523264
        %v2537 = vsel %vm2536, %v2535, %v2463
        %vm2538 = vcmask 588800
        %v2539 = vsel %vm2538, %v2537, %v2467
        %vm2540 = vcmask 654336
        %v2541 = vsel %vm2540, %v2539, %v2508
        %vm2542 = vcmask 719872
        %v2543 = vsel %vm2542, %v2541, %v2512
        %vm2544 = vcmask 785408
        %v2545 = vsel %vm2544, %v2543, %v2516
        %vm2546 = vcmask 850944
        %v2547 = vsel %vm2546, %v2545, %v2520
        %vm2548 = vcmask 916480
        %v2549 = vsel %vm2548, %v2547, 0.0
        %v2550 = vpack.c.bf16 %v2549, %v2549
        %v2551 = vld [vmem:[%s12] sm:$0xf]
        %v2552 = vld [vmem:[%s12 + $0x4] sm:$0xf]
        %v2553 = vld [vmem:[%s12 + $0x8] sm:$0xf]
        %v2554 = vld [vmem:[%s12 + $0xc] sm:$0xf]
        %v2555 = vld [vmem:[%s12 + $0x10] sm:$0xf]
        %v2556 = vld [vmem:[%s12 + $0x14] sm:$0xf]
        %v2557 = vld [vmem:[%s12 + $0x18] sm:$0xf]
        %v2558 = vld [vmem:[%s12 + $0x1c] sm:$0xf]
        %v2559 = vld [vmem:[%s12 + $0x20] sm:$0xf]
        %v2560 = vld [vmem:[%s12 + $0x24] sm:$0xf]
        %v2561 = vld [vmem:[%s12 + $0x28] sm:$0xf]
        %v2562 = vld [vmem:[%s12 + $0x2c] sm:$0xf]
        %v2563 = vld [vmem:[%s12 + $0x30] sm:$0xf]
        %v2564 = vld [vmem:[%s12 + $0x34] sm:$0xf]
        %v2565 = vld [vmem:[%s12 + $0x38] sm:$0xf]
        %v2566 = vld [vmem:[%s12 + $0x3c] sm:$0xf]
        %v2583 = vunpack.c.l.b16 %v2551
        %v2584 = vunpack.c.l.b16 %v2552
        %v2585 = vunpack.c.l.b16 %v2553
        %v2586 = vunpack.c.l.b16 %v2554
        %v2587 = vunpack.c.l.b16 %v2555
        %v2588 = vunpack.c.l.b16 %v2556
        %v2589 = vunpack.c.l.b16 %v2557
        %v2590 = vunpack.c.l.b16 %v2558
        %v2591 = vunpack.c.l.b16 %v2559
        %v2592 = vunpack.c.l.b16 %v2560
        %v2593 = vunpack.c.l.b16 %v2561
        %v2594 = vunpack.c.l.b16 %v2562
        %v2595 = vunpack.c.l.b16 %v2563
        %v2596 = vunpack.c.l.b16 %v2564
        %v2597 = vunpack.c.l.b16 %v2565
        %v2598 = vunpack.c.l.b16 %v2566
        %v2599 = vpack.c.b16 %v2584, %v2583
        %v2600 = vpack.c.b16 %v2586, %v2585
        %v2601 = vpack.c.b16 %v2588, %v2587
        %v2602 = vpack.c.b16 %v2590, %v2589
        %v2603 = vpack.c.b16 %v2592, %v2591
        %v2604 = vpack.c.b16 %v2594, %v2593
        %v2605 = vpack.c.b16 %v2596, %v2595
        %v2606 = vpack.c.b16 %v2598, %v2597
        %2615 = vmatprep.subr.bf16.mxu0 0
        %2616 = vmatpush1.bf16.msra.mxu0 %v2599
        %2617 = vmatprep.subr.bf16.mxu0 0
        %2618 = vmatpush1.bf16.msra.mxu0 %v2600
        %2619 = vmatprep.subr.bf16.mxu0 0
        %2620 = vmatpush1.bf16.msra.mxu0 %v2601
        %2621 = vmatprep.subr.bf16.mxu0 0
        %2622 = vmatpush1.bf16.msra.mxu0 %v2602
        %2623 = vmatprep.subr.bf16.mxu0 0
        %2624 = vmatpush1.bf16.msra.mxu0 %v2603
        %2625 = vmatprep.subr.bf16.mxu0 0
        %2626 = vmatpush1.bf16.msra.mxu0 %v2604
        %2627 = vmatprep.subr.bf16.mxu0 0
        %2628 = vmatpush1.bf16.msra.mxu0 %v2605
        %2629 = vmatprep.subr.bf16.mxu0 0
        %2630 = vmatpush1.bf16.msra.mxu0 %v2606
        %2631 = vmatprep.subr.bf16.mxu0 0
        %2632 = vmatpush1.bf16.msra.mxu0 0
        %2633 = vmatprep.subr.bf16.mxu0 0
        %2634 = vmatpush1.bf16.msra.mxu0 0
        %2635 = vmatprep.subr.bf16.mxu0 0
        %2636 = vmatpush1.bf16.msra.mxu0 0
        %2637 = vmatprep.subr.bf16.mxu0 0
        %2638 = vmatpush1.bf16.msra.mxu0 0
        %2639 = vmatprep.subr.bf16.mxu0 0
        %2640 = vmatpush1.bf16.msra.mxu0 0
        %2641 = vmatprep.subr.bf16.mxu0 0
        %2642 = vmatpush1.bf16.msra.mxu0 0
        %2643 = vmatprep.subr.bf16.mxu0 0
        %2644 = vmatpush1.bf16.msra.mxu0 0
        %2645 = vmatprep.subr.bf16.mxu0 0
        %2646 = vmatpush1.bf16.msra.mxu0 0
        %2647 = vmatprep.mubr.bf16.mxu0 0
        %2648 = vmatmul.mubr.bf16.gmra.mrb[0].mxu0 %v2550
        %v2649 = vpop.f32.mrb[0].mxu0
        %v2650 = vadd.f32 0.0, %v2649
        %v2651 = vpop.f32.mrb[0].mxu0
        %v2652 = vpop.f32.mrb[0].mxu0
        %v2653 = vpop.f32.mrb[0].mxu0
        %2654 = vdwg.mxu0
        %v2655 = vxor.u32 %v2650, 2147483648
        %v2656 = vmul.f32 %v2655, 1.442695
        %v2657 = vpow.pop %v2656
        %v2658 = vadd.f32 %v2657, 1.0
        %v2659 = vrcp.pop %v2658
        %v2660 = vmul.f32 1.0, %v2659
        %v2661 = vlaneseq
        %v2662 = vshrl.u32 %v2661, 7
        %v2663 = vsub.s32 0, %v2662
        %v2664 = vrot.slane %v2660, %v2663
        %2666 = vbcast.lane.b32.xlu0 %v2664, 256
        %v2667 = vpop.permute.xlu0 %2666
        %v2668 = vlaneseq
        %v2669 = vshrl.u32 %v2668, 7
        %v2670 = vsub.s32 1, %v2669
        %v2671 = vrot.slane %v2660, %v2670
        %2673 = vbcast.lane.b32.xlu0 %v2671, 256
        %v2674 = vpop.permute.xlu0 %2673
        %v2675 = vlaneseq
        %v2676 = vshrl.u32 %v2675, 7
        %v2677 = vsub.s32 2, %v2676
        %v2678 = vrot.slane %v2660, %v2677
        %2680 = vbcast.lane.b32.xlu0 %v2678, 256
        %v2681 = vpop.permute.xlu0 %2680
        %v2682 = vlaneseq
        %v2683 = vshrl.u32 %v2682, 7
        %v2684 = vsub.s32 3, %v2683
        %v2685 = vrot.slane %v2660, %v2684
        %2687 = vbcast.lane.b32.xlu0 %v2685, 256
        %v2688 = vpop.permute.xlu0 %2687
        %v2689 = vlaneseq
        %v2690 = vshrl.u32 %v2689, 7
        %v2691 = vsub.s32 4, %v2690
        %v2692 = vrot.slane %v2660, %v2691
        %2694 = vbcast.lane.b32.xlu0 %v2692, 256
        %v2695 = vpop.permute.xlu0 %2694
        %v2696 = vlaneseq
        %v2697 = vshrl.u32 %v2696, 7
        %v2698 = vsub.s32 5, %v2697
        %v2699 = vrot.slane %v2660, %v2698
        %2701 = vbcast.lane.b32.xlu0 %v2699, 256
        %v2702 = vpop.permute.xlu0 %2701
        %v2703 = vlaneseq
        %v2704 = vshrl.u32 %v2703, 7
        %v2705 = vsub.s32 6, %v2704
        %v2706 = vrot.slane %v2660, %v2705
        %2708 = vbcast.lane.b32.xlu0 %v2706, 256
        %v2709 = vpop.permute.xlu0 %2708
        %v2710 = vlaneseq
        %v2711 = vshrl.u32 %v2710, 7
        %v2712 = vsub.s32 7, %v2711
        %v2713 = vrot.slane %v2660, %v2712
        %2715 = vbcast.lane.b32.xlu0 %v2713, 256
        %v2716 = vpop.permute.xlu0 %2715
        %v2717 = vmul.f32 %v2160, %v2667
        %v2718 = vmul.f32 %v2161, %v2674
        %v2719 = vmul.f32 %v2162, %v2681
        %v2720 = vmul.f32 %v2163, %v2688
        %v2721 = vmul.f32 %v2164, %v2695
        %v2722 = vmul.f32 %v2165, %v2702
        %v2723 = vmul.f32 %v2166, %v2709
        %v2724 = vmul.f32 %v2167, %v2716
        %v2725 = vadd.f32 %v2717, %v1898
        %v2726 = vadd.f32 %v2718, %v1899
        %v2727 = vadd.f32 %v2719, %v1900
        %v2728 = vadd.f32 %v2720, %v1901
        %v2729 = vadd.f32 %v2721, %v1902
        %v2730 = vadd.f32 %v2722, %v1903
        %v2731 = vadd.f32 %v2723, %v1904
        %v2732 = vadd.f32 %v2724, %v1905
        %v2733 = vmax.f32 %v2725, 0.0
        %v2734 = vmax.f32 %v2726, 0.0
        %v2735 = vmax.f32 %v2727, 0.0
        %v2736 = vmax.f32 %v2728, 0.0
        %v2737 = vmax.f32 %v2729, 0.0
        %v2738 = vmax.f32 %v2730, 0.0
        %v2739 = vmax.f32 %v2731, 0.0
        %v2740 = vmax.f32 %v2732, 0.0
        %v2741 = vpack.c.bf16 %v2734, %v2733
        %v2742 = vpack.c.bf16 %v2736, %v2735
        %v2743 = vpack.c.bf16 %v2738, %v2737
        %v2744 = vpack.c.bf16 %v2740, %v2739
        %v2749 = vunpack.c.l.b16 %v2741
        %v2750 = vunpack.c.h.b16 %v2741
        %v2751 = vunpack.c.l.b16 %v2742
        %v2752 = vunpack.c.h.b16 %v2742
        %v2753 = vunpack.c.l.b16 %v2743
        %v2754 = vunpack.c.h.b16 %v2743
        %v2755 = vunpack.c.l.b16 %v2744
        %v2756 = vunpack.c.h.b16 %v2744
        %v2757 = vpack.c.b16 %v2749, %v2749
        %v2758 = vpack.c.b16 %v2750, %v2750
        %v2759 = vpack.c.b16 %v2751, %v2751
        %v2760 = vpack.c.b16 %v2752, %v2752
        %v2761 = vpack.c.b16 %v2753, %v2753
        %v2762 = vpack.c.b16 %v2754, %v2754
        %v2763 = vpack.c.b16 %v2755, %v2755
        %v2764 = vpack.c.b16 %v2756, %v2756
        %2773 = vst [vmem:[%s503] sm:$0xf] %v2757
        %2774 = vst [vmem:[%s503 + $0x4] sm:$0xf] %v2758
        %2775 = vst [vmem:[%s503 + $0x8] sm:$0xf] %v2759
        %2776 = vst [vmem:[%s503 + $0xc] sm:$0xf] %v2760
        %2777 = vst [vmem:[%s503 + $0x10] sm:$0xf] %v2761
        %2778 = vst [vmem:[%s503 + $0x14] sm:$0xf] %v2762
        %2779 = vst [vmem:[%s503 + $0x18] sm:$0xf] %v2763
        %2780 = vst [vmem:[%s503 + $0x1c] sm:$0xf] %v2764
        %p2781 = scmp.lt.s32.totalorder %s27, 1
        %s2782 = scalar_select %p2781, %s27, 1
        %s2783 = smul.addr %s2782, 8
        %s2784 = smul.addr %s2783, 4
        %s2785 = scalar_lea.vmem %s13, %s2784
        // Predicated region
        $region93: #{_lambda_.6} parent=71 // pred_check
          %p2786 = pneg %p323
        $region94: #{_lambda_.6} parent=71 // pred_check_branch
          %2788 = sbr.rel (%p2786) target = $region96
        $region95: #{_lambda_.6} parent=71 // pred_region
          _
        $region96: #{_lambda_.6} parent=71 // pred_fallthru
          _
      $region72: #{_lambda_.6} parent=5 // pred_fallthru
        _
      %p2789 = scmp.le.s32.totalorder 2, %s22
      // Predicated region
      $region97: #{_lambda_.6} parent=5 // pred_check
        %p2790 = pneg %p2789
      $region98: #{_lambda_.6} parent=5 // pred_check_branch
        %2792 = sbr.rel (%p2790) target = $region100
      $region99: #{_lambda_.6} parent=5 // pred_region
        %s2793 = ssub.s32 %s22, 2
        // Predicated region
        $region101: #{_lambda_.6} parent=99 // pred_check
          %p2794 = pneg %p329
        $region102: #{_lambda_.6} parent=99 // pred_check_branch
          %2796 = sbr.rel (%p2794) target = $region104
        $region103: #{_lambda_.6} parent=99 // pred_region
          %p2797 = scmp.lt.s32.totalorder %s28, 1
          %s2798 = scalar_select %p2797, %s28, 1
          %s2799 = smul.addr %s2798, 8
          %s2800 = smul.addr %s2799, 4
          %s2801 = scalar_lea.vmem %s13, %s2800
        $region104: #{_lambda_.6} parent=99 // pred_fallthru
          _
      $region100: #{_lambda_.6} parent=5 // pred_fallthru
        _
    $region6: #{_lambda_.6} parent=1 // loop_footer
      %s26 = sadd.s32 1, %s22
    $region7: #{_lambda_.6} parent=1 // loop_footer_branch
      %21 = sbr.rel target = $region3
    $region8: #{_lambda_.6} parent=1 // loop_exit
      _
    %2802 = vsyncpa [#allocation3], 1
    %s2803 = scalar_lea.sflag [#allocation3], 1
    %2804 = vsyncpa %s2803, 1
    %2805 = vsyncpa [#allocation5], 1
    %2806 = vsyncpa [#allocation8], 1

// kernel: _lambda_.4
$region0: #{_lambda_.4}
  #allocation0 [shape = 'u32[]', space=smem, size = 0x4, offset = 0x4, fixed_abs, tag = 'smem constant byte address 0x4 - core index']
  #allocation1 [shape = 'u32[144,128]{1,0:T(1,128)}', space=vmem, size = 0x12000, scoped, tag = 'internal scratch']
  %s0 = inlined_call_operand.vmem [shape: bf16[2,256,128], index: 0, kind: input, shape index: {}]
  %s1 = inlined_call_operand.vmem [shape: bf16[128,128], index: 1, kind: input, shape index: {}]
  %s2 = inlined_call_operand.vmem [shape: f32[1,128], index: 2, kind: input, shape index: {}]
  %s3 = inlined_call_operand.vmem [shape: f32[1,128], index: 3, kind: input, shape index: {}]
  %s4 = inlined_call_operand.vmem [shape: bf16[1152,128], index: 4, kind: input, shape index: {}]
  %s5 = inlined_call_operand.vmem [shape: f32[1,128], index: 5, kind: input, shape index: {}]
  %s6 = inlined_call_operand.vmem [shape: f32[1,128], index: 6, kind: input, shape index: {}]
  %s7 = inlined_call_operand.vmem [shape: bf16[128,128], index: 7, kind: input, shape index: {}]
  %s8 = inlined_call_operand.vmem [shape: f32[1,128], index: 8, kind: input, shape index: {}]
  %s9 = inlined_call_operand.vmem [shape: f32[1,128], index: 9, kind: input, shape index: {}]
  %s10 = inlined_call_operand.vmem [shape: bf16[128,128], index: 10, kind: input, shape index: {}]
  %s11 = inlined_call_operand.vmem [shape: f32[1,128], index: 11, kind: input, shape index: {}]
  %s12 = inlined_call_operand.vmem [shape: f32[1,128], index: 12, kind: input, shape index: {}]
  %s13 = inlined_call_operand.vmem [shape: bf16[128,128], index: 13, kind: input, shape index: {}]
  %s14 = inlined_call_operand.vmem [shape: bf16[128,128], index: 14, kind: input, shape index: {}]
  %s15 = inlined_call_operand.vmem [shape: bf16[128,8], index: 15, kind: input, shape index: {}]
  %s16 = inlined_call_operand.vmem [shape: bf16[2,64,128], index: 16, kind: output, shape index: {}]
  %s17 = sld [smem:[#allocation0]]
  $region97: #{_lambda_.4} parent=0
    _
  %s19 = ssub.s32 1, %s17
  %s20 = scalar_select 0, %s19, %s17
  loop: start=0, step=1, limit=4
  $region2: #{_lambda_.4} parent=0 // loop_pre_header
    _
  $region3: #{_lambda_.4} parent=0 // loop_header
    %s22 = sphi 0, %s26
    %p23 = scmp.ge.s32.totalorder %s22, 4
    %s32 = sphi 0, %s34
    %s35 = sphi 0, %s32
    %s36 = sphi 0, %s35
    %s52 = sphi 0, %s36
    %s56 = sphi 0, %s56
    %s58 = sphi 0, %s56
    %s59 = sphi 0, %s58
    %s73 = sphi 0, %s59
    %s77 = sphi 0, %s77
    %s79 = sphi 0, %s77
    %s80 = sphi 0, %s79
    %s94 = sphi 0, %s80
    %s98 = sphi 0, %s98
    %s100 = sphi 0, %s98
    %s101 = sphi 0, %s100
    %s115 = sphi 0, %s101
    %s119 = sphi 0, %s119
    %s121 = sphi 0, %s119
    %s122 = sphi 0, %s121
    %s136 = sphi 0, %s122
    %s140 = sphi 0, %s140
    %s142 = sphi 0, %s140
    %s143 = sphi 0, %s142
    %s157 = sphi 0, %s143
    %s161 = sphi 0, %s161
    %s163 = sphi 0, %s161
    %s164 = sphi 0, %s163
    %s178 = sphi 0, %s164
    %s182 = sphi 0, %s182
    %s184 = sphi 0, %s182
    %s185 = sphi 0, %s184
    %s199 = sphi 0, %s185
    %s203 = sphi 0, %s203
    %s205 = sphi 0, %s203
    %s206 = sphi 0, %s205
    %s220 = sphi 0, %s206
    %s224 = sphi 0, %s224
    %s226 = sphi 0, %s224
    %s227 = sphi 0, %s226
    %s241 = sphi 0, %s227
    %s245 = sphi 0, %s245
    %s247 = sphi 0, %s245
    %s248 = sphi 0, %s247
    %s262 = sphi 0, %s248
    %s266 = sphi 0, %s266
    %s268 = sphi 0, %s266
    %s269 = sphi 0, %s268
    %s283 = sphi 0, %s269
    %s287 = sphi 0, %s287
    %s289 = sphi 0, %s287
    %s290 = sphi 0, %s289
    %s304 = sphi 0, %s290
    %s308 = sphi 0, %s308
    %s310 = sphi 0, %s308
    %s311 = sphi 0, %s310
    %s325 = sphi 0, %s311
    %s329 = sphi 0, %s329
    %s331 = sphi 0, %s329
    %s332 = sphi 0, %s331
    %s346 = sphi 0, %s332
    %s350 = sphi 0, %s350
    %s352 = sphi 0, %s350
    %s353 = sphi 0, %s352
    %s367 = sphi 0, %s353
    %s373 = sphi 0, %s375
    %s376 = sphi 0, %s373
    %s377 = sphi 0, %s376
    %s393 = sphi 0, %s377
  $region4: #{_lambda_.4} parent=0 // loop_header_branch
    %25 = sbr.rel (%p23) target = $region8
  $region5: #{_lambda_.4} parent=0 // loop_body
    %s27 = ssub.s32 %s22, 1
    %s28 = ssub.s32 %s22, 2
    %s29 = sadd.s32 %s22, 1
    %s30 = ssub.s32 %s22, %s29
    %p31 = scmp.eq.s32.totalorder %s30, 0
    %s33 = sadd.s32 %s32, 1
    %s34 = scalar_select %p31, %s32, %s33
    %p37 = pneg %p31
    %p38 = scmp.eq.s32.totalorder %s22, 1
    %p39 = por %p37, %p38
    %p40 = scmp.ne.s32.totalorder %s32, %s35
    %p41 = scmp.eq.s32.totalorder %s22, 0
    %p42 = por %p40, %p41
    %p43 = scmp.ne.s32.totalorder %s32, %s35
    %p44 = scmp.eq.s32.totalorder %s27, 1
    %p45 = por %p43, %p44
    %p46 = scmp.ne.s32.totalorder %s35, %s36
    %p47 = scmp.eq.s32.totalorder %s27, 0
    %p48 = por %p46, %p47
    %p49 = scmp.ne.s32.totalorder %s35, %s36
    %p50 = scmp.eq.s32.totalorder %s28, 1
    %p51 = por %p49, %p50
    %p53 = scmp.ne.s32.totalorder %s36, %s52
    %p54 = scmp.eq.s32.totalorder %s28, 0
    %p55 = por %p53, %p54
    %s57 = sadd.s32 %s56, 1
    %p60 = scmp.eq.s32.totalorder %s22, 1
    %p61 = scmp.ne.s32.totalorder %s56, %s58
    %p62 = scmp.eq.s32.totalorder %s22, 0
    %p63 = por %p61, %p62
    %p64 = scmp.ne.s32.totalorder %s56, %s58
    %p65 = scmp.eq.s32.totalorder %s27, 1
    %p66 = por %p64, %p65
    %p67 = scmp.ne.s32.totalorder %s58, %s59
    %p68 = scmp.eq.s32.totalorder %s27, 0
    %p69 = por %p67, %p68
    %p70 = scmp.ne.s32.totalorder %s58, %s59
    %p71 = scmp.eq.s32.totalorder %s28, 1
    %p72 = por %p70, %p71
    %p74 = scmp.ne.s32.totalorder %s59, %s73
    %p75 = scmp.eq.s32.totalorder %s28, 0
    %p76 = por %p74, %p75
    %s78 = sadd.s32 %s77, 1
    %p81 = scmp.eq.s32.totalorder %s22, 1
    %p82 = scmp.ne.s32.totalorder %s77, %s79
    %p83 = scmp.eq.s32.totalorder %s22, 0
    %p84 = por %p82, %p83
    %p85 = scmp.ne.s32.totalorder %s77, %s79
    %p86 = scmp.eq.s32.totalorder %s27, 1
    %p87 = por %p85, %p86
    %p88 = scmp.ne.s32.totalorder %s79, %s80
    %p89 = scmp.eq.s32.totalorder %s27, 0
    %p90 = por %p88, %p89
    %p91 = scmp.ne.s32.totalorder %s79, %s80
    %p92 = scmp.eq.s32.totalorder %s28, 1
    %p93 = por %p91, %p92
    %p95 = scmp.ne.s32.totalorder %s80, %s94
    %p96 = scmp.eq.s32.totalorder %s28, 0
    %p97 = por %p95, %p96
    %s99 = sadd.s32 %s98, 1
    %p102 = scmp.eq.s32.totalorder %s22, 1
    %p103 = scmp.ne.s32.totalorder %s98, %s100
    %p104 = scmp.eq.s32.totalorder %s22, 0
    %p105 = por %p103, %p104
    %p106 = scmp.ne.s32.totalorder %s98, %s100
    %p107 = scmp.eq.s32.totalorder %s27, 1
    %p108 = por %p106, %p107
    %p109 = scmp.ne.s32.totalorder %s100, %s101
    %p110 = scmp.eq.s32.totalorder %s27, 0
    %p111 = por %p109, %p110
    %p112 = scmp.ne.s32.totalorder %s100, %s101
    %p113 = scmp.eq.s32.totalorder %s28, 1
    %p114 = por %p112, %p113
    %p116 = scmp.ne.s32.totalorder %s101, %s115
    %p117 = scmp.eq.s32.totalorder %s28, 0
    %p118 = por %p116, %p117
    %s120 = sadd.s32 %s119, 1
    %p123 = scmp.eq.s32.totalorder %s22, 1
    %p124 = scmp.ne.s32.totalorder %s119, %s121
    %p125 = scmp.eq.s32.totalorder %s22, 0
    %p126 = por %p124, %p125
    %p127 = scmp.ne.s32.totalorder %s119, %s121
    %p128 = scmp.eq.s32.totalorder %s27, 1
    %p129 = por %p127, %p128
    %p130 = scmp.ne.s32.totalorder %s121, %s122
    %p131 = scmp.eq.s32.totalorder %s27, 0
    %p132 = por %p130, %p131
    %p133 = scmp.ne.s32.totalorder %s121, %s122
    %p134 = scmp.eq.s32.totalorder %s28, 1
    %p135 = por %p133, %p134
    %p137 = scmp.ne.s32.totalorder %s122, %s136
    %p138 = scmp.eq.s32.totalorder %s28, 0
    %p139 = por %p137, %p138
    %s141 = sadd.s32 %s140, 1
    %p144 = scmp.eq.s32.totalorder %s22, 1
    %p145 = scmp.ne.s32.totalorder %s140, %s142
    %p146 = scmp.eq.s32.totalorder %s22, 0
    %p147 = por %p145, %p146
    %p148 = scmp.ne.s32.totalorder %s140, %s142
    %p149 = scmp.eq.s32.totalorder %s27, 1
    %p150 = por %p148, %p149
    %p151 = scmp.ne.s32.totalorder %s142, %s143
    %p152 = scmp.eq.s32.totalorder %s27, 0
    %p153 = por %p151, %p152
    %p154 = scmp.ne.s32.totalorder %s142, %s143
    %p155 = scmp.eq.s32.totalorder %s28, 1
    %p156 = por %p154, %p155
    %p158 = scmp.ne.s32.totalorder %s143, %s157
    %p159 = scmp.eq.s32.totalorder %s28, 0
    %p160 = por %p158, %p159
    %s162 = sadd.s32 %s161, 1
    %p165 = scmp.eq.s32.totalorder %s22, 1
    %p166 = scmp.ne.s32.totalorder %s161, %s163
    %p167 = scmp.eq.s32.totalorder %s22, 0
    %p168 = por %p166, %p167
    %p169 = scmp.ne.s32.totalorder %s161, %s163
    %p170 = scmp.eq.s32.totalorder %s27, 1
    %p171 = por %p169, %p170
    %p172 = scmp.ne.s32.totalorder %s163, %s164
    %p173 = scmp.eq.s32.totalorder %s27, 0
    %p174 = por %p172, %p173
    %p175 = scmp.ne.s32.totalorder %s163, %s164
    %p176 = scmp.eq.s32.totalorder %s28, 1
    %p177 = por %p175, %p176
    %p179 = scmp.ne.s32.totalorder %s164, %s178
    %p180 = scmp.eq.s32.totalorder %s28, 0
    %p181 = por %p179, %p180
    %s183 = sadd.s32 %s182, 1
    %p186 = scmp.eq.s32.totalorder %s22, 1
    %p187 = scmp.ne.s32.totalorder %s182, %s184
    %p188 = scmp.eq.s32.totalorder %s22, 0
    %p189 = por %p187, %p188
    %p190 = scmp.ne.s32.totalorder %s182, %s184
    %p191 = scmp.eq.s32.totalorder %s27, 1
    %p192 = por %p190, %p191
    %p193 = scmp.ne.s32.totalorder %s184, %s185
    %p194 = scmp.eq.s32.totalorder %s27, 0
    %p195 = por %p193, %p194
    %p196 = scmp.ne.s32.totalorder %s184, %s185
    %p197 = scmp.eq.s32.totalorder %s28, 1
    %p198 = por %p196, %p197
    %p200 = scmp.ne.s32.totalorder %s185, %s199
    %p201 = scmp.eq.s32.totalorder %s28, 0
    %p202 = por %p200, %p201
    %s204 = sadd.s32 %s203, 1
    %p207 = scmp.eq.s32.totalorder %s22, 1
    %p208 = scmp.ne.s32.totalorder %s203, %s205
    %p209 = scmp.eq.s32.totalorder %s22, 0
    %p210 = por %p208, %p209
    %p211 = scmp.ne.s32.totalorder %s203, %s205
    %p212 = scmp.eq.s32.totalorder %s27, 1
    %p213 = por %p211, %p212
    %p214 = scmp.ne.s32.totalorder %s205, %s206
    %p215 = scmp.eq.s32.totalorder %s27, 0
    %p216 = por %p214, %p215
    %p217 = scmp.ne.s32.totalorder %s205, %s206
    %p218 = scmp.eq.s32.totalorder %s28, 1
    %p219 = por %p217, %p218
    %p221 = scmp.ne.s32.totalorder %s206, %s220
    %p222 = scmp.eq.s32.totalorder %s28, 0
    %p223 = por %p221, %p222
    %s225 = sadd.s32 %s224, 1
    %p228 = scmp.eq.s32.totalorder %s22, 1
    %p229 = scmp.ne.s32.totalorder %s224, %s226
    %p230 = scmp.eq.s32.totalorder %s22, 0
    %p231 = por %p229, %p230
    %p232 = scmp.ne.s32.totalorder %s224, %s226
    %p233 = scmp.eq.s32.totalorder %s27, 1
    %p234 = por %p232, %p233
    %p235 = scmp.ne.s32.totalorder %s226, %s227
    %p236 = scmp.eq.s32.totalorder %s27, 0
    %p237 = por %p235, %p236
    %p238 = scmp.ne.s32.totalorder %s226, %s227
    %p239 = scmp.eq.s32.totalorder %s28, 1
    %p240 = por %p238, %p239
    %p242 = scmp.ne.s32.totalorder %s227, %s241
    %p243 = scmp.eq.s32.totalorder %s28, 0
    %p244 = por %p242, %p243
    %s246 = sadd.s32 %s245, 1
    %p249 = scmp.eq.s32.totalorder %s22, 1
    %p250 = scmp.ne.s32.totalorder %s245, %s247
    %p251 = scmp.eq.s32.totalorder %s22, 0
    %p252 = por %p250, %p251
    %p253 = scmp.ne.s32.totalorder %s245, %s247
    %p254 = scmp.eq.s32.totalorder %s27, 1
    %p255 = por %p253, %p254
    %p256 = scmp.ne.s32.totalorder %s247, %s248
    %p257 = scmp.eq.s32.totalorder %s27, 0
    %p258 = por %p256, %p257
    %p259 = scmp.ne.s32.totalorder %s247, %s248
    %p260 = scmp.eq.s32.totalorder %s28, 1
    %p261 = por %p259, %p260
    %p263 = scmp.ne.s32.totalorder %s248, %s262
    %p264 = scmp.eq.s32.totalorder %s28, 0
    %p265 = por %p263, %p264
    %s267 = sadd.s32 %s266, 1
    %p270 = scmp.eq.s32.totalorder %s22, 1
    %p271 = scmp.ne.s32.totalorder %s266, %s268
    %p272 = scmp.eq.s32.totalorder %s22, 0
    %p273 = por %p271, %p272
    %p274 = scmp.ne.s32.totalorder %s266, %s268
    %p275 = scmp.eq.s32.totalorder %s27, 1
    %p276 = por %p274, %p275
    %p277 = scmp.ne.s32.totalorder %s268, %s269
    %p278 = scmp.eq.s32.totalorder %s27, 0
    %p279 = por %p277, %p278
    %p280 = scmp.ne.s32.totalorder %s268, %s269
    %p281 = scmp.eq.s32.totalorder %s28, 1
    %p282 = por %p280, %p281
    %p284 = scmp.ne.s32.totalorder %s269, %s283
    %p285 = scmp.eq.s32.totalorder %s28, 0
    %p286 = por %p284, %p285
    %s288 = sadd.s32 %s287, 1
    %p291 = scmp.eq.s32.totalorder %s22, 1
    %p292 = scmp.ne.s32.totalorder %s287, %s289
    %p293 = scmp.eq.s32.totalorder %s22, 0
    %p294 = por %p292, %p293
    %p295 = scmp.ne.s32.totalorder %s287, %s289
    %p296 = scmp.eq.s32.totalorder %s27, 1
    %p297 = por %p295, %p296
    %p298 = scmp.ne.s32.totalorder %s289, %s290
    %p299 = scmp.eq.s32.totalorder %s27, 0
    %p300 = por %p298, %p299
    %p301 = scmp.ne.s32.totalorder %s289, %s290
    %p302 = scmp.eq.s32.totalorder %s28, 1
    %p303 = por %p301, %p302
    %p305 = scmp.ne.s32.totalorder %s290, %s304
    %p306 = scmp.eq.s32.totalorder %s28, 0
    %p307 = por %p305, %p306
    %s309 = sadd.s32 %s308, 1
    %p312 = scmp.eq.s32.totalorder %s22, 1
    %p313 = scmp.ne.s32.totalorder %s308, %s310
    %p314 = scmp.eq.s32.totalorder %s22, 0
    %p315 = por %p313, %p314
    %p316 = scmp.ne.s32.totalorder %s308, %s310
    %p317 = scmp.eq.s32.totalorder %s27, 1
    %p318 = por %p316, %p317
    %p319 = scmp.ne.s32.totalorder %s310, %s311
    %p320 = scmp.eq.s32.totalorder %s27, 0
    %p321 = por %p319, %p320
    %p322 = scmp.ne.s32.totalorder %s310, %s311
    %p323 = scmp.eq.s32.totalorder %s28, 1
    %p324 = por %p322, %p323
    %p326 = scmp.ne.s32.totalorder %s311, %s325
    %p327 = scmp.eq.s32.totalorder %s28, 0
    %p328 = por %p326, %p327
    %s330 = sadd.s32 %s329, 1
    %p333 = scmp.eq.s32.totalorder %s22, 1
    %p334 = scmp.ne.s32.totalorder %s329, %s331
    %p335 = scmp.eq.s32.totalorder %s22, 0
    %p336 = por %p334, %p335
    %p337 = scmp.ne.s32.totalorder %s329, %s331
    %p338 = scmp.eq.s32.totalorder %s27, 1
    %p339 = por %p337, %p338
    %p340 = scmp.ne.s32.totalorder %s331, %s332
    %p341 = scmp.eq.s32.totalorder %s27, 0
    %p342 = por %p340, %p341
    %p343 = scmp.ne.s32.totalorder %s331, %s332
    %p344 = scmp.eq.s32.totalorder %s28, 1
    %p345 = por %p343, %p344
    %p347 = scmp.ne.s32.totalorder %s332, %s346
    %p348 = scmp.eq.s32.totalorder %s28, 0
    %p349 = por %p347, %p348
    %s351 = sadd.s32 %s350, 1
    %p354 = scmp.eq.s32.totalorder %s22, 1
    %p355 = scmp.ne.s32.totalorder %s350, %s352
    %p356 = scmp.eq.s32.totalorder %s22, 0
    %p357 = por %p355, %p356
    %p358 = scmp.ne.s32.totalorder %s350, %s352
    %p359 = scmp.eq.s32.totalorder %s27, 1
    %p360 = por %p358, %p359
    %p361 = scmp.ne.s32.totalorder %s352, %s353
    %p362 = scmp.eq.s32.totalorder %s27, 0
    %p363 = por %p361, %p362
    %p364 = scmp.ne.s32.totalorder %s352, %s353
    %p365 = scmp.eq.s32.totalorder %s28, 1
    %p366 = por %p364, %p365
    %p368 = scmp.ne.s32.totalorder %s353, %s367
    %p369 = scmp.eq.s32.totalorder %s28, 0
    %p370 = por %p368, %p369
    %s371 = ssub.s32 %s22, %s29
    %p372 = scmp.eq.s32.totalorder %s371, 0
    %s374 = sadd.s32 %s373, 1
    %s375 = scalar_select %p372, %s373, %s374
    %p378 = pneg %p372
    %p379 = scmp.eq.s32.totalorder %s22, 1
    %p380 = por %p378, %p379
    %p381 = scmp.ne.s32.totalorder %s373, %s376
    %p382 = scmp.eq.s32.totalorder %s22, 0
    %p383 = por %p381, %p382
    %p384 = scmp.ne.s32.totalorder %s373, %s376
    %p385 = scmp.eq.s32.totalorder %s27, 1
    %p386 = por %p384, %p385
    %p387 = scmp.ne.s32.totalorder %s376, %s377
    %p388 = scmp.eq.s32.totalorder %s27, 0
    %p389 = por %p387, %p388
    %p390 = scmp.ne.s32.totalorder %s376, %s377
    %p391 = scmp.eq.s32.totalorder %s28, 1
    %p392 = por %p390, %p391
    %p394 = scmp.ne.s32.totalorder %s377, %s393
    %p395 = scmp.eq.s32.totalorder %s28, 0
    %p396 = por %p394, %p395
    %p397 = scmp.le.s32.totalorder 1, %s22
    %p398 = scmp.lt.s32.totalorder %s22, 3
    %p399 = pnand %p397, %p398
    %p400 = pneg %p399
    // Predicated region
    $region9: #{_lambda_.4} parent=5 // pred_check
      _
    $region10: #{_lambda_.4} parent=5 // pred_check_branch
      %402 = sbr.rel (%p399) target = $region12
    $region11: #{_lambda_.4} parent=5 // pred_region
      %s403 = ssub.s32 %s22, 1
      // Predicated region
      $region13: #{_lambda_.4} parent=11 // pred_check
        %p404 = pneg %p69
      $region14: #{_lambda_.4} parent=11 // pred_check_branch
        %406 = sbr.rel (%p404) target = $region16
      $region15: #{_lambda_.4} parent=11 // pred_region
        _
      $region16: #{_lambda_.4} parent=11 // pred_fallthru
        _
      // Predicated region
      $region17: #{_lambda_.4} parent=11 // pred_check
        %p407 = pneg %p90
      $region18: #{_lambda_.4} parent=11 // pred_check_branch
        %409 = sbr.rel (%p407) target = $region20
      $region19: #{_lambda_.4} parent=11 // pred_region
        _
      $region20: #{_lambda_.4} parent=11 // pred_fallthru
        _
      // Predicated region
      $region21: #{_lambda_.4} parent=11 // pred_check
        %p410 = pneg %p111
      $region22: #{_lambda_.4} parent=11 // pred_check_branch
        %412 = sbr.rel (%p410) target = $region24
      $region23: #{_lambda_.4} parent=11 // pred_region
        _
      $region24: #{_lambda_.4} parent=11 // pred_fallthru
        _
      // Predicated region
      $region25: #{_lambda_.4} parent=11 // pred_check
        %p413 = pneg %p132
      $region26: #{_lambda_.4} parent=11 // pred_check_branch
        %415 = sbr.rel (%p413) target = $region28
      $region27: #{_lambda_.4} parent=11 // pred_region
        _
      $region28: #{_lambda_.4} parent=11 // pred_fallthru
        _
      // Predicated region
      $region29: #{_lambda_.4} parent=11 // pred_check
        %p416 = pneg %p153
      $region30: #{_lambda_.4} parent=11 // pred_check_branch
        %418 = sbr.rel (%p416) target = $region32
      $region31: #{_lambda_.4} parent=11 // pred_region
        _
      $region32: #{_lambda_.4} parent=11 // pred_fallthru
        _
      // Predicated region
      $region33: #{_lambda_.4} parent=11 // pred_check
        %p419 = pneg %p174
      $region34: #{_lambda_.4} parent=11 // pred_check_branch
        %421 = sbr.rel (%p419) target = $region36
      $region35: #{_lambda_.4} parent=11 // pred_region
        _
      $region36: #{_lambda_.4} parent=11 // pred_fallthru
        _
      // Predicated region
      $region37: #{_lambda_.4} parent=11 // pred_check
        %p422 = pneg %p195
      $region38: #{_lambda_.4} parent=11 // pred_check_branch
        %424 = sbr.rel (%p422) target = $region40
      $region39: #{_lambda_.4} parent=11 // pred_region
        _
      $region40: #{_lambda_.4} parent=11 // pred_fallthru
        _
      // Predicated region
      $region41: #{_lambda_.4} parent=11 // pred_check
        %p425 = pneg %p216
      $region42: #{_lambda_.4} parent=11 // pred_check_branch
        %427 = sbr.rel (%p425) target = $region44
      $region43: #{_lambda_.4} parent=11 // pred_region
        _
      $region44: #{_lambda_.4} parent=11 // pred_fallthru
        _
      // Predicated region
      $region45: #{_lambda_.4} parent=11 // pred_check
        %p428 = pneg %p237
      $region46: #{_lambda_.4} parent=11 // pred_check_branch
        %430 = sbr.rel (%p428) target = $region48
      $region47: #{_lambda_.4} parent=11 // pred_region
        _
      $region48: #{_lambda_.4} parent=11 // pred_fallthru
        _
      // Predicated region
      $region49: #{_lambda_.4} parent=11 // pred_check
        %p431 = pneg %p258
      $region50: #{_lambda_.4} parent=11 // pred_check_branch
        %433 = sbr.rel (%p431) target = $region52
      $region51: #{_lambda_.4} parent=11 // pred_region
        _
      $region52: #{_lambda_.4} parent=11 // pred_fallthru
        _
      // Predicated region
      $region53: #{_lambda_.4} parent=11 // pred_check
        %p434 = pneg %p279
      $region54: #{_lambda_.4} parent=11 // pred_check_branch
        %436 = sbr.rel (%p434) target = $region56
      $region55: #{_lambda_.4} parent=11 // pred_region
        _
      $region56: #{_lambda_.4} parent=11 // pred_fallthru
        _
      // Predicated region
      $region57: #{_lambda_.4} parent=11 // pred_check
        %p437 = pneg %p300
      $region58: #{_lambda_.4} parent=11 // pred_check_branch
        %439 = sbr.rel (%p437) target = $region60
      $region59: #{_lambda_.4} parent=11 // pred_region
        _
      $region60: #{_lambda_.4} parent=11 // pred_fallthru
        _
      // Predicated region
      $region61: #{_lambda_.4} parent=11 // pred_check
        %p440 = pneg %p321
      $region62: #{_lambda_.4} parent=11 // pred_check_branch
        %442 = sbr.rel (%p440) target = $region64
      $region63: #{_lambda_.4} parent=11 // pred_region
        _
      $region64: #{_lambda_.4} parent=11 // pred_fallthru
        _
      // Predicated region
      $region65: #{_lambda_.4} parent=11 // pred_check
        %p443 = pneg %p342
      $region66: #{_lambda_.4} parent=11 // pred_check_branch
        %445 = sbr.rel (%p443) target = $region68
      $region67: #{_lambda_.4} parent=11 // pred_region
        _
      $region68: #{_lambda_.4} parent=11 // pred_fallthru
        _
      // Predicated region
      $region69: #{_lambda_.4} parent=11 // pred_check
        %p446 = pneg %p363
      $region70: #{_lambda_.4} parent=11 // pred_check_branch
        %448 = sbr.rel (%p446) target = $region72
      $region71: #{_lambda_.4} parent=11 // pred_region
        _
      $region72: #{_lambda_.4} parent=11 // pred_fallthru
        _
    $region12: #{_lambda_.4} parent=5 // pred_fallthru
      _
    %p449 = scmp.lt.s32.totalorder %s22, 2
    // Predicated region
    $region73: #{_lambda_.4} parent=5 // pred_check
      %p450 = pneg %p449
    $region74: #{_lambda_.4} parent=5 // pred_check_branch
      %452 = sbr.rel (%p450) target = $region76
    $region75: #{_lambda_.4} parent=5 // pred_region
      // Predicated region
      $region77: #{_lambda_.4} parent=75 // pred_check
        %p453 = pneg %p42
      $region78: #{_lambda_.4} parent=75 // pred_check_branch
        %455 = sbr.rel (%p453) target = $region80
      $region79: #{_lambda_.4} parent=75 // pred_region
        %p456 = scmp.lt.s32.totalorder %s22, 1
        %s457 = scalar_select %p456, %s22, 1
        %s458 = smul.addr %s457, 32
        %s459 = smul.addr %s458, 4
        %s460 = scalar_lea.vmem %s0, %s459
      $region80: #{_lambda_.4} parent=75 // pred_fallthru
        _
    $region76: #{_lambda_.4} parent=5 // pred_fallthru
      _
    %p461 = scmp.le.s32.totalorder 1, %s22
    %p462 = scmp.lt.s32.totalorder %s22, 3
    %p463 = pnand %p461, %p462
    %p464 = pneg %p463
    // Predicated region
    $region81: #{_lambda_.4} parent=5 // pred_check
      _
    $region82: #{_lambda_.4} parent=5 // pred_check_branch
      %466 = sbr.rel (%p463) target = $region84
    $region83: #{_lambda_.4} parent=5 // pred_region
      %s467 = ssub.s32 %s22, 1
      %p468 = scmp.lt.s32.totalorder %s27, 1
      %s469 = scalar_select %p468, %s27, 1
      %s470 = smul.addr %s469, 32
      %s471 = smul.addr %s470, 4
      %s472 = scalar_lea.vmem %s0, %s471
      %p473 = pneg %p48
      %p474 = pneg %p45
      %p475 = pneg %p69
      %p476 = pneg %p66
      %p477 = pneg %p90
      %p478 = pneg %p87
      %p479 = pneg %p111
      %p480 = pneg %p108
      %p481 = pneg %p132
      %p482 = pneg %p129
      %p483 = pneg %p153
      %p484 = pneg %p150
      %p485 = pneg %p174
      %p486 = pneg %p171
      %p487 = pneg %p195
      %p488 = pneg %p192
      %p489 = pneg %p216
      %p490 = pneg %p213
      %p491 = pneg %p237
      %p492 = pneg %p234
      %p493 = pneg %p258
      %p494 = pneg %p255
      %p495 = pneg %p279
      %p496 = pneg %p276
      %p497 = pneg %p300
      %p498 = pneg %p297
      %p499 = pneg %p321
      %p500 = pneg %p318
      %p501 = pneg %p342
      %p502 = pneg %p339
      %p503 = pneg %p363
      %p504 = pneg %p360
      %p505 = pneg %p389
      %p506 = pneg %p386
      %p507 = scmp.lt.s32.totalorder %s27, 1
      %s508 = scalar_select %p507, %s27, 1
      %s509 = smul.addr %s508, 8
      %s510 = smul.addr %s509, 4
      %s511 = scalar_lea.vmem %s16, %s510
      %p512 = scmp.lt.s32.totalorder %s27, 1
      %s513 = scalar_select %p512, %s27, 1
      %s514 = smul.addr %s513, 32
      %s515 = smul.addr %s514, 4
      %s516 = scalar_lea.vmem %s0, %s515
      %p517 = scmp.lt.s32.totalorder %s27, 1
      %s518 = scalar_select %p517, %s27, 1
      %s519 = smul.addr %s518, 8
      %s520 = smul.addr %s519, 4
      %s521 = scalar_lea.vmem %s16, %s520
      %v523 = vld [vmem:[%s516] sm:$0xf]
      %v524 = vld [vmem:[%s516 + $0x4] sm:$0xf]
      %v525 = vld [vmem:[%s516 + $0x8] sm:$0xf]
      %v526 = vld [vmem:[%s516 + $0xc] sm:$0xf]
      %v527 = vld [vmem:[%s516 + $0x10] sm:$0xf]
      %v528 = vld [vmem:[%s516 + $0x14] sm:$0xf]
      %v529 = vld [vmem:[%s516 + $0x18] sm:$0xf]
      %v530 = vld [vmem:[%s516 + $0x1c] sm:$0xf]
      %v531 = vld [vmem:[%s516 + $0x20] sm:$0xf]
      %v532 = vld [vmem:[%s516 + $0x24] sm:$0xf]
      %v533 = vld [vmem:[%s516 + $0x28] sm:$0xf]
      %v534 = vld [vmem:[%s516 + $0x2c] sm:$0xf]
      %v535 = vld [vmem:[%s516 + $0x30] sm:$0xf]
      %v536 = vld [vmem:[%s516 + $0x34] sm:$0xf]
      %v537 = vld [vmem:[%s516 + $0x38] sm:$0xf]
      %v538 = vld [vmem:[%s516 + $0x3c] sm:$0xf]
      %v539 = vld [vmem:[%s516 + $0x40] sm:$0xf]
      %v540 = vld [vmem:[%s516 + $0x44] sm:$0xf]
      %v541 = vld [vmem:[%s516 + $0x48] sm:$0xf]
      %v542 = vld [vmem:[%s516 + $0x4c] sm:$0xf]
      %v543 = vld [vmem:[%s516 + $0x50] sm:$0xf]
      %v544 = vld [vmem:[%s516 + $0x54] sm:$0xf]
      %v545 = vld [vmem:[%s516 + $0x58] sm:$0xf]
      %v546 = vld [vmem:[%s516 + $0x5c] sm:$0xf]
      %v547 = vld [vmem:[%s516 + $0x60] sm:$0xf]
      %v548 = vld [vmem:[%s516 + $0x64] sm:$0xf]
      %v549 = vld [vmem:[%s516 + $0x68] sm:$0xf]
      %v550 = vld [vmem:[%s516 + $0x6c] sm:$0xf]
      %v551 = vld [vmem:[%s516 + $0x70] sm:$0xf]
      %v552 = vld [vmem:[%s516 + $0x74] sm:$0xf]
      %v553 = vld [vmem:[%s516 + $0x78] sm:$0xf]
      %v554 = vld [vmem:[%s516 + $0x7c] sm:$0xf]
      %v555 = vld [vmem:[%s1] sm:$0xf]
      %v556 = vld [vmem:[%s1 + $0x4] sm:$0xf]
      %v557 = vld [vmem:[%s1 + $0x8] sm:$0xf]
      %v558 = vld [vmem:[%s1 + $0xc] sm:$0xf]
      %v559 = vld [vmem:[%s1 + $0x10] sm:$0xf]
      %v560 = vld [vmem:[%s1 + $0x14] sm:$0xf]
      %v561 = vld [vmem:[%s1 + $0x18] sm:$0xf]
      %v562 = vld [vmem:[%s1 + $0x1c] sm:$0xf]
      %v563 = vld [vmem:[%s1 + $0x20] sm:$0xf]
      %v564 = vld [vmem:[%s1 + $0x24] sm:$0xf]
      %v565 = vld [vmem:[%s1 + $0x28] sm:$0xf]
      %v566 = vld [vmem:[%s1 + $0x2c] sm:$0xf]
      %v567 = vld [vmem:[%s1 + $0x30] sm:$0xf]
      %v568 = vld [vmem:[%s1 + $0x34] sm:$0xf]
      %v569 = vld [vmem:[%s1 + $0x38] sm:$0xf]
      %v570 = vld [vmem:[%s1 + $0x3c] sm:$0xf]
      %v603 = vunpack.c.l.b16 %v523
      %v604 = vunpack.c.l.b16 %v524
      %v605 = vunpack.c.l.b16 %v525
      %v606 = vunpack.c.l.b16 %v526
      %v607 = vunpack.c.l.b16 %v527
      %v608 = vunpack.c.l.b16 %v528
      %v609 = vunpack.c.l.b16 %v529
      %v610 = vunpack.c.l.b16 %v530
      %v611 = vunpack.c.l.b16 %v531
      %v612 = vunpack.c.l.b16 %v532
      %v613 = vunpack.c.l.b16 %v533
      %v614 = vunpack.c.l.b16 %v534
      %v615 = vunpack.c.l.b16 %v535
      %v616 = vunpack.c.l.b16 %v536
      %v617 = vunpack.c.l.b16 %v537
      %v618 = vunpack.c.l.b16 %v538
      %v619 = vunpack.c.l.b16 %v539
      %v620 = vunpack.c.l.b16 %v540
      %v621 = vunpack.c.l.b16 %v541
      %v622 = vunpack.c.l.b16 %v542
      %v623 = vunpack.c.l.b16 %v543
      %v624 = vunpack.c.l.b16 %v544
      %v625 = vunpack.c.l.b16 %v545
      %v626 = vunpack.c.l.b16 %v546
      %v627 = vunpack.c.l.b16 %v547
      %v628 = vunpack.c.l.b16 %v548
      %v629 = vunpack.c.l.b16 %v549
      %v630 = vunpack.c.l.b16 %v550
      %v631 = vunpack.c.l.b16 %v551
      %v632 = vunpack.c.l.b16 %v552
      %v633 = vunpack.c.l.b16 %v553
      %v634 = vunpack.c.l.b16 %v554
      %v635 = vpack.c.b16 %v604, %v603
      %v636 = vpack.c.b16 %v606, %v605
      %v637 = vpack.c.b16 %v608, %v607
      %v638 = vpack.c.b16 %v610, %v609
      %v639 = vpack.c.b16 %v612, %v611
      %v640 = vpack.c.b16 %v614, %v613
      %v641 = vpack.c.b16 %v616, %v615
      %v642 = vpack.c.b16 %v618, %v617
      %v643 = vpack.c.b16 %v620, %v619
      %v644 = vpack.c.b16 %v622, %v621
      %v645 = vpack.c.b16 %v624, %v623
      %v646 = vpack.c.b16 %v626, %v625
      %v647 = vpack.c.b16 %v628, %v627
      %v648 = vpack.c.b16 %v630, %v629
      %v649 = vpack.c.b16 %v632, %v631
      %v650 = vpack.c.b16 %v634, %v633
      %v683 = vunpack.c.l.b16 %v555
      %v684 = vunpack.c.l.b16 %v556
      %v685 = vunpack.c.l.b16 %v557
      %v686 = vunpack.c.l.b16 %v558
      %v687 = vunpack.c.l.b16 %v559
      %v688 = vunpack.c.l.b16 %v560
      %v689 = vunpack.c.l.b16 %v561
      %v690 = vunpack.c.l.b16 %v562
      %v691 = vunpack.c.l.b16 %v563
      %v692 = vunpack.c.l.b16 %v564
      %v693 = vunpack.c.l.b16 %v565
      %v694 = vunpack.c.l.b16 %v566
      %v695 = vunpack.c.l.b16 %v567
      %v696 = vunpack.c.l.b16 %v568
      %v697 = vunpack.c.l.b16 %v569
      %v698 = vunpack.c.l.b16 %v570
      %v699 = vpack.c.b16 %v684, %v683
      %v700 = vpack.c.b16 %v686, %v685
      %v701 = vpack.c.b16 %v688, %v687
      %v702 = vpack.c.b16 %v690, %v689
      %v703 = vpack.c.b16 %v692, %v691
      %v704 = vpack.c.b16 %v694, %v693
      %v705 = vpack.c.b16 %v696, %v695
      %v706 = vpack.c.b16 %v698, %v697
      %715 = vmatprep.subr.bf16.mxu0 0
      %716 = vmatpush1.bf16.msra.mxu0 %v699
      %717 = vmatprep.subr.bf16.mxu0 0
      %718 = vmatpush1.bf16.msra.mxu0 %v700
      %719 = vmatprep.subr.bf16.mxu0 0
      %720 = vmatpush1.bf16.msra.mxu0 %v701
      %721 = vmatprep.subr.bf16.mxu0 0
      %722 = vmatpush1.bf16.msra.mxu0 %v702
      %723 = vmatprep.subr.bf16.mxu0 0
      %724 = vmatpush1.bf16.msra.mxu0 %v703
      %725 = vmatprep.subr.bf16.mxu0 0
      %726 = vmatpush1.bf16.msra.mxu0 %v704
      %727 = vmatprep.subr.bf16.mxu0 0
      %728 = vmatpush1.bf16.msra.mxu0 %v705
      %729 = vmatprep.subr.bf16.mxu0 0
      %730 = vmatpush1.bf16.msra.mxu0 %v706
      %731 = vmatprep.subr.bf16.mxu0 0
      %732 = vmatpush1.bf16.msra.mxu0 0
      %733 = vmatprep.subr.bf16.mxu0 0
      %734 = vmatpush1.bf16.msra.mxu0 0
      %735 = vmatprep.subr.bf16.mxu0 0
      %736 = vmatpush1.bf16.msra.mxu0 0
      %737 = vmatprep.subr.bf16.mxu0 0
      %738 = vmatpush1.bf16.msra.mxu0 0
      %739 = vmatprep.subr.bf16.mxu0 0
      %740 = vmatpush1.bf16.msra.mxu0 0
      %741 = vmatprep.subr.bf16.mxu0 0
      %742 = vmatpush1.bf16.msra.mxu0 0
      %743 = vmatprep.subr.bf16.mxu0 0
      %744 = vmatpush1.bf16.msra.mxu0 0
      %745 = vmatprep.subr.bf16.mxu0 0
      %746 = vmatpush1.bf16.msra.mxu0 0
      %747 = vmatprep.mubr.bf16.mxu0 0
      %748 = vmatmul.mubr.bf16.gmra.mrb[0].mxu0 %v635
      %v749 = vpop.f32.mrb[0].mxu0
      %v750 = vadd.f32 0.0, %v749
      %v751 = vpop.f32.mrb[0].mxu0
      %v752 = vpop.f32.mrb[0].mxu0
      %v753 = vadd.f32 0.0, %v752
      %v754 = vpop.f32.mrb[0].mxu0
      %755 = vmatprep.mubr.bf16.mxu0 0
      %756 = vmatmul.mubr.bf16.gmra.mrb[0].mxu0 %v636
      %v757 = vpop.f32.mrb[0].mxu0
      %v758 = vadd.f32 0.0, %v757
      %v759 = vpop.f32.mrb[0].mxu0
      %v760 = vpop.f32.mrb[0].mxu0
      %v761 = vadd.f32 0.0, %v760
      %v762 = vpop.f32.mrb[0].mxu0
      %763 = vmatprep.mubr.bf16.mxu0 0
      %764 = vmatmul.mubr.bf16.gmra.mrb[0].mxu0 %v637
      %v765 = vpop.f32.mrb[0].mxu0
      %v766 = vadd.f32 0.0, %v765
      %v767 = vpop.f32.mrb[0].mxu0
      %v768 = vpop.f32.mrb[0].mxu0
      %v769 = vadd.f32 0.0, %v768
      %v770 = vpop.f32.mrb[0].mxu0
      %771 = vmatprep.mubr.bf16.mxu0 0
      %772 = vmatmul.mubr.bf16.gmra.mrb[0].mxu0 %v638
      %v773 = vpop.f32.mrb[0].mxu0
      %v774 = vadd.f32 0.0, %v773
      %v775 = vpop.f32.mrb[0].mxu0
      %v776 = vpop.f32.mrb[0].mxu0
      %v777 = vadd.f32 0.0, %v776
      %v778 = vpop.f32.mrb[0].mxu0
      %779 = vmatprep.mubr.bf16.mxu0 0
      %780 = vmatmul.mubr.bf16.gmra.mrb[0].mxu0 %v639
      %v781 = vpop.f32.mrb[0].mxu0
      %v782 = vadd.f32 0.0, %v781
      %v783 = vpop.f32.mrb[0].mxu0
      %v784 = vpop.f32.mrb[0].mxu0
      %v785 = vadd.f32 0.0, %v784
      %v786 = vpop.f32.mrb[0].mxu0
      %787 = vmatprep.mubr.bf16.mxu0 0
      %788 = vmatmul.mubr.bf16.gmra.mrb[0].mxu0 %v640
      %v789 = vpop.f32.mrb[0].mxu0
      %v790 = vadd.f32 0.0, %v789
      %v791 = vpop.f32.mrb[0].mxu0
      %v792 = vpop.f32.mrb[0].mxu0
      %v793 = vadd.f32 0.0, %v792
      %v794 = vpop.f32.mrb[0].mxu0
      %795 = vmatprep.mubr.bf16.mxu0 0
      %796 = vmatmul.mubr.bf16.gmra.mrb[0].mxu0 %v641
      %v797 = vpop.f32.mrb[0].mxu0
      %v798 = vadd.f32 0.0, %v797
      %v799 = vpop.f32.mrb[0].mxu0
      %v800 = vpop.f32.mrb[0].mxu0
      %v801 = vadd.f32 0.0, %v800
      %v802 = vpop.f32.mrb[0].mxu0
      %803 = vmatprep.mubr.bf16.mxu0 0
      %804 = vmatmul.mubr.bf16.gmra.mrb[0].mxu0 %v642
      %v805 = vpop.f32.mrb[0].mxu0
      %v806 = vadd.f32 0.0, %v805
      %v807 = vpop.f32.mrb[0].mxu0
      %v808 = vpop.f32.mrb[0].mxu0
      %v809 = vadd.f32 0.0, %v808
      %v810 = vpop.f32.mrb[0].mxu0
      %811 = vmatprep.mubr.bf16.mxu0 0
      %812 = vmatmul.mubr.bf16.gmra.mrb[0].mxu0 %v643
      %v813 = vpop.f32.mrb[0].mxu0
      %v814 = vadd.f32 0.0, %v813
      %v815 = vpop.f32.mrb[0].mxu0
      %v816 = vpop.f32.mrb[0].mxu0
      %v817 = vadd.f32 0.0, %v816
      %v818 = vpop.f32.mrb[0].mxu0
      %819 = vmatprep.mubr.bf16.mxu0 0
      %820 = vmatmul.mubr.bf16.gmra.mrb[0].mxu0 %v644
      %v821 = vpop.f32.mrb[0].mxu0
      %v822 = vadd.f32 0.0, %v821
      %v823 = vpop.f32.mrb[0].mxu0
      %v824 = vpop.f32.mrb[0].mxu0
      %v825 = vadd.f32 0.0, %v824
      %v826 = vpop.f32.mrb[0].mxu0
      %827 = vmatprep.mubr.bf16.mxu0 0
      %828 = vmatmul.mubr.bf16.gmra.mrb[0].mxu0 %v645
      %v829 = vpop.f32.mrb[0].mxu0
      %v830 = vadd.f32 0.0, %v829
      %v831 = vpop.f32.mrb[0].mxu0
      %v832 = vpop.f32.mrb[0].mxu0
      %v833 = vadd.f32 0.0, %v832
      %v834 = vpop.f32.mrb[0].mxu0
      %835 = vmatprep.mubr.bf16.mxu0 0
      %836 = vmatmul.mubr.bf16.gmra.mrb[0].mxu0 %v646
      %v837 = vpop.f32.mrb[0].mxu0
      %v838 = vadd.f32 0.0, %v837
      %v839 = vpop.f32.mrb[0].mxu0
      %v840 = vpop.f32.mrb[0].mxu0
      %v841 = vadd.f32 0.0, %v840
      %v842 = vpop.f32.mrb[0].mxu0
      %843 = vmatprep.mubr.bf16.mxu0 0
      %844 = vmatmul.mubr.bf16.gmra.mrb[0].mxu0 %v647
      %v845 = vpop.f32.mrb[0].mxu0
      %v846 = vadd.f32 0.0, %v845
      %v847 = vpop.f32.mrb[0].mxu0
      %v848 = vpop.f32.mrb[0].mxu0
      %v849 = vadd.f32 0.0, %v848
      %v850 = vpop.f32.mrb[0].mxu0
      %851 = vmatprep.mubr.bf16.mxu0 0
      %852 = vmatmul.mubr.bf16.gmra.mrb[0].mxu0 %v648
      %v853 = vpop.f32.mrb[0].mxu0
      %v854 = vadd.f32 0.0, %v853
      %v855 = vpop.f32.mrb[0].mxu0
      %v856 = vpop.f32.mrb[0].mxu0
      %v857 = vadd.f32 0.0, %v856
      %v858 = vpop.f32.mrb[0].mxu0
      %859 = vmatprep.mubr.bf16.mxu0 0
      %860 = vmatmul.mubr.bf16.gmra.mrb[0].mxu0 %v649
      %v861 = vpop.f32.mrb[0].mxu0
      %v862 = vadd.f32 0.0, %v861
      %v863 = vpop.f32.mrb[0].mxu0
      %v864 = vpop.f32.mrb[0].mxu0
      %v865 = vadd.f32 0.0, %v864
      %v866 = vpop.f32.mrb[0].mxu0
      %867 = vmatprep.mubr.bf16.mxu0 0
      %868 = vmatmul.mubr.bf16.gmra.mrb[0].mxu0 %v650
      %v869 = vpop.f32.mrb[0].mxu0
      %v870 = vadd.f32 0.0, %v869
      %v871 = vpop.f32.mrb[0].mxu0
      %v872 = vpop.f32.mrb[0].mxu0
      %v873 = vadd.f32 0.0, %v872
      %v874 = vpop.f32.mrb[0].mxu0
      %875 = vdwg.mxu0
      %v876 = vld [vmem:[%s2] sm:$0x1]
      %v878 = vlaneseq
      %v879 = vshrl.u32 %v878, 7
      %v880 = vsub.s32 0, %v879
      %v881 = vrot.slane %v876, %v880
      %v883 = vmul.f32 %v750, %v881
      %v884 = vmul.f32 %v753, %v881
      %v885 = vmul.f32 %v758, %v881
      %v886 = vmul.f32 %v761, %v881
      %v887 = vmul.f32 %v766, %v881
      %v888 = vmul.f32 %v769, %v881
      %v889 = vmul.f32 %v774, %v881
      %v890 = vmul.f32 %v777, %v881
      %v891 = vmul.f32 %v782, %v881
      %v892 = vmul.f32 %v785, %v881
      %v893 = vmul.f32 %v790, %v881
      %v894 = vmul.f32 %v793, %v881
      %v895 = vmul.f32 %v798, %v881
      %v896 = vmul.f32 %v801, %v881
      %v897 = vmul.f32 %v806, %v881
      %v898 = vmul.f32 %v809, %v881
      %v899 = vmul.f32 %v814, %v881
      %v900 = vmul.f32 %v817, %v881
      %v901 = vmul.f32 %v822, %v881
      %v902 = vmul.f32 %v825, %v881
      %v903 = vmul.f32 %v830, %v881
      %v904 = vmul.f32 %v833, %v881
      %v905 = vmul.f32 %v838, %v881
      %v906 = vmul.f32 %v841, %v881
      %v907 = vmul.f32 %v846, %v881
      %v908 = vmul.f32 %v849, %v881
      %v909 = vmul.f32 %v854, %v881
      %v910 = vmul.f32 %v857, %v881
      %v911 = vmul.f32 %v862, %v881
      %v912 = vmul.f32 %v865, %v881
      %v913 = vmul.f32 %v870, %v881
      %v914 = vmul.f32 %v873, %v881
      %v915 = vld [vmem:[%s3] sm:$0x1]
      %v917 = vlaneseq
      %v918 = vshrl.u32 %v917, 7
      %v919 = vsub.s32 0, %v918
      %v920 = vrot.slane %v915, %v919
      %v922 = vadd.f32 %v883, %v920
      %v923 = vadd.f32 %v884, %v920
      %v924 = vadd.f32 %v885, %v920
      %v925 = vadd.f32 %v886, %v920
      %v926 = vadd.f32 %v887, %v920
      %v927 = vadd.f32 %v888, %v920
      %v928 = vadd.f32 %v889, %v920
      %v929 = vadd.f32 %v890, %v920
      %v930 = vadd.f32 %v891, %v920
      %v931 = vadd.f32 %v892, %v920
      %v932 = vadd.f32 %v893, %v920
      %v933 = vadd.f32 %v894, %v920
      %v934 = vadd.f32 %v895, %v920
      %v935 = vadd.f32 %v896, %v920
      %v936 = vadd.f32 %v897, %v920
      %v937 = vadd.f32 %v898, %v920
      %v938 = vadd.f32 %v899, %v920
      %v939 = vadd.f32 %v900, %v920
      %v940 = vadd.f32 %v901, %v920
      %v941 = vadd.f32 %v902, %v920
      %v942 = vadd.f32 %v903, %v920
      %v943 = vadd.f32 %v904, %v920
      %v944 = vadd.f32 %v905, %v920
      %v945 = vadd.f32 %v906, %v920
      %v946 = vadd.f32 %v907, %v920
      %v947 = vadd.f32 %v908, %v920
      %v948 = vadd.f32 %v909, %v920
      %v949 = vadd.f32 %v910, %v920
      %v950 = vadd.f32 %v911, %v920
      %v951 = vadd.f32 %v912, %v920
      %v952 = vadd.f32 %v913, %v920
      %v953 = vadd.f32 %v914, %v920
      %v954 = vmax.f32 %v922, 0.0
      %v955 = vmax.f32 %v923, 0.0
      %v956 = vmax.f32 %v924, 0.0
      %v957 = vmax.f32 %v925, 0.0
      %v958 = vmax.f32 %v926, 0.0
      %v959 = vmax.f32 %v927, 0.0
      %v960 = vmax.f32 %v928, 0.0
      %v961 = vmax.f32 %v929, 0.0
      %v962 = vmax.f32 %v930, 0.0
      %v963 = vmax.f32 %v931, 0.0
      %v964 = vmax.f32 %v932, 0.0
      %v965 = vmax.f32 %v933, 0.0
      %v966 = vmax.f32 %v934, 0.0
      %v967 = vmax.f32 %v935, 0.0
      %v968 = vmax.f32 %v936, 0.0
      %v969 = vmax.f32 %v937, 0.0
      %v970 = vmax.f32 %v938, 0.0
      %v971 = vmax.f32 %v939, 0.0
      %v972 = vmax.f32 %v940, 0.0
      %v973 = vmax.f32 %v941, 0.0
      %v974 = vmax.f32 %v942, 0.0
      %v975 = vmax.f32 %v943, 0.0
      %v976 = vmax.f32 %v944, 0.0
      %v977 = vmax.f32 %v945, 0.0
      %v978 = vmax.f32 %v946, 0.0
      %v979 = vmax.f32 %v947, 0.0
      %v980 = vmax.f32 %v948, 0.0
      %v981 = vmax.f32 %v949, 0.0
      %v982 = vmax.f32 %v950, 0.0
      %v983 = vmax.f32 %v951, 0.0
      %v984 = vmax.f32 %v952, 0.0
      %v985 = vmax.f32 %v953, 0.0
      %v994 = vrot.slane 0.0, 7
      %v995 = vrot.slane %v978, 7
      %v996 = vrot.slane %v979, 7
      %v997 = vrot.slane %v980, 7
      %v998 = vrot.slane %v981, 7
      %v999 = vrot.slane %v982, 7
      %v1000 = vrot.slane %v983, 7
      %v1001 = vrot.slane %v984, 7
      %vm1010 = vcmask 1040384
      %v1011 = vsel %vm1010, 0.0, %v994
      %v1012 = vsel %vm1010, 0.0, %v995
      %v1013 = vsel %vm1010, 0.0, %v996
      %v1014 = vsel %vm1010, 0.0, %v997
      %v1015 = vsel %vm1010, 0.0, %v998
      %v1016 = vsel %vm1010, 0.0, %v999
      %v1017 = vsel %vm1010, 0.0, %v1000
      %v1018 = vsel %vm1010, 0.0, %v1001
      %v1019 = vpack.c.bf16 %v1012, %v1011
      %v1020 = vpack.c.bf16 %v1014, %v1013
      %v1021 = vpack.c.bf16 %v1016, %v1015
      %v1022 = vpack.c.bf16 %v1018, %v1017
      %v1023 = vpack.c.bf16 %v970, 0.0
      %v1024 = vpack.c.bf16 %v972, %v971
      %v1025 = vpack.c.bf16 %v974, %v973
      %v1026 = vpack.c.bf16 %v976, %v975
      %v1027 = vpack.c.bf16 %v978, 0.0
      %v1028 = vpack.c.bf16 %v980, %v979
      %v1029 = vpack.c.bf16 %v982, %v981
      %v1030 = vpack.c.bf16 %v984, %v983
      %v1039 = vrot.slane %v962, 7
      %v1040 = vrot.slane %v963, 7
      %v1041 = vrot.slane %v964, 7
      %v1042 = vrot.slane %v965, 7
      %v1043 = vrot.slane %v966, 7
      %v1044 = vrot.slane %v967, 7
      %v1045 = vrot.slane %v968, 7
      %v1046 = vrot.slane %v969, 7
      %v1055 = vsel %vm1010, 0.0, %v1039
      %v1056 = vsel %vm1010, 0.0, %v1040
      %v1057 = vsel %vm1010, 0.0, %v1041
      %v1058 = vsel %vm1010, 0.0, %v1042
      %v1059 = vsel %vm1010, 0.0, %v1043
      %v1060 = vsel %vm1010, 0.0, %v1044
      %v1061 = vsel %vm1010, 0.0, %v1045
      %v1062 = vsel %vm1010, 0.0, %v1046
      %v1063 = vpack.c.bf16 %v1056, %v1055
      %v1064 = vpack.c.bf16 %v1058, %v1057
      %v1065 = vpack.c.bf16 %v1060, %v1059
      %v1066 = vpack.c.bf16 %v1062, %v1061
      %v1067 = vpack.c.bf16 %v955, %v954
      %v1068 = vpack.c.bf16 %v957, %v956
      %v1069 = vpack.c.bf16 %v959, %v958
      %v1070 = vpack.c.bf16 %v961, %v960
      %v1071 = vpack.c.bf16 %v963, %v962
      %v1072 = vpack.c.bf16 %v965, %v964
      %v1073 = vpack.c.bf16 %v967, %v966
      %v1074 = vpack.c.bf16 %v969, %v968
      %v1076 = vrot.slane %v985, 7
      %v1078 = vsel %vm1010, 0.0, %v1076
      %v1079 = vpack.c.bf16 %v1013, %v1012
      %v1080 = vpack.c.bf16 %v1015, %v1014
      %v1081 = vpack.c.bf16 %v1017, %v1016
      %v1082 = vpack.c.bf16 %v1078, %v1018
      %v1083 = vpack.c.bf16 %v971, %v970
      %v1084 = vpack.c.bf16 %v973, %v972
      %v1085 = vpack.c.bf16 %v975, %v974
      %v1086 = vpack.c.bf16 %v977, %v976
      %v1087 = vpack.c.bf16 %v979, %v978
      %v1088 = vpack.c.bf16 %v981, %v980
      %v1089 = vpack.c.bf16 %v983, %v982
      %v1090 = vpack.c.bf16 %v985, %v984
      %v1091 = vld [vmem:[%s4] sm:$0xf]
      %v1092 = vld [vmem:[%s4 + $0x4] sm:$0xf]
      %v1093 = vld [vmem:[%s4 + $0x8] sm:$0xf]
      %v1094 = vld [vmem:[%s4 + $0xc] sm:$0xf]
      %v1095 = vld [vmem:[%s4 + $0x10] sm:$0xf]
      %v1096 = vld [vmem:[%s4 + $0x14] sm:$0xf]
      %v1097 = vld [vmem:[%s4 + $0x18] sm:$0xf]
      %v1098 = vld [vmem:[%s4 + $0x1c] sm:$0xf]
      %v1099 = vld [vmem:[%s4 + $0x20] sm:$0xf]
      %v1100 = vld [vmem:[%s4 + $0x24] sm:$0xf]
      %v1101 = vld [vmem:[%s4 + $0x28] sm:$0xf]
      %v1102 = vld [vmem:[%s4 + $0x2c] sm:$0xf]
      %v1103 = vld [vmem:[%s4 + $0x30] sm:$0xf]
      %v1104 = vld [vmem:[%s4 + $0x34] sm:$0xf]
      %v1105 = vld [vmem:[%s4 + $0x38] sm:$0xf]
      %v1106 = vld [vmem:[%s4 + $0x3c] sm:$0xf]
      %v1107 = vld [vmem:[%s4 + $0x40] sm:$0xf]
      %v1108 = vld [vmem:[%s4 + $0x44] sm:$0xf]
      %v1109 = vld [vmem:[%s4 + $0x48] sm:$0xf]
      %v1110 = vld [vmem:[%s4 + $0x4c] sm:$0xf]
      %v1111 = vld [vmem:[%s4 + $0x50] sm:$0xf]
      %v1112 = vld [vmem:[%s4 + $0x54] sm:$0xf]
      %v1113 = vld [vmem:[%s4 + $0x58] sm:$0xf]
      %v1114 = vld [vmem:[%s4 + $0x5c] sm:$0xf]
      %v1115 = vld [vmem:[%s4 + $0x60] sm:$0xf]
      %v1116 = vld [vmem:[%s4 + $0x64] sm:$0xf]
      %v1117 = vld [vmem:[%s4 + $0x68] sm:$0xf]
      %v1118 = vld [vmem:[%s4 + $0x6c] sm:$0xf]
      %v1119 = vld [vmem:[%s4 + $0x70] sm:$0xf]
      %v1120 = vld [vmem:[%s4 + $0x74] sm:$0xf]
      %v1121 = vld [vmem:[%s4 + $0x78] sm:$0xf]
      %v1122 = vld [vmem:[%s4 + $0x7c] sm:$0xf]
      %v1123 = vld [vmem:[%s4 + $0x80] sm:$0xf]
      %v1124 = vld [vmem:[%s4 + $0x84] sm:$0xf]
      %v1125 = vld [vmem:[%s4 + $0x88] sm:$0xf]
      %v1126 = vld [vmem:[%s4 + $0x8c] sm:$0xf]
      %v1127 = vld [vmem:[%s4 + $0x90] sm:$0xf]
      %v1128 = vld [vmem:[%s4 + $0x94] sm:$0xf]
      %v1129 = vld [vmem:[%s4 + $0x98] sm:$0xf]
      %v1130 = vld [vmem:[%s4 + $0x9c] sm:$0xf]
      %v1131 = vld [vmem:[%s4 + $0xa0] sm:$0xf]
      %v1132 = vld [vmem:[%s4 + $0xa4] sm:$0xf]
      %v1133 = vld [vmem:[%s4 + $0xa8] sm:$0xf]
      %v1134 = vld [vmem:[%s4 + $0xac] sm:$0xf]
      %v1135 = vld [vmem:[%s4 + $0xb0] sm:$0xf]
      %v1136 = vld [vmem:[%s4 + $0xb4] sm:$0xf]
      %v1137 = vld [vmem:[%s4 + $0xb8] sm:$0xf]
      %v1138 = vld [vmem:[%s4 + $0xbc] sm:$0xf]
      %v1139 = vld [vmem:[%s4 + $0xc0] sm:$0xf]
      %v1140 = vld [vmem:[%s4 + $0xc4] sm:$0xf]
      %v1141 = vld [vmem:[%s4 + $0xc8] sm:$0xf]
      %v1142 = vld [vmem:[%s4 + $0xcc] sm:$0xf]
      %v1143 = vld [vmem:[%s4 + $0xd0] sm:$0xf]
      %v1144 = vld [vmem:[%s4 + $0xd4] sm:$0xf]
      %v1145 = vld [vmem:[%s4 + $0xd8] sm:$0xf]
      %v1146 = vld [vmem:[%s4 + $0xdc] sm:$0xf]
      %v1147 = vld [vmem:[%s4 + $0xe0] sm:$0xf]
      %v1148 = vld [vmem:[%s4 + $0xe4] sm:$0xf]
      %v1149 = vld [vmem:[%s4 + $0xe8] sm:$0xf]
      %v1150 = vld [vmem:[%s4 + $0xec] sm:$0xf]
      %v1151 = vld [vmem:[%s4 + $0xf0] sm:$0xf]
      %v1152 = vld [vmem:[%s4 + $0xf4] sm:$0xf]
      %v1153 = vld [vmem:[%s4 + $0xf8] sm:$0xf]
      %v1154 = vld [vmem:[%s4 + $0xfc] sm:$0xf]
      %v1155 = vld [vmem:[%s4 + $0x100] sm:$0xf]
      %v1156 = vld [vmem:[%s4 + $0x104] sm:$0xf]
      %v1157 = vld [vmem:[%s4 + $0x108] sm:$0xf]
      %v1158 = vld [vmem:[%s4 + $0x10c] sm:$0xf]
      %v1159 = vld [vmem:[%s4 + $0x110] sm:$0xf]
      %v1160 = vld [vmem:[%s4 + $0x114] sm:$0xf]
      %v1161 = vld [vmem:[%s4 + $0x118] sm:$0xf]
      %v1162 = vld [vmem:[%s4 + $0x11c] sm:$0xf]
      %v1163 = vld [vmem:[%s4 + $0x120] sm:$0xf]
      %v1164 = vld [vmem:[%s4 + $0x124] sm:$0xf]
      %v1165 = vld [vmem:[%s4 + $0x128] sm:$0xf]
      %v1166 = vld [vmem:[%s4 + $0x12c] sm:$0xf]
      %v1167 = vld [vmem:[%s4 + $0x130] sm:$0xf]
      %v1168 = vld [vmem:[%s4 + $0x134] sm:$0xf]
      %v1169 = vld [vmem:[%s4 + $0x138] sm:$0xf]
      %v1170 = vld [vmem:[%s4 + $0x13c] sm:$0xf]
      %v1171 = vld [vmem:[%s4 + $0x140] sm:$0xf]
      %v1172 = vld [vmem:[%s4 + $0x144] sm:$0xf]
      %v1173 = vld [vmem:[%s4 + $0x148] sm:$0xf]
      %v1174 = vld [vmem:[%s4 + $0x14c] sm:$0xf]
      %v1175 = vld [vmem:[%s4 + $0x150] sm:$0xf]
      %v1176 = vld [vmem:[%s4 + $0x154] sm:$0xf]
      %v1177 = vld [vmem:[%s4 + $0x158] sm:$0xf]
      %v1178 = vld [vmem:[%s4 + $0x15c] sm:$0xf]
      %v1179 = vld [vmem:[%s4 + $0x160] sm:$0xf]
      %v1180 = vld [vmem:[%s4 + $0x164] sm:$0xf]
      %v1181 = vld [vmem:[%s4 + $0x168] sm:$0xf]
      %v1182 = vld [vmem:[%s4 + $0x16c] sm:$0xf]
      %v1183 = vld [vmem:[%s4 + $0x170] sm:$0xf]
      %v1184 = vld [vmem:[%s4 + $0x174] sm:$0xf]
      %v1185 = vld [vmem:[%s4 + $0x178] sm:$0xf]
      %v1186 = vld [vmem:[%s4 + $0x17c] sm:$0xf]
      %v1187 = vld [vmem:[%s4 + $0x180] sm:$0xf]
      %v1188 = vld [vmem:[%s4 + $0x184] sm:$0xf]
      %v1189 = vld [vmem:[%s4 + $0x188] sm:$0xf]
      %v1190 = vld [vmem:[%s4 + $0x18c] sm:$0xf]
      %v1191 = vld [vmem:[%s4 + $0x190] sm:$0xf]
      %v1192 = vld [vmem:[%s4 + $0x194] sm:$0xf]
      %v1193 = vld [vmem:[%s4 + $0x198] sm:$0xf]
      %v1194 = vld [vmem:[%s4 + $0x19c] sm:$0xf]
      %v1195 = vld [vmem:[%s4 + $0x1a0] sm:$0xf]
      %v1196 = vld [vmem:[%s4 + $0x1a4] sm:$0xf]
      %v1197 = vld [vmem:[%s4 + $0x1a8] sm:$0xf]
      %v1198 = vld [vmem:[%s4 + $0x1ac] sm:$0xf]
      %v1199 = vld [vmem:[%s4 + $0x1b0] sm:$0xf]
      %v1200 = vld [vmem:[%s4 + $0x1b4] sm:$0xf]
      %v1201 = vld [vmem:[%s4 + $0x1b8] sm:$0xf]
      %v1202 = vld [vmem:[%s4 + $0x1bc] sm:$0xf]
      %v1203 = vld [vmem:[%s4 + $0x1c0] sm:$0xf]
      %v1204 = vld [vmem:[%s4 + $0x1c4] sm:$0xf]
      %v1205 = vld [vmem:[%s4 + $0x1c8] sm:$0xf]
      %v1206 = vld [vmem:[%s4 + $0x1cc] sm:$0xf]
      %v1207 = vld [vmem:[%s4 + $0x1d0] sm:$0xf]
      %v1208 = vld [vmem:[%s4 + $0x1d4] sm:$0xf]
      %v1209 = vld [vmem:[%s4 + $0x1d8] sm:$0xf]
      %v1210 = vld [vmem:[%s4 + $0x1dc] sm:$0xf]
      %v1211 = vld [vmem:[%s4 + $0x1e0] sm:$0xf]
      %v1212 = vld [vmem:[%s4 + $0x1e4] sm:$0xf]
      %v1213 = vld [vmem:[%s4 + $0x1e8] sm:$0xf]
      %v1214 = vld [vmem:[%s4 + $0x1ec] sm:$0xf]
      %v1215 = vld [vmem:[%s4 + $0x1f0] sm:$0xf]
      %v1216 = vld [vmem:[%s4 + $0x1f4] sm:$0xf]
      %v1217 = vld [vmem:[%s4 + $0x1f8] sm:$0xf]
      %v1218 = vld [vmem:[%s4 + $0x1fc] sm:$0xf]
      %v1219 = vld [vmem:[%s4 + $0x200] sm:$0xf]
      %v1220 = vld [vmem:[%s4 + $0x204] sm:$0xf]
      %v1221 = vld [vmem:[%s4 + $0x208] sm:$0xf]
      %v1222 = vld [vmem:[%s4 + $0x20c] sm:$0xf]
      %v1223 = vld [vmem:[%s4 + $0x210] sm:$0xf]
      %v1224 = vld [vmem:[%s4 + $0x214] sm:$0xf]
      %v1225 = vld [vmem:[%s4 + $0x218] sm:$0xf]
      %v1226 = vld [vmem:[%s4 + $0x21c] sm:$0xf]
      %v1227 = vld [vmem:[%s4 + $0x220] sm:$0xf]
      %v1228 = vld [vmem:[%s4 + $0x224] sm:$0xf]
      %v1229 = vld [vmem:[%s4 + $0x228] sm:$0xf]
      %v1230 = vld [vmem:[%s4 + $0x22c] sm:$0xf]
      %v1231 = vld [vmem:[%s4 + $0x230] sm:$0xf]
      %v1232 = vld [vmem:[%s4 + $0x234] sm:$0xf]
      %v1233 = vld [vmem:[%s4 + $0x238] sm:$0xf]
      %v1234 = vld [vmem:[%s4 + $0x23c] sm:$0xf]
      %v1379 = vunpack.c.l.b16 %v1091
      %v1380 = vunpack.c.l.b16 %v1092
      %v1381 = vunpack.c.l.b16 %v1093
      %v1382 = vunpack.c.l.b16 %v1094
      %v1383 = vunpack.c.l.b16 %v1095
      %v1384 = vunpack.c.l.b16 %v1096
      %v1385 = vunpack.c.l.b16 %v1097
      %v1386 = vunpack.c.l.b16 %v1098
      %v1387 = vunpack.c.l.b16 %v1099
      %v1388 = vunpack.c.l.b16 %v1100
      %v1389 = vunpack.c.l.b16 %v1101
      %v1390 = vunpack.c.l.b16 %v1102
      %v1391 = vunpack.c.l.b16 %v1103
      %v1392 = vunpack.c.l.b16 %v1104
      %v1393 = vunpack.c.l.b16 %v1105
      %v1394 = vunpack.c.l.b16 %v1106
      %v1395 = vunpack.c.l.b16 %v1107
      %v1396 = vunpack.c.l.b16 %v1108
      %v1397 = vunpack.c.l.b16 %v1109
      %v1398 = vunpack.c.l.b16 %v1110
      %v1399 = vunpack.c.l.b16 %v1111
      %v1400 = vunpack.c.l.b16 %v1112
      %v1401 = vunpack.c.l.b16 %v1113
      %v1402 = vunpack.c.l.b16 %v1114
      %v1403 = vunpack.c.l.b16 %v1115
      %v1404 = vunpack.c.l.b16 %v1116
      %v1405 = vunpack.c.l.b16 %v1117
      %v1406 = vunpack.c.l.b16 %v1118
      %v1407 = vunpack.c.l.b16 %v1119
      %v1408 = vunpack.c.l.b16 %v1120
      %v1409 = vunpack.c.l.b16 %v1121
      %v1410 = vunpack.c.l.b16 %v1122
      %v1411 = vunpack.c.l.b16 %v1123
      %v1412 = vunpack.c.l.b16 %v1124
      %v1413 = vunpack.c.l.b16 %v1125
      %v1414 = vunpack.c.l.b16 %v1126
      %v1415 = vunpack.c.l.b16 %v1127
      %v1416 = vunpack.c.l.b16 %v1128
      %v1417 = vunpack.c.l.b16 %v1129
      %v1418 = vunpack.c.l.b16 %v1130
      %v1419 = vunpack.c.l.b16 %v1131
      %v1420 = vunpack.c.l.b16 %v1132
      %v1421 = vunpack.c.l.b16 %v1133
      %v1422 = vunpack.c.l.b16 %v1134
      %v1423 = vunpack.c.l.b16 %v1135
      %v1424 = vunpack.c.l.b16 %v1136
      %v1425 = vunpack.c.l.b16 %v1137
      %v1426 = vunpack.c.l.b16 %v1138
      %v1427 = vunpack.c.l.b16 %v1139
      %v1428 = vunpack.c.l.b16 %v1140
      %v1429 = vunpack.c.l.b16 %v1141
      %v1430 = vunpack.c.l.b16 %v1142
      %v1431 = vunpack.c.l.b16 %v1143
      %v1432 = vunpack.c.l.b16 %v1144
      %v1433 = vunpack.c.l.b16 %v1145
      %v1434 = vunpack.c.l.b16 %v1146
      %v1435 = vunpack.c.l.b16 %v1147
      %v1436 = vunpack.c.l.b16 %v1148
      %v1437 = vunpack.c.l.b16 %v1149
      %v1438 = vunpack.c.l.b16 %v1150
      %v1439 = vunpack.c.l.b16 %v1151
      %v1440 = vunpack.c.l.b16 %v1152
      %v1441 = vunpack.c.l.b16 %v1153
      %v1442 = vunpack.c.l.b16 %v1154
      %v1443 = vunpack.c.l.b16 %v1155
      %v1444 = vunpack.c.l.b16 %v1156
      %v1445 = vunpack.c.l.b16 %v1157
      %v1446 = vunpack.c.l.b16 %v1158
      %v1447 = vunpack.c.l.b16 %v1159
      %v1448 = vunpack.c.l.b16 %v1160
      %v1449 = vunpack.c.l.b16 %v1161
      %v1450 = vunpack.c.l.b16 %v1162
      %v1451 = vunpack.c.l.b16 %v1163
      %v1452 = vunpack.c.l.b16 %v1164
      %v1453 = vunpack.c.l.b16 %v1165
      %v1454 = vunpack.c.l.b16 %v1166
      %v1455 = vunpack.c.l.b16 %v1167
      %v1456 = vunpack.c.l.b16 %v1168
      %v1457 = vunpack.c.l.b16 %v1169
      %v1458 = vunpack.c.l.b16 %v1170
      %v1459 = vunpack.c.l.b16 %v1171
      %v1460 = vunpack.c.l.b16 %v1172
      %v1461 = vunpack.c.l.b16 %v1173
      %v1462 = vunpack.c.l.b16 %v1174
      %v1463 = vunpack.c.l.b16 %v1175
      %v1464 = vunpack.c.l.b16 %v1176
      %v1465 = vunpack.c.l.b16 %v1177
      %v1466 = vunpack.c.l.b16 %v1178
      %v1467 = vunpack.c.l.b16 %v1179
      %v1468 = vunpack.c.l.b16 %v1180
      %v1469 = vunpack.c.l.b16 %v1181
      %v1470 = vunpack.c.l.b16 %v1182
      %v1471 = vunpack.c.l.b16 %v1183
      %v1472 = vunpack.c.l.b16 %v1184
      %v1473 = vunpack.c.l.b16 %v1185
      %v1474 = vunpack.c.l.b16 %v1186
      %v1475 = vunpack.c.l.b16 %v1187
      %v1476 = vunpack.c.l.b16 %v1188
      %v1477 = vunpack.c.l.b16 %v1189
      %v1478 = vunpack.c.l.b16 %v1190
      %v1479 = vunpack.c.l.b16 %v1191
      %v1480 = vunpack.c.l.b16 %v1192
      %v1481 = vunpack.c.l.b16 %v1193
      %v1482 = vunpack.c.l.b16 %v1194
      %v1483 = vunpack.c.l.b16 %v1195
      %v1484 = vunpack.c.l.b16 %v1196
      %v1485 = vunpack.c.l.b16 %v1197
      %v1486 = vunpack.c.l.b16 %v1198
      %v1487 = vunpack.c.l.b16 %v1199
      %v1488 = vunpack.c.l.b16 %v1200
      %v1489 = vunpack.c.l.b16 %v1201
      %v1490 = vunpack.c.l.b16 %v1202
      %v1491 = vunpack.c.l.b16 %v1203
      %v1492 = vunpack.c.l.b16 %v1204
      %v1493 = vunpack.c.l.b16 %v1205
      %v1494 = vunpack.c.l.b16 %v1206
      %v1495 = vunpack.c.l.b16 %v1207
      %v1496 = vunpack.c.l.b16 %v1208
      %v1497 = vunpack.c.l.b16 %v1209
      %v1498 = vunpack.c.l.b16 %v1210
      %v1499 = vunpack.c.l.b16 %v1211
      %v1500 = vunpack.c.l.b16 %v1212
      %v1501 = vunpack.c.l.b16 %v1213
      %v1502 = vunpack.c.l.b16 %v1214
      %v1503 = vunpack.c.l.b16 %v1215
      %v1504 = vunpack.c.l.b16 %v1216
      %v1505 = vunpack.c.l.b16 %v1217
      %v1506 = vunpack.c.l.b16 %v1218
      %v1507 = vunpack.c.l.b16 %v1219
      %v1508 = vunpack.c.l.b16 %v1220
      %v1509 = vunpack.c.l.b16 %v1221
      %v1510 = vunpack.c.l.b16 %v1222
      %v1511 = vunpack.c.l.b16 %v1223
      %v1512 = vunpack.c.l.b16 %v1224
      %v1513 = vunpack.c.l.b16 %v1225
      %v1514 = vunpack.c.l.b16 %v1226
      %v1515 = vunpack.c.l.b16 %v1227
      %v1516 = vunpack.c.l.b16 %v1228
      %v1517 = vunpack.c.l.b16 %v1229
      %v1518 = vunpack.c.l.b16 %v1230
      %v1519 = vunpack.c.l.b16 %v1231
      %v1520 = vunpack.c.l.b16 %v1232
      %v1521 = vunpack.c.l.b16 %v1233
      %v1522 = vunpack.c.l.b16 %v1234
      %v1523 = vpack.c.b16 %v1380, %v1379
      %v1524 = vpack.c.b16 %v1382, %v1381
      %v1525 = vpack.c.b16 %v1384, %v1383
      %v1526 = vpack.c.b16 %v1386, %v1385
      %v1527 = vpack.c.b16 %v1388, %v1387
      %v1528 = vpack.c.b16 %v1390, %v1389
      %v1529 = vpack.c.b16 %v1392, %v1391
      %v1530 = vpack.c.b16 %v1394, %v1393
      %v1531 = vpack.c.b16 %v1396, %v1395
      %v1532 = vpack.c.b16 %v1398, %v1397
      %v1533 = vpack.c.b16 %v1400, %v1399
      %v1534 = vpack.c.b16 %v1402, %v1401
      %v1535 = vpack.c.b16 %v1404, %v1403
      %v1536 = vpack.c.b16 %v1406, %v1405
      %v1537 = vpack.c.b16 %v1408, %v1407
      %v1538 = vpack.c.b16 %v1410, %v1409
      %v1539 = vpack.c.b16 %v1412, %v1411
      %v1540 = vpack.c.b16 %v1414, %v1413
      %v1541 = vpack.c.b16 %v1416, %v1415
      %v1542 = vpack.c.b16 %v1418, %v1417
      %v1543 = vpack.c.b16 %v1420, %v1419
      %v1544 = vpack.c.b16 %v1422, %v1421
      %v1545 = vpack.c.b16 %v1424, %v1423
      %v1546 = vpack.c.b16 %v1426, %v1425
      %v1547 = vpack.c.b16 %v1428, %v1427
      %v1548 = vpack.c.b16 %v1430, %v1429
      %v1549 = vpack.c.b16 %v1432, %v1431
      %v1550 = vpack.c.b16 %v1434, %v1433
      %v1551 = vpack.c.b16 %v1436, %v1435
      %v1552 = vpack.c.b16 %v1438, %v1437
      %v1553 = vpack.c.b16 %v1440, %v1439
      %v1554 = vpack.c.b16 %v1442, %v1441
      %v1555 = vpack.c.b16 %v1444, %v1443
      %v1556 = vpack.c.b16 %v1446, %v1445
      %v1557 = vpack.c.b16 %v1448, %v1447
      %v1558 = vpack.c.b16 %v1450, %v1449
      %v1559 = vpack.c.b16 %v1452, %v1451
      %v1560 = vpack.c.b16 %v1454, %v1453
      %v1561 = vpack.c.b16 %v1456, %v1455
      %v1562 = vpack.c.b16 %v1458, %v1457
      %v1563 = vpack.c.b16 %v1460, %v1459
      %v1564 = vpack.c.b16 %v1462, %v1461
      %v1565 = vpack.c.b16 %v1464, %v1463
      %v1566 = vpack.c.b16 %v1466, %v1465
      %v1567 = vpack.c.b16 %v1468, %v1467
      %v1568 = vpack.c.b16 %v1470, %v1469
      %v1569 = vpack.c.b16 %v1472, %v1471
      %v1570 = vpack.c.b16 %v1474, %v1473
      %v1571 = vpack.c.b16 %v1476, %v1475
      %v1572 = vpack.c.b16 %v1478, %v1477
      %v1573 = vpack.c.b16 %v1480, %v1479
      %v1574 = vpack.c.b16 %v1482, %v1481
      %v1575 = vpack.c.b16 %v1484, %v1483
      %v1576 = vpack.c.b16 %v1486, %v1485
      %v1577 = vpack.c.b16 %v1488, %v1487
      %v1578 = vpack.c.b16 %v1490, %v1489
      %v1579 = vpack.c.b16 %v1492, %v1491
      %v1580 = vpack.c.b16 %v1494, %v1493
      %v1581 = vpack.c.b16 %v1496, %v1495
      %v1582 = vpack.c.b16 %v1498, %v1497
      %v1583 = vpack.c.b16 %v1500, %v1499
      %v1584 = vpack.c.b16 %v1502, %v1501
      %v1585 = vpack.c.b16 %v1504, %v1503
      %v1586 = vpack.c.b16 %v1506, %v1505
      %v1587 = vpack.c.b16 %v1508, %v1507
      %v1588 = vpack.c.b16 %v1510, %v1509
      %v1589 = vpack.c.b16 %v1512, %v1511
      %v1590 = vpack.c.b16 %v1514, %v1513
      %v1591 = vpack.c.b16 %v1516, %v1515
      %v1592 = vpack.c.b16 %v1518, %v1517
      %v1593 = vpack.c.b16 %v1520, %v1519
      %v1594 = vpack.c.b16 %v1522, %v1521
      %1667 = vmatprep.subr.bf16.mxu0 0
      %1668 = vmatpush1.bf16.msra.mxu0 %v1523
      %1669 = vmatprep.subr.bf16.mxu0 0
      %1670 = vmatpush1.bf16.msra.mxu0 %v1524
      %1671 = vmatprep.subr.bf16.mxu0 0
      %1672 = vmatpush1.bf16.msra.mxu0 %v1525
      %1673 = vmatprep.subr.bf16.mxu0 0
      %1674 = vmatpush1.bf16.msra.mxu0 %v1526
      %1675 = vmatprep.subr.bf16.mxu0 0
      %1676 = vmatpush1.bf16.msra.mxu0 %v1527
      %1677 = vmatprep.subr.bf16.mxu0 0
      %1678 = vmatpush1.bf16.msra.mxu0 %v1528
      %1679 = vmatprep.subr.bf16.mxu0 0
      %1680 = vmatpush1.bf16.msra.mxu0 %v1529
      %1681 = vmatprep.subr.bf16.mxu0 0
      %1682 = vmatpush1.bf16.msra.mxu0 %v1530
      %1683 = vmatprep.subr.bf16.mxu0 0
      %1684 = vmatpush1.bf16.msra.mxu0 %v1531
      %1685 = vmatprep.subr.bf16.mxu0 0
      %1686 = vmatpush1.bf16.msra.mxu0 %v1532
      %1687 = vmatprep.subr.bf16.mxu0 0
      %1688 = vmatpush1.bf16.msra.mxu0 %v1533
      %1689 = vmatprep.subr.bf16.mxu0 0
      %1690 = vmatpush1.bf16.msra.mxu0 %v1534
      %1691 = vmatprep.subr.bf16.mxu0 0
      %1692 = vmatpush1.bf16.msra.mxu0 %v1535
      %1693 = vmatprep.subr.bf16.mxu0 0
      %1694 = vmatpush1.bf16.msra.mxu0 %v1536
      %1695 = vmatprep.subr.bf16.mxu0 0
      %1696 = vmatpush1.bf16.msra.mxu0 %v1537
      %1697 = vmatprep.subr.bf16.mxu0 0
      %1698 = vmatpush1.bf16.msra.mxu0 %v1538
      %1699 = vmatprep.mubr.bf16.mxu0 %v1023
      %1700 = vmatmul.mubr.bf16.gmra.mrb[0].mxu0 %v1019
      %v1701 = vpop.f32.mrb[0].mxu0
      %v1702 = vadd.f32 0.0, %v1701
      %v1703 = vpop.f32.mrb[0].mxu0
      %v1704 = vpop.f32.mrb[0].mxu0
      %v1705 = vadd.f32 0.0, %v1704
      %v1706 = vpop.f32.mrb[0].mxu0
      %1707 = vmatprep.mubr.bf16.mxu0 %v1024
      %1708 = vmatmul.mubr.bf16.gmra.mrb[0].mxu0 %v1020
      %v1709 = vpop.f32.mrb[0].mxu0
      %v1710 = vadd.f32 0.0, %v1709
      %v1711 = vpop.f32.mrb[0].mxu0
      %v1712 = vpop.f32.mrb[0].mxu0
      %v1713 = vadd.f32 0.0, %v1712
      %v1714 = vpop.f32.mrb[0].mxu0
      %1715 = vmatprep.mubr.bf16.mxu0 %v1025
      %1716 = vmatmul.mubr.bf16.gmra.mrb[0].mxu0 %v1021
      %v1717 = vpop.f32.mrb[0].mxu0
      %v1718 = vadd.f32 0.0, %v1717
      %v1719 = vpop.f32.mrb[0].mxu0
      %v1720 = vpop.f32.mrb[0].mxu0
      %v1721 = vadd.f32 0.0, %v1720
      %v1722 = vpop.f32.mrb[0].mxu0
      %1723 = vmatprep.mubr.bf16.mxu0 %v1026
      %1724 = vmatmul.mubr.bf16.gmra.mrb[0].mxu0 %v1022
      %v1725 = vpop.f32.mrb[0].mxu0
      %v1726 = vadd.f32 0.0, %v1725
      %v1727 = vpop.f32.mrb[0].mxu0
      %v1728 = vpop.f32.mrb[0].mxu0
      %v1729 = vadd.f32 0.0, %v1728
      %v1730 = vpop.f32.mrb[0].mxu0
      %1731 = vdwg.mxu0
      %1732 = vmatprep.subr.bf16.mxu0 0
      %1733 = vmatpush1.bf16.msra.mxu0 %v1539
      %1734 = vmatprep.subr.bf16.mxu0 0
      %1735 = vmatpush1.bf16.msra.mxu0 %v1540
      %1736 = vmatprep.subr.bf16.mxu0 0
      %1737 = vmatpush1.bf16.msra.mxu0 %v1541
      %1738 = vmatprep.subr.bf16.mxu0 0
      %1739 = vmatpush1.bf16.msra.mxu0 %v1542
      %1740 = vmatprep.subr.bf16.mxu0 0
      %1741 = vmatpush1.bf16.msra.mxu0 %v1543
      %1742 = vmatprep.subr.bf16.mxu0 0
      %1743 = vmatpush1.bf16.msra.mxu0 %v1544
      %1744 = vmatprep.subr.bf16.mxu0 0
      %1745 = vmatpush1.bf16.msra.mxu0 %v1545
      %1746 = vmatprep.subr.bf16.mxu0 0
      %1747 = vmatpush1.bf16.msra.mxu0 %v1546
      %1748 = vmatprep.subr.bf16.mxu0 0
      %1749 = vmatpush1.bf16.msra.mxu0 %v1547
      %1750 = vmatprep.subr.bf16.mxu0 0
      %1751 = vmatpush1.bf16.msra.mxu0 %v1548
      %1752 = vmatprep.subr.bf16.mxu0 0
      %1753 = vmatpush1.bf16.msra.mxu0 %v1549
      %1754 = vmatprep.subr.bf16.mxu0 0
      %1755 = vmatpush1.bf16.msra.mxu0 %v1550
      %1756 = vmatprep.subr.bf16.mxu0 0
      %1757 = vmatpush1.bf16.msra.mxu0 %v1551
      %1758 = vmatprep.subr.bf16.mxu0 0
      %1759 = vmatpush1.bf16.msra.mxu0 %v1552
      %1760 = vmatprep.subr.bf16.mxu0 0
      %1761 = vmatpush1.bf16.msra.mxu0 %v1553
      %1762 = vmatprep.subr.bf16.mxu0 0
      %1763 = vmatpush1.bf16.msra.mxu0 %v1554
      %1764 = vmatprep.mubr.bf16.mxu0 %v1063
      %1765 = vmatmul.mubr.bf16.gmra.mrb[0].mxu0 %v1027
      %v1766 = vpop.f32.mrb[0].mxu0
      %v1767 = vadd.f32 %v1702, %v1766
      %v1768 = vpop.f32.mrb[0].mxu0
      %v1769 = vpop.f32.mrb[0].mxu0
      %v1770 = vadd.f32 %v1705, %v1769
      %v1771 = vpop.f32.mrb[0].mxu0
      %1772 = vmatprep.mubr.bf16.mxu0 %v1064
      %1773 = vmatmul.mubr.bf16.gmra.mrb[0].mxu0 %v1028
      %v1774 = vpop.f32.mrb[0].mxu0
      %v1775 = vadd.f32 %v1710, %v1774
      %v1776 = vpop.f32.mrb[0].mxu0
      %v1777 = vpop.f32.mrb[0].mxu0
      %v1778 = vadd.f32 %v1713, %v1777
      %v1779 = vpop.f32.mrb[0].mxu0
      %1780 = vmatprep.mubr.bf16.mxu0 %v1065
      %1781 = vmatmul.mubr.bf16.gmra.mrb[0].mxu0 %v1029
      %v1782 = vpop.f32.mrb[0].mxu0
      %v1783 = vadd.f32 %v1718, %v1782
      %v1784 = vpop.f32.mrb[0].mxu0
      %v1785 = vpop.f32.mrb[0].mxu0
      %v1786 = vadd.f32 %v1721, %v1785
      %v1787 = vpop.f32.mrb[0].mxu0
      %1788 = vmatprep.mubr.bf16.mxu0 %v1066
      %1789 = vmatmul.mubr.bf16.gmra.mrb[0].mxu0 %v1030
      %v1790 = vpop.f32.mrb[0].mxu0
      %v1791 = vadd.f32 %v1726, %v1790
      %v1792 = vpop.f32.mrb[0].mxu0
      %v1793 = vpop.f32.mrb[0].mxu0
      %v1794 = vadd.f32 %v1729, %v1793
      %v1795 = vpop.f32.mrb[0].mxu0
      %1796 = vdwg.mxu0
      %1797 = vmatprep.subr.bf16.mxu0 0
      %1798 = vmatpush1.bf16.msra.mxu0 %v1555
      %1799 = vmatprep.subr.bf16.mxu0 0
      %1800 = vmatpush1.bf16.msra.mxu0 %v1556
      %1801 = vmatprep.subr.bf16.mxu0 0
      %1802 = vmatpush1.bf16.msra.mxu0 %v1557
      %1803 = vmatprep.subr.bf16.mxu0 0
      %1804 = vmatpush1.bf16.msra.mxu0 %v1558
      %1805 = vmatprep.subr.bf16.mxu0 0
      %1806 = vmatpush1.bf16.msra.mxu0 %v1559
      %1807 = vmatprep.subr.bf16.mxu0 0
      %1808 = vmatpush1.bf16.msra.mxu0 %v1560
      %1809 = vmatprep.subr.bf16.mxu0 0
      %1810 = vmatpush1.bf16.msra.mxu0 %v1561
      %1811 = vmatprep.subr.bf16.mxu0 0
      %1812 = vmatpush1.bf16.msra.mxu0 %v1562
      %1813 = vmatprep.subr.bf16.mxu0 0
      %1814 = vmatpush1.bf16.msra.mxu0 %v1563
      %1815 = vmatprep.subr.bf16.mxu0 0
      %1816 = vmatpush1.bf16.msra.mxu0 %v1564
      %1817 = vmatprep.subr.bf16.mxu0 0
      %1818 = vmatpush1.bf16.msra.mxu0 %v1565
      %1819 = vmatprep.subr.bf16.mxu0 0
      %1820 = vmatpush1.bf16.msra.mxu0 %v1566
      %1821 = vmatprep.subr.bf16.mxu0 0
      %1822 = vmatpush1.bf16.msra.mxu0 %v1567
      %1823 = vmatprep.subr.bf16.mxu0 0
      %1824 = vmatpush1.bf16.msra.mxu0 %v1568
      %1825 = vmatprep.subr.bf16.mxu0 0
      %1826 = vmatpush1.bf16.msra.mxu0 %v1569
      %1827 = vmatprep.subr.bf16.mxu0 0
      %1828 = vmatpush1.bf16.msra.mxu0 %v1570
      %1829 = vmatprep.mubr.bf16.mxu0 %v1071
      %1830 = vmatmul.mubr.bf16.gmra.mrb[0].mxu0 %v1067
      %v1831 = vpop.f32.mrb[0].mxu0
      %v1832 = vadd.f32 %v1767, %v1831
      %v1833 = vpop.f32.mrb[0].mxu0
      %v1834 = vpop.f32.mrb[0].mxu0
      %v1835 = vadd.f32 %v1770, %v1834
      %v1836 = vpop.f32.mrb[0].mxu0
      %1837 = vmatprep.mubr.bf16.mxu0 %v1072
      %1838 = vmatmul.mubr.bf16.gmra.mrb[0].mxu0 %v1068
      %v1839 = vpop.f32.mrb[0].mxu0
      %v1840 = vadd.f32 %v1775, %v1839
      %v1841 = vpop.f32.mrb[0].mxu0
      %v1842 = vpop.f32.mrb[0].mxu0
      %v1843 = vadd.f32 %v1778, %v1842
      %v1844 = vpop.f32.mrb[0].mxu0
      %1845 = vmatprep.mubr.bf16.mxu0 %v1073
      %1846 = vmatmul.mubr.bf16.gmra.mrb[0].mxu0 %v1069
      %v1847 = vpop.f32.mrb[0].mxu0
      %v1848 = vadd.f32 %v1783, %v1847
      %v1849 = vpop.f32.mrb[0].mxu0
      %v1850 = vpop.f32.mrb[0].mxu0
      %v1851 = vadd.f32 %v1786, %v1850
      %v1852 = vpop.f32.mrb[0].mxu0
      %1853 = vmatprep.mubr.bf16.mxu0 %v1074
      %1854 = vmatmul.mubr.bf16.gmra.mrb[0].mxu0 %v1070
      %v1855 = vpop.f32.mrb[0].mxu0
      %v1856 = vadd.f32 %v1791, %v1855
      %v1857 = vpop.f32.mrb[0].mxu0
      %v1858 = vpop.f32.mrb[0].mxu0
      %v1859 = vadd.f32 %v1794, %v1858
      %v1860 = vpop.f32.mrb[0].mxu0
      %1861 = vdwg.mxu0
      %1862 = vmatprep.subr.bf16.mxu0 0
      %1863 = vmatpush1.bf16.msra.mxu0 %v1571
      %1864 = vmatprep.subr.bf16.mxu0 0
      %1865 = vmatpush1.bf16.msra.mxu0 %v1572
      %1866 = vmatprep.subr.bf16.mxu0 0
      %1867 = vmatpush1.bf16.msra.mxu0 %v1573
      %1868 = vmatprep.subr.bf16.mxu0 0
      %1869 = vmatpush1.bf16.msra.mxu0 %v1574
      %1870 = vmatprep.subr.bf16.mxu0 0
      %1871 = vmatpush1.bf16.msra.mxu0 %v1575
      %1872 = vmatprep.subr.bf16.mxu0 0
      %1873 = vmatpush1.bf16.msra.mxu0 %v1576
      %1874 = vmatprep.subr.bf16.mxu0 0
      %1875 = vmatpush1.bf16.msra.mxu0 %v1577
      %1876 = vmatprep.subr.bf16.mxu0 0
      %1877 = vmatpush1.bf16.msra.mxu0 %v1578
      %1878 = vmatprep.subr.bf16.mxu0 0
      %1879 = vmatpush1.bf16.msra.mxu0 %v1579
      %1880 = vmatprep.subr.bf16.mxu0 0
      %1881 = vmatpush1.bf16.msra.mxu0 %v1580
      %1882 = vmatprep.subr.bf16.mxu0 0
      %1883 = vmatpush1.bf16.msra.mxu0 %v1581
      %1884 = vmatprep.subr.bf16.mxu0 0
      %1885 = vmatpush1.bf16.msra.mxu0 %v1582
      %1886 = vmatprep.subr.bf16.mxu0 0
      %1887 = vmatpush1.bf16.msra.mxu0 %v1583
      %1888 = vmatprep.subr.bf16.mxu0 0
      %1889 = vmatpush1.bf16.msra.mxu0 %v1584
      %1890 = vmatprep.subr.bf16.mxu0 0
      %1891 = vmatpush1.bf16.msra.mxu0 %v1585
      %1892 = vmatprep.subr.bf16.mxu0 0
      %1893 = vmatpush1.bf16.msra.mxu0 %v1586
      %1894 = vmatprep.mubr.bf16.mxu0 %v1083
      %1895 = vmatmul.mubr.bf16.gmra.mrb[0].mxu0 %v1079
      %v1896 = vpop.f32.mrb[0].mxu0
      %v1897 = vadd.f32 %v1832, %v1896
      %v1898 = vpop.f32.mrb[0].mxu0
      %v1899 = vpop.f32.mrb[0].mxu0
      %v1900 = vadd.f32 %v1835, %v1899
      %v1901 = vpop.f32.mrb[0].mxu0
      %1902 = vmatprep.mubr.bf16.mxu0 %v1084
      %1903 = vmatmul.mubr.bf16.gmra.mrb[0].mxu0 %v1080
      %v1904 = vpop.f32.mrb[0].mxu0
      %v1905 = vadd.f32 %v1840, %v1904
      %v1906 = vpop.f32.mrb[0].mxu0
      %v1907 = vpop.f32.mrb[0].mxu0
      %v1908 = vadd.f32 %v1843, %v1907
      %v1909 = vpop.f32.mrb[0].mxu0
      %1910 = vmatprep.mubr.bf16.mxu0 %v1085
      %1911 = vmatmul.mubr.bf16.gmra.mrb[0].mxu0 %v1081
      %v1912 = vpop.f32.mrb[0].mxu0
      %v1913 = vadd.f32 %v1848, %v1912
      %v1914 = vpop.f32.mrb[0].mxu0
      %v1915 = vpop.f32.mrb[0].mxu0
      %v1916 = vadd.f32 %v1851, %v1915
      %v1917 = vpop.f32.mrb[0].mxu0
      %1918 = vmatprep.mubr.bf16.mxu0 %v1086
      %1919 = vmatmul.mubr.bf16.gmra.mrb[0].mxu0 %v1082
      %v1920 = vpop.f32.mrb[0].mxu0
      %v1921 = vadd.f32 %v1856, %v1920
      %v1922 = vpop.f32.mrb[0].mxu0
      %v1923 = vpop.f32.mrb[0].mxu0
      %v1924 = vadd.f32 %v1859, %v1923
      %v1925 = vpop.f32.mrb[0].mxu0
      %1926 = vdwg.mxu0
      %1927 = vmatprep.subr.bf16.mxu0 0
      %1928 = vmatpush1.bf16.msra.mxu0 %v1587
      %1929 = vmatprep.subr.bf16.mxu0 0
      %1930 = vmatpush1.bf16.msra.mxu0 %v1588
      %1931 = vmatprep.subr.bf16.mxu0 0
      %1932 = vmatpush1.bf16.msra.mxu0 %v1589
      %1933 = vmatprep.subr.bf16.mxu0 0
      %1934 = vmatpush1.bf16.msra.mxu0 %v1590
      %1935 = vmatprep.subr.bf16.mxu0 0
      %1936 = vmatpush1.bf16.msra.mxu0 %v1591
      %1937 = vmatprep.subr.bf16.mxu0 0
      %1938 = vmatpush1.bf16.msra.mxu0 %v1592
      %1939 = vmatprep.subr.bf16.mxu0 0
      %1940 = vmatpush1.bf16.msra.mxu0 %v1593
      %1941 = vmatprep.subr.bf16.mxu0 0
      %1942 = vmatpush1.bf16.msra.mxu0 %v1594
      %1943 = vmatprep.subr.bf16.mxu0 0
      %1944 = vmatpush1.bf16.msra.mxu0 0
      %1945 = vmatprep.subr.bf16.mxu0 0
      %1946 = vmatpush1.bf16.msra.mxu0 0
      %1947 = vmatprep.subr.bf16.mxu0 0
      %1948 = vmatpush1.bf16.msra.mxu0 0
      %1949 = vmatprep.subr.bf16.mxu0 0
      %1950 = vmatpush1.bf16.msra.mxu0 0
      %1951 = vmatprep.subr.bf16.mxu0 0
      %1952 = vmatpush1.bf16.msra.mxu0 0
      %1953 = vmatprep.subr.bf16.mxu0 0
      %1954 = vmatpush1.bf16.msra.mxu0 0
      %1955 = vmatprep.subr.bf16.mxu0 0
      %1956 = vmatpush1.bf16.msra.mxu0 0
      %1957 = vmatprep.subr.bf16.mxu0 0
      %1958 = vmatpush1.bf16.msra.mxu0 0
      %1959 = vmatprep.mubr.bf16.mxu0 0
      %1960 = vmatmul.mubr.bf16.gmra.mrb[0].mxu0 %v1087
      %v1961 = vpop.f32.mrb[0].mxu0
      %v1962 = vadd.f32 %v1897, %v1961
      %v1963 = vpop.f32.mrb[0].mxu0
      %v1964 = vpop.f32.mrb[0].mxu0
      %v1965 = vadd.f32 %v1900, %v1964
      %v1966 = vpop.f32.mrb[0].mxu0
      %1967 = vmatprep.mubr.bf16.mxu0 0
      %1968 = vmatmul.mubr.bf16.gmra.mrb[0].mxu0 %v1088
      %v1969 = vpop.f32.mrb[0].mxu0
      %v1970 = vadd.f32 %v1905, %v1969
      %v1971 = vpop.f32.mrb[0].mxu0
      %v1972 = vpop.f32.mrb[0].mxu0
      %v1973 = vadd.f32 %v1908, %v1972
      %v1974 = vpop.f32.mrb[0].mxu0
      %1975 = vmatprep.mubr.bf16.mxu0 0
      %1976 = vmatmul.mubr.bf16.gmra.mrb[0].mxu0 %v1089
      %v1977 = vpop.f32.mrb[0].mxu0
      %v1978 = vadd.f32 %v1913, %v1977
      %v1979 = vpop.f32.mrb[0].mxu0
      %v1980 = vpop.f32.mrb[0].mxu0
      %v1981 = vadd.f32 %v1916, %v1980
      %v1982 = vpop.f32.mrb[0].mxu0
      %1983 = vmatprep.mubr.bf16.mxu0 0
      %1984 = vmatmul.mubr.bf16.gmra.mrb[0].mxu0 %v1090
      %v1985 = vpop.f32.mrb[0].mxu0
      %v1986 = vadd.f32 %v1921, %v1985
      %v1987 = vpop.f32.mrb[0].mxu0
      %v1988 = vpop.f32.mrb[0].mxu0
      %v1989 = vadd.f32 %v1924, %v1988
      %v1990 = vpop.f32.mrb[0].mxu0
      %1991 = vdwg.mxu0
      %v1992 = vld [vmem:[%s5] sm:$0x1]
      %v1994 = vlaneseq
      %v1995 = vshrl.u32 %v1994, 7
      %v1996 = vsub.s32 0, %v1995
      %v1997 = vrot.slane %v1992, %v1996
      %v1999 = vmul.f32 %v1962, %v1997
      %v2000 = vmul.f32 %v1965, %v1997
      %v2001 = vmul.f32 %v1970, %v1997
      %v2002 = vmul.f32 %v1973, %v1997
      %v2003 = vmul.f32 %v1978, %v1997
      %v2004 = vmul.f32 %v1981, %v1997
      %v2005 = vmul.f32 %v1986, %v1997
      %v2006 = vmul.f32 %v1989, %v1997
      %v2007 = vld [vmem:[%s6] sm:$0x1]
      %v2009 = vlaneseq
      %v2010 = vshrl.u32 %v2009, 7
      %v2011 = vsub.s32 0, %v2010
      %v2012 = vrot.slane %v2007, %v2011
      %v2014 = vadd.f32 %v1999, %v2012
      %v2015 = vadd.f32 %v2000, %v2012
      %v2016 = vadd.f32 %v2001, %v2012
      %v2017 = vadd.f32 %v2002, %v2012
      %v2018 = vadd.f32 %v2003, %v2012
      %v2019 = vadd.f32 %v2004, %v2012
      %v2020 = vadd.f32 %v2005, %v2012
      %v2021 = vadd.f32 %v2006, %v2012
      %v2022 = vmax.f32 %v2014, 0.0
      %v2023 = vmax.f32 %v2015, 0.0
      %v2024 = vmax.f32 %v2016, 0.0
      %v2025 = vmax.f32 %v2017, 0.0
      %v2026 = vmax.f32 %v2018, 0.0
      %v2027 = vmax.f32 %v2019, 0.0
      %v2028 = vmax.f32 %v2020, 0.0
      %v2029 = vmax.f32 %v2021, 0.0
      %v2030 = vpack.c.bf16 %v2023, %v2022
      %v2031 = vpack.c.bf16 %v2025, %v2024
      %v2032 = vpack.c.bf16 %v2027, %v2026
      %v2033 = vpack.c.bf16 %v2029, %v2028
      %v2034 = vld [vmem:[%s7] sm:$0xf]
      %v2035 = vld [vmem:[%s7 + $0x4] sm:$0xf]
      %v2036 = vld [vmem:[%s7 + $0x8] sm:$0xf]
      %v2037 = vld [vmem:[%s7 + $0xc] sm:$0xf]
      %v2038 = vld [vmem:[%s7 + $0x10] sm:$0xf]
      %v2039 = vld [vmem:[%s7 + $0x14] sm:$0xf]
      %v2040 = vld [vmem:[%s7 + $0x18] sm:$0xf]
      %v2041 = vld [vmem:[%s7 + $0x1c] sm:$0xf]
      %v2042 = vld [vmem:[%s7 + $0x20] sm:$0xf]
      %v2043 = vld [vmem:[%s7 + $0x24] sm:$0xf]
      %v2044 = vld [vmem:[%s7 + $0x28] sm:$0xf]
      %v2045 = vld [vmem:[%s7 + $0x2c] sm:$0xf]
      %v2046 = vld [vmem:[%s7 + $0x30] sm:$0xf]
      %v2047 = vld [vmem:[%s7 + $0x34] sm:$0xf]
      %v2048 = vld [vmem:[%s7 + $0x38] sm:$0xf]
      %v2049 = vld [vmem:[%s7 + $0x3c] sm:$0xf]
      %v2066 = vunpack.c.l.b16 %v2034
      %v2067 = vunpack.c.l.b16 %v2035
      %v2068 = vunpack.c.l.b16 %v2036
      %v2069 = vunpack.c.l.b16 %v2037
      %v2070 = vunpack.c.l.b16 %v2038
      %v2071 = vunpack.c.l.b16 %v2039
      %v2072 = vunpack.c.l.b16 %v2040
      %v2073 = vunpack.c.l.b16 %v2041
      %v2074 = vunpack.c.l.b16 %v2042
      %v2075 = vunpack.c.l.b16 %v2043
      %v2076 = vunpack.c.l.b16 %v2044
      %v2077 = vunpack.c.l.b16 %v2045
      %v2078 = vunpack.c.l.b16 %v2046
      %v2079 = vunpack.c.l.b16 %v2047
      %v2080 = vunpack.c.l.b16 %v2048
      %v2081 = vunpack.c.l.b16 %v2049
      %v2082 = vpack.c.b16 %v2067, %v2066
      %v2083 = vpack.c.b16 %v2069, %v2068
      %v2084 = vpack.c.b16 %v2071, %v2070
      %v2085 = vpack.c.b16 %v2073, %v2072
      %v2086 = vpack.c.b16 %v2075, %v2074
      %v2087 = vpack.c.b16 %v2077, %v2076
      %v2088 = vpack.c.b16 %v2079, %v2078
      %v2089 = vpack.c.b16 %v2081, %v2080
      %2098 = vmatprep.subr.bf16.mxu0 0
      %2099 = vmatpush1.bf16.msra.mxu0 %v2082
      %2100 = vmatprep.subr.bf16.mxu0 0
      %2101 = vmatpush1.bf16.msra.mxu0 %v2083
      %2102 = vmatprep.subr.bf16.mxu0 0
      %2103 = vmatpush1.bf16.msra.mxu0 %v2084
      %2104 = vmatprep.subr.bf16.mxu0 0
      %2105 = vmatpush1.bf16.msra.mxu0 %v2085
      %2106 = vmatprep.subr.bf16.mxu0 0
      %2107 = vmatpush1.bf16.msra.mxu0 %v2086
      %2108 = vmatprep.subr.bf16.mxu0 0
      %2109 = vmatpush1.bf16.msra.mxu0 %v2087
      %2110 = vmatprep.subr.bf16.mxu0 0
      %2111 = vmatpush1.bf16.msra.mxu0 %v2088
      %2112 = vmatprep.subr.bf16.mxu0 0
      %2113 = vmatpush1.bf16.msra.mxu0 %v2089
      %2114 = vmatprep.subr.bf16.mxu0 0
      %2115 = vmatpush1.bf16.msra.mxu0 0
      %2116 = vmatprep.subr.bf16.mxu0 0
      %2117 = vmatpush1.bf16.msra.mxu0 0
      %2118 = vmatprep.subr.bf16.mxu0 0
      %2119 = vmatpush1.bf16.msra.mxu0 0
      %2120 = vmatprep.subr.bf16.mxu0 0
      %2121 = vmatpush1.bf16.msra.mxu0 0
      %2122 = vmatprep.subr.bf16.mxu0 0
      %2123 = vmatpush1.bf16.msra.mxu0 0
      %2124 = vmatprep.subr.bf16.mxu0 0
      %2125 = vmatpush1.bf16.msra.mxu0 0
      %2126 = vmatprep.subr.bf16.mxu0 0
      %2127 = vmatpush1.bf16.msra.mxu0 0
      %2128 = vmatprep.subr.bf16.mxu0 0
      %2129 = vmatpush1.bf16.msra.mxu0 0
      %2130 = vmatprep.mubr.bf16.mxu0 0
      %2131 = vmatmul.mubr.bf16.gmra.mrb[0].mxu0 %v2030
      %v2132 = vpop.f32.mrb[0].mxu0
      %v2133 = vadd.f32 0.0, %v2132
      %v2134 = vpop.f32.mrb[0].mxu0
      %v2135 = vpop.f32.mrb[0].mxu0
      %v2136 = vadd.f32 0.0, %v2135
      %v2137 = vpop.f32.mrb[0].mxu0
      %2138 = vmatprep.mubr.bf16.mxu0 0
      %2139 = vmatmul.mubr.bf16.gmra.mrb[0].mxu0 %v2031
      %v2140 = vpop.f32.mrb[0].mxu0
      %v2141 = vadd.f32 0.0, %v2140
      %v2142 = vpop.f32.mrb[0].mxu0
      %v2143 = vpop.f32.mrb[0].mxu0
      %v2144 = vadd.f32 0.0, %v2143
      %v2145 = vpop.f32.mrb[0].mxu0
      %2146 = vmatprep.mubr.bf16.mxu0 0
      %2147 = vmatmul.mubr.bf16.gmra.mrb[0].mxu0 %v2032
      %v2148 = vpop.f32.mrb[0].mxu0
      %v2149 = vadd.f32 0.0, %v2148
      %v2150 = vpop.f32.mrb[0].mxu0
      %v2151 = vpop.f32.mrb[0].mxu0
      %v2152 = vadd.f32 0.0, %v2151
      %v2153 = vpop.f32.mrb[0].mxu0
      %2154 = vmatprep.mubr.bf16.mxu0 0
      %2155 = vmatmul.mubr.bf16.gmra.mrb[0].mxu0 %v2033
      %v2156 = vpop.f32.mrb[0].mxu0
      %v2157 = vadd.f32 0.0, %v2156
      %v2158 = vpop.f32.mrb[0].mxu0
      %v2159 = vpop.f32.mrb[0].mxu0
      %v2160 = vadd.f32 0.0, %v2159
      %v2161 = vpop.f32.mrb[0].mxu0
      %2162 = vdwg.mxu0
      %v2163 = vld [vmem:[%s8] sm:$0x1]
      %v2165 = vlaneseq
      %v2166 = vshrl.u32 %v2165, 7
      %v2167 = vsub.s32 0, %v2166
      %v2168 = vrot.slane %v2163, %v2167
      %v2170 = vmul.f32 %v2133, %v2168
      %v2171 = vmul.f32 %v2136, %v2168
      %v2172 = vmul.f32 %v2141, %v2168
      %v2173 = vmul.f32 %v2144, %v2168
      %v2174 = vmul.f32 %v2149, %v2168
      %v2175 = vmul.f32 %v2152, %v2168
      %v2176 = vmul.f32 %v2157, %v2168
      %v2177 = vmul.f32 %v2160, %v2168
      %v2178 = vld [vmem:[%s9] sm:$0x1]
      %v2180 = vlaneseq
      %v2181 = vshrl.u32 %v2180, 7
      %v2182 = vsub.s32 0, %v2181
      %v2183 = vrot.slane %v2178, %v2182
      %v2185 = vadd.f32 %v2170, %v2183
      %v2186 = vadd.f32 %v2171, %v2183
      %v2187 = vadd.f32 %v2172, %v2183
      %v2188 = vadd.f32 %v2173, %v2183
      %v2189 = vadd.f32 %v2174, %v2183
      %v2190 = vadd.f32 %v2175, %v2183
      %v2191 = vadd.f32 %v2176, %v2183
      %v2192 = vadd.f32 %v2177, %v2183
      %v2193 = vld [vmem:[%s10] sm:$0xf]
      %v2194 = vld [vmem:[%s10 + $0x4] sm:$0xf]
      %v2195 = vld [vmem:[%s10 + $0x8] sm:$0xf]
      %v2196 = vld [vmem:[%s10 + $0xc] sm:$0xf]
      %v2197 = vld [vmem:[%s10 + $0x10] sm:$0xf]
      %v2198 = vld [vmem:[%s10 + $0x14] sm:$0xf]
      %v2199 = vld [vmem:[%s10 + $0x18] sm:$0xf]
      %v2200 = vld [vmem:[%s10 + $0x1c] sm:$0xf]
      %v2201 = vld [vmem:[%s10 + $0x20] sm:$0xf]
      %v2202 = vld [vmem:[%s10 + $0x24] sm:$0xf]
      %v2203 = vld [vmem:[%s10 + $0x28] sm:$0xf]
      %v2204 = vld [vmem:[%s10 + $0x2c] sm:$0xf]
      %v2205 = vld [vmem:[%s10 + $0x30] sm:$0xf]
      %v2206 = vld [vmem:[%s10 + $0x34] sm:$0xf]
      %v2207 = vld [vmem:[%s10 + $0x38] sm:$0xf]
      %v2208 = vld [vmem:[%s10 + $0x3c] sm:$0xf]
      %v2225 = vunpack.c.l.b16 %v2193
      %v2226 = vunpack.c.l.b16 %v2194
      %v2227 = vunpack.c.l.b16 %v2195
      %v2228 = vunpack.c.l.b16 %v2196
      %v2229 = vunpack.c.l.b16 %v2197
      %v2230 = vunpack.c.l.b16 %v2198
      %v2231 = vunpack.c.l.b16 %v2199
      %v2232 = vunpack.c.l.b16 %v2200
      %v2233 = vunpack.c.l.b16 %v2201
      %v2234 = vunpack.c.l.b16 %v2202
      %v2235 = vunpack.c.l.b16 %v2203
      %v2236 = vunpack.c.l.b16 %v2204
      %v2237 = vunpack.c.l.b16 %v2205
      %v2238 = vunpack.c.l.b16 %v2206
      %v2239 = vunpack.c.l.b16 %v2207
      %v2240 = vunpack.c.l.b16 %v2208
      %v2241 = vpack.c.b16 %v2226, %v2225
      %v2242 = vpack.c.b16 %v2228, %v2227
      %v2243 = vpack.c.b16 %v2230, %v2229
      %v2244 = vpack.c.b16 %v2232, %v2231
      %v2245 = vpack.c.b16 %v2234, %v2233
      %v2246 = vpack.c.b16 %v2236, %v2235
      %v2247 = vpack.c.b16 %v2238, %v2237
      %v2248 = vpack.c.b16 %v2240, %v2239
      %2257 = vmatprep.subr.bf16.mxu0 0
      %2258 = vmatpush1.bf16.msra.mxu0 %v2241
      %2259 = vmatprep.subr.bf16.mxu0 0
      %2260 = vmatpush1.bf16.msra.mxu0 %v2242
      %2261 = vmatprep.subr.bf16.mxu0 0
      %2262 = vmatpush1.bf16.msra.mxu0 %v2243
      %2263 = vmatprep.subr.bf16.mxu0 0
      %2264 = vmatpush1.bf16.msra.mxu0 %v2244
      %2265 = vmatprep.subr.bf16.mxu0 0
      %2266 = vmatpush1.bf16.msra.mxu0 %v2245
      %2267 = vmatprep.subr.bf16.mxu0 0
      %2268 = vmatpush1.bf16.msra.mxu0 %v2246
      %2269 = vmatprep.subr.bf16.mxu0 0
      %2270 = vmatpush1.bf16.msra.mxu0 %v2247
      %2271 = vmatprep.subr.bf16.mxu0 0
      %2272 = vmatpush1.bf16.msra.mxu0 %v2248
      %2273 = vmatprep.subr.bf16.mxu0 0
      %2274 = vmatpush1.bf16.msra.mxu0 0
      %2275 = vmatprep.subr.bf16.mxu0 0
      %2276 = vmatpush1.bf16.msra.mxu0 0
      %2277 = vmatprep.subr.bf16.mxu0 0
      %2278 = vmatpush1.bf16.msra.mxu0 0
      %2279 = vmatprep.subr.bf16.mxu0 0
      %2280 = vmatpush1.bf16.msra.mxu0 0
      %2281 = vmatprep.subr.bf16.mxu0 0
      %2282 = vmatpush1.bf16.msra.mxu0 0
      %2283 = vmatprep.subr.bf16.mxu0 0
      %2284 = vmatpush1.bf16.msra.mxu0 0
      %2285 = vmatprep.subr.bf16.mxu0 0
      %2286 = vmatpush1.bf16.msra.mxu0 0
      %2287 = vmatprep.subr.bf16.mxu0 0
      %2288 = vmatpush1.bf16.msra.mxu0 0
      %2289 = vmatprep.mubr.bf16.mxu0 0
      %2290 = vmatmul.mubr.bf16.gmra.mrb[0].mxu0 %v635
      %v2291 = vpop.f32.mrb[0].mxu0
      %v2292 = vadd.f32 0.0, %v2291
      %v2293 = vpop.f32.mrb[0].mxu0
      %v2294 = vpop.f32.mrb[0].mxu0
      %v2295 = vadd.f32 0.0, %v2294
      %v2296 = vpop.f32.mrb[0].mxu0
      %2297 = vmatprep.mubr.bf16.mxu0 0
      %2298 = vmatmul.mubr.bf16.gmra.mrb[0].mxu0 %v636
      %v2299 = vpop.f32.mrb[0].mxu0
      %v2300 = vadd.f32 0.0, %v2299
      %v2301 = vpop.f32.mrb[0].mxu0
      %v2302 = vpop.f32.mrb[0].mxu0
      %v2303 = vadd.f32 0.0, %v2302
      %v2304 = vpop.f32.mrb[0].mxu0
      %2305 = vmatprep.mubr.bf16.mxu0 0
      %2306 = vmatmul.mubr.bf16.gmra.mrb[0].mxu0 %v637
      %v2307 = vpop.f32.mrb[0].mxu0
      %v2308 = vadd.f32 0.0, %v2307
      %v2309 = vpop.f32.mrb[0].mxu0
      %v2310 = vpop.f32.mrb[0].mxu0
      %v2311 = vadd.f32 0.0, %v2310
      %v2312 = vpop.f32.mrb[0].mxu0
      %2313 = vmatprep.mubr.bf16.mxu0 0
      %2314 = vmatmul.mubr.bf16.gmra.mrb[0].mxu0 %v638
      %v2315 = vpop.f32.mrb[0].mxu0
      %v2316 = vadd.f32 0.0, %v2315
      %v2317 = vpop.f32.mrb[0].mxu0
      %v2318 = vpop.f32.mrb[0].mxu0
      %v2319 = vadd.f32 0.0, %v2318
      %v2320 = vpop.f32.mrb[0].mxu0
      %2321 = vdwg.mxu0
      %v2322 = vld [vmem:[%s11] sm:$0x1]
      %v2324 = vlaneseq
      %v2325 = vshrl.u32 %v2324, 7
      %v2326 = vsub.s32 0, %v2325
      %v2327 = vrot.slane %v2322, %v2326
      %v2329 = vmul.f32 %v2292, %v2327
      %v2330 = vmul.f32 %v2295, %v2327
      %v2331 = vmul.f32 %v2300, %v2327
      %v2332 = vmul.f32 %v2303, %v2327
      %v2333 = vmul.f32 %v2308, %v2327
      %v2334 = vmul.f32 %v2311, %v2327
      %v2335 = vmul.f32 %v2316, %v2327
      %v2336 = vmul.f32 %v2319, %v2327
      %v2337 = vld [vmem:[%s12] sm:$0x1]
      %v2339 = vlaneseq
      %v2340 = vshrl.u32 %v2339, 7
      %v2341 = vsub.s32 0, %v2340
      %v2342 = vrot.slane %v2337, %v2341
      %v2344 = vadd.f32 %v2329, %v2342
      %v2345 = vadd.f32 %v2330, %v2342
      %v2346 = vadd.f32 %v2331, %v2342
      %v2347 = vadd.f32 %v2332, %v2342
      %v2348 = vadd.f32 %v2333, %v2342
      %v2349 = vadd.f32 %v2334, %v2342
      %v2350 = vadd.f32 %v2335, %v2342
      %v2351 = vadd.f32 %v2336, %v2342
      %v2352 = vadd.f32 %v2185, %v2186
      %v2353 = vadd.f32 %v2352, %v2187
      %v2354 = vadd.f32 %v2353, %v2188
      %v2355 = vadd.f32 %v2354, %v2189
      %v2356 = vadd.f32 %v2355, %v2190
      %v2357 = vadd.f32 %v2356, %v2191
      %v2358 = vadd.f32 %v2357, %v2192
      %v2359 = vrot.slane %v2358, 4
      %v2360 = vadd.f32 %v2358, %v2359
      %v2361 = vrot.slane %v2360, 2
      %v2362 = vadd.f32 %v2360, %v2361
      %v2363 = vrot.slane %v2362, 1
      %v2364 = vadd.f32 %v2362, %v2363
      %v2365 = vrcp.pop 64.0
      %v2366 = vmul.f32 %v2364, %v2365
      %v2367 = vmax.f32 %v2185, %v2189
      %v2368 = vmax.f32 %v2186, %v2190
      %v2369 = vmax.f32 %v2187, %v2191
      %v2370 = vmax.f32 %v2188, %v2192
      %v2371 = vmax.f32 %v2367, %v2368
      %v2372 = vmax.f32 %v2369, %v2370
      %v2373 = vmax.f32 %v2371, %v2372
      %v2374 = vrot.slane %v2373, 4
      %v2375 = vmax.f32 %v2373, %v2374
      %v2376 = vrot.slane %v2375, 2
      %v2377 = vmax.f32 %v2375, %v2376
      %v2378 = vrot.slane %v2377, 1
      %v2379 = vmax.f32 %v2377, %v2378
      %v2380 = vsel %vm1010, %v2366, %v2379
      %v2381 = vpack.c.bf16 %v2380, %v2380
      %v2382 = vld [vmem:[%s13] sm:$0xf]
      %v2383 = vld [vmem:[%s13 + $0x4] sm:$0xf]
      %v2384 = vld [vmem:[%s13 + $0x8] sm:$0xf]
      %v2385 = vld [vmem:[%s13 + $0xc] sm:$0xf]
      %v2386 = vld [vmem:[%s13 + $0x10] sm:$0xf]
      %v2387 = vld [vmem:[%s13 + $0x14] sm:$0xf]
      %v2388 = vld [vmem:[%s13 + $0x18] sm:$0xf]
      %v2389 = vld [vmem:[%s13 + $0x1c] sm:$0xf]
      %v2390 = vld [vmem:[%s13 + $0x20] sm:$0xf]
      %v2391 = vld [vmem:[%s13 + $0x24] sm:$0xf]
      %v2392 = vld [vmem:[%s13 + $0x28] sm:$0xf]
      %v2393 = vld [vmem:[%s13 + $0x2c] sm:$0xf]
      %v2394 = vld [vmem:[%s13 + $0x30] sm:$0xf]
      %v2395 = vld [vmem:[%s13 + $0x34] sm:$0xf]
      %v2396 = vld [vmem:[%s13 + $0x38] sm:$0xf]
      %v2397 = vld [vmem:[%s13 + $0x3c] sm:$0xf]
      %v2414 = vunpack.c.l.b16 %v2382
      %v2415 = vunpack.c.l.b16 %v2383
      %v2416 = vunpack.c.l.b16 %v2384
      %v2417 = vunpack.c.l.b16 %v2385
      %v2418 = vunpack.c.l.b16 %v2386
      %v2419 = vunpack.c.l.b16 %v2387
      %v2420 = vunpack.c.l.b16 %v2388
      %v2421 = vunpack.c.l.b16 %v2389
      %v2422 = vunpack.c.l.b16 %v2390
      %v2423 = vunpack.c.l.b16 %v2391
      %v2424 = vunpack.c.l.b16 %v2392
      %v2425 = vunpack.c.l.b16 %v2393
      %v2426 = vunpack.c.l.b16 %v2394
      %v2427 = vunpack.c.l.b16 %v2395
      %v2428 = vunpack.c.l.b16 %v2396
      %v2429 = vunpack.c.l.b16 %v2397
      %v2430 = vpack.c.b16 %v2415, %v2414
      %v2431 = vpack.c.b16 %v2417, %v2416
      %v2432 = vpack.c.b16 %v2419, %v2418
      %v2433 = vpack.c.b16 %v2421, %v2420
      %v2434 = vpack.c.b16 %v2423, %v2422
      %v2435 = vpack.c.b16 %v2425, %v2424
      %v2436 = vpack.c.b16 %v2427, %v2426
      %v2437 = vpack.c.b16 %v2429, %v2428
      %2446 = vmatprep.subr.bf16.mxu0 0
      %2447 = vmatpush1.bf16.msra.mxu0 %v2430
      %2448 = vmatprep.subr.bf16.mxu0 0
      %2449 = vmatpush1.bf16.msra.mxu0 %v2431
      %2450 = vmatprep.subr.bf16.mxu0 0
      %2451 = vmatpush1.bf16.msra.mxu0 %v2432
      %2452 = vmatprep.subr.bf16.mxu0 0
      %2453 = vmatpush1.bf16.msra.mxu0 %v2433
      %2454 = vmatprep.subr.bf16.mxu0 0
      %2455 = vmatpush1.bf16.msra.mxu0 %v2434
      %2456 = vmatprep.subr.bf16.mxu0 0
      %2457 = vmatpush1.bf16.msra.mxu0 %v2435
      %2458 = vmatprep.subr.bf16.mxu0 0
      %2459 = vmatpush1.bf16.msra.mxu0 %v2436
      %2460 = vmatprep.subr.bf16.mxu0 0
      %2461 = vmatpush1.bf16.msra.mxu0 %v2437
      %2462 = vmatprep.subr.bf16.mxu0 0
      %2463 = vmatpush1.bf16.msra.mxu0 0
      %2464 = vmatprep.subr.bf16.mxu0 0
      %2465 = vmatpush1.bf16.msra.mxu0 0
      %2466 = vmatprep.subr.bf16.mxu0 0
      %2467 = vmatpush1.bf16.msra.mxu0 0
      %2468 = vmatprep.subr.bf16.mxu0 0
      %2469 = vmatpush1.bf16.msra.mxu0 0
      %2470 = vmatprep.subr.bf16.mxu0 0
      %2471 = vmatpush1.bf16.msra.mxu0 0
      %2472 = vmatprep.subr.bf16.mxu0 0
      %2473 = vmatpush1.bf16.msra.mxu0 0
      %2474 = vmatprep.subr.bf16.mxu0 0
      %2475 = vmatpush1.bf16.msra.mxu0 0
      %2476 = vmatprep.subr.bf16.mxu0 0
      %2477 = vmatpush1.bf16.msra.mxu0 0
      %2478 = vmatprep.mubr.bf16.mxu0 0
      %2479 = vmatmul.mubr.bf16.gmra.mrb[0].mxu0 %v2381
      %v2480 = vpop.f32.mrb[0].mxu0
      %v2481 = vadd.f32 0.0, %v2480
      %v2482 = vpop.f32.mrb[0].mxu0
      %v2483 = vpop.f32.mrb[0].mxu0
      %v2484 = vpop.f32.mrb[0].mxu0
      %2485 = vdwg.mxu0
      %v2486 = vmax.f32 %v2481, 0.0
      %v2487 = vpack.c.bf16 %v2486, %v2486
      %v2488 = vld [vmem:[%s14] sm:$0xf]
      %v2489 = vld [vmem:[%s14 + $0x4] sm:$0xf]
      %v2490 = vld [vmem:[%s14 + $0x8] sm:$0xf]
      %v2491 = vld [vmem:[%s14 + $0xc] sm:$0xf]
      %v2492 = vld [vmem:[%s14 + $0x10] sm:$0xf]
      %v2493 = vld [vmem:[%s14 + $0x14] sm:$0xf]
      %v2494 = vld [vmem:[%s14 + $0x18] sm:$0xf]
      %v2495 = vld [vmem:[%s14 + $0x1c] sm:$0xf]
      %v2496 = vld [vmem:[%s14 + $0x20] sm:$0xf]
      %v2497 = vld [vmem:[%s14 + $0x24] sm:$0xf]
      %v2498 = vld [vmem:[%s14 + $0x28] sm:$0xf]
      %v2499 = vld [vmem:[%s14 + $0x2c] sm:$0xf]
      %v2500 = vld [vmem:[%s14 + $0x30] sm:$0xf]
      %v2501 = vld [vmem:[%s14 + $0x34] sm:$0xf]
      %v2502 = vld [vmem:[%s14 + $0x38] sm:$0xf]
      %v2503 = vld [vmem:[%s14 + $0x3c] sm:$0xf]
      %v2520 = vunpack.c.l.b16 %v2488
      %v2521 = vunpack.c.l.b16 %v2489
      %v2522 = vunpack.c.l.b16 %v2490
      %v2523 = vunpack.c.l.b16 %v2491
      %v2524 = vunpack.c.l.b16 %v2492
      %v2525 = vunpack.c.l.b16 %v2493
      %v2526 = vunpack.c.l.b16 %v2494
      %v2527 = vunpack.c.l.b16 %v2495
      %v2528 = vunpack.c.l.b16 %v2496
      %v2529 = vunpack.c.l.b16 %v2497
      %v2530 = vunpack.c.l.b16 %v2498
      %v2531 = vunpack.c.l.b16 %v2499
      %v2532 = vunpack.c.l.b16 %v2500
      %v2533 = vunpack.c.l.b16 %v2501
      %v2534 = vunpack.c.l.b16 %v2502
      %v2535 = vunpack.c.l.b16 %v2503
      %v2536 = vpack.c.b16 %v2521, %v2520
      %v2537 = vpack.c.b16 %v2523, %v2522
      %v2538 = vpack.c.b16 %v2525, %v2524
      %v2539 = vpack.c.b16 %v2527, %v2526
      %v2540 = vpack.c.b16 %v2529, %v2528
      %v2541 = vpack.c.b16 %v2531, %v2530
      %v2542 = vpack.c.b16 %v2533, %v2532
      %v2543 = vpack.c.b16 %v2535, %v2534
      %2552 = vmatprep.subr.bf16.mxu0 0
      %2553 = vmatpush1.bf16.msra.mxu0 %v2536
      %2554 = vmatprep.subr.bf16.mxu0 0
      %2555 = vmatpush1.bf16.msra.mxu0 %v2537
      %2556 = vmatprep.subr.bf16.mxu0 0
      %2557 = vmatpush1.bf16.msra.mxu0 %v2538
      %2558 = vmatprep.subr.bf16.mxu0 0
      %2559 = vmatpush1.bf16.msra.mxu0 %v2539
      %2560 = vmatprep.subr.bf16.mxu0 0
      %2561 = vmatpush1.bf16.msra.mxu0 %v2540
      %2562 = vmatprep.subr.bf16.mxu0 0
      %2563 = vmatpush1.bf16.msra.mxu0 %v2541
      %2564 = vmatprep.subr.bf16.mxu0 0
      %2565 = vmatpush1.bf16.msra.mxu0 %v2542
      %2566 = vmatprep.subr.bf16.mxu0 0
      %2567 = vmatpush1.bf16.msra.mxu0 %v2543
      %2568 = vmatprep.subr.bf16.mxu0 0
      %2569 = vmatpush1.bf16.msra.mxu0 0
      %2570 = vmatprep.subr.bf16.mxu0 0
      %2571 = vmatpush1.bf16.msra.mxu0 0
      %2572 = vmatprep.subr.bf16.mxu0 0
      %2573 = vmatpush1.bf16.msra.mxu0 0
      %2574 = vmatprep.subr.bf16.mxu0 0
      %2575 = vmatpush1.bf16.msra.mxu0 0
      %2576 = vmatprep.subr.bf16.mxu0 0
      %2577 = vmatpush1.bf16.msra.mxu0 0
      %2578 = vmatprep.subr.bf16.mxu0 0
      %2579 = vmatpush1.bf16.msra.mxu0 0
      %2580 = vmatprep.subr.bf16.mxu0 0
      %2581 = vmatpush1.bf16.msra.mxu0 0
      %2582 = vmatprep.subr.bf16.mxu0 0
      %2583 = vmatpush1.bf16.msra.mxu0 0
      %2584 = vmatprep.mubr.bf16.mxu0 0
      %2585 = vmatmul.mubr.bf16.gmra.mrb[0].mxu0 %v2487
      %v2586 = vpop.f32.mrb[0].mxu0
      %v2587 = vadd.f32 0.0, %v2586
      %v2588 = vpop.f32.mrb[0].mxu0
      %v2589 = vpop.f32.mrb[0].mxu0
      %v2590 = vpop.f32.mrb[0].mxu0
      %2591 = vdwg.mxu0
      %v2593 = vrot.slane %v2587, 1
      %v2595 = vadd.f32 %v2587, %v2593
      %v2596 = vxor.u32 %v2595, 2147483648
      %v2597 = vmul.f32 %v2596, 1.442695
      %v2598 = vpow.pop %v2597
      %v2599 = vadd.f32 %v2598, 1.0
      %v2600 = vrcp.pop %v2599
      %v2601 = vmul.f32 1.0, %v2600
      %v2602 = vlaneseq
      %v2603 = vshrl.u32 %v2602, 7
      %v2604 = vsub.s32 0, %v2603
      %v2605 = vrot.slane %v2601, %v2604
      %v2606 = vmul.f32 %v2185, %v2605
      %v2607 = vmul.f32 %v2186, %v2605
      %v2608 = vmul.f32 %v2187, %v2605
      %v2609 = vmul.f32 %v2188, %v2605
      %v2610 = vmul.f32 %v2189, %v2605
      %v2611 = vmul.f32 %v2190, %v2605
      %v2612 = vmul.f32 %v2191, %v2605
      %v2613 = vmul.f32 %v2192, %v2605
      %2614 = vadd.xlane.f32.xlu0 %v2606
      %v2615 = vpop.xlane.xlu0 %2614
      %2616 = vadd.xlane.f32.xlu0 %v2607
      %v2617 = vpop.xlane.xlu0 %2616
      %2618 = vadd.xlane.f32.xlu0 %v2608
      %v2619 = vpop.xlane.xlu0 %2618
      %2620 = vadd.xlane.f32.xlu0 %v2609
      %v2621 = vpop.xlane.xlu0 %2620
      %2622 = vadd.xlane.f32.xlu0 %v2610
      %v2623 = vpop.xlane.xlu0 %2622
      %2624 = vadd.xlane.f32.xlu0 %v2611
      %v2625 = vpop.xlane.xlu0 %2624
      %2626 = vadd.xlane.f32.xlu0 %v2612
      %v2627 = vpop.xlane.xlu0 %2626
      %2628 = vadd.xlane.f32.xlu0 %v2613
      %v2629 = vpop.xlane.xlu0 %2628
      %v2630 = vmul.f32 %v2615, 0.0625
      %v2631 = vmul.f32 %v2617, 0.0625
      %v2632 = vmul.f32 %v2619, 0.0625
      %v2633 = vmul.f32 %v2621, 0.0625
      %v2634 = vmul.f32 %v2623, 0.0625
      %v2635 = vmul.f32 %v2625, 0.0625
      %v2636 = vmul.f32 %v2627, 0.0625
      %v2637 = vmul.f32 %v2629, 0.0625
      %v2638 = vlaneseq
      %v2639 = vand.u32 %v2638, 127
      %vm2640 = vcmp.lt.s32.totalorder %v2639, 16
      %v2641 = vsel %vm2640, 1, 0
      %vm2642 = vcmp.eq.s32.totalorder %v2641, 1
      %v2643 = vsel %vm2642, %v2606, -3.4028235e+38
      %v2644 = vsel %vm2642, %v2607, -3.4028235e+38
      %v2645 = vsel %vm2642, %v2608, -3.4028235e+38
      %v2646 = vsel %vm2642, %v2609, -3.4028235e+38
      %v2647 = vsel %vm2642, %v2610, -3.4028235e+38
      %v2648 = vsel %vm2642, %v2611, -3.4028235e+38
      %v2649 = vsel %vm2642, %v2612, -3.4028235e+38
      %v2650 = vsel %vm2642, %v2613, -3.4028235e+38
      %2651 = vmax.xlane.f32.xlu0 %v2643
      %v2652 = vpop.xlane.xlu0 %2651
      %2653 = vmax.xlane.f32.xlu0 %v2644
      %v2654 = vpop.xlane.xlu0 %2653
      %2655 = vmax.xlane.f32.xlu0 %v2645
      %v2656 = vpop.xlane.xlu0 %2655
      %2657 = vmax.xlane.f32.xlu0 %v2646
      %v2658 = vpop.xlane.xlu0 %2657
      %2659 = vmax.xlane.f32.xlu0 %v2647
      %v2660 = vpop.xlane.xlu0 %2659
      %2661 = vmax.xlane.f32.xlu0 %v2648
      %v2662 = vpop.xlane.xlu0 %2661
      %2663 = vmax.xlane.f32.xlu0 %v2649
      %v2664 = vpop.xlane.xlu0 %2663
      %2665 = vmax.xlane.f32.xlu0 %v2650
      %v2666 = vpop.xlane.xlu0 %2665
      %v2672 = vlaneseq
      %v2673 = vshrl.u32 %v2672, 7
      %v2674 = vsub.s32 %v2639, %v2673
      %v2675 = vrot.slane %v2630, %v2674
      %v2676 = vlaneseq
      %v2677 = vshrl.u32 %v2676, 7
      %v2678 = vsub.s32 %v2639, %v2677
      %v2679 = vrot.slane %v2631, %v2678
      %v2680 = vlaneseq
      %v2681 = vshrl.u32 %v2680, 7
      %v2682 = vsub.s32 %v2639, %v2681
      %v2683 = vrot.slane %v2632, %v2682
      %v2684 = vlaneseq
      %v2685 = vshrl.u32 %v2684, 7
      %v2686 = vsub.s32 %v2639, %v2685
      %v2687 = vrot.slane %v2633, %v2686
      %v2688 = vlaneseq
      %v2689 = vshrl.u32 %v2688, 7
      %v2690 = vsub.s32 %v2639, %v2689
      %v2691 = vrot.slane %v2634, %v2690
      %vm2692 = vcmask 1044484
      %v2693 = vsel %vm2692, %v2679, %v2675
      %vm2694 = vcmask 1045509
      %v2695 = vsel %vm2694, %v2683, %v2693
      %vm2696 = vcmask 1046534
      %v2697 = vsel %vm2696, %v2687, %v2695
      %vm2698 = vcmask 1047559
      %v2699 = vsel %vm2698, %v2691, %v2697
      %vm2701 = vcmask 1042432
      %v2702 = vsel %vm2701, 0.0, %v2699
      %v2704 = vlaneseq
      %v2705 = vshrl.u32 %v2704, 7
      %v2706 = vsub.s32 %v2639, %v2705
      %v2707 = vrot.slane %v2635, %v2706
      %vm2708 = vcmask 1043459
      %v2709 = vsel %vm2708, %v2679, %v2675
      %v2710 = vsel %vm2692, %v2683, %v2709
      %v2711 = vsel %vm2694, %v2687, %v2710
      %v2712 = vsel %vm2696, %v2691, %v2711
      %v2713 = vsel %vm2698, %v2707, %v2712
      %vm2715 = vcmask 1041408
      %v2716 = vsel %vm2715, 0.0, %v2713
      %v2718 = vlaneseq
      %v2719 = vshrl.u32 %v2718, 7
      %v2720 = vsub.s32 %v2639, %v2719
      %v2721 = vrot.slane %v2636, %v2720
      %vm2722 = vcmask 1042434
      %v2723 = vsel %vm2722, %v2679, %v2675
      %v2724 = vsel %vm2708, %v2683, %v2723
      %v2725 = vsel %vm2692, %v2687, %v2724
      %v2726 = vsel %vm2694, %v2691, %v2725
      %v2727 = vsel %vm2696, %v2707, %v2726
      %v2728 = vsel %vm2698, %v2721, %v2727
      %v2730 = vsel %vm1010, 0.0, %v2728
      %v2732 = vlaneseq
      %v2733 = vshrl.u32 %v2732, 7
      %v2734 = vsub.s32 %v2639, %v2733
      %v2735 = vrot.slane %v2637, %v2734
      %vm2736 = vcmask 1041409
      %v2737 = vsel %vm2736, %v2683, %v2679
      %v2738 = vsel %vm2722, %v2687, %v2737
      %v2739 = vsel %vm2708, %v2691, %v2738
      %v2740 = vsel %vm2692, %v2707, %v2739
      %v2741 = vsel %vm2694, %v2721, %v2740
      %v2742 = vsel %vm2696, %v2735, %v2741
      %vm2744 = vcmask 1046528
      %v2745 = vsel %vm2744, %v2742, 0.0
      %v2746 = vsel %vm2736, %v2687, %v2683
      %v2747 = vsel %vm2722, %v2691, %v2746
      %v2748 = vsel %vm2708, %v2707, %v2747
      %v2749 = vsel %vm2692, %v2721, %v2748
      %v2750 = vsel %vm2694, %v2735, %v2749
      %vm2752 = vcmask 1045504
      %v2753 = vsel %vm2752, %v2750, 0.0
      %v2754 = vsel %vm2736, %v2691, %v2687
      %v2755 = vsel %vm2722, %v2707, %v2754
      %v2756 = vsel %vm2708, %v2721, %v2755
      %v2757 = vsel %vm2692, %v2735, %v2756
      %vm2759 = vcmask 1044480
      %v2760 = vsel %vm2759, %v2757, 0.0
      %v2766 = vlaneseq
      %v2767 = vshrl.u32 %v2766, 7
      %v2768 = vsub.s32 %v2639, %v2767
      %v2769 = vrot.slane %v2652, %v2768
      %v2770 = vlaneseq
      %v2771 = vshrl.u32 %v2770, 7
      %v2772 = vsub.s32 %v2639, %v2771
      %v2773 = vrot.slane %v2654, %v2772
      %v2774 = vlaneseq
      %v2775 = vshrl.u32 %v2774, 7
      %v2776 = vsub.s32 %v2639, %v2775
      %v2777 = vrot.slane %v2656, %v2776
      %v2778 = vlaneseq
      %v2779 = vshrl.u32 %v2778, 7
      %v2780 = vsub.s32 %v2639, %v2779
      %v2781 = vrot.slane %v2658, %v2780
      %v2782 = vlaneseq
      %v2783 = vshrl.u32 %v2782, 7
      %v2784 = vsub.s32 %v2639, %v2783
      %v2785 = vrot.slane %v2660, %v2784
      %v2786 = vsel %vm2692, %v2773, %v2769
      %v2787 = vsel %vm2694, %v2777, %v2786
      %v2788 = vsel %vm2696, %v2781, %v2787
      %v2789 = vsel %vm2698, %v2785, %v2788
      %v2791 = vsel %vm2701, 0.0, %v2789
      %v2793 = vlaneseq
      %v2794 = vshrl.u32 %v2793, 7
      %v2795 = vsub.s32 %v2639, %v2794
      %v2796 = vrot.slane %v2662, %v2795
      %v2797 = vsel %vm2708, %v2773, %v2769
      %v2798 = vsel %vm2692, %v2777, %v2797
      %v2799 = vsel %vm2694, %v2781, %v2798
      %v2800 = vsel %vm2696, %v2785, %v2799
      %v2801 = vsel %vm2698, %v2796, %v2800
      %v2803 = vsel %vm2715, 0.0, %v2801
      %v2805 = vlaneseq
      %v2806 = vshrl.u32 %v2805, 7
      %v2807 = vsub.s32 %v2639, %v2806
      %v2808 = vrot.slane %v2664, %v2807
      %v2809 = vsel %vm2722, %v2773, %v2769
      %v2810 = vsel %vm2708, %v2777, %v2809
      %v2811 = vsel %vm2692, %v2781, %v2810
      %v2812 = vsel %vm2694, %v2785, %v2811
      %v2813 = vsel %vm2696, %v2796, %v2812
      %v2814 = vsel %vm2698, %v2808, %v2813
      %v2816 = vsel %vm1010, 0.0, %v2814
      %v2818 = vlaneseq
      %v2819 = vshrl.u32 %v2818, 7
      %v2820 = vsub.s32 %v2639, %v2819
      %v2821 = vrot.slane %v2666, %v2820
      %v2822 = vsel %vm2736, %v2777, %v2773
      %v2823 = vsel %vm2722, %v2781, %v2822
      %v2824 = vsel %vm2708, %v2785, %v2823
      %v2825 = vsel %vm2692, %v2796, %v2824
      %v2826 = vsel %vm2694, %v2808, %v2825
      %v2827 = vsel %vm2696, %v2821, %v2826
      %v2829 = vsel %vm2744, %v2827, 0.0
      %v2830 = vsel %vm2736, %v2781, %v2777
      %v2831 = vsel %vm2722, %v2785, %v2830
      %v2832 = vsel %vm2708, %v2796, %v2831
      %v2833 = vsel %vm2692, %v2808, %v2832
      %v2834 = vsel %vm2694, %v2821, %v2833
      %v2836 = vsel %vm2752, %v2834, 0.0
      %v2837 = vsel %vm2736, %v2785, %v2781
      %v2838 = vsel %vm2722, %v2796, %v2837
      %v2839 = vsel %vm2708, %v2808, %v2838
      %v2840 = vsel %vm2692, %v2821, %v2839
      %v2842 = vsel %vm2759, %v2840, 0.0
      %2844 = vrot.lane.b32.xlu0 %v2716, 8
      %v2845 = vpop.permute.xlu0 %2844
      %2848 = vrot.lane.b32.xlu0 %v2730, 16
      %v2849 = vpop.permute.xlu0 %2848
      %v2851 = vadd.s32 %v2639, 4294967272
      %v2852 = vlaneseq
      %v2853 = vshrl.u32 %v2852, 7
      %v2854 = vsub.s32 %v2851, %v2853
      %v2855 = vrot.slane %v2630, %v2854
      %v2856 = vlaneseq
      %v2857 = vshrl.u32 %v2856, 7
      %v2858 = vsub.s32 %v2851, %v2857
      %v2859 = vrot.slane %v2631, %v2858
      %v2860 = vlaneseq
      %v2861 = vshrl.u32 %v2860, 7
      %v2862 = vsub.s32 %v2851, %v2861
      %v2863 = vrot.slane %v2632, %v2862
      %v2864 = vlaneseq
      %v2865 = vshrl.u32 %v2864, 7
      %v2866 = vsub.s32 %v2851, %v2865
      %v2867 = vrot.slane %v2633, %v2866
      %v2868 = vlaneseq
      %v2869 = vshrl.u32 %v2868, 7
      %v2870 = vsub.s32 %v2851, %v2869
      %v2871 = vrot.slane %v2634, %v2870
      %v2872 = vlaneseq
      %v2873 = vshrl.u32 %v2872, 7
      %v2874 = vsub.s32 %v2851, %v2873
      %v2875 = vrot.slane %v2635, %v2874
      %v2876 = vlaneseq
      %v2877 = vshrl.u32 %v2876, 7
      %v2878 = vsub.s32 %v2851, %v2877
      %v2879 = vrot.slane %v2636, %v2878
      %v2880 = vlaneseq
      %v2881 = vshrl.u32 %v2880, 7
      %v2882 = vsub.s32 %v2851, %v2881
      %v2883 = vrot.slane %v2637, %v2882
      %v2884 = vsel %vm2736, %v2859, %v2855
      %v2885 = vsel %vm2722, %v2863, %v2884
      %v2886 = vsel %vm2708, %v2867, %v2885
      %v2887 = vsel %vm2692, %v2871, %v2886
      %v2888 = vsel %vm2694, %v2875, %v2887
      %v2889 = vsel %vm2696, %v2879, %v2888
      %v2890 = vsel %vm2698, %v2883, %v2889
      %2893 = vrot.lane.b32.xlu0 %v2745, 32
      %v2894 = vpop.permute.xlu0 %2893
      %2897 = vrot.lane.b32.xlu0 %v2753, 40
      %v2898 = vpop.permute.xlu0 %2897
      %2901 = vrot.lane.b32.xlu0 %v2760, 48
      %v2902 = vpop.permute.xlu0 %2901
      %2905 = vrot.lane.b32.xlu0 %v2791, 56
      %v2906 = vpop.permute.xlu0 %2905
      %2909 = vrot.lane.b32.xlu0 %v2803, 64
      %v2910 = vpop.permute.xlu0 %2909
      %2913 = vrot.lane.b32.xlu0 %v2816, 72
      %v2914 = vpop.permute.xlu0 %2913
      %v2916 = vadd.s32 %v2639, 4294967216
      %v2917 = vlaneseq
      %v2918 = vshrl.u32 %v2917, 7
      %v2919 = vsub.s32 %v2916, %v2918
      %v2920 = vrot.slane %v2652, %v2919
      %v2921 = vlaneseq
      %v2922 = vshrl.u32 %v2921, 7
      %v2923 = vsub.s32 %v2916, %v2922
      %v2924 = vrot.slane %v2654, %v2923
      %v2925 = vlaneseq
      %v2926 = vshrl.u32 %v2925, 7
      %v2927 = vsub.s32 %v2916, %v2926
      %v2928 = vrot.slane %v2656, %v2927
      %v2929 = vlaneseq
      %v2930 = vshrl.u32 %v2929, 7
      %v2931 = vsub.s32 %v2916, %v2930
      %v2932 = vrot.slane %v2658, %v2931
      %v2933 = vlaneseq
      %v2934 = vshrl.u32 %v2933, 7
      %v2935 = vsub.s32 %v2916, %v2934
      %v2936 = vrot.slane %v2660, %v2935
      %v2937 = vlaneseq
      %v2938 = vshrl.u32 %v2937, 7
      %v2939 = vsub.s32 %v2916, %v2938
      %v2940 = vrot.slane %v2662, %v2939
      %v2941 = vlaneseq
      %v2942 = vshrl.u32 %v2941, 7
      %v2943 = vsub.s32 %v2916, %v2942
      %v2944 = vrot.slane %v2664, %v2943
      %v2945 = vlaneseq
      %v2946 = vshrl.u32 %v2945, 7
      %v2947 = vsub.s32 %v2916, %v2946
      %v2948 = vrot.slane %v2666, %v2947
      %v2949 = vsel %vm2736, %v2924, %v2920
      %v2950 = vsel %vm2722, %v2928, %v2949
      %v2951 = vsel %vm2708, %v2932, %v2950
      %v2952 = vsel %vm2692, %v2936, %v2951
      %v2953 = vsel %vm2694, %v2940, %v2952
      %v2954 = vsel %vm2696, %v2944, %v2953
      %v2955 = vsel %vm2698, %v2948, %v2954
      %2958 = vrot.lane.b32.xlu0 %v2829, 88
      %v2959 = vpop.permute.xlu0 %2958
      %2962 = vrot.lane.b32.xlu0 %v2836, 96
      %v2963 = vpop.permute.xlu0 %2962
      %2966 = vrot.lane.b32.xlu0 %v2842, 104
      %v2967 = vpop.permute.xlu0 %2966
      %vm2969 = vcmask 64512
      %v2970 = vsel %vm2969, %v2702, %v2845
      %vm2971 = vcmask 130048
      %v2972 = vsel %vm2971, %v2970, %v2849
      %vm2973 = vcmask 195584
      %v2974 = vsel %vm2973, %v2972, %v2890
      %vm2975 = vcmask 261120
      %v2976 = vsel %vm2975, %v2974, %v2894
      %vm2977 = vcmask 326656
      %v2978 = vsel %vm2977, %v2976, %v2898
      %vm2979 = vcmask 392192
      %v2980 = vsel %vm2979, %v2978, %v2902
      %vm2981 = vcmask 457728
      %v2982 = vsel %vm2981, %v2980, %v2906
      %vm2983 = vcmask 523264
      %v2984 = vsel %vm2983, %v2982, %v2910
      %vm2985 = vcmask 588800
      %v2986 = vsel %vm2985, %v2984, %v2914
      %vm2987 = vcmask 654336
      %v2988 = vsel %vm2987, %v2986, %v2955
      %vm2989 = vcmask 719872
      %v2990 = vsel %vm2989, %v2988, %v2959
      %vm2991 = vcmask 785408
      %v2992 = vsel %vm2991, %v2990, %v2963
      %vm2993 = vcmask 850944
      %v2994 = vsel %vm2993, %v2992, %v2967
      %vm2995 = vcmask 916480
      %v2996 = vsel %vm2995, %v2994, 0.0
      %v2997 = vpack.c.bf16 %v2996, %v2996
      %v2998 = vld [vmem:[%s15] sm:$0xf]
      %v2999 = vld [vmem:[%s15 + $0x4] sm:$0xf]
      %v3000 = vld [vmem:[%s15 + $0x8] sm:$0xf]
      %v3001 = vld [vmem:[%s15 + $0xc] sm:$0xf]
      %v3002 = vld [vmem:[%s15 + $0x10] sm:$0xf]
      %v3003 = vld [vmem:[%s15 + $0x14] sm:$0xf]
      %v3004 = vld [vmem:[%s15 + $0x18] sm:$0xf]
      %v3005 = vld [vmem:[%s15 + $0x1c] sm:$0xf]
      %v3006 = vld [vmem:[%s15 + $0x20] sm:$0xf]
      %v3007 = vld [vmem:[%s15 + $0x24] sm:$0xf]
      %v3008 = vld [vmem:[%s15 + $0x28] sm:$0xf]
      %v3009 = vld [vmem:[%s15 + $0x2c] sm:$0xf]
      %v3010 = vld [vmem:[%s15 + $0x30] sm:$0xf]
      %v3011 = vld [vmem:[%s15 + $0x34] sm:$0xf]
      %v3012 = vld [vmem:[%s15 + $0x38] sm:$0xf]
      %v3013 = vld [vmem:[%s15 + $0x3c] sm:$0xf]
      %v3030 = vunpack.c.l.b16 %v2998
      %v3031 = vunpack.c.l.b16 %v2999
      %v3032 = vunpack.c.l.b16 %v3000
      %v3033 = vunpack.c.l.b16 %v3001
      %v3034 = vunpack.c.l.b16 %v3002
      %v3035 = vunpack.c.l.b16 %v3003
      %v3036 = vunpack.c.l.b16 %v3004
      %v3037 = vunpack.c.l.b16 %v3005
      %v3038 = vunpack.c.l.b16 %v3006
      %v3039 = vunpack.c.l.b16 %v3007
      %v3040 = vunpack.c.l.b16 %v3008
      %v3041 = vunpack.c.l.b16 %v3009
      %v3042 = vunpack.c.l.b16 %v3010
      %v3043 = vunpack.c.l.b16 %v3011
      %v3044 = vunpack.c.l.b16 %v3012
      %v3045 = vunpack.c.l.b16 %v3013
      %v3046 = vpack.c.b16 %v3031, %v3030
      %v3047 = vpack.c.b16 %v3033, %v3032
      %v3048 = vpack.c.b16 %v3035, %v3034
      %v3049 = vpack.c.b16 %v3037, %v3036
      %v3050 = vpack.c.b16 %v3039, %v3038
      %v3051 = vpack.c.b16 %v3041, %v3040
      %v3052 = vpack.c.b16 %v3043, %v3042
      %v3053 = vpack.c.b16 %v3045, %v3044
      %3062 = vmatprep.subr.bf16.mxu0 0
      %3063 = vmatpush1.bf16.msra.mxu0 %v3046
      %3064 = vmatprep.subr.bf16.mxu0 0
      %3065 = vmatpush1.bf16.msra.mxu0 %v3047
      %3066 = vmatprep.subr.bf16.mxu0 0
      %3067 = vmatpush1.bf16.msra.mxu0 %v3048
      %3068 = vmatprep.subr.bf16.mxu0 0
      %3069 = vmatpush1.bf16.msra.mxu0 %v3049
      %3070 = vmatprep.subr.bf16.mxu0 0
      %3071 = vmatpush1.bf16.msra.mxu0 %v3050
      %3072 = vmatprep.subr.bf16.mxu0 0
      %3073 = vmatpush1.bf16.msra.mxu0 %v3051
      %3074 = vmatprep.subr.bf16.mxu0 0
      %3075 = vmatpush1.bf16.msra.mxu0 %v3052
      %3076 = vmatprep.subr.bf16.mxu0 0
      %3077 = vmatpush1.bf16.msra.mxu0 %v3053
      %3078 = vmatprep.subr.bf16.mxu0 0
      %3079 = vmatpush1.bf16.msra.mxu0 0
      %3080 = vmatprep.subr.bf16.mxu0 0
      %3081 = vmatpush1.bf16.msra.mxu0 0
      %3082 = vmatprep.subr.bf16.mxu0 0
      %3083 = vmatpush1.bf16.msra.mxu0 0
      %3084 = vmatprep.subr.bf16.mxu0 0
      %3085 = vmatpush1.bf16.msra.mxu0 0
      %3086 = vmatprep.subr.bf16.mxu0 0
      %3087 = vmatpush1.bf16.msra.mxu0 0
      %3088 = vmatprep.subr.bf16.mxu0 0
      %3089 = vmatpush1.bf16.msra.mxu0 0
      %3090 = vmatprep.subr.bf16.mxu0 0
      %3091 = vmatpush1.bf16.msra.mxu0 0
      %3092 = vmatprep.subr.bf16.mxu0 0
      %3093 = vmatpush1.bf16.msra.mxu0 0
      %3094 = vmatprep.mubr.bf16.mxu0 0
      %3095 = vmatmul.mubr.bf16.gmra.mrb[0].mxu0 %v2997
      %v3096 = vpop.f32.mrb[0].mxu0
      %v3097 = vadd.f32 0.0, %v3096
      %v3098 = vpop.f32.mrb[0].mxu0
      %v3099 = vpop.f32.mrb[0].mxu0
      %v3100 = vpop.f32.mrb[0].mxu0
      %3101 = vdwg.mxu0
      %v3102 = vxor.u32 %v3097, 2147483648
      %v3103 = vmul.f32 %v3102, 1.442695
      %v3104 = vpow.pop %v3103
      %v3105 = vadd.f32 %v3104, 1.0
      %v3106 = vrcp.pop %v3105
      %v3107 = vmul.f32 1.0, %v3106
      %v3108 = vlaneseq
      %v3109 = vshrl.u32 %v3108, 7
      %v3110 = vsub.s32 0, %v3109
      %v3111 = vrot.slane %v3107, %v3110
      %3113 = vbcast.lane.b32.xlu0 %v3111, 256
      %v3114 = vpop.permute.xlu0 %3113
      %v3115 = vlaneseq
      %v3116 = vshrl.u32 %v3115, 7
      %v3117 = vsub.s32 1, %v3116
      %v3118 = vrot.slane %v3107, %v3117
      %3120 = vbcast.lane.b32.xlu0 %v3118, 256
      %v3121 = vpop.permute.xlu0 %3120
      %v3122 = vlaneseq
      %v3123 = vshrl.u32 %v3122, 7
      %v3124 = vsub.s32 2, %v3123
      %v3125 = vrot.slane %v3107, %v3124
      %3127 = vbcast.lane.b32.xlu0 %v3125, 256
      %v3128 = vpop.permute.xlu0 %3127
      %v3129 = vlaneseq
      %v3130 = vshrl.u32 %v3129, 7
      %v3131 = vsub.s32 3, %v3130
      %v3132 = vrot.slane %v3107, %v3131
      %3134 = vbcast.lane.b32.xlu0 %v3132, 256
      %v3135 = vpop.permute.xlu0 %3134
      %v3136 = vlaneseq
      %v3137 = vshrl.u32 %v3136, 7
      %v3138 = vsub.s32 4, %v3137
      %v3139 = vrot.slane %v3107, %v3138
      %3141 = vbcast.lane.b32.xlu0 %v3139, 256
      %v3142 = vpop.permute.xlu0 %3141
      %v3143 = vlaneseq
      %v3144 = vshrl.u32 %v3143, 7
      %v3145 = vsub.s32 5, %v3144
      %v3146 = vrot.slane %v3107, %v3145
      %3148 = vbcast.lane.b32.xlu0 %v3146, 256
      %v3149 = vpop.permute.xlu0 %3148
      %v3150 = vlaneseq
      %v3151 = vshrl.u32 %v3150, 7
      %v3152 = vsub.s32 6, %v3151
      %v3153 = vrot.slane %v3107, %v3152
      %3155 = vbcast.lane.b32.xlu0 %v3153, 256
      %v3156 = vpop.permute.xlu0 %3155
      %v3157 = vlaneseq
      %v3158 = vshrl.u32 %v3157, 7
      %v3159 = vsub.s32 7, %v3158
      %v3160 = vrot.slane %v3107, %v3159
      %3162 = vbcast.lane.b32.xlu0 %v3160, 256
      %v3163 = vpop.permute.xlu0 %3162
      %v3164 = vmul.f32 %v2606, %v3114
      %v3165 = vmul.f32 %v2607, %v3121
      %v3166 = vmul.f32 %v2608, %v3128
      %v3167 = vmul.f32 %v2609, %v3135
      %v3168 = vmul.f32 %v2610, %v3142
      %v3169 = vmul.f32 %v2611, %v3149
      %v3170 = vmul.f32 %v2612, %v3156
      %v3171 = vmul.f32 %v2613, %v3163
      %v3172 = vadd.f32 %v3164, %v2344
      %v3173 = vadd.f32 %v3165, %v2345
      %v3174 = vadd.f32 %v3166, %v2346
      %v3175 = vadd.f32 %v3167, %v2347
      %v3176 = vadd.f32 %v3168, %v2348
      %v3177 = vadd.f32 %v3169, %v2349
      %v3178 = vadd.f32 %v3170, %v2350
      %v3179 = vadd.f32 %v3171, %v2351
      %v3180 = vmax.f32 %v3172, 0.0
      %v3181 = vmax.f32 %v3173, 0.0
      %v3182 = vmax.f32 %v3174, 0.0
      %v3183 = vmax.f32 %v3175, 0.0
      %v3184 = vmax.f32 %v3176, 0.0
      %v3185 = vmax.f32 %v3177, 0.0
      %v3186 = vmax.f32 %v3178, 0.0
      %v3187 = vmax.f32 %v3179, 0.0
      %v3188 = vpack.c.bf16 %v3181, %v3180
      %v3189 = vpack.c.bf16 %v3183, %v3182
      %v3190 = vpack.c.bf16 %v3185, %v3184
      %v3191 = vpack.c.bf16 %v3187, %v3186
      %v3196 = vunpack.c.l.b16 %v3188
      %v3197 = vunpack.c.h.b16 %v3188
      %v3198 = vunpack.c.l.b16 %v3189
      %v3199 = vunpack.c.h.b16 %v3189
      %v3200 = vunpack.c.l.b16 %v3190
      %v3201 = vunpack.c.h.b16 %v3190
      %v3202 = vunpack.c.l.b16 %v3191
      %v3203 = vunpack.c.h.b16 %v3191
      %v3204 = vpack.c.b16 %v3196, %v3196
      %v3205 = vpack.c.b16 %v3197, %v3197
      %v3206 = vpack.c.b16 %v3198, %v3198
      %v3207 = vpack.c.b16 %v3199, %v3199
      %v3208 = vpack.c.b16 %v3200, %v3200
      %v3209 = vpack.c.b16 %v3201, %v3201
      %v3210 = vpack.c.b16 %v3202, %v3202
      %v3211 = vpack.c.b16 %v3203, %v3203
      %3220 = vst [vmem:[%s521] sm:$0xf] %v3204
      %3221 = vst [vmem:[%s521 + $0x4] sm:$0xf] %v3205
      %3222 = vst [vmem:[%s521 + $0x8] sm:$0xf] %v3206
      %3223 = vst [vmem:[%s521 + $0xc] sm:$0xf] %v3207
      %3224 = vst [vmem:[%s521 + $0x10] sm:$0xf] %v3208
      %3225 = vst [vmem:[%s521 + $0x14] sm:$0xf] %v3209
      %3226 = vst [vmem:[%s521 + $0x18] sm:$0xf] %v3210
      %3227 = vst [vmem:[%s521 + $0x1c] sm:$0xf] %v3211
      %p3228 = scmp.lt.s32.totalorder %s27, 1
      %s3229 = scalar_select %p3228, %s27, 1
      %s3230 = smul.addr %s3229, 8
      %s3231 = smul.addr %s3230, 4
      %s3232 = scalar_lea.vmem %s16, %s3231
      // Predicated region
      $region85: #{_lambda_.4} parent=83 // pred_check
        %p3233 = pneg %p386
      $region86: #{_lambda_.4} parent=83 // pred_check_branch
        %3235 = sbr.rel (%p3233) target = $region88
      $region87: #{_lambda_.4} parent=83 // pred_region
        _
      $region88: #{_lambda_.4} parent=83 // pred_fallthru
        _
    $region84: #{_lambda_.4} parent=5 // pred_fallthru
      _
    %p3236 = scmp.le.s32.totalorder 2, %s22
    // Predicated region
    $region89: #{_lambda_.4} parent=5 // pred_check
      %p3237 = pneg %p3236
    $region90: #{_lambda_.4} parent=5 // pred_check_branch
      %3239 = sbr.rel (%p3237) target = $region92
    $region91: #{_lambda_.4} parent=5 // pred_region
      %s3240 = ssub.s32 %s22, 2
      // Predicated region
      $region93: #{_lambda_.4} parent=91 // pred_check
        %p3241 = pneg %p392
      $region94: #{_lambda_.4} parent=91 // pred_check_branch
        %3243 = sbr.rel (%p3241) target = $region96
      $region95: #{_lambda_.4} parent=91 // pred_region
        %p3244 = scmp.lt.s32.totalorder %s28, 1
        %s3245 = scalar_select %p3244, %s28, 1
        %s3246 = smul.addr %s3245, 8
        %s3247 = smul.addr %s3246, 4
        %s3248 = scalar_lea.vmem %s16, %s3247
      $region96: #{_lambda_.4} parent=91 // pred_fallthru
        _
    $region92: #{_lambda_.4} parent=5 // pred_fallthru
      _
  $region6: #{_lambda_.4} parent=0 // loop_footer
    %s26 = sadd.s32 1, %s22
  $region7: #{_lambda_.4} parent=0 // loop_footer_branch
    %21 = sbr.rel target = $region3
  $region8: #{_lambda_.4} parent=0 // loop_exit
    _

</llo_original>
